<compile_context>
chip_gen: v7x
topology: tpu7x:2x2x1
jax: 0.10.0
libtpu: 0.0.40
codegen_flags: <defaults>
</compile_context>

<pallas_src>
import jax
import jax.numpy as jnp
from jax.experimental import pallas as pl
from jax.experimental.pallas import tpu as pltpu
import math

# ---------------- scaled-down configuration ----------------
IN_CH = 3
C1, C2 = 16, 32                    # conv channels
IMG = 16
H1 = W1 = IMG                      # conv1 spatial
H2 = W2 = IMG // 2                 # conv2 spatial (after pool1)
H3 = W3 = IMG // 4                 # after pool2
FLAT_DIM = C2 * H3 * W3            # 512
HIDDEN = 128                       # analogue of 4096
CONV_FEATURES = 64                 # cfg.ConvFeatures


# ---------------- kernel 1: fused conv stage (both images) ----------------
def _conv3x3_bias_relu(pad_ref, w_ref, b_ref, h, w, cin, cout):
    """3x3 stride-1 conv on two images stacked in pad_ref, as 9 shifted matmuls.

    pad_ref: (2*(h+2), w+2, cin) zero-padded images; image b occupies rows
             [b*(h+2), (b+1)*(h+2)).
    w_ref:   (9*cin, cout) with row order (kh, kw, cin) (PyTorch OIHW -> (2,3,1,0)).
    b_ref:   (1, cout).
    returns: (2*h*w, cout) f32 with bias + ReLU applied; row order (image, y, x).
    """
    acc = jnp.zeros((2 * h * w, cout), jnp.float32)
    for di in range(3):
        for dj in range(3):
            per_img = [
                pad_ref[b * (h + 2) + di : b * (h + 2) + di + h, dj : dj + w, :]
                for b in range(2)
            ]
            tap = jnp.concatenate(per_img, axis=0)              # (2h, w, cin)
            tap2d = tap.reshape(2 * h * w, cin)                 # layout no-op (w % 8 == 0)
            wk = w_ref[(di * 3 + dj) * cin : (di * 3 + dj + 1) * cin, :]
            acc = acc + jnp.dot(tap2d, wk, preferred_element_type=jnp.float32)
    return jnp.maximum(acc + b_ref[...], 0.0)


def _conv_stage_kernel(x_ref, w1_ref, b1_ref, w2_ref, b2_ref, o_ref,
                       pad1, s1, hp1, pad2, s2, hp2):
    # ---- conv1 (3x3, pad 1) + bias + ReLU ----
    pad1[...] = jnp.zeros((2 * (H1 + 2), W1 + 2, IN_CH), jnp.float32)
    for b in range(2):
        pad1[b * (H1 + 2) + 1 : b * (H1 + 2) + 1 + H1, 1 : 1 + W1, :] = (
            x_ref[b * H1 : (b + 1) * H1, :, :])
    y1 = _conv3x3_bias_relu(pad1, w1_ref, b1_ref, H1, W1, IN_CH, C1)   # (512, C1)
    s1[...] = y1.reshape(2 * H1, W1, C1)

    # ---- fused 2x2 / stride-2 max pool (H then W, via strided VMEM reads) ----
    hp1[...] = jnp.maximum(s1[pl.ds(0, H1, 2), :, :], s1[pl.ds(1, H1, 2), :, :])
    pooled1 = jnp.maximum(hp1[:, pl.ds(0, W2, 2), :], hp1[:, pl.ds(1, W2, 2), :])
    # pooled1: (2*H2, W2, C1)

    # ---- conv2 (3x3, pad 1) + bias + ReLU ----
    pad2[...] = jnp.zeros((2 * (H2 + 2), W2 + 2, C1), jnp.float32)
    for b in range(2):
        pad2[b * (H2 + 2) + 1 : b * (H2 + 2) + 1 + H2, 1 : 1 + W2, :] = (
            pooled1[b * H2 : (b + 1) * H2, :, :])
    y2 = _conv3x3_bias_relu(pad2, w2_ref, b2_ref, H2, W2, C1, C2)      # (128, C2)
    s2[...] = y2.reshape(2 * H2, W2, C2)

    hp2[...] = jnp.maximum(s2[pl.ds(0, H2, 2), :, :], s2[pl.ds(1, H2, 2), :, :])
    o_ref[...] = jnp.maximum(hp2[:, pl.ds(0, W3, 2), :], hp2[:, pl.ds(1, W3, 2), :])


def conv_stage(x_stacked, w1, b1, w2, b2):
    """x_stacked: (2*H1, W1, IN_CH) both images stacked along the leading dim."""
    flops = 2 * (2 * H1 * W1 * 9 * IN_CH * C1 + 2 * H2 * W2 * 9 * C1 * C2)
    bytes_accessed = 4 * (2 * H1 * W1 * IN_CH + 9 * IN_CH * C1 + C1
                          + 9 * C1 * C2 + C2 + 2 * H3 * W3 * C2)
    return pl.pallas_call(
        _conv_stage_kernel,
        grid=(1,),
        in_specs=[
            pl.BlockSpec((2 * H1, W1, IN_CH), lambda i: (0, 0, 0)),
            pl.BlockSpec((9 * IN_CH, C1), lambda i: (0, 0)),
            pl.BlockSpec((1, C1), lambda i: (0, 0)),
            pl.BlockSpec((9 * C1, C2), lambda i: (0, 0)),
            pl.BlockSpec((1, C2), lambda i: (0, 0)),
        ],
        out_specs=pl.BlockSpec((2 * H3, W3, C2), lambda i: (0, 0, 0)),
        out_shape=jax.ShapeDtypeStruct((2 * H3, W3, C2), jnp.float32),
        scratch_shapes=[
            pltpu.VMEM((2 * (H1 + 2), W1 + 2, IN_CH), jnp.float32),  # pad1
            pltpu.VMEM((2 * H1, W1, C1), jnp.float32),               # conv1 output
            pltpu.VMEM((2 * H2, W1, C1), jnp.float32),               # H-pooled 1
            pltpu.VMEM((2 * (H2 + 2), W2 + 2, C1), jnp.float32),     # pad2
            pltpu.VMEM((2 * H2, W2, C2), jnp.float32),               # conv2 output
            pltpu.VMEM((2 * H3, W2, C2), jnp.float32),               # H-pooled 2
        ],
        compiler_params=pltpu.CompilerParams(dimension_semantics=("arbitrary",)),
        cost_estimate=pl.CostEstimate(flops=flops, transcendentals=0,
                                      bytes_accessed=bytes_accessed),
    )(x_stacked, w1, b1, w2, b2)


# ---------------- kernel 2: fused FC head + diff + predict ----------------
def _head_kernel(f_ref, w1_ref, b1_ref, w2_ref, b2_ref, w3_ref, b3_ref,
                 p1w_ref, p1b_ref, p2w_ref, p2b_ref, diff_ref, res_ref):
    x = f_ref[...]                                                     # (2, FLAT_DIM)
    x = jnp.maximum(jnp.dot(x, w1_ref[...],
                            preferred_element_type=jnp.float32) + b1_ref[...], 0.0)
    # TODO(synk): nn.Dropout(p=0.5) is identity at inference; training-mode masking not implemented.
    x = jnp.maximum(jnp.dot(x, w2_ref[...],
                            preferred_element_type=jnp.float32) + b2_ref[...], 0.0)
    x = jnp.dot(x, w3_ref[...], preferred_element_type=jnp.float32) + b3_ref[...]
    diff = x[0:1, :] - x[1:2, :]                                       # (1, CF)
    q = jnp.dot(diff, p1w_ref[...],
                preferred_element_type=jnp.float32) + p1b_ref[...]     # (1, CF)
    r = jnp.sum(q * p2w_ref[...], axis=-1, keepdims=True) + p2b_ref[...]  # (1, 1)
    diff_ref[...] = diff
    res_ref[...] = r


def head_stage(feats, p):
    flops = 2 * (2 * FLAT_DIM * HIDDEN + 2 * HIDDEN * HIDDEN
                 + 2 * HIDDEN * CONV_FEATURES + CONV_FEATURES * CONV_FEATURES
                 + CONV_FEATURES)
    bytes_accessed = 4 * (2 * FLAT_DIM + FLAT_DIM * HIDDEN + HIDDEN * HIDDEN
                          + HIDDEN * CONV_FEATURES + CONV_FEATURES * CONV_FEATURES
                          + 2 * CONV_FEATURES + 2 * HIDDEN + CONV_FEATURES + 2)
    return pl.pallas_call(
        _head_kernel,
        grid=(1,),
        in_specs=[
            pl.BlockSpec((2, FLAT_DIM), lambda i: (0, 0)),
            pl.BlockSpec((FLAT_DIM, HIDDEN), lambda i: (0, 0)),
            pl.BlockSpec((1, HIDDEN), lambda i: (0, 0)),
            pl.BlockSpec((HIDDEN, HIDDEN), lambda i: (0, 0)),
            pl.BlockSpec((1, HIDDEN), lambda i: (0, 0)),
            pl.BlockSpec((HIDDEN, CONV_FEATURES), lambda i: (0, 0)),
            pl.BlockSpec((1, CONV_FEATURES), lambda i: (0, 0)),
            pl.BlockSpec((CONV_FEATURES, CONV_FEATURES), lambda i: (0, 0)),
            pl.BlockSpec((1, CONV_FEATURES), lambda i: (0, 0)),
            pl.BlockSpec((1, CONV_FEATURES), lambda i: (0, 0)),
            pl.BlockSpec((1, 1), lambda i: (0, 0)),
        ],
        out_specs=[
            pl.BlockSpec((1, CONV_FEATURES), lambda i: (0, 0)),
            pl.BlockSpec((1, 1), lambda i: (0, 0)),
        ],
        out_shape=(
            jax.ShapeDtypeStruct((1, CONV_FEATURES), jnp.float32),
            jax.ShapeDtypeStruct((1, 1), jnp.float32),
        ),
        compiler_params=pltpu.CompilerParams(dimension_semantics=("arbitrary",)),
        cost_estimate=pl.CostEstimate(flops=flops, transcendentals=0,
                                      bytes_accessed=bytes_accessed),
    )(feats, p["fc1_w"], p["fc1_b"], p["fc2_w"], p["fc2_b"], p["fc3_w"], p["fc3_b"],
      p["p1_w"], p["p1_b"], p["p2_w"], p["p2_b"])


# ---------------- parameters (xavier_uniform, zero bias, kernel-ready layouts) ----------------
def _xavier(key, shape, fan_in, fan_out):
    bound = math.sqrt(6.0 / (fan_in + fan_out))
    return jax.random.uniform(key, shape, jnp.float32, -bound, bound)


def init_params(key):
    ks = jax.random.split(key, 7)
    p = {}
    # conv weights stored pre-reshaped to (kh*kw*cin, cout) matmul layout.
    w = _xavier(ks[0], (C1, IN_CH, 3, 3), IN_CH * 9, C1 * 9)
    p["conv1_w"] = jnp.transpose(w, (2, 3, 1, 0)).reshape(9 * IN_CH, C1)
    p["conv1_b"] = jnp.zeros((1, C1), jnp.float32)
    w = _xavier(ks[1], (C2, C1, 3, 3), C1 * 9, C2 * 9)
    p["conv2_w"] = jnp.transpose(w, (2, 3, 1, 0)).reshape(9 * C1, C2)
    p["conv2_b"] = jnp.zeros((1, C2), jnp.float32)
    # getDeepFeatures: Linear, ReLU, Dropout, Linear, ReLU, Dropout, Linear
    p["fc1_w"] = _xavier(ks[2], (FLAT_DIM, HIDDEN), FLAT_DIM, HIDDEN)
    p["fc1_b"] = jnp.zeros((1, HIDDEN), jnp.float32)
    p["fc2_w"] = _xavier(ks[3], (HIDDEN, HIDDEN), HIDDEN, HIDDEN)
    p["fc2_b"] = jnp.zeros((1, HIDDEN), jnp.float32)
    p["fc3_w"] = _xavier(ks[4], (HIDDEN, CONV_FEATURES), HIDDEN, CONV_FEATURES)
    p["fc3_b"] = jnp.zeros((1, CONV_FEATURES), jnp.float32)
    # predict: Linear(CF, CF), Linear(CF, 1) (last weight stored as a (1, CF) row).
    p["p1_w"] = _xavier(ks[5], (CONV_FEATURES, CONV_FEATURES),
                        CONV_FEATURES, CONV_FEATURES)
    p["p1_b"] = jnp.zeros((1, CONV_FEATURES), jnp.float32)
    p["p2_w"] = _xavier(ks[6], (1, CONV_FEATURES), CONV_FEATURES, 1)
    p["p2_b"] = jnp.zeros((1, 1), jnp.float32)
    return p


# ---------------- forward pass (mirrors ConvVGG.forward) ----------------
def conv_vgg_forward(params, img_copy, img_model):
    # NCHW (N=1) -> HWC; stack both images along the leading dim so the conv
    # kernel batches them through a single set of matmuls.
    x = jnp.concatenate(
        [jnp.transpose(img_copy[0], (1, 2, 0)),
         jnp.transpose(img_model[0], (1, 2, 0))], axis=0)            # (2*H1, W1, IN_CH)
    feats = conv_stage(x, params["conv1_w"], params["conv1_b"],
                       params["conv2_w"], params["conv2_b"])          # (2*H3, W3, C2)
    # torch.flatten(start_dim=0) flattens each image's feature map in (C, H, W) order.
    feats = feats.reshape(2, H3, W3, C2).transpose(0, 3, 1, 2).reshape(2, FLAT_DIM)
    diff, res = head_stage(feats, params)
    return diff.reshape(CONV_FEATURES), res.reshape(1)


if __name__ == "__main__":
    key = jax.random.PRNGKey(0)
    kp, k1, k2 = jax.random.split(key, 3)
    params = init_params(kp)
    img_copy = jax.random.normal(k1, (1, IN_CH, IMG, IMG), jnp.float32)
    img_model = jax.random.normal(k2, (1, IN_CH, IMG, IMG), jnp.float32)

    fwd = jax.jit(conv_vgg_forward)
    features_diff, result = fwd(params, img_copy, img_model)
    jax.block_until_ready((features_diff, result))

    assert features_diff.shape == (CONV_FEATURES,)
    assert result.shape == (1,)
    assert bool(jnp.all(jnp.isfinite(features_diff))) and bool(jnp.all(jnp.isfinite(result)))
    print("KERNEL_OK")
</pallas_src>

<mosaic_0001>
module attributes {stable_mosaic.version = 11 : i64} {
  func.func @_head_kernel(%arg0: i32, %arg1: memref<2x512xf32, #tpu.memory_space<vmem>>, %arg2: memref<512x128xf32, #tpu.memory_space<vmem>>, %arg3: memref<1x128xf32, #tpu.memory_space<vmem>>, %arg4: memref<128x128xf32, #tpu.memory_space<vmem>>, %arg5: memref<1x128xf32, #tpu.memory_space<vmem>>, %arg6: memref<128x64xf32, #tpu.memory_space<vmem>>, %arg7: memref<1x64xf32, #tpu.memory_space<vmem>>, %arg8: memref<64x64xf32, #tpu.memory_space<vmem>>, %arg9: memref<1x64xf32, #tpu.memory_space<vmem>>, %arg10: memref<1x64xf32, #tpu.memory_space<vmem>>, %arg11: memref<1x1xf32, #tpu.memory_space<vmem>>, %arg12: memref<1x64xf32, #tpu.memory_space<vmem>>, %arg13: memref<1x1xf32, #tpu.memory_space<vmem>>) attributes {dimension_semantics = [#tpu.dimension_semantics<arbitrary>], iteration_bounds = array<i64: 1>, scalar_prefetch = 0 : i64, scratch_operands = 0 : i64, tpu.core_type = #tpu.core_type<tc>, window_params = [{pipeline_mode = #tpu.pipeline_mode<synchronous>, transform_indices = @transform_0, window_bounds = array<i64: 2, 512>}, {pipeline_mode = #tpu.pipeline_mode<synchronous>, transform_indices = @transform_1, window_bounds = array<i64: 512, 128>}, {pipeline_mode = #tpu.pipeline_mode<synchronous>, transform_indices = @transform_2, window_bounds = array<i64: 1, 128>}, {pipeline_mode = #tpu.pipeline_mode<synchronous>, transform_indices = @transform_3, window_bounds = array<i64: 128, 128>}, {pipeline_mode = #tpu.pipeline_mode<synchronous>, transform_indices = @transform_4, window_bounds = array<i64: 1, 128>}, {pipeline_mode = #tpu.pipeline_mode<synchronous>, transform_indices = @transform_5, window_bounds = array<i64: 128, 64>}, {pipeline_mode = #tpu.pipeline_mode<synchronous>, transform_indices = @transform_6, window_bounds = array<i64: 1, 64>}, {pipeline_mode = #tpu.pipeline_mode<synchronous>, transform_indices = @transform_7, window_bounds = array<i64: 64, 64>}, {pipeline_mode = #tpu.pipeline_mode<synchronous>, transform_indices = @transform_8, window_bounds = array<i64: 1, 64>}, {pipeline_mode = #tpu.pipeline_mode<synchronous>, transform_indices = @transform_9, window_bounds = array<i64: 1, 64>}, {pipeline_mode = #tpu.pipeline_mode<synchronous>, transform_indices = @transform_10, window_bounds = array<i64: 1, 1>}, {pipeline_mode = #tpu.pipeline_mode<synchronous>, transform_indices = @transform_11, window_bounds = array<i64: 1, 64>}, {pipeline_mode = #tpu.pipeline_mode<synchronous>, transform_indices = @transform_12, window_bounds = array<i64: 1, 1>}]} {
    %c0 = arith.constant 0 : index
    %c0_0 = arith.constant 0 : index
    %0 = vector.load %arg1[%c0, %c0_0] : memref<2x512xf32, #tpu.memory_space<vmem>>, vector<2x512xf32>
    %c0_1 = arith.constant 0 : index
    %c0_2 = arith.constant 0 : index
    %1 = vector.load %arg2[%c0_1, %c0_2] : memref<512x128xf32, #tpu.memory_space<vmem>>, vector<512x128xf32>
    %cst = arith.constant dense<0.000000e+00> : vector<2x128xf32>
    %2 = tpu.matmul %0, %1, %cst {dimension_numbers = #tpu.dot_dimension_numbers<[1], [0], [0], [1], [0, 0, 1, 1], [], []>} : vector<2x512xf32>, vector<512x128xf32>, vector<2x128xf32> -> vector<2x128xf32>
    %c0_3 = arith.constant 0 : index
    %c0_4 = arith.constant 0 : index
    %3 = vector.load %arg3[%c0_3, %c0_4] : memref<1x128xf32, #tpu.memory_space<vmem>>, vector<1x128xf32>
    %4 = vector.broadcast %3 : vector<1x128xf32> to vector<2x128xf32>
    %5 = arith.addf %2, %4 : vector<2x128xf32>
    %cst_5 = arith.constant 0.000000e+00 : f32
    %6 = vector.broadcast %cst_5 : f32 to vector<2x128xf32>
    %7 = arith.maximumf %5, %6 : vector<2x128xf32>
    %c0_6 = arith.constant 0 : index
    %c0_7 = arith.constant 0 : index
    %8 = vector.load %arg4[%c0_6, %c0_7] : memref<128x128xf32, #tpu.memory_space<vmem>>, vector<128x128xf32>
    %cst_8 = arith.constant dense<0.000000e+00> : vector<2x128xf32>
    %9 = tpu.matmul %7, %8, %cst_8 {dimension_numbers = #tpu.dot_dimension_numbers<[1], [0], [0], [1], [0, 0, 1, 1], [], []>} : vector<2x128xf32>, vector<128x128xf32>, vector<2x128xf32> -> vector<2x128xf32>
    %c0_9 = arith.constant 0 : index
    %c0_10 = arith.constant 0 : index
    %10 = vector.load %arg5[%c0_9, %c0_10] : memref<1x128xf32, #tpu.memory_space<vmem>>, vector<1x128xf32>
    %11 = vector.broadcast %10 : vector<1x128xf32> to vector<2x128xf32>
    %12 = arith.addf %9, %11 : vector<2x128xf32>
    %cst_11 = arith.constant 0.000000e+00 : f32
    %13 = vector.broadcast %cst_11 : f32 to vector<2x128xf32>
    %14 = arith.maximumf %12, %13 : vector<2x128xf32>
    %c0_12 = arith.constant 0 : index
    %c0_13 = arith.constant 0 : index
    %15 = vector.load %arg6[%c0_12, %c0_13] : memref<128x64xf32, #tpu.memory_space<vmem>>, vector<128x64xf32>
    %cst_14 = arith.constant dense<0.000000e+00> : vector<2x64xf32>
    %16 = tpu.matmul %14, %15, %cst_14 {dimension_numbers = #tpu.dot_dimension_numbers<[1], [0], [0], [1], [0, 0, 1, 1], [], []>} : vector<2x128xf32>, vector<128x64xf32>, vector<2x64xf32> -> vector<2x64xf32>
    %c0_15 = arith.constant 0 : index
    %c0_16 = arith.constant 0 : index
    %17 = vector.load %arg7[%c0_15, %c0_16] : memref<1x64xf32, #tpu.memory_space<vmem>>, vector<1x64xf32>
    %18 = vector.broadcast %17 : vector<1x64xf32> to vector<2x64xf32>
    %19 = arith.addf %16, %18 : vector<2x64xf32>
    %20 = vector.extract_strided_slice %19 {offsets = [0, 0], sizes = [1, 64], strides = [1, 1]} : vector<2x64xf32> to vector<1x64xf32>
    %21 = vector.extract_strided_slice %19 {offsets = [1, 0], sizes = [1, 64], strides = [1, 1]} : vector<2x64xf32> to vector<1x64xf32>
    %22 = arith.subf %20, %21 : vector<1x64xf32>
    %c0_17 = arith.constant 0 : index
    %c0_18 = arith.constant 0 : index
    %23 = vector.load %arg8[%c0_17, %c0_18] : memref<64x64xf32, #tpu.memory_space<vmem>>, vector<64x64xf32>
    %cst_19 = arith.constant dense<0.000000e+00> : vector<1x64xf32>
    %24 = tpu.matmul %22, %23, %cst_19 {dimension_numbers = #tpu.dot_dimension_numbers<[1], [0], [0], [1], [0, 0, 1, 1], [], []>} : vector<1x64xf32>, vector<64x64xf32>, vector<1x64xf32> -> vector<1x64xf32>
    %c0_20 = arith.constant 0 : index
    %c0_21 = arith.constant 0 : index
    %25 = vector.load %arg9[%c0_20, %c0_21] : memref<1x64xf32, #tpu.memory_space<vmem>>, vector<1x64xf32>
    %26 = arith.addf %24, %25 : vector<1x64xf32>
    %c0_22 = arith.constant 0 : index
    %c0_23 = arith.constant 0 : index
    %27 = vector.load %arg10[%c0_22, %c0_23] : memref<1x64xf32, #tpu.memory_space<vmem>>, vector<1x64xf32>
    %28 = arith.mulf %26, %27 : vector<1x64xf32>
    %cst_24 = arith.constant dense<0.000000e+00> : vector<1xf32>
    %29 = vector.multi_reduction <add>, %28, %cst_24 [1] : vector<1x64xf32> to vector<1xf32>
    %30 = vector.shape_cast %29 : vector<1xf32> to vector<1x1xf32>
    %c0_25 = arith.constant 0 : index
    %c0_26 = arith.constant 0 : index
    %31 = vector.load %arg11[%c0_25, %c0_26] : memref<1x1xf32, #tpu.memory_space<vmem>>, vector<1x1xf32>
    %32 = arith.addf %30, %31 : vector<1x1xf32>
    %c0_27 = arith.constant 0 : index
    %c0_28 = arith.constant 0 : index
    %33 = vector.load %arg12[%c0_27, %c0_28] : memref<1x64xf32, #tpu.memory_space<vmem>>, vector<1x64xf32>
    tpu.vector_store %arg12[%c0_27, %c0_28], %22 {strides = array<i32>} : memref<1x64xf32, #tpu.memory_space<vmem>>, vector<1x64xf32>,
    %c0_29 = arith.constant 0 : index
    %c0_30 = arith.constant 0 : index
    %34 = vector.load %arg13[%c0_29, %c0_30] : memref<1x1xf32, #tpu.memory_space<vmem>>, vector<1x1xf32>
    tpu.vector_store %arg13[%c0_29, %c0_30], %32 {strides = array<i32>} : memref<1x1xf32, #tpu.memory_space<vmem>>, vector<1x1xf32>,
    return
  }
  func.func @transform_0(%arg0: i32) -> (i32, i32) {
    %c0_i32 = arith.constant 0 : i32
    %c0_i32_0 = arith.constant 0 : i32
    %c0_i32_1 = arith.constant 0 : i32
    return %c0_i32, %c0_i32_0 : i32, i32
  }
  func.func @transform_1(%arg0: i32) -> (i32, i32) {
    %c0_i32 = arith.constant 0 : i32
    %c0_i32_0 = arith.constant 0 : i32
    %c0_i32_1 = arith.constant 0 : i32
    return %c0_i32, %c0_i32_0 : i32, i32
  }
  func.func @transform_2(%arg0: i32) -> (i32, i32) {
    %c0_i32 = arith.constant 0 : i32
    %c0_i32_0 = arith.constant 0 : i32
    %c0_i32_1 = arith.constant 0 : i32
    return %c0_i32, %c0_i32_0 : i32, i32
  }
  func.func @transform_3(%arg0: i32) -> (i32, i32) {
    %c0_i32 = arith.constant 0 : i32
    %c0_i32_0 = arith.constant 0 : i32
    %c0_i32_1 = arith.constant 0 : i32
    return %c0_i32, %c0_i32_0 : i32, i32
  }
  func.func @transform_4(%arg0: i32) -> (i32, i32) {
    %c0_i32 = arith.constant 0 : i32
    %c0_i32_0 = arith.constant 0 : i32
    %c0_i32_1 = arith.constant 0 : i32
    return %c0_i32, %c0_i32_0 : i32, i32
  }
  func.func @transform_5(%arg0: i32) -> (i32, i32) {
    %c0_i32 = arith.constant 0 : i32
    %c0_i32_0 = arith.constant 0 : i32
    %c0_i32_1 = arith.constant 0 : i32
    return %c0_i32, %c0_i32_0 : i32, i32
  }
  func.func @transform_6(%arg0: i32) -> (i32, i32) {
    %c0_i32 = arith.constant 0 : i32
    %c0_i32_0 = arith.constant 0 : i32
    %c0_i32_1 = arith.constant 0 : i32
    return %c0_i32, %c0_i32_0 : i32, i32
  }
  func.func @transform_7(%arg0: i32) -> (i32, i32) {
    %c0_i32 = arith.constant 0 : i32
    %c0_i32_0 = arith.constant 0 : i32
    %c0_i32_1 = arith.constant 0 : i32
    return %c0_i32, %c0_i32_0 : i32, i32
  }
  func.func @transform_8(%arg0: i32) -> (i32, i32) {
    %c0_i32 = arith.constant 0 : i32
    %c0_i32_0 = arith.constant 0 : i32
    %c0_i32_1 = arith.constant 0 : i32
    return %c0_i32, %c0_i32_0 : i32, i32
  }
  func.func @transform_9(%arg0: i32) -> (i32, i32) {
    %c0_i32 = arith.constant 0 : i32
    %c0_i32_0 = arith.constant 0 : i32
    %c0_i32_1 = arith.constant 0 : i32
    return %c0_i32, %c0_i32_0 : i32, i32
  }
  func.func @transform_10(%arg0: i32) -> (i32, i32) {
    %c0_i32 = arith.constant 0 : i32
    %c0_i32_0 = arith.constant 0 : i32
    %c0_i32_1 = arith.constant 0 : i32
    return %c0_i32, %c0_i32_0 : i32, i32
  }
  func.func @transform_11(%arg0: i32) -> (i32, i32) {
    %c0_i32 = arith.constant 0 : i32
    %c0_i32_0 = arith.constant 0 : i32
    %c0_i32_1 = arith.constant 0 : i32
    return %c0_i32, %c0_i32_0 : i32, i32
  }
  func.func @transform_12(%arg0: i32) -> (i32, i32) {
    %c0_i32 = arith.constant 0 : i32
    %c0_i32_0 = arith.constant 0 : i32
    %c0_i32_1 = arith.constant 0 : i32
    return %c0_i32, %c0_i32_0 : i32, i32
  }
}

module attributes {stable_mosaic.version = 11 : i64} {
  func.func @_conv_stage_kernel(%arg0: i32, %arg1: memref<32x16x3xf32, #tpu.memory_space<vmem>>, %arg2: memref<27x16xf32, #tpu.memory_space<vmem>>, %arg3: memref<1x16xf32, #tpu.memory_space<vmem>>, %arg4: memref<144x32xf32, #tpu.memory_space<vmem>>, %arg5: memref<1x32xf32, #tpu.memory_space<vmem>>, %arg6: memref<8x4x32xf32, #tpu.memory_space<vmem>>, %arg7: memref<36x18x3xf32, #tpu.memory_space<vmem>>, %arg8: memref<32x16x16xf32, #tpu.memory_space<vmem>>, %arg9: memref<16x16x16xf32, #tpu.memory_space<vmem>>, %arg10: memref<20x10x16xf32, #tpu.memory_space<vmem>>, %arg11: memref<16x8x32xf32, #tpu.memory_space<vmem>>, %arg12: memref<8x8x32xf32, #tpu.memory_space<vmem>>) attributes {dimension_semantics = [#tpu.dimension_semantics<arbitrary>], iteration_bounds = array<i64: 1>, scalar_prefetch = 0 : i64, scratch_operands = 6 : i64, tpu.core_type = #tpu.core_type<tc>, window_params = [{pipeline_mode = #tpu.pipeline_mode<synchronous>, transform_indices = @transform_0, window_bounds = array<i64: 32, 16, 3>}, {pipeline_mode = #tpu.pipeline_mode<synchronous>, transform_indices = @transform_1, window_bounds = array<i64: 27, 16>}, {pipeline_mode = #tpu.pipeline_mode<synchronous>, transform_indices = @transform_2, window_bounds = array<i64: 1, 16>}, {pipeline_mode = #tpu.pipeline_mode<synchronous>, transform_indices = @transform_3, window_bounds = array<i64: 144, 32>}, {pipeline_mode = #tpu.pipeline_mode<synchronous>, transform_indices = @transform_4, window_bounds = array<i64: 1, 32>}, {pipeline_mode = #tpu.pipeline_mode<synchronous>, transform_indices = @transform_5, window_bounds = array<i64: 8, 4, 32>}]} {
    %cst = arith.constant 0.000000e+00 : f32
    %0 = vector.broadcast %cst : f32 to vector<36x18x3xf32>
    %c0 = arith.constant 0 : index
    %c0_0 = arith.constant 0 : index
    %c0_1 = arith.constant 0 : index
    %1 = vector.load %arg7[%c0, %c0_0, %c0_1] : memref<36x18x3xf32, #tpu.memory_space<vmem>>, vector<36x18x3xf32>
    tpu.vector_store %arg7[%c0, %c0_0, %c0_1], %0 {strides = array<i32>} : memref<36x18x3xf32, #tpu.memory_space<vmem>>, vector<36x18x3xf32>,
    %c0_2 = arith.constant 0 : index
    %c0_3 = arith.constant 0 : index
    %c0_4 = arith.constant 0 : index
    %2 = vector.load %arg1[%c0_2, %c0_3, %c0_4] : memref<32x16x3xf32, #tpu.memory_space<vmem>>, vector<16x16x3xf32>
    %c1 = arith.constant 1 : index
    %c1_5 = arith.constant 1 : index
    %c0_6 = arith.constant 0 : index
    %3 = vector.load %arg7[%c1, %c1_5, %c0_6] : memref<36x18x3xf32, #tpu.memory_space<vmem>>, vector<16x16x3xf32>
    tpu.vector_store %arg7[%c1, %c1_5, %c0_6], %2 {strides = array<i32>} : memref<36x18x3xf32, #tpu.memory_space<vmem>>, vector<16x16x3xf32>,
    %c16 = arith.constant 16 : index
    %c0_7 = arith.constant 0 : index
    %c0_8 = arith.constant 0 : index
    %4 = vector.load %arg1[%c16, %c0_7, %c0_8] : memref<32x16x3xf32, #tpu.memory_space<vmem>>, vector<16x16x3xf32>
    %c19 = arith.constant 19 : index
    %c1_9 = arith.constant 1 : index
    %c0_10 = arith.constant 0 : index
    %5 = vector.load %arg7[%c19, %c1_9, %c0_10] : memref<36x18x3xf32, #tpu.memory_space<vmem>>, vector<16x16x3xf32>
    tpu.vector_store %arg7[%c19, %c1_9, %c0_10], %4 {strides = array<i32>} : memref<36x18x3xf32, #tpu.memory_space<vmem>>, vector<16x16x3xf32>,
    %cst_11 = arith.constant 0.000000e+00 : f32
    %6 = vector.broadcast %cst_11 : f32 to vector<512x16xf32>
    %c0_12 = arith.constant 0 : index
    %c0_13 = arith.constant 0 : index
    %c0_14 = arith.constant 0 : index
    %7 = vector.load %arg7[%c0_12, %c0_13, %c0_14] : memref<36x18x3xf32, #tpu.memory_space<vmem>>, vector<16x16x3xf32>
    %c18 = arith.constant 18 : index
    %c0_15 = arith.constant 0 : index
    %c0_16 = arith.constant 0 : index
    %8 = vector.load %arg7[%c18, %c0_15, %c0_16] : memref<36x18x3xf32, #tpu.memory_space<vmem>>, vector<16x16x3xf32>
    %9 = tpu.concatenate %7, %8 in 0 : vector<16x16x3xf32>, vector<16x16x3xf32> -> vector<32x16x3xf32>
    %10 = vector.shape_cast %9 : vector<32x16x3xf32> to vector<512x3xf32>
    %c0_17 = arith.constant 0 : index
    %c0_18 = arith.constant 0 : index
    %11 = vector.load %arg2[%c0_17, %c0_18] : memref<27x16xf32, #tpu.memory_space<vmem>>, vector<3x16xf32>
    %cst_19 = arith.constant dense<0.000000e+00> : vector<512x16xf32>
    %12 = tpu.matmul %10, %11, %cst_19 {dimension_numbers = #tpu.dot_dimension_numbers<[1], [0], [0], [1], [0, 0, 1, 1], [], []>} : vector<512x3xf32>, vector<3x16xf32>, vector<512x16xf32> -> vector<512x16xf32>
    %13 = arith.addf %6, %12 : vector<512x16xf32>
    %c0_20 = arith.constant 0 : index
    %c1_21 = arith.constant 1 : index
    %c0_22 = arith.constant 0 : index
    %14 = vector.load %arg7[%c0_20, %c1_21, %c0_22] : memref<36x18x3xf32, #tpu.memory_space<vmem>>, vector<16x16x3xf32>
    %c18_23 = arith.constant 18 : index
    %c1_24 = arith.constant 1 : index
    %c0_25 = arith.constant 0 : index
    %15 = vector.load %arg7[%c18_23, %c1_24, %c0_25] : memref<36x18x3xf32, #tpu.memory_space<vmem>>, vector<16x16x3xf32>
    %16 = tpu.concatenate %14, %15 in 0 : vector<16x16x3xf32>, vector<16x16x3xf32> -> vector<32x16x3xf32>
    %17 = vector.shape_cast %16 : vector<32x16x3xf32> to vector<512x3xf32>
    %c3 = arith.constant 3 : index
    %c0_26 = arith.constant 0 : index
    %18 = vector.load %arg2[%c3, %c0_26] : memref<27x16xf32, #tpu.memory_space<vmem>>, vector<3x16xf32>
    %cst_27 = arith.constant dense<0.000000e+00> : vector<512x16xf32>
    %19 = tpu.matmul %17, %18, %cst_27 {dimension_numbers = #tpu.dot_dimension_numbers<[1], [0], [0], [1], [0, 0, 1, 1], [], []>} : vector<512x3xf32>, vector<3x16xf32>, vector<512x16xf32> -> vector<512x16xf32>
    %20 = arith.addf %13, %19 : vector<512x16xf32>
    %c0_28 = arith.constant 0 : index
    %c2 = arith.constant 2 : index
    %c0_29 = arith.constant 0 : index
    %21 = vector.load %arg7[%c0_28, %c2, %c0_29] : memref<36x18x3xf32, #tpu.memory_space<vmem>>, vector<16x16x3xf32>
    %c18_30 = arith.constant 18 : index
    %c2_31 = arith.constant 2 : index
    %c0_32 = arith.constant 0 : index
    %22 = vector.load %arg7[%c18_30, %c2_31, %c0_32] : memref<36x18x3xf32, #tpu.memory_space<vmem>>, vector<16x16x3xf32>
    %23 = tpu.concatenate %21, %22 in 0 : vector<16x16x3xf32>, vector<16x16x3xf32> -> vector<32x16x3xf32>
    %24 = vector.shape_cast %23 : vector<32x16x3xf32> to vector<512x3xf32>
    %c6 = arith.constant 6 : index
    %c0_33 = arith.constant 0 : index
    %25 = vector.load %arg2[%c6, %c0_33] : memref<27x16xf32, #tpu.memory_space<vmem>>, vector<3x16xf32>
    %cst_34 = arith.constant dense<0.000000e+00> : vector<512x16xf32>
    %26 = tpu.matmul %24, %25, %cst_34 {dimension_numbers = #tpu.dot_dimension_numbers<[1], [0], [0], [1], [0, 0, 1, 1], [], []>} : vector<512x3xf32>, vector<3x16xf32>, vector<512x16xf32> -> vector<512x16xf32>
    %27 = arith.addf %20, %26 : vector<512x16xf32>
    %c1_35 = arith.constant 1 : index
    %c0_36 = arith.constant 0 : index
    %c0_37 = arith.constant 0 : index
    %28 = vector.load %arg7[%c1_35, %c0_36, %c0_37] : memref<36x18x3xf32, #tpu.memory_space<vmem>>, vector<16x16x3xf32>
    %c19_38 = arith.constant 19 : index
    %c0_39 = arith.constant 0 : index
    %c0_40 = arith.constant 0 : index
    %29 = vector.load %arg7[%c19_38, %c0_39, %c0_40] : memref<36x18x3xf32, #tpu.memory_space<vmem>>, vector<16x16x3xf32>
    %30 = tpu.concatenate %28, %29 in 0 : vector<16x16x3xf32>, vector<16x16x3xf32> -> vector<32x16x3xf32>
    %31 = vector.shape_cast %30 : vector<32x16x3xf32> to vector<512x3xf32>
    %c9 = arith.constant 9 : index
    %c0_41 = arith.constant 0 : index
    %32 = vector.load %arg2[%c9, %c0_41] : memref<27x16xf32, #tpu.memory_space<vmem>>, vector<3x16xf32>
    %cst_42 = arith.constant dense<0.000000e+00> : vector<512x16xf32>
    %33 = tpu.matmul %31, %32, %cst_42 {dimension_numbers = #tpu.dot_dimension_numbers<[1], [0], [0], [1], [0, 0, 1, 1], [], []>} : vector<512x3xf32>, vector<3x16xf32>, vector<512x16xf32> -> vector<512x16xf32>
    %34 = arith.addf %27, %33 : vector<512x16xf32>
    %c1_43 = arith.constant 1 : index
    %c1_44 = arith.constant 1 : index
    %c0_45 = arith.constant 0 : index
    %35 = vector.load %arg7[%c1_43, %c1_44, %c0_45] : memref<36x18x3xf32, #tpu.memory_space<vmem>>, vector<16x16x3xf32>
    %c19_46 = arith.constant 19 : index
    %c1_47 = arith.constant 1 : index
    %c0_48 = arith.constant 0 : index
    %36 = vector.load %arg7[%c19_46, %c1_47, %c0_48] : memref<36x18x3xf32, #tpu.memory_space<vmem>>, vector<16x16x3xf32>
    %37 = tpu.concatenate %35, %36 in 0 : vector<16x16x3xf32>, vector<16x16x3xf32> -> vector<32x16x3xf32>
    %38 = vector.shape_cast %37 : vector<32x16x3xf32> to vector<512x3xf32>
    %c12 = arith.constant 12 : index
    %c0_49 = arith.constant 0 : index
    %39 = vector.load %arg2[%c12, %c0_49] : memref<27x16xf32, #tpu.memory_space<vmem>>, vector<3x16xf32>
    %cst_50 = arith.constant dense<0.000000e+00> : vector<512x16xf32>
    %40 = tpu.matmul %38, %39, %cst_50 {dimension_numbers = #tpu.dot_dimension_numbers<[1], [0], [0], [1], [0, 0, 1, 1], [], []>} : vector<512x3xf32>, vector<3x16xf32>, vector<512x16xf32> -> vector<512x16xf32>
    %41 = arith.addf %34, %40 : vector<512x16xf32>
    %c1_51 = arith.constant 1 : index
    %c2_52 = arith.constant 2 : index
    %c0_53 = arith.constant 0 : index
    %42 = vector.load %arg7[%c1_51, %c2_52, %c0_53] : memref<36x18x3xf32, #tpu.memory_space<vmem>>, vector<16x16x3xf32>
    %c19_54 = arith.constant 19 : index
    %c2_55 = arith.constant 2 : index
    %c0_56 = arith.constant 0 : index
    %43 = vector.load %arg7[%c19_54, %c2_55, %c0_56] : memref<36x18x3xf32, #tpu.memory_space<vmem>>, vector<16x16x3xf32>
    %44 = tpu.concatenate %42, %43 in 0 : vector<16x16x3xf32>, vector<16x16x3xf32> -> vector<32x16x3xf32>
    %45 = vector.shape_cast %44 : vector<32x16x3xf32> to vector<512x3xf32>
    %c15 = arith.constant 15 : index
    %c0_57 = arith.constant 0 : index
    %46 = vector.load %arg2[%c15, %c0_57] : memref<27x16xf32, #tpu.memory_space<vmem>>, vector<3x16xf32>
    %cst_58 = arith.constant dense<0.000000e+00> : vector<512x16xf32>
    %47 = tpu.matmul %45, %46, %cst_58 {dimension_numbers = #tpu.dot_dimension_numbers<[1], [0], [0], [1], [0, 0, 1, 1], [], []>} : vector<512x3xf32>, vector<3x16xf32>, vector<512x16xf32> -> vector<512x16xf32>
    %48 = arith.addf %41, %47 : vector<512x16xf32>
    %c2_59 = arith.constant 2 : index
    %c0_60 = arith.constant 0 : index
    %c0_61 = arith.constant 0 : index
    %49 = vector.load %arg7[%c2_59, %c0_60, %c0_61] : memref<36x18x3xf32, #tpu.memory_space<vmem>>, vector<16x16x3xf32>
    %c20 = arith.constant 20 : index
    %c0_62 = arith.constant 0 : index
    %c0_63 = arith.constant 0 : index
    %50 = vector.load %arg7[%c20, %c0_62, %c0_63] : memref<36x18x3xf32, #tpu.memory_space<vmem>>, vector<16x16x3xf32>
    %51 = tpu.concatenate %49, %50 in 0 : vector<16x16x3xf32>, vector<16x16x3xf32> -> vector<32x16x3xf32>
    %52 = vector.shape_cast %51 : vector<32x16x3xf32> to vector<512x3xf32>
    %c18_64 = arith.constant 18 : index
    %c0_65 = arith.constant 0 : index
    %53 = vector.load %arg2[%c18_64, %c0_65] : memref<27x16xf32, #tpu.memory_space<vmem>>, vector<3x16xf32>
    %cst_66 = arith.constant dense<0.000000e+00> : vector<512x16xf32>
    %54 = tpu.matmul %52, %53, %cst_66 {dimension_numbers = #tpu.dot_dimension_numbers<[1], [0], [0], [1], [0, 0, 1, 1], [], []>} : vector<512x3xf32>, vector<3x16xf32>, vector<512x16xf32> -> vector<512x16xf32>
    %55 = arith.addf %48, %54 : vector<512x16xf32>
    %c2_67 = arith.constant 2 : index
    %c1_68 = arith.constant 1 : index
    %c0_69 = arith.constant 0 : index
    %56 = vector.load %arg7[%c2_67, %c1_68, %c0_69] : memref<36x18x3xf32, #tpu.memory_space<vmem>>, vector<16x16x3xf32>
    %c20_70 = arith.constant 20 : index
    %c1_71 = arith.constant 1 : index
    %c0_72 = arith.constant 0 : index
    %57 = vector.load %arg7[%c20_70, %c1_71, %c0_72] : memref<36x18x3xf32, #tpu.memory_space<vmem>>, vector<16x16x3xf32>
    %58 = tpu.concatenate %56, %57 in 0 : vector<16x16x3xf32>, vector<16x16x3xf32> -> vector<32x16x3xf32>
    %59 = vector.shape_cast %58 : vector<32x16x3xf32> to vector<512x3xf32>
    %c21 = arith.constant 21 : index
    %c0_73 = arith.constant 0 : index
    %60 = vector.load %arg2[%c21, %c0_73] : memref<27x16xf32, #tpu.memory_space<vmem>>, vector<3x16xf32>
    %cst_74 = arith.constant dense<0.000000e+00> : vector<512x16xf32>
    %61 = tpu.matmul %59, %60, %cst_74 {dimension_numbers = #tpu.dot_dimension_numbers<[1], [0], [0], [1], [0, 0, 1, 1], [], []>} : vector<512x3xf32>, vector<3x16xf32>, vector<512x16xf32> -> vector<512x16xf32>
    %62 = arith.addf %55, %61 : vector<512x16xf32>
    %c2_75 = arith.constant 2 : index
    %c2_76 = arith.constant 2 : index
    %c0_77 = arith.constant 0 : index
    %63 = vector.load %arg7[%c2_75, %c2_76, %c0_77] : memref<36x18x3xf32, #tpu.memory_space<vmem>>, vector<16x16x3xf32>
    %c20_78 = arith.constant 20 : index
    %c2_79 = arith.constant 2 : index
    %c0_80 = arith.constant 0 : index
    %64 = vector.load %arg7[%c20_78, %c2_79, %c0_80] : memref<36x18x3xf32, #tpu.memory_space<vmem>>, vector<16x16x3xf32>
    %65 = tpu.concatenate %63, %64 in 0 : vector<16x16x3xf32>, vector<16x16x3xf32> -> vector<32x16x3xf32>
    %66 = vector.shape_cast %65 : vector<32x16x3xf32> to vector<512x3xf32>
    %c24 = arith.constant 24 : index
    %c0_81 = arith.constant 0 : index
    %67 = vector.load %arg2[%c24, %c0_81] : memref<27x16xf32, #tpu.memory_space<vmem>>, vector<3x16xf32>
    %cst_82 = arith.constant dense<0.000000e+00> : vector<512x16xf32>
    %68 = tpu.matmul %66, %67, %cst_82 {dimension_numbers = #tpu.dot_dimension_numbers<[1], [0], [0], [1], [0, 0, 1, 1], [], []>} : vector<512x3xf32>, vector<3x16xf32>, vector<512x16xf32> -> vector<512x16xf32>
    %69 = arith.addf %62, %68 : vector<512x16xf32>
    %c0_83 = arith.constant 0 : index
    %c0_84 = arith.constant 0 : index
    %70 = vector.load %arg3[%c0_83, %c0_84] : memref<1x16xf32, #tpu.memory_space<vmem>>, vector<1x16xf32>
    %71 = vector.broadcast %70 : vector<1x16xf32> to vector<512x16xf32>
    %72 = arith.addf %69, %71 : vector<512x16xf32>
    %cst_85 = arith.constant 0.000000e+00 : f32
    %73 = vector.broadcast %cst_85 : f32 to vector<512x16xf32>
    %74 = arith.maximumf %72, %73 : vector<512x16xf32>
    %75 = vector.shape_cast %74 : vector<512x16xf32> to vector<32x16x16xf32>
    %c0_86 = arith.constant 0 : index
    %c0_87 = arith.constant 0 : index
    %c0_88 = arith.constant 0 : index
    %76 = vector.load %arg8[%c0_86, %c0_87, %c0_88] : memref<32x16x16xf32, #tpu.memory_space<vmem>>, vector<32x16x16xf32>
    tpu.vector_store %arg8[%c0_86, %c0_87, %c0_88], %75 {strides = array<i32>} : memref<32x16x16xf32, #tpu.memory_space<vmem>>, vector<32x16x16xf32>,
    %c0_89 = arith.constant 0 : index
    %c0_90 = arith.constant 0 : index
    %c0_91 = arith.constant 0 : index
    %77 = tpu.strided_load %arg8[%c0_89, %c0_90, %c0_91] {strides = array<i32: 2, 1, 1>} : memref<32x16x16xf32, #tpu.memory_space<vmem>>, vector<16x16x16xf32>
    %c1_92 = arith.constant 1 : index
    %c0_93 = arith.constant 0 : index
    %c0_94 = arith.constant 0 : index
    %78 = tpu.strided_load %arg8[%c1_92, %c0_93, %c0_94] {strides = array<i32: 2, 1, 1>} : memref<32x16x16xf32, #tpu.memory_space<vmem>>, vector<16x16x16xf32>
    %79 = arith.maximumf %77, %78 : vector<16x16x16xf32>
    %c0_95 = arith.constant 0 : index
    %c0_96 = arith.constant 0 : index
    %c0_97 = arith.constant 0 : index
    %80 = vector.load %arg9[%c0_95, %c0_96, %c0_97] : memref<16x16x16xf32, #tpu.memory_space<vmem>>, vector<16x16x16xf32>
    tpu.vector_store %arg9[%c0_95, %c0_96, %c0_97], %79 {strides = array<i32>} : memref<16x16x16xf32, #tpu.memory_space<vmem>>, vector<16x16x16xf32>,
    %c0_98 = arith.constant 0 : index
    %c0_99 = arith.constant 0 : index
    %c0_100 = arith.constant 0 : index
    %81 = tpu.strided_load %arg9[%c0_98, %c0_99, %c0_100] {strides = array<i32: 1, 2, 1>} : memref<16x16x16xf32, #tpu.memory_space<vmem>>, vector<16x8x16xf32>
    %c0_101 = arith.constant 0 : index
    %c1_102 = arith.constant 1 : index
    %c0_103 = arith.constant 0 : index
    %82 = tpu.strided_load %arg9[%c0_101, %c1_102, %c0_103] {strides = array<i32: 1, 2, 1>} : memref<16x16x16xf32, #tpu.memory_space<vmem>>, vector<16x8x16xf32>
    %83 = arith.maximumf %81, %82 : vector<16x8x16xf32>
    %cst_104 = arith.constant 0.000000e+00 : f32
    %84 = vector.broadcast %cst_104 : f32 to vector<20x10x16xf32>
    %c0_105 = arith.constant 0 : index
    %c0_106 = arith.constant 0 : index
    %c0_107 = arith.constant 0 : index
    %85 = vector.load %arg10[%c0_105, %c0_106, %c0_107] : memref<20x10x16xf32, #tpu.memory_space<vmem>>, vector<20x10x16xf32>
    tpu.vector_store %arg10[%c0_105, %c0_106, %c0_107], %84 {strides = array<i32>} : memref<20x10x16xf32, #tpu.memory_space<vmem>>, vector<20x10x16xf32>,
    %86 = vector.extract_strided_slice %83 {offsets = [0, 0, 0], sizes = [8, 8, 16], strides = [1, 1, 1]} : vector<16x8x16xf32> to vector<8x8x16xf32>
    %c1_108 = arith.constant 1 : index
    %c1_109 = arith.constant 1 : index
    %c0_110 = arith.constant 0 : index
    %87 = vector.load %arg10[%c1_108, %c1_109, %c0_110] : memref<20x10x16xf32, #tpu.memory_space<vmem>>, vector<8x8x16xf32>
    tpu.vector_store %arg10[%c1_108, %c1_109, %c0_110], %86 {strides = array<i32>} : memref<20x10x16xf32, #tpu.memory_space<vmem>>, vector<8x8x16xf32>,
    %88 = vector.extract_strided_slice %83 {offsets = [8, 0, 0], sizes = [8, 8, 16], strides = [1, 1, 1]} : vector<16x8x16xf32> to vector<8x8x16xf32>
    %c11 = arith.constant 11 : index
    %c1_111 = arith.constant 1 : index
    %c0_112 = arith.constant 0 : index
    %89 = vector.load %arg10[%c11, %c1_111, %c0_112] : memref<20x10x16xf32, #tpu.memory_space<vmem>>, vector<8x8x16xf32>
    tpu.vector_store %arg10[%c11, %c1_111, %c0_112], %88 {strides = array<i32>} : memref<20x10x16xf32, #tpu.memory_space<vmem>>, vector<8x8x16xf32>,
    %cst_113 = arith.constant 0.000000e+00 : f32
    %90 = vector.broadcast %cst_113 : f32 to vector<128x32xf32>
    %c0_114 = arith.constant 0 : index
    %c0_115 = arith.constant 0 : index
    %c0_116 = arith.constant 0 : index
    %91 = vector.load %arg10[%c0_114, %c0_115, %c0_116] : memref<20x10x16xf32, #tpu.memory_space<vmem>>, vector<8x8x16xf32>
    %c10 = arith.constant 10 : index
    %c0_117 = arith.constant 0 : index
    %c0_118 = arith.constant 0 : index
    %92 = vector.load %arg10[%c10, %c0_117, %c0_118] : memref<20x10x16xf32, #tpu.memory_space<vmem>>, vector<8x8x16xf32>
    %93 = tpu.concatenate %91, %92 in 0 : vector<8x8x16xf32>, vector<8x8x16xf32> -> vector<16x8x16xf32>
    %94 = vector.shape_cast %93 : vector<16x8x16xf32> to vector<128x16xf32>
    %c0_119 = arith.constant 0 : index
    %c0_120 = arith.constant 0 : index
    %95 = vector.load %arg4[%c0_119, %c0_120] : memref<144x32xf32, #tpu.memory_space<vmem>>, vector<16x32xf32>
    %cst_121 = arith.constant dense<0.000000e+00> : vector<128x32xf32>
    %96 = tpu.matmul %94, %95, %cst_121 {dimension_numbers = #tpu.dot_dimension_numbers<[1], [0], [0], [1], [0, 0, 1, 1], [], []>} : vector<128x16xf32>, vector<16x32xf32>, vector<128x32xf32> -> vector<128x32xf32>
    %97 = arith.addf %90, %96 : vector<128x32xf32>
    %c0_122 = arith.constant 0 : index
    %c1_123 = arith.constant 1 : index
    %c0_124 = arith.constant 0 : index
    %98 = vector.load %arg10[%c0_122, %c1_123, %c0_124] : memref<20x10x16xf32, #tpu.memory_space<vmem>>, vector<8x8x16xf32>
    %c10_125 = arith.constant 10 : index
    %c1_126 = arith.constant 1 : index
    %c0_127 = arith.constant 0 : index
    %99 = vector.load %arg10[%c10_125, %c1_126, %c0_127] : memref<20x10x16xf32, #tpu.memory_space<vmem>>, vector<8x8x16xf32>
    %100 = tpu.concatenate %98, %99 in 0 : vector<8x8x16xf32>, vector<8x8x16xf32> -> vector<16x8x16xf32>
    %101 = vector.shape_cast %100 : vector<16x8x16xf32> to vector<128x16xf32>
    %c16_128 = arith.constant 16 : index
    %c0_129 = arith.constant 0 : index
    %102 = vector.load %arg4[%c16_128, %c0_129] : memref<144x32xf32, #tpu.memory_space<vmem>>, vector<16x32xf32>
    %cst_130 = arith.constant dense<0.000000e+00> : vector<128x32xf32>
    %103 = tpu.matmul %101, %102, %cst_130 {dimension_numbers = #tpu.dot_dimension_numbers<[1], [0], [0], [1], [0, 0, 1, 1], [], []>} : vector<128x16xf32>, vector<16x32xf32>, vector<128x32xf32> -> vector<128x32xf32>
    %104 = arith.addf %97, %103 : vector<128x32xf32>
    %c0_131 = arith.constant 0 : index
    %c2_132 = arith.constant 2 : index
    %c0_133 = arith.constant 0 : index
    %105 = vector.load %arg10[%c0_131, %c2_132, %c0_133] : memref<20x10x16xf32, #tpu.memory_space<vmem>>, vector<8x8x16xf32>
    %c10_134 = arith.constant 10 : index
    %c2_135 = arith.constant 2 : index
    %c0_136 = arith.constant 0 : index
    %106 = vector.load %arg10[%c10_134, %c2_135, %c0_136] : memref<20x10x16xf32, #tpu.memory_space<vmem>>, vector<8x8x16xf32>
    %107 = tpu.concatenate %105, %106 in 0 : vector<8x8x16xf32>, vector<8x8x16xf32> -> vector<16x8x16xf32>
    %108 = vector.shape_cast %107 : vector<16x8x16xf32> to vector<128x16xf32>
    %c32 = arith.constant 32 : index
    %c0_137 = arith.constant 0 : index
    %109 = vector.load %arg4[%c32, %c0_137] : memref<144x32xf32, #tpu.memory_space<vmem>>, vector<16x32xf32>
    %cst_138 = arith.constant dense<0.000000e+00> : vector<128x32xf32>
    %110 = tpu.matmul %108, %109, %cst_138 {dimension_numbers = #tpu.dot_dimension_numbers<[1], [0], [0], [1], [0, 0, 1, 1], [], []>} : vector<128x16xf32>, vector<16x32xf32>, vector<128x32xf32> -> vector<128x32xf32>
    %111 = arith.addf %104, %110 : vector<128x32xf32>
    %c1_139 = arith.constant 1 : index
    %c0_140 = arith.constant 0 : index
    %c0_141 = arith.constant 0 : index
    %112 = vector.load %arg10[%c1_139, %c0_140, %c0_141] : memref<20x10x16xf32, #tpu.memory_space<vmem>>, vector<8x8x16xf32>
    %c11_142 = arith.constant 11 : index
    %c0_143 = arith.constant 0 : index
    %c0_144 = arith.constant 0 : index
    %113 = vector.load %arg10[%c11_142, %c0_143, %c0_144] : memref<20x10x16xf32, #tpu.memory_space<vmem>>, vector<8x8x16xf32>
    %114 = tpu.concatenate %112, %113 in 0 : vector<8x8x16xf32>, vector<8x8x16xf32> -> vector<16x8x16xf32>
    %115 = vector.shape_cast %114 : vector<16x8x16xf32> to vector<128x16xf32>
    %c48 = arith.constant 48 : index
    %c0_145 = arith.constant 0 : index
    %116 = vector.load %arg4[%c48, %c0_145] : memref<144x32xf32, #tpu.memory_space<vmem>>, vector<16x32xf32>
    %cst_146 = arith.constant dense<0.000000e+00> : vector<128x32xf32>
    %117 = tpu.matmul %115, %116, %cst_146 {dimension_numbers = #tpu.dot_dimension_numbers<[1], [0], [0], [1], [0, 0, 1, 1], [], []>} : vector<128x16xf32>, vector<16x32xf32>, vector<128x32xf32> -> vector<128x32xf32>
    %118 = arith.addf %111, %117 : vector<128x32xf32>
    %c1_147 = arith.constant 1 : index
    %c1_148 = arith.constant 1 : index
    %c0_149 = arith.constant 0 : index
    %119 = vector.load %arg10[%c1_147, %c1_148, %c0_149] : memref<20x10x16xf32, #tpu.memory_space<vmem>>, vector<8x8x16xf32>
    %c11_150 = arith.constant 11 : index
    %c1_151 = arith.constant 1 : index
    %c0_152 = arith.constant 0 : index
    %120 = vector.load %arg10[%c11_150, %c1_151, %c0_152] : memref<20x10x16xf32, #tpu.memory_space<vmem>>, vector<8x8x16xf32>
    %121 = tpu.concatenate %119, %120 in 0 : vector<8x8x16xf32>, vector<8x8x16xf32> -> vector<16x8x16xf32>
    %122 = vector.shape_cast %121 : vector<16x8x16xf32> to vector<128x16xf32>
    %c64 = arith.constant 64 : index
    %c0_153 = arith.constant 0 : index
    %123 = vector.load %arg4[%c64, %c0_153] : memref<144x32xf32, #tpu.memory_space<vmem>>, vector<16x32xf32>
    %cst_154 = arith.constant dense<0.000000e+00> : vector<128x32xf32>
    %124 = tpu.matmul %122, %123, %cst_154 {dimension_numbers = #tpu.dot_dimension_numbers<[1], [0], [0], [1], [0, 0, 1, 1], [], []>} : vector<128x16xf32>, vector<16x32xf32>, vector<128x32xf32> -> vector<128x32xf32>
    %125 = arith.addf %118, %124 : vector<128x32xf32>
    %c1_155 = arith.constant 1 : index
    %c2_156 = arith.constant 2 : index
    %c0_157 = arith.constant 0 : index
    %126 = vector.load %arg10[%c1_155, %c2_156, %c0_157] : memref<20x10x16xf32, #tpu.memory_space<vmem>>, vector<8x8x16xf32>
    %c11_158 = arith.constant 11 : index
    %c2_159 = arith.constant 2 : index
    %c0_160 = arith.constant 0 : index
    %127 = vector.load %arg10[%c11_158, %c2_159, %c0_160] : memref<20x10x16xf32, #tpu.memory_space<vmem>>, vector<8x8x16xf32>
    %128 = tpu.concatenate %126, %127 in 0 : vector<8x8x16xf32>, vector<8x8x16xf32> -> vector<16x8x16xf32>
    %129 = vector.shape_cast %128 : vector<16x8x16xf32> to vector<128x16xf32>
    %c80 = arith.constant 80 : index
    %c0_161 = arith.constant 0 : index
    %130 = vector.load %arg4[%c80, %c0_161] : memref<144x32xf32, #tpu.memory_space<vmem>>, vector<16x32xf32>
    %cst_162 = arith.constant dense<0.000000e+00> : vector<128x32xf32>
    %131 = tpu.matmul %129, %130, %cst_162 {dimension_numbers = #tpu.dot_dimension_numbers<[1], [0], [0], [1], [0, 0, 1, 1], [], []>} : vector<128x16xf32>, vector<16x32xf32>, vector<128x32xf32> -> vector<128x32xf32>
    %132 = arith.addf %125, %131 : vector<128x32xf32>
    %c2_163 = arith.constant 2 : index
    %c0_164 = arith.constant 0 : index
    %c0_165 = arith.constant 0 : index
    %133 = vector.load %arg10[%c2_163, %c0_164, %c0_165] : memref<20x10x16xf32, #tpu.memory_space<vmem>>, vector<8x8x16xf32>
    %c12_166 = arith.constant 12 : index
    %c0_167 = arith.constant 0 : index
    %c0_168 = arith.constant 0 : index
    %134 = vector.load %arg10[%c12_166, %c0_167, %c0_168] : memref<20x10x16xf32, #tpu.memory_space<vmem>>, vector<8x8x16xf32>
    %135 = tpu.concatenate %133, %134 in 0 : vector<8x8x16xf32>, vector<8x8x16xf32> -> vector<16x8x16xf32>
    %136 = vector.shape_cast %135 : vector<16x8x16xf32> to vector<128x16xf32>
    %c96 = arith.constant 96 : index
    %c0_169 = arith.constant 0 : index
    %137 = vector.load %arg4[%c96, %c0_169] : memref<144x32xf32, #tpu.memory_space<vmem>>, vector<16x32xf32>
    %cst_170 = arith.constant dense<0.000000e+00> : vector<128x32xf32>
    %138 = tpu.matmul %136, %137, %cst_170 {dimension_numbers = #tpu.dot_dimension_numbers<[1], [0], [0], [1], [0, 0, 1, 1], [], []>} : vector<128x16xf32>, vector<16x32xf32>, vector<128x32xf32> -> vector<128x32xf32>
    %139 = arith.addf %132, %138 : vector<128x32xf32>
    %c2_171 = arith.constant 2 : index
    %c1_172 = arith.constant 1 : index
    %c0_173 = arith.constant 0 : index
    %140 = vector.load %arg10[%c2_171, %c1_172, %c0_173] : memref<20x10x16xf32, #tpu.memory_space<vmem>>, vector<8x8x16xf32>
    %c12_174 = arith.constant 12 : index
    %c1_175 = arith.constant 1 : index
    %c0_176 = arith.constant 0 : index
    %141 = vector.load %arg10[%c12_174, %c1_175, %c0_176] : memref<20x10x16xf32, #tpu.memory_space<vmem>>, vector<8x8x16xf32>
    %142 = tpu.concatenate %140, %141 in 0 : vector<8x8x16xf32>, vector<8x8x16xf32> -> vector<16x8x16xf32>
    %143 = vector.shape_cast %142 : vector<16x8x16xf32> to vector<128x16xf32>
    %c112 = arith.constant 112 : index
    %c0_177 = arith.constant 0 : index
    %144 = vector.load %arg4[%c112, %c0_177] : memref<144x32xf32, #tpu.memory_space<vmem>>, vector<16x32xf32>
    %cst_178 = arith.constant dense<0.000000e+00> : vector<128x32xf32>
    %145 = tpu.matmul %143, %144, %cst_178 {dimension_numbers = #tpu.dot_dimension_numbers<[1], [0], [0], [1], [0, 0, 1, 1], [], []>} : vector<128x16xf32>, vector<16x32xf32>, vector<128x32xf32> -> vector<128x32xf32>
    %146 = arith.addf %139, %145 : vector<128x32xf32>
    %c2_179 = arith.constant 2 : index
    %c2_180 = arith.constant 2 : index
    %c0_181 = arith.constant 0 : index
    %147 = vector.load %arg10[%c2_179, %c2_180, %c0_181] : memref<20x10x16xf32, #tpu.memory_space<vmem>>, vector<8x8x16xf32>
    %c12_182 = arith.constant 12 : index
    %c2_183 = arith.constant 2 : index
    %c0_184 = arith.constant 0 : index
    %148 = vector.load %arg10[%c12_182, %c2_183, %c0_184] : memref<20x10x16xf32, #tpu.memory_space<vmem>>, vector<8x8x16xf32>
    %149 = tpu.concatenate %147, %148 in 0 : vector<8x8x16xf32>, vector<8x8x16xf32> -> vector<16x8x16xf32>
    %150 = vector.shape_cast %149 : vector<16x8x16xf32> to vector<128x16xf32>
    %c128 = arith.constant 128 : index
    %c0_185 = arith.constant 0 : index
    %151 = vector.load %arg4[%c128, %c0_185] : memref<144x32xf32, #tpu.memory_space<vmem>>, vector<16x32xf32>
    %cst_186 = arith.constant dense<0.000000e+00> : vector<128x32xf32>
    %152 = tpu.matmul %150, %151, %cst_186 {dimension_numbers = #tpu.dot_dimension_numbers<[1], [0], [0], [1], [0, 0, 1, 1], [], []>} : vector<128x16xf32>, vector<16x32xf32>, vector<128x32xf32> -> vector<128x32xf32>
    %153 = arith.addf %146, %152 : vector<128x32xf32>
    %c0_187 = arith.constant 0 : index
    %c0_188 = arith.constant 0 : index
    %154 = vector.load %arg5[%c0_187, %c0_188] : memref<1x32xf32, #tpu.memory_space<vmem>>, vector<1x32xf32>
    %155 = vector.broadcast %154 : vector<1x32xf32> to vector<128x32xf32>
    %156 = arith.addf %153, %155 : vector<128x32xf32>
    %cst_189 = arith.constant 0.000000e+00 : f32
    %157 = vector.broadcast %cst_189 : f32 to vector<128x32xf32>
    %158 = arith.maximumf %156, %157 : vector<128x32xf32>
    %159 = vector.shape_cast %158 : vector<128x32xf32> to vector<16x8x32xf32>
    %c0_190 = arith.constant 0 : index
    %c0_191 = arith.constant 0 : index
    %c0_192 = arith.constant 0 : index
    %160 = vector.load %arg11[%c0_190, %c0_191, %c0_192] : memref<16x8x32xf32, #tpu.memory_space<vmem>>, vector<16x8x32xf32>
    tpu.vector_store %arg11[%c0_190, %c0_191, %c0_192], %159 {strides = array<i32>} : memref<16x8x32xf32, #tpu.memory_space<vmem>>, vector<16x8x32xf32>,
    %c0_193 = arith.constant 0 : index
    %c0_194 = arith.constant 0 : index
    %c0_195 = arith.constant 0 : index
    %161 = tpu.strided_load %arg11[%c0_193, %c0_194, %c0_195] {strides = array<i32: 2, 1, 1>} : memref<16x8x32xf32, #tpu.memory_space<vmem>>, vector<8x8x32xf32>
    %c1_196 = arith.constant 1 : index
    %c0_197 = arith.constant 0 : index
    %c0_198 = arith.constant 0 : index
    %162 = tpu.strided_load %arg11[%c1_196, %c0_197, %c0_198] {strides = array<i32: 2, 1, 1>} : memref<16x8x32xf32, #tpu.memory_space<vmem>>, vector<8x8x32xf32>
    %163 = arith.maximumf %161, %162 : vector<8x8x32xf32>
    %c0_199 = arith.constant 0 : index
    %c0_200 = arith.constant 0 : index
    %c0_201 = arith.constant 0 : index
    %164 = vector.load %arg12[%c0_199, %c0_200, %c0_201] : memref<8x8x32xf32, #tpu.memory_space<vmem>>, vector<8x8x32xf32>
    tpu.vector_store %arg12[%c0_199, %c0_200, %c0_201], %163 {strides = array<i32>} : memref<8x8x32xf32, #tpu.memory_space<vmem>>, vector<8x8x32xf32>,
    %c0_202 = arith.constant 0 : index
    %c0_203 = arith.constant 0 : index
    %c0_204 = arith.constant 0 : index
    %165 = tpu.strided_load %arg12[%c0_202, %c0_203, %c0_204] {strides = array<i32: 1, 2, 1>} : memref<8x8x32xf32, #tpu.memory_space<vmem>>, vector<8x4x32xf32>
    %c0_205 = arith.constant 0 : index
    %c1_206 = arith.constant 1 : index
    %c0_207 = arith.constant 0 : index
    %166 = tpu.strided_load %arg12[%c0_205, %c1_206, %c0_207] {strides = array<i32: 1, 2, 1>} : memref<8x8x32xf32, #tpu.memory_space<vmem>>, vector<8x4x32xf32>
    %167 = arith.maximumf %165, %166 : vector<8x4x32xf32>
    %c0_208 = arith.constant 0 : index
    %c0_209 = arith.constant 0 : index
    %c0_210 = arith.constant 0 : index
    %168 = vector.load %arg6[%c0_208, %c0_209, %c0_210] : memref<8x4x32xf32, #tpu.memory_space<vmem>>, vector<8x4x32xf32>
    tpu.vector_store %arg6[%c0_208, %c0_209, %c0_210], %167 {strides = array<i32>} : memref<8x4x32xf32, #tpu.memory_space<vmem>>, vector<8x4x32xf32>,
    return
  }
  func.func @transform_0(%arg0: i32) -> (i32, i32, i32) {
    %c0_i32 = arith.constant 0 : i32
    %c0_i32_0 = arith.constant 0 : i32
    %c0_i32_1 = arith.constant 0 : i32
    %c0_i32_2 = arith.constant 0 : i32
    return %c0_i32, %c0_i32_0, %c0_i32_1 : i32, i32, i32
  }
  func.func @transform_1(%arg0: i32) -> (i32, i32) {
    %c0_i32 = arith.constant 0 : i32
    %c0_i32_0 = arith.constant 0 : i32
    %c0_i32_1 = arith.constant 0 : i32
    return %c0_i32, %c0_i32_0 : i32, i32
  }
  func.func @transform_2(%arg0: i32) -> (i32, i32) {
    %c0_i32 = arith.constant 0 : i32
    %c0_i32_0 = arith.constant 0 : i32
    %c0_i32_1 = arith.constant 0 : i32
    return %c0_i32, %c0_i32_0 : i32, i32
  }
  func.func @transform_3(%arg0: i32) -> (i32, i32) {
    %c0_i32 = arith.constant 0 : i32
    %c0_i32_0 = arith.constant 0 : i32
    %c0_i32_1 = arith.constant 0 : i32
    return %c0_i32, %c0_i32_0 : i32, i32
  }
  func.func @transform_4(%arg0: i32) -> (i32, i32) {
    %c0_i32 = arith.constant 0 : i32
    %c0_i32_0 = arith.constant 0 : i32
    %c0_i32_1 = arith.constant 0 : i32
    return %c0_i32, %c0_i32_0 : i32, i32
  }
  func.func @transform_5(%arg0: i32) -> (i32, i32, i32) {
    %c0_i32 = arith.constant 0 : i32
    %c0_i32_0 = arith.constant 0 : i32
    %c0_i32_1 = arith.constant 0 : i32
    %c0_i32_2 = arith.constant 0 : i32
    return %c0_i32, %c0_i32_0, %c0_i32_1 : i32, i32, i32
  }
}

</mosaic_0001>

<llo_original>
// kernel: conv_vgg_forward.3
$region0: #{conv_vgg_forward.3}
  #allocation0 [shape = 'u32[]', space=smem, size = 0x4, offset = 0x4, fixed_abs, tag = 'smem constant byte address 0x4 - core index']
  #allocation1 [shape = 'u32[144,128]{1,0:T(1,128)}', space=vmem, size = 0x12000, scoped, tag = 'internal scratch']
  #allocation2 [shape = 'f32[1,1]{1,0:T(1,128)S(1)}', space=vmem, size = 0x200, scoped, tag = 'scoped memory for conv_vgg_forward.3']
  %s0 = inlined_call_operand.vmem [shape: f32[2,512], index: 0, kind: input, shape index: {}]
  %s1 = inlined_call_operand.vmem [shape: f32[512,128], index: 1, kind: input, shape index: {}]
  %s2 = inlined_call_operand.vmem [shape: f32[1,128], index: 2, kind: input, shape index: {}]
  %s3 = inlined_call_operand.vmem [shape: f32[128,128], index: 3, kind: input, shape index: {}]
  %s4 = inlined_call_operand.vmem [shape: f32[1,128], index: 4, kind: input, shape index: {}]
  %s5 = inlined_call_operand.vmem [shape: f32[128,64], index: 5, kind: input, shape index: {}]
  %s6 = inlined_call_operand.vmem [shape: f32[1,64], index: 6, kind: input, shape index: {}]
  %s7 = inlined_call_operand.vmem [shape: f32[64,64], index: 7, kind: input, shape index: {}]
  %s8 = inlined_call_operand.vmem [shape: f32[1,64], index: 8, kind: input, shape index: {}]
  %s9 = inlined_call_operand.vmem [shape: f32[1,64], index: 9, kind: input, shape index: {}]
  %s10 = inlined_call_operand.<no memory space> [shape: f32[1,1], index: 10, kind: input, shape index: {}]
  %s11 = inlined_call_operand.hbm [shape: f32[1,64], index: 11, kind: output, shape index: {0}]
  %s12 = inlined_call_operand.hbm [shape: f32[1,1], index: 12, kind: output, shape index: {1}]
  %13 = xla_tuple %s11, %s12
  %s14 = sld [smem:[#allocation0]]
  $region62: #{conv_vgg_forward.3} parent=0
    _
  %s16 = ssub.s32 1, %s14
  %s17 = scalar_select 0, %s16, %s14
  %v18 = vstv %s10
  %19 = vst [vmem:[#allocation2] sm:$0x1] %v18
  $region1: #{conv_vgg_forward.3} parent=0
    #allocation3 [shape = 'u8[512]{0}', space=vmem, size = 0x400, scoped, tag = 'output window, operand 0, single buffered']
    #allocation4 [shape = 's32[1]{0}', space=sflag, size = 0x4, scoped, tag = 'scoped memory for conv_vgg_forward.3']
    #allocation5 [shape = 'u8[512]{0}', space=vmem, size = 0x400, scoped, tag = 'output window, operand 1, single buffered']
    #allocation6 [shape = 's32[1]{0}', space=sflag, size = 0x4, scoped, tag = 'scoped memory for conv_vgg_forward.3']
    %20 = vsyncpa [#allocation4], 0
    %21 = vsyncpa [#allocation6], 0
    // Predicated region
    $region2: #{conv_vgg_forward.3} parent=1 // pred_check
      _
    $region3: #{conv_vgg_forward.3} parent=1 // pred_check_branch
      %23 = sbr.rel (0) target = $region5
    $region4: #{conv_vgg_forward.3} parent=1 // pred_region
      _
    $region5: #{conv_vgg_forward.3} parent=1 // pred_fallthru
      _
    // Predicated region
    $region6: #{conv_vgg_forward.3} parent=1 // pred_check
      _
    $region7: #{conv_vgg_forward.3} parent=1 // pred_check_branch
      %25 = sbr.rel (0) target = $region9
    $region8: #{conv_vgg_forward.3} parent=1 // pred_region
      _
    $region9: #{conv_vgg_forward.3} parent=1 // pred_fallthru
      _
    // Predicated region
    $region10: #{conv_vgg_forward.3} parent=1 // pred_check
      _
    $region11: #{conv_vgg_forward.3} parent=1 // pred_check_branch
      %27 = sbr.rel (0) target = $region13
    $region12: #{conv_vgg_forward.3} parent=1 // pred_region
      _
    $region13: #{conv_vgg_forward.3} parent=1 // pred_fallthru
      _
    // Predicated region
    $region14: #{conv_vgg_forward.3} parent=1 // pred_check
      _
    $region15: #{conv_vgg_forward.3} parent=1 // pred_check_branch
      %29 = sbr.rel (0) target = $region17
    $region16: #{conv_vgg_forward.3} parent=1 // pred_region
      _
    $region17: #{conv_vgg_forward.3} parent=1 // pred_fallthru
      _
    // Predicated region
    $region18: #{conv_vgg_forward.3} parent=1 // pred_check
      _
    $region19: #{conv_vgg_forward.3} parent=1 // pred_check_branch
      %31 = sbr.rel (0) target = $region21
    $region20: #{conv_vgg_forward.3} parent=1 // pred_region
      _
    $region21: #{conv_vgg_forward.3} parent=1 // pred_fallthru
      _
    // Predicated region
    $region22: #{conv_vgg_forward.3} parent=1 // pred_check
      _
    $region23: #{conv_vgg_forward.3} parent=1 // pred_check_branch
      %33 = sbr.rel (0) target = $region25
    $region24: #{conv_vgg_forward.3} parent=1 // pred_region
      _
    $region25: #{conv_vgg_forward.3} parent=1 // pred_fallthru
      _
    // Predicated region
    $region26: #{conv_vgg_forward.3} parent=1 // pred_check
      _
    $region27: #{conv_vgg_forward.3} parent=1 // pred_check_branch
      %35 = sbr.rel (0) target = $region29
    $region28: #{conv_vgg_forward.3} parent=1 // pred_region
      _
    $region29: #{conv_vgg_forward.3} parent=1 // pred_fallthru
      _
    // Predicated region
    $region30: #{conv_vgg_forward.3} parent=1 // pred_check
      _
    $region31: #{conv_vgg_forward.3} parent=1 // pred_check_branch
      %37 = sbr.rel (0) target = $region33
    $region32: #{conv_vgg_forward.3} parent=1 // pred_region
      _
    $region33: #{conv_vgg_forward.3} parent=1 // pred_fallthru
      _
    // Predicated region
    $region34: #{conv_vgg_forward.3} parent=1 // pred_check
      _
    $region35: #{conv_vgg_forward.3} parent=1 // pred_check_branch
      %39 = sbr.rel (0) target = $region37
    $region36: #{conv_vgg_forward.3} parent=1 // pred_region
      _
    $region37: #{conv_vgg_forward.3} parent=1 // pred_fallthru
      _
    // Predicated region
    $region38: #{conv_vgg_forward.3} parent=1 // pred_check
      _
    $region39: #{conv_vgg_forward.3} parent=1 // pred_check_branch
      %41 = sbr.rel (0) target = $region41
    $region40: #{conv_vgg_forward.3} parent=1 // pred_region
      _
    $region41: #{conv_vgg_forward.3} parent=1 // pred_fallthru
      _
    // Predicated region
    $region42: #{conv_vgg_forward.3} parent=1 // pred_check
      _
    $region43: #{conv_vgg_forward.3} parent=1 // pred_check_branch
      %43 = sbr.rel (0) target = $region45
    $region44: #{conv_vgg_forward.3} parent=1 // pred_region
      _
    $region45: #{conv_vgg_forward.3} parent=1 // pred_fallthru
      _
    %v44 = vld [vmem:[%s0] sm:$0xff]
    %v45 = vld [vmem:[%s1] sm:$0xff]
    %v46 = vld [vmem:[%s1 + $0x8] sm:$0xff]
    %v47 = vld [vmem:[%s1 + $0x10] sm:$0xff]
    %v48 = vld [vmem:[%s1 + $0x18] sm:$0xff]
    %v49 = vld [vmem:[%s1 + $0x20] sm:$0xff]
    %v50 = vld [vmem:[%s1 + $0x28] sm:$0xff]
    %v51 = vld [vmem:[%s1 + $0x30] sm:$0xff]
    %v52 = vld [vmem:[%s1 + $0x38] sm:$0xff]
    %v53 = vld [vmem:[%s1 + $0x40] sm:$0xff]
    %v54 = vld [vmem:[%s1 + $0x48] sm:$0xff]
    %v55 = vld [vmem:[%s1 + $0x50] sm:$0xff]
    %v56 = vld [vmem:[%s1 + $0x58] sm:$0xff]
    %v57 = vld [vmem:[%s1 + $0x60] sm:$0xff]
    %v58 = vld [vmem:[%s1 + $0x68] sm:$0xff]
    %v59 = vld [vmem:[%s1 + $0x70] sm:$0xff]
    %v60 = vld [vmem:[%s1 + $0x78] sm:$0xff]
    %v61 = vld [vmem:[%s1 + $0x80] sm:$0xff]
    %v62 = vld [vmem:[%s1 + $0x88] sm:$0xff]
    %v63 = vld [vmem:[%s1 + $0x90] sm:$0xff]
    %v64 = vld [vmem:[%s1 + $0x98] sm:$0xff]
    %v65 = vld [vmem:[%s1 + $0xa0] sm:$0xff]
    %v66 = vld [vmem:[%s1 + $0xa8] sm:$0xff]
    %v67 = vld [vmem:[%s1 + $0xb0] sm:$0xff]
    %v68 = vld [vmem:[%s1 + $0xb8] sm:$0xff]
    %v69 = vld [vmem:[%s1 + $0xc0] sm:$0xff]
    %v70 = vld [vmem:[%s1 + $0xc8] sm:$0xff]
    %v71 = vld [vmem:[%s1 + $0xd0] sm:$0xff]
    %v72 = vld [vmem:[%s1 + $0xd8] sm:$0xff]
    %v73 = vld [vmem:[%s1 + $0xe0] sm:$0xff]
    %v74 = vld [vmem:[%s1 + $0xe8] sm:$0xff]
    %v75 = vld [vmem:[%s1 + $0xf0] sm:$0xff]
    %v76 = vld [vmem:[%s1 + $0xf8] sm:$0xff]
    %v77 = vld [vmem:[%s1 + $0x100] sm:$0xff]
    %v78 = vld [vmem:[%s1 + $0x108] sm:$0xff]
    %v79 = vld [vmem:[%s1 + $0x110] sm:$0xff]
    %v80 = vld [vmem:[%s1 + $0x118] sm:$0xff]
    %v81 = vld [vmem:[%s1 + $0x120] sm:$0xff]
    %v82 = vld [vmem:[%s1 + $0x128] sm:$0xff]
    %v83 = vld [vmem:[%s1 + $0x130] sm:$0xff]
    %v84 = vld [vmem:[%s1 + $0x138] sm:$0xff]
    %v85 = vld [vmem:[%s1 + $0x140] sm:$0xff]
    %v86 = vld [vmem:[%s1 + $0x148] sm:$0xff]
    %v87 = vld [vmem:[%s1 + $0x150] sm:$0xff]
    %v88 = vld [vmem:[%s1 + $0x158] sm:$0xff]
    %v89 = vld [vmem:[%s1 + $0x160] sm:$0xff]
    %v90 = vld [vmem:[%s1 + $0x168] sm:$0xff]
    %v91 = vld [vmem:[%s1 + $0x170] sm:$0xff]
    %v92 = vld [vmem:[%s1 + $0x178] sm:$0xff]
    %v93 = vld [vmem:[%s1 + $0x180] sm:$0xff]
    %v94 = vld [vmem:[%s1 + $0x188] sm:$0xff]
    %v95 = vld [vmem:[%s1 + $0x190] sm:$0xff]
    %v96 = vld [vmem:[%s1 + $0x198] sm:$0xff]
    %v97 = vld [vmem:[%s1 + $0x1a0] sm:$0xff]
    %v98 = vld [vmem:[%s1 + $0x1a8] sm:$0xff]
    %v99 = vld [vmem:[%s1 + $0x1b0] sm:$0xff]
    %v100 = vld [vmem:[%s1 + $0x1b8] sm:$0xff]
    %v101 = vld [vmem:[%s1 + $0x1c0] sm:$0xff]
    %v102 = vld [vmem:[%s1 + $0x1c8] sm:$0xff]
    %v103 = vld [vmem:[%s1 + $0x1d0] sm:$0xff]
    %v104 = vld [vmem:[%s1 + $0x1d8] sm:$0xff]
    %v105 = vld [vmem:[%s1 + $0x1e0] sm:$0xff]
    %v106 = vld [vmem:[%s1 + $0x1e8] sm:$0xff]
    %v107 = vld [vmem:[%s1 + $0x1f0] sm:$0xff]
    %v108 = vld [vmem:[%s1 + $0x1f8] sm:$0xff]
    %v109 = vld [vmem:[%s2] sm:$0x1]
    %v111 = vlaneseq
    %v112 = vshrl.u32 %v111, 7
    %v113 = vsub.s32 0, %v112
    %v114 = vrot.slane %v109, %v113
    %v117 = vcombine.high %v44, %v44
    %v119 = vunpack.c.l.s4 1983009808
    %v120 = vunpack.c.0.s8 %v119
    %v121 = vlaneseq
    %v122 = vshrl.u32 %v121, 7
    %v123 = vsub.s32 %v120, %v122
    %v124 = vrot.slane %v44, %v123
    %v126 = vunpack.c.l.s4 1983009808
    %v127 = vunpack.c.0.s8 %v126
    %v128 = vlaneseq
    %v129 = vshrl.u32 %v128, 7
    %v130 = vsub.s32 %v127, %v129
    %v131 = vrot.slane %v117, %v130
    %v132 = vcombine.high %v124, %v124
    %v133 = vcombine.high %v131, %v131
    %138 = vmatprep.subr.mxu0 0.0
    %139 = vmatpush1.msra.mxu0 %v45
    %140 = vmatprep.subr.mxu0 0.0
    %141 = vmatpush1.msra.mxu0 %v46
    %142 = vmatprep.subr.mxu0 0.0
    %143 = vmatpush1.msra.mxu0 %v47
    %144 = vmatprep.subr.mxu0 0.0
    %145 = vmatpush1.msra.mxu0 %v48
    %146 = vmatprep.subr.mxu0 0.0
    %147 = vmatpush1.msra.mxu0 %v49
    %148 = vmatprep.subr.mxu0 0.0
    %149 = vmatpush1.msra.mxu0 %v50
    %150 = vmatprep.subr.mxu0 0.0
    %151 = vmatpush1.msra.mxu0 %v51
    %152 = vmatprep.subr.mxu0 0.0
    %153 = vmatpush1.msra.mxu0 %v52
    %154 = vmatprep.subr.mxu0 0.0
    %155 = vmatpush1.msra.mxu0 %v53
    %156 = vmatprep.subr.mxu0 0.0
    %157 = vmatpush1.msra.mxu0 %v54
    %158 = vmatprep.subr.mxu0 0.0
    %159 = vmatpush1.msra.mxu0 %v55
    %160 = vmatprep.subr.mxu0 0.0
    %161 = vmatpush1.msra.mxu0 %v56
    %162 = vmatprep.subr.mxu0 0.0
    %163 = vmatpush1.msra.mxu0 %v57
    %164 = vmatprep.subr.mxu0 0.0
    %165 = vmatpush1.msra.mxu0 %v58
    %166 = vmatprep.subr.mxu0 0.0
    %167 = vmatpush1.msra.mxu0 %v59
    %168 = vmatprep.subr.mxu0 0.0
    %169 = vmatpush1.msra.mxu0 %v60
    %170 = vmatprep.subr.mxu0 0.0
    %171 = vmatpush1.msra.mxu0 %v61
    %172 = vmatprep.subr.mxu0 0.0
    %173 = vmatpush1.msra.mxu0 %v62
    %174 = vmatprep.subr.mxu0 0.0
    %175 = vmatpush1.msra.mxu0 %v63
    %176 = vmatprep.subr.mxu0 0.0
    %177 = vmatpush1.msra.mxu0 %v64
    %178 = vmatprep.subr.mxu0 0.0
    %179 = vmatpush1.msra.mxu0 %v65
    %180 = vmatprep.subr.mxu0 0.0
    %181 = vmatpush1.msra.mxu0 %v66
    %182 = vmatprep.subr.mxu0 0.0
    %183 = vmatpush1.msra.mxu0 %v67
    %184 = vmatprep.subr.mxu0 0.0
    %185 = vmatpush1.msra.mxu0 %v68
    %186 = vmatprep.subr.mxu0 0.0
    %187 = vmatpush1.msra.mxu0 %v69
    %188 = vmatprep.subr.mxu0 0.0
    %189 = vmatpush1.msra.mxu0 %v70
    %190 = vmatprep.subr.mxu0 0.0
    %191 = vmatpush1.msra.mxu0 %v71
    %192 = vmatprep.subr.mxu0 0.0
    %193 = vmatpush1.msra.mxu0 %v72
    %194 = vmatprep.subr.mxu0 0.0
    %195 = vmatpush1.msra.mxu0 %v73
    %196 = vmatprep.subr.mxu0 0.0
    %197 = vmatpush1.msra.mxu0 %v74
    %198 = vmatprep.subr.mxu0 0.0
    %199 = vmatpush1.msra.mxu0 %v75
    %200 = vmatprep.subr.mxu0 0.0
    %201 = vmatpush1.msra.mxu0 %v76
    %202 = vmatprep.mubr.f32.mxu0 %v132
    %203 = vmatmul.mubr.f32.gmra.mrb[0].mxu0 %v124
    %v204 = vpop.f32.mrb[0].mxu0
    %v205 = vadd.f32 %v114, %v204
    %v206 = vpop.f32.mrb[0].mxu0
    %207 = vdwg.mxu0
    %208 = vmatprep.subr.mxu0 0.0
    %209 = vmatpush1.msra.mxu0 %v77
    %210 = vmatprep.subr.mxu0 0.0
    %211 = vmatpush1.msra.mxu0 %v78
    %212 = vmatprep.subr.mxu0 0.0
    %213 = vmatpush1.msra.mxu0 %v79
    %214 = vmatprep.subr.mxu0 0.0
    %215 = vmatpush1.msra.mxu0 %v80
    %216 = vmatprep.subr.mxu0 0.0
    %217 = vmatpush1.msra.mxu0 %v81
    %218 = vmatprep.subr.mxu0 0.0
    %219 = vmatpush1.msra.mxu0 %v82
    %220 = vmatprep.subr.mxu0 0.0
    %221 = vmatpush1.msra.mxu0 %v83
    %222 = vmatprep.subr.mxu0 0.0
    %223 = vmatpush1.msra.mxu0 %v84
    %224 = vmatprep.subr.mxu0 0.0
    %225 = vmatpush1.msra.mxu0 %v85
    %226 = vmatprep.subr.mxu0 0.0
    %227 = vmatpush1.msra.mxu0 %v86
    %228 = vmatprep.subr.mxu0 0.0
    %229 = vmatpush1.msra.mxu0 %v87
    %230 = vmatprep.subr.mxu0 0.0
    %231 = vmatpush1.msra.mxu0 %v88
    %232 = vmatprep.subr.mxu0 0.0
    %233 = vmatpush1.msra.mxu0 %v89
    %234 = vmatprep.subr.mxu0 0.0
    %235 = vmatpush1.msra.mxu0 %v90
    %236 = vmatprep.subr.mxu0 0.0
    %237 = vmatpush1.msra.mxu0 %v91
    %238 = vmatprep.subr.mxu0 0.0
    %239 = vmatpush1.msra.mxu0 %v92
    %240 = vmatprep.subr.mxu0 0.0
    %241 = vmatpush1.msra.mxu0 %v93
    %242 = vmatprep.subr.mxu0 0.0
    %243 = vmatpush1.msra.mxu0 %v94
    %244 = vmatprep.subr.mxu0 0.0
    %245 = vmatpush1.msra.mxu0 %v95
    %246 = vmatprep.subr.mxu0 0.0
    %247 = vmatpush1.msra.mxu0 %v96
    %248 = vmatprep.subr.mxu0 0.0
    %249 = vmatpush1.msra.mxu0 %v97
    %250 = vmatprep.subr.mxu0 0.0
    %251 = vmatpush1.msra.mxu0 %v98
    %252 = vmatprep.subr.mxu0 0.0
    %253 = vmatpush1.msra.mxu0 %v99
    %254 = vmatprep.subr.mxu0 0.0
    %255 = vmatpush1.msra.mxu0 %v100
    %256 = vmatprep.subr.mxu0 0.0
    %257 = vmatpush1.msra.mxu0 %v101
    %258 = vmatprep.subr.mxu0 0.0
    %259 = vmatpush1.msra.mxu0 %v102
    %260 = vmatprep.subr.mxu0 0.0
    %261 = vmatpush1.msra.mxu0 %v103
    %262 = vmatprep.subr.mxu0 0.0
    %263 = vmatpush1.msra.mxu0 %v104
    %264 = vmatprep.subr.mxu0 0.0
    %265 = vmatpush1.msra.mxu0 %v105
    %266 = vmatprep.subr.mxu0 0.0
    %267 = vmatpush1.msra.mxu0 %v106
    %268 = vmatprep.subr.mxu0 0.0
    %269 = vmatpush1.msra.mxu0 %v107
    %270 = vmatprep.subr.mxu0 0.0
    %271 = vmatpush1.msra.mxu0 %v108
    %272 = vmatprep.mubr.f32.mxu0 %v133
    %273 = vmatmul.mubr.f32.gmra.mrb[0].mxu0 %v131
    %v274 = vpop.f32.mrb[0].mxu0
    %v275 = vadd.f32 %v205, %v274
    %v276 = vpop.f32.mrb[0].mxu0
    %277 = vdwg.mxu0
    %v278 = vmax.f32 %v275, 0.0
    %v279 = vld [vmem:[%s3] sm:$0xff]
    %v280 = vld [vmem:[%s3 + $0x8] sm:$0xff]
    %v281 = vld [vmem:[%s3 + $0x10] sm:$0xff]
    %v282 = vld [vmem:[%s3 + $0x18] sm:$0xff]
    %v283 = vld [vmem:[%s3 + $0x20] sm:$0xff]
    %v284 = vld [vmem:[%s3 + $0x28] sm:$0xff]
    %v285 = vld [vmem:[%s3 + $0x30] sm:$0xff]
    %v286 = vld [vmem:[%s3 + $0x38] sm:$0xff]
    %v287 = vld [vmem:[%s3 + $0x40] sm:$0xff]
    %v288 = vld [vmem:[%s3 + $0x48] sm:$0xff]
    %v289 = vld [vmem:[%s3 + $0x50] sm:$0xff]
    %v290 = vld [vmem:[%s3 + $0x58] sm:$0xff]
    %v291 = vld [vmem:[%s3 + $0x60] sm:$0xff]
    %v292 = vld [vmem:[%s3 + $0x68] sm:$0xff]
    %v293 = vld [vmem:[%s3 + $0x70] sm:$0xff]
    %v294 = vld [vmem:[%s3 + $0x78] sm:$0xff]
    %v295 = vld [vmem:[%s4] sm:$0x1]
    %v297 = vlaneseq
    %v298 = vshrl.u32 %v297, 7
    %v299 = vsub.s32 0, %v298
    %v300 = vrot.slane %v295, %v299
    %302 = vmatprep.subr.mxu0 0.0
    %303 = vmatpush1.msra.mxu0 %v279
    %304 = vmatprep.subr.mxu0 0.0
    %305 = vmatpush1.msra.mxu0 %v280
    %306 = vmatprep.subr.mxu0 0.0
    %307 = vmatpush1.msra.mxu0 %v281
    %308 = vmatprep.subr.mxu0 0.0
    %309 = vmatpush1.msra.mxu0 %v282
    %310 = vmatprep.subr.mxu0 0.0
    %311 = vmatpush1.msra.mxu0 %v283
    %312 = vmatprep.subr.mxu0 0.0
    %313 = vmatpush1.msra.mxu0 %v284
    %314 = vmatprep.subr.mxu0 0.0
    %315 = vmatpush1.msra.mxu0 %v285
    %316 = vmatprep.subr.mxu0 0.0
    %317 = vmatpush1.msra.mxu0 %v286
    %318 = vmatprep.subr.mxu0 0.0
    %319 = vmatpush1.msra.mxu0 %v287
    %320 = vmatprep.subr.mxu0 0.0
    %321 = vmatpush1.msra.mxu0 %v288
    %322 = vmatprep.subr.mxu0 0.0
    %323 = vmatpush1.msra.mxu0 %v289
    %324 = vmatprep.subr.mxu0 0.0
    %325 = vmatpush1.msra.mxu0 %v290
    %326 = vmatprep.subr.mxu0 0.0
    %327 = vmatpush1.msra.mxu0 %v291
    %328 = vmatprep.subr.mxu0 0.0
    %329 = vmatpush1.msra.mxu0 %v292
    %330 = vmatprep.subr.mxu0 0.0
    %331 = vmatpush1.msra.mxu0 %v293
    %332 = vmatprep.subr.mxu0 0.0
    %333 = vmatpush1.msra.mxu0 %v294
    %334 = vmatprep.subr.mxu0 0.0
    %335 = vmatpush1.msra.mxu0 0.0
    %336 = vmatprep.subr.mxu0 0.0
    %337 = vmatpush1.msra.mxu0 0.0
    %338 = vmatprep.subr.mxu0 0.0
    %339 = vmatpush1.msra.mxu0 0.0
    %340 = vmatprep.subr.mxu0 0.0
    %341 = vmatpush1.msra.mxu0 0.0
    %342 = vmatprep.subr.mxu0 0.0
    %343 = vmatpush1.msra.mxu0 0.0
    %344 = vmatprep.subr.mxu0 0.0
    %345 = vmatpush1.msra.mxu0 0.0
    %346 = vmatprep.subr.mxu0 0.0
    %347 = vmatpush1.msra.mxu0 0.0
    %348 = vmatprep.subr.mxu0 0.0
    %349 = vmatpush1.msra.mxu0 0.0
    %350 = vmatprep.subr.mxu0 0.0
    %351 = vmatpush1.msra.mxu0 0.0
    %352 = vmatprep.subr.mxu0 0.0
    %353 = vmatpush1.msra.mxu0 0.0
    %354 = vmatprep.subr.mxu0 0.0
    %355 = vmatpush1.msra.mxu0 0.0
    %356 = vmatprep.subr.mxu0 0.0
    %357 = vmatpush1.msra.mxu0 0.0
    %358 = vmatprep.subr.mxu0 0.0
    %359 = vmatpush1.msra.mxu0 0.0
    %360 = vmatprep.subr.mxu0 0.0
    %361 = vmatpush1.msra.mxu0 0.0
    %362 = vmatprep.subr.mxu0 0.0
    %363 = vmatpush1.msra.mxu0 0.0
    %364 = vmatprep.subr.mxu0 0.0
    %365 = vmatpush1.msra.mxu0 0.0
    %366 = vmatprep.mubr.f32.mxu0 0.0
    %367 = vmatmul.mubr.f32.gmra.mrb[0].mxu0 %v278
    %v368 = vpop.f32.mrb[0].mxu0
    %v369 = vadd.f32 %v300, %v368
    %v370 = vpop.f32.mrb[0].mxu0
    %371 = vdwg.mxu0
    %v372 = vmax.f32 %v369, 0.0
    %v373 = vld [vmem:[%s5] sm:$0xff]
    %v374 = vld [vmem:[%s5 + $0x8] sm:$0xff]
    %v375 = vld [vmem:[%s5 + $0x10] sm:$0xff]
    %v376 = vld [vmem:[%s5 + $0x18] sm:$0xff]
    %v377 = vld [vmem:[%s5 + $0x20] sm:$0xff]
    %v378 = vld [vmem:[%s5 + $0x28] sm:$0xff]
    %v379 = vld [vmem:[%s5 + $0x30] sm:$0xff]
    %v380 = vld [vmem:[%s5 + $0x38] sm:$0xff]
    %v381 = vld [vmem:[%s5 + $0x40] sm:$0xff]
    %v382 = vld [vmem:[%s5 + $0x48] sm:$0xff]
    %v383 = vld [vmem:[%s5 + $0x50] sm:$0xff]
    %v384 = vld [vmem:[%s5 + $0x58] sm:$0xff]
    %v385 = vld [vmem:[%s5 + $0x60] sm:$0xff]
    %v386 = vld [vmem:[%s5 + $0x68] sm:$0xff]
    %v387 = vld [vmem:[%s5 + $0x70] sm:$0xff]
    %v388 = vld [vmem:[%s5 + $0x78] sm:$0xff]
    %v389 = vld [vmem:[%s6] sm:$0x1]
    %v391 = vlaneseq
    %v392 = vshrl.u32 %v391, 7
    %v393 = vsub.s32 0, %v392
    %v394 = vrot.slane %v389, %v393
    %396 = vmatprep.subr.mxu0 0.0
    %397 = vmatpush1.msra.mxu0 %v373
    %398 = vmatprep.subr.mxu0 0.0
    %399 = vmatpush1.msra.mxu0 %v374
    %400 = vmatprep.subr.mxu0 0.0
    %401 = vmatpush1.msra.mxu0 %v375
    %402 = vmatprep.subr.mxu0 0.0
    %403 = vmatpush1.msra.mxu0 %v376
    %404 = vmatprep.subr.mxu0 0.0
    %405 = vmatpush1.msra.mxu0 %v377
    %406 = vmatprep.subr.mxu0 0.0
    %407 = vmatpush1.msra.mxu0 %v378
    %408 = vmatprep.subr.mxu0 0.0
    %409 = vmatpush1.msra.mxu0 %v379
    %410 = vmatprep.subr.mxu0 0.0
    %411 = vmatpush1.msra.mxu0 %v380
    %412 = vmatprep.subr.mxu0 0.0
    %413 = vmatpush1.msra.mxu0 %v381
    %414 = vmatprep.subr.mxu0 0.0
    %415 = vmatpush1.msra.mxu0 %v382
    %416 = vmatprep.subr.mxu0 0.0
    %417 = vmatpush1.msra.mxu0 %v383
    %418 = vmatprep.subr.mxu0 0.0
    %419 = vmatpush1.msra.mxu0 %v384
    %420 = vmatprep.subr.mxu0 0.0
    %421 = vmatpush1.msra.mxu0 %v385
    %422 = vmatprep.subr.mxu0 0.0
    %423 = vmatpush1.msra.mxu0 %v386
    %424 = vmatprep.subr.mxu0 0.0
    %425 = vmatpush1.msra.mxu0 %v387
    %426 = vmatprep.subr.mxu0 0.0
    %427 = vmatpush1.msra.mxu0 %v388
    %428 = vmatprep.subr.mxu0 0.0
    %429 = vmatpush1.msra.mxu0 0.0
    %430 = vmatprep.subr.mxu0 0.0
    %431 = vmatpush1.msra.mxu0 0.0
    %432 = vmatprep.subr.mxu0 0.0
    %433 = vmatpush1.msra.mxu0 0.0
    %434 = vmatprep.subr.mxu0 0.0
    %435 = vmatpush1.msra.mxu0 0.0
    %436 = vmatprep.subr.mxu0 0.0
    %437 = vmatpush1.msra.mxu0 0.0
    %438 = vmatprep.subr.mxu0 0.0
    %439 = vmatpush1.msra.mxu0 0.0
    %440 = vmatprep.subr.mxu0 0.0
    %441 = vmatpush1.msra.mxu0 0.0
    %442 = vmatprep.subr.mxu0 0.0
    %443 = vmatpush1.msra.mxu0 0.0
    %444 = vmatprep.subr.mxu0 0.0
    %445 = vmatpush1.msra.mxu0 0.0
    %446 = vmatprep.subr.mxu0 0.0
    %447 = vmatpush1.msra.mxu0 0.0
    %448 = vmatprep.subr.mxu0 0.0
    %449 = vmatpush1.msra.mxu0 0.0
    %450 = vmatprep.subr.mxu0 0.0
    %451 = vmatpush1.msra.mxu0 0.0
    %452 = vmatprep.subr.mxu0 0.0
    %453 = vmatpush1.msra.mxu0 0.0
    %454 = vmatprep.subr.mxu0 0.0
    %455 = vmatpush1.msra.mxu0 0.0
    %456 = vmatprep.subr.mxu0 0.0
    %457 = vmatpush1.msra.mxu0 0.0
    %458 = vmatprep.subr.mxu0 0.0
    %459 = vmatpush1.msra.mxu0 0.0
    %460 = vmatprep.mubr.f32.mxu0 0.0
    %461 = vmatmul.mubr.f32.gmra.mrb[0].mxu0 %v372
    %v462 = vpop.f32.mrb[0].mxu0
    %v463 = vadd.f32 %v394, %v462
    %v464 = vpop.f32.mrb[0].mxu0
    %465 = vdwg.mxu0
    %v467 = vrot.slane %v463, 1
    %v469 = vsub.f32 %v463, %v467
    %v470 = vld [vmem:[%s7] sm:$0xff]
    %v471 = vld [vmem:[%s7 + $0x8] sm:$0xff]
    %v472 = vld [vmem:[%s7 + $0x10] sm:$0xff]
    %v473 = vld [vmem:[%s7 + $0x18] sm:$0xff]
    %v474 = vld [vmem:[%s7 + $0x20] sm:$0xff]
    %v475 = vld [vmem:[%s7 + $0x28] sm:$0xff]
    %v476 = vld [vmem:[%s7 + $0x30] sm:$0xff]
    %v477 = vld [vmem:[%s7 + $0x38] sm:$0xff]
    %v478 = vld [vmem:[%s8] sm:$0x1]
    %vm479 = vcmask 523264
    %v481 = vsel %vm479, %v469, 0
    %483 = vmatprep.subr.mxu0 0.0
    %484 = vmatpush1.msra.mxu0 %v470
    %485 = vmatprep.subr.mxu0 0.0
    %486 = vmatpush1.msra.mxu0 %v471
    %487 = vmatprep.subr.mxu0 0.0
    %488 = vmatpush1.msra.mxu0 %v472
    %489 = vmatprep.subr.mxu0 0.0
    %490 = vmatpush1.msra.mxu0 %v473
    %491 = vmatprep.subr.mxu0 0.0
    %492 = vmatpush1.msra.mxu0 %v474
    %493 = vmatprep.subr.mxu0 0.0
    %494 = vmatpush1.msra.mxu0 %v475
    %495 = vmatprep.subr.mxu0 0.0
    %496 = vmatpush1.msra.mxu0 %v476
    %497 = vmatprep.subr.mxu0 0.0
    %498 = vmatpush1.msra.mxu0 %v477
    %499 = vmatprep.subr.mxu0 0.0
    %500 = vmatpush1.msra.mxu0 0.0
    %501 = vmatprep.subr.mxu0 0.0
    %502 = vmatpush1.msra.mxu0 0.0
    %503 = vmatprep.subr.mxu0 0.0
    %504 = vmatpush1.msra.mxu0 0.0
    %505 = vmatprep.subr.mxu0 0.0
    %506 = vmatpush1.msra.mxu0 0.0
    %507 = vmatprep.subr.mxu0 0.0
    %508 = vmatpush1.msra.mxu0 0.0
    %509 = vmatprep.subr.mxu0 0.0
    %510 = vmatpush1.msra.mxu0 0.0
    %511 = vmatprep.subr.mxu0 0.0
    %512 = vmatpush1.msra.mxu0 0.0
    %513 = vmatprep.subr.mxu0 0.0
    %514 = vmatpush1.msra.mxu0 0.0
    %515 = vmatprep.subr.mxu0 0.0
    %516 = vmatpush1.msra.mxu0 0.0
    %517 = vmatprep.subr.mxu0 0.0
    %518 = vmatpush1.msra.mxu0 0.0
    %519 = vmatprep.subr.mxu0 0.0
    %520 = vmatpush1.msra.mxu0 0.0
    %521 = vmatprep.subr.mxu0 0.0
    %522 = vmatpush1.msra.mxu0 0.0
    %523 = vmatprep.subr.mxu0 0.0
    %524 = vmatpush1.msra.mxu0 0.0
    %525 = vmatprep.subr.mxu0 0.0
    %526 = vmatpush1.msra.mxu0 0.0
    %527 = vmatprep.subr.mxu0 0.0
    %528 = vmatpush1.msra.mxu0 0.0
    %529 = vmatprep.subr.mxu0 0.0
    %530 = vmatpush1.msra.mxu0 0.0
    %531 = vmatprep.subr.mxu0 0.0
    %532 = vmatpush1.msra.mxu0 0.0
    %533 = vmatprep.subr.mxu0 0.0
    %534 = vmatpush1.msra.mxu0 0.0
    %535 = vmatprep.subr.mxu0 0.0
    %536 = vmatpush1.msra.mxu0 0.0
    %537 = vmatprep.subr.mxu0 0.0
    %538 = vmatpush1.msra.mxu0 0.0
    %539 = vmatprep.subr.mxu0 0.0
    %540 = vmatpush1.msra.mxu0 0.0
    %541 = vmatprep.subr.mxu0 0.0
    %542 = vmatpush1.msra.mxu0 0.0
    %543 = vmatprep.subr.mxu0 0.0
    %544 = vmatpush1.msra.mxu0 0.0
    %545 = vmatprep.subr.mxu0 0.0
    %546 = vmatpush1.msra.mxu0 0.0
    %547 = vmatprep.mubr.f32.mxu0 0.0
    %548 = vmatmul.mubr.f32.gmra.mrb[0].mxu0 %v481
    %v549 = vpop.f32.mrb[0].mxu0
    %v550 = vadd.f32 %v478, %v549
    %v551 = vpop.f32.mrb[0].mxu0
    %552 = vdwg.mxu0
    %v553 = vld [vmem:[%s9] sm:$0x1]
    %v554 = vmul.f32 %v550, %v553
    %vm555 = vcmask 516096
    %v556 = vsel %vm555, %v554, 0.0
    %557 = vadd.xlane.f32.xlu0 %v556
    %v558 = vpop.xlane.xlu0 %557
    %v559 = vld [vmem:[#allocation2] sm:$0x1]
    %v560 = vadd.f32 %v558, %v559
    %561 = vst.msk [vmem:[#allocation3] sm:$0x1] %vm555, %v469
    %vm562 = vcmask 0
    %563 = vst.msk [vmem:[#allocation5] sm:$0x1] %vm562, %v560
    // Predicated region
    $region46: #{conv_vgg_forward.3} parent=1 // pred_check
      _
    $region47: #{conv_vgg_forward.3} parent=1 // pred_check_branch
      %565 = sbr.rel (0) target = $region49
    $region48: #{conv_vgg_forward.3} parent=1 // pred_region
      %s567 = ssub.s32 16, 16
      %568 = vsyncadd [#allocation4], %s567
      %s570 = sshll.u32 [#allocation3], 4
      %s571 = int_to_ptr.vmem [resolvable:$true] %s570
      %573 = dma.vmem_to_hbm [thread:$0]  %s571, 16, %s11, [#allocation4]
    $region49: #{conv_vgg_forward.3} parent=1 // pred_fallthru
      _
    // Predicated region
    $region50: #{conv_vgg_forward.3} parent=1 // pred_check
      _
    $region51: #{conv_vgg_forward.3} parent=1 // pred_check_branch
      %575 = sbr.rel (0) target = $region53
    $region52: #{conv_vgg_forward.3} parent=1 // pred_region
      %s577 = ssub.s32 16, 16
      %578 = vsyncadd [#allocation6], %s577
      %s580 = sshll.u32 [#allocation5], 4
      %s581 = int_to_ptr.vmem [resolvable:$true] %s580
      %583 = dma.vmem_to_hbm [thread:$0]  %s581, 16, %s12, [#allocation6]
    $region53: #{conv_vgg_forward.3} parent=1 // pred_fallthru
      _
    // Predicated region
    $region54: #{conv_vgg_forward.3} parent=1 // pred_check
      _
    $region55: #{conv_vgg_forward.3} parent=1 // pred_check_branch
      %585 = sbr.rel (0) target = $region57
    $region56: #{conv_vgg_forward.3} parent=1 // pred_region
      %586 = dma.done [#allocation4], 16
    $region57: #{conv_vgg_forward.3} parent=1 // pred_fallthru
      _
    // Predicated region
    $region58: #{conv_vgg_forward.3} parent=1 // pred_check
      _
    $region59: #{conv_vgg_forward.3} parent=1 // pred_check_branch
      %588 = sbr.rel (0) target = $region61
    $region60: #{conv_vgg_forward.3} parent=1 // pred_region
      %589 = dma.done [#allocation6], 16
    $region61: #{conv_vgg_forward.3} parent=1 // pred_fallthru
      _
    %590 = vsyncpa [#allocation4], 1
    %591 = vsyncpa [#allocation6], 1

// kernel: conv_vgg_forward.2
$region0: #{conv_vgg_forward.2}
  #allocation0 [shape = 'u32[]', space=smem, size = 0x4, offset = 0x4, fixed_abs, tag = 'smem constant byte address 0x4 - core index']
  #allocation1 [shape = 'u32[144,128]{1,0:T(1,128)}', space=vmem, size = 0x12000, scoped, tag = 'internal scratch']
  #allocation2 [shape = 'f32[36,18,3]{2,1,0:T(8,128)}', space=vmem, size = 0x6c000, scoped, tag = 'scratch operand']
  #allocation3 [shape = 'f32[32,16,16]{2,1,0:T(8,128)}', space=vmem, size = 0x40000, scoped, tag = 'scratch operand']
  #allocation4 [shape = 'f32[16,16,16]{2,1,0:T(8,128)}', space=vmem, size = 0x20000, scoped, tag = 'scratch operand']
  #allocation5 [shape = 'f32[20,10,16]{2,1,0:T(8,128)}', space=vmem, size = 0x28000, scoped, tag = 'scratch operand']
  #allocation6 [shape = 'f32[16,8,32]{2,1,0:T(8,128)}', space=vmem, size = 0x10000, scoped, tag = 'scratch operand']
  #allocation7 [shape = 'f32[8,8,32]{2,1,0:T(8,128)}', space=vmem, size = 0x8000, scoped, tag = 'scratch operand']
  %s0 = inlined_call_operand.vmem [shape: f32[32,16,3], index: 0, kind: input, shape index: {}]
  %s1 = inlined_call_operand.vmem [shape: f32[27,16], index: 1, kind: input, shape index: {}]
  %s2 = inlined_call_operand.vmem [shape: f32[1,16], index: 2, kind: input, shape index: {}]
  %s3 = inlined_call_operand.vmem [shape: f32[144,32], index: 3, kind: input, shape index: {}]
  %s4 = inlined_call_operand.vmem [shape: f32[1,32], index: 4, kind: input, shape index: {}]
  %s5 = inlined_call_operand.vmem [shape: f32[8,4,32], index: 5, kind: output, shape index: {}]
  %s6 = sld [smem:[#allocation0]]
  $region30: #{conv_vgg_forward.2} parent=0
    _
  %s8 = ssub.s32 1, %s6
  %s9 = scalar_select 0, %s8, %s6
  // Predicated region
  $region2: #{conv_vgg_forward.2} parent=0 // pred_check
    _
  $region3: #{conv_vgg_forward.2} parent=0 // pred_check_branch
    %11 = sbr.rel (0) target = $region5
  $region4: #{conv_vgg_forward.2} parent=0 // pred_region
    _
  $region5: #{conv_vgg_forward.2} parent=0 // pred_fallthru
    _
  // Predicated region
  $region6: #{conv_vgg_forward.2} parent=0 // pred_check
    _
  $region7: #{conv_vgg_forward.2} parent=0 // pred_check_branch
    %13 = sbr.rel (0) target = $region9
  $region8: #{conv_vgg_forward.2} parent=0 // pred_region
    _
  $region9: #{conv_vgg_forward.2} parent=0 // pred_fallthru
    _
  // Predicated region
  $region10: #{conv_vgg_forward.2} parent=0 // pred_check
    _
  $region11: #{conv_vgg_forward.2} parent=0 // pred_check_branch
    %15 = sbr.rel (0) target = $region13
  $region12: #{conv_vgg_forward.2} parent=0 // pred_region
    _
  $region13: #{conv_vgg_forward.2} parent=0 // pred_fallthru
    _
  // Predicated region
  $region14: #{conv_vgg_forward.2} parent=0 // pred_check
    _
  $region15: #{conv_vgg_forward.2} parent=0 // pred_check_branch
    %17 = sbr.rel (0) target = $region17
  $region16: #{conv_vgg_forward.2} parent=0 // pred_region
    _
  $region17: #{conv_vgg_forward.2} parent=0 // pred_fallthru
    _
  // Predicated region
  $region18: #{conv_vgg_forward.2} parent=0 // pred_check
    _
  $region19: #{conv_vgg_forward.2} parent=0 // pred_check_branch
    %19 = sbr.rel (0) target = $region21
  $region20: #{conv_vgg_forward.2} parent=0 // pred_region
    _
  $region21: #{conv_vgg_forward.2} parent=0 // pred_fallthru
    _
  %vm20 = vcmask 23552
  %21 = vst.msk [vmem:[#allocation2] sm:$0xff] %vm20, 0.0
  %22 = vst.msk [vmem:[#allocation2 + $0x8] sm:$0xff] %vm20, 0.0
  %vm23 = vcmask 17408
  %24 = vst.msk [vmem:[#allocation2 + $0x10] sm:$0x3] %vm23, 0.0
  %25 = vst.msk [vmem:[#allocation2 + $0x18] sm:$0xff] %vm20, 0.0
  %26 = vst.msk [vmem:[#allocation2 + $0x20] sm:$0xff] %vm20, 0.0
  %27 = vst.msk [vmem:[#allocation2 + $0x28] sm:$0x3] %vm23, 0.0
  %28 = vst.msk [vmem:[#allocation2 + $0x30] sm:$0xff] %vm20, 0.0
  %29 = vst.msk [vmem:[#allocation2 + $0x38] sm:$0xff] %vm20, 0.0
  %30 = vst.msk [vmem:[#allocation2 + $0x40] sm:$0x3] %vm23, 0.0
  %31 = vst.msk [vmem:[#allocation2 + $0x48] sm:$0xff] %vm20, 0.0
  %32 = vst.msk [vmem:[#allocation2 + $0x50] sm:$0xff] %vm20, 0.0
  %33 = vst.msk [vmem:[#allocation2 + $0x58] sm:$0x3] %vm23, 0.0
  %34 = vst.msk [vmem:[#allocation2 + $0x60] sm:$0xff] %vm20, 0.0
  %35 = vst.msk [vmem:[#allocation2 + $0x68] sm:$0xff] %vm20, 0.0
  %36 = vst.msk [vmem:[#allocation2 + $0x70] sm:$0x3] %vm23, 0.0
  %37 = vst.msk [vmem:[#allocation2 + $0x78] sm:$0xff] %vm20, 0.0
  %38 = vst.msk [vmem:[#allocation2 + $0x80] sm:$0xff] %vm20, 0.0
  %39 = vst.msk [vmem:[#allocation2 + $0x88] sm:$0x3] %vm23, 0.0
  %40 = vst.msk [vmem:[#allocation2 + $0x90] sm:$0xff] %vm20, 0.0
  %41 = vst.msk [vmem:[#allocation2 + $0x98] sm:$0xff] %vm20, 0.0
  %42 = vst.msk [vmem:[#allocation2 + $0xa0] sm:$0x3] %vm23, 0.0
  %43 = vst.msk [vmem:[#allocation2 + $0xa8] sm:$0xff] %vm20, 0.0
  %44 = vst.msk [vmem:[#allocation2 + $0xb0] sm:$0xff] %vm20, 0.0
  %45 = vst.msk [vmem:[#allocation2 + $0xb8] sm:$0x3] %vm23, 0.0
  %46 = vst.msk [vmem:[#allocation2 + $0xc0] sm:$0xff] %vm20, 0.0
  %47 = vst.msk [vmem:[#allocation2 + $0xc8] sm:$0xff] %vm20, 0.0
  %48 = vst.msk [vmem:[#allocation2 + $0xd0] sm:$0x3] %vm23, 0.0
  %49 = vst.msk [vmem:[#allocation2 + $0xd8] sm:$0xff] %vm20, 0.0
  %50 = vst.msk [vmem:[#allocation2 + $0xe0] sm:$0xff] %vm20, 0.0
  %51 = vst.msk [vmem:[#allocation2 + $0xe8] sm:$0x3] %vm23, 0.0
  %52 = vst.msk [vmem:[#allocation2 + $0xf0] sm:$0xff] %vm20, 0.0
  %53 = vst.msk [vmem:[#allocation2 + $0xf8] sm:$0xff] %vm20, 0.0
  %54 = vst.msk [vmem:[#allocation2 + $0x100] sm:$0x3] %vm23, 0.0
  %55 = vst.msk [vmem:[#allocation2 + $0x108] sm:$0xff] %vm20, 0.0
  %56 = vst.msk [vmem:[#allocation2 + $0x110] sm:$0xff] %vm20, 0.0
  %57 = vst.msk [vmem:[#allocation2 + $0x118] sm:$0x3] %vm23, 0.0
  %58 = vst.msk [vmem:[#allocation2 + $0x120] sm:$0xff] %vm20, 0.0
  %59 = vst.msk [vmem:[#allocation2 + $0x128] sm:$0xff] %vm20, 0.0
  %60 = vst.msk [vmem:[#allocation2 + $0x130] sm:$0x3] %vm23, 0.0
  %61 = vst.msk [vmem:[#allocation2 + $0x138] sm:$0xff] %vm20, 0.0
  %62 = vst.msk [vmem:[#allocation2 + $0x140] sm:$0xff] %vm20, 0.0
  %63 = vst.msk [vmem:[#allocation2 + $0x148] sm:$0x3] %vm23, 0.0
  %64 = vst.msk [vmem:[#allocation2 + $0x150] sm:$0xff] %vm20, 0.0
  %65 = vst.msk [vmem:[#allocation2 + $0x158] sm:$0xff] %vm20, 0.0
  %66 = vst.msk [vmem:[#allocation2 + $0x160] sm:$0x3] %vm23, 0.0
  %67 = vst.msk [vmem:[#allocation2 + $0x168] sm:$0xff] %vm20, 0.0
  %68 = vst.msk [vmem:[#allocation2 + $0x170] sm:$0xff] %vm20, 0.0
  %69 = vst.msk [vmem:[#allocation2 + $0x178] sm:$0x3] %vm23, 0.0
  %70 = vst.msk [vmem:[#allocation2 + $0x180] sm:$0xff] %vm20, 0.0
  %71 = vst.msk [vmem:[#allocation2 + $0x188] sm:$0xff] %vm20, 0.0
  %72 = vst.msk [vmem:[#allocation2 + $0x190] sm:$0x3] %vm23, 0.0
  %73 = vst.msk [vmem:[#allocation2 + $0x198] sm:$0xff] %vm20, 0.0
  %74 = vst.msk [vmem:[#allocation2 + $0x1a0] sm:$0xff] %vm20, 0.0
  %75 = vst.msk [vmem:[#allocation2 + $0x1a8] sm:$0x3] %vm23, 0.0
  %76 = vst.msk [vmem:[#allocation2 + $0x1b0] sm:$0xff] %vm20, 0.0
  %77 = vst.msk [vmem:[#allocation2 + $0x1b8] sm:$0xff] %vm20, 0.0
  %78 = vst.msk [vmem:[#allocation2 + $0x1c0] sm:$0x3] %vm23, 0.0
  %79 = vst.msk [vmem:[#allocation2 + $0x1c8] sm:$0xff] %vm20, 0.0
  %80 = vst.msk [vmem:[#allocation2 + $0x1d0] sm:$0xff] %vm20, 0.0
  %81 = vst.msk [vmem:[#allocation2 + $0x1d8] sm:$0x3] %vm23, 0.0
  %82 = vst.msk [vmem:[#allocation2 + $0x1e0] sm:$0xff] %vm20, 0.0
  %83 = vst.msk [vmem:[#allocation2 + $0x1e8] sm:$0xff] %vm20, 0.0
  %84 = vst.msk [vmem:[#allocation2 + $0x1f0] sm:$0x3] %vm23, 0.0
  %85 = vst.msk [vmem:[#allocation2 + $0x1f8] sm:$0xff] %vm20, 0.0
  %86 = vst.msk [vmem:[#allocation2 + $0x200] sm:$0xff] %vm20, 0.0
  %87 = vst.msk [vmem:[#allocation2 + $0x208] sm:$0x3] %vm23, 0.0
  %88 = vst.msk [vmem:[#allocation2 + $0x210] sm:$0xff] %vm20, 0.0
  %89 = vst.msk [vmem:[#allocation2 + $0x218] sm:$0xff] %vm20, 0.0
  %90 = vst.msk [vmem:[#allocation2 + $0x220] sm:$0x3] %vm23, 0.0
  %91 = vst.msk [vmem:[#allocation2 + $0x228] sm:$0xff] %vm20, 0.0
  %92 = vst.msk [vmem:[#allocation2 + $0x230] sm:$0xff] %vm20, 0.0
  %93 = vst.msk [vmem:[#allocation2 + $0x238] sm:$0x3] %vm23, 0.0
  %94 = vst.msk [vmem:[#allocation2 + $0x240] sm:$0xff] %vm20, 0.0
  %95 = vst.msk [vmem:[#allocation2 + $0x248] sm:$0xff] %vm20, 0.0
  %96 = vst.msk [vmem:[#allocation2 + $0x250] sm:$0x3] %vm23, 0.0
  %97 = vst.msk [vmem:[#allocation2 + $0x258] sm:$0xff] %vm20, 0.0
  %98 = vst.msk [vmem:[#allocation2 + $0x260] sm:$0xff] %vm20, 0.0
  %99 = vst.msk [vmem:[#allocation2 + $0x268] sm:$0x3] %vm23, 0.0
  %100 = vst.msk [vmem:[#allocation2 + $0x270] sm:$0xff] %vm20, 0.0
  %101 = vst.msk [vmem:[#allocation2 + $0x278] sm:$0xff] %vm20, 0.0
  %102 = vst.msk [vmem:[#allocation2 + $0x280] sm:$0x3] %vm23, 0.0
  %103 = vst.msk [vmem:[#allocation2 + $0x288] sm:$0xff] %vm20, 0.0
  %104 = vst.msk [vmem:[#allocation2 + $0x290] sm:$0xff] %vm20, 0.0
  %105 = vst.msk [vmem:[#allocation2 + $0x298] sm:$0x3] %vm23, 0.0
  %106 = vst.msk [vmem:[#allocation2 + $0x2a0] sm:$0xff] %vm20, 0.0
  %107 = vst.msk [vmem:[#allocation2 + $0x2a8] sm:$0xff] %vm20, 0.0
  %108 = vst.msk [vmem:[#allocation2 + $0x2b0] sm:$0x3] %vm23, 0.0
  %109 = vst.msk [vmem:[#allocation2 + $0x2b8] sm:$0xff] %vm20, 0.0
  %110 = vst.msk [vmem:[#allocation2 + $0x2c0] sm:$0xff] %vm20, 0.0
  %111 = vst.msk [vmem:[#allocation2 + $0x2c8] sm:$0x3] %vm23, 0.0
  %112 = vst.msk [vmem:[#allocation2 + $0x2d0] sm:$0xff] %vm20, 0.0
  %113 = vst.msk [vmem:[#allocation2 + $0x2d8] sm:$0xff] %vm20, 0.0
  %114 = vst.msk [vmem:[#allocation2 + $0x2e0] sm:$0x3] %vm23, 0.0
  %115 = vst.msk [vmem:[#allocation2 + $0x2e8] sm:$0xff] %vm20, 0.0
  %116 = vst.msk [vmem:[#allocation2 + $0x2f0] sm:$0xff] %vm20, 0.0
  %117 = vst.msk [vmem:[#allocation2 + $0x2f8] sm:$0x3] %vm23, 0.0
  %118 = vst.msk [vmem:[#allocation2 + $0x300] sm:$0xff] %vm20, 0.0
  %119 = vst.msk [vmem:[#allocation2 + $0x308] sm:$0xff] %vm20, 0.0
  %120 = vst.msk [vmem:[#allocation2 + $0x310] sm:$0x3] %vm23, 0.0
  %121 = vst.msk [vmem:[#allocation2 + $0x318] sm:$0xff] %vm20, 0.0
  %122 = vst.msk [vmem:[#allocation2 + $0x320] sm:$0xff] %vm20, 0.0
  %123 = vst.msk [vmem:[#allocation2 + $0x328] sm:$0x3] %vm23, 0.0
  %124 = vst.msk [vmem:[#allocation2 + $0x330] sm:$0xff] %vm20, 0.0
  %125 = vst.msk [vmem:[#allocation2 + $0x338] sm:$0xff] %vm20, 0.0
  %126 = vst.msk [vmem:[#allocation2 + $0x340] sm:$0x3] %vm23, 0.0
  %127 = vst.msk [vmem:[#allocation2 + $0x348] sm:$0xff] %vm20, 0.0
  %128 = vst.msk [vmem:[#allocation2 + $0x350] sm:$0xff] %vm20, 0.0
  %129 = vst.msk [vmem:[#allocation2 + $0x358] sm:$0x3] %vm23, 0.0
  %v130 = vld [vmem:[%s0] sm:$0xff]
  %v131 = vld [vmem:[%s0 + $0x8] sm:$0xff]
  %v132 = vld [vmem:[%s0 + $0x10] sm:$0xff]
  %v133 = vld [vmem:[%s0 + $0x18] sm:$0xff]
  %v134 = vld [vmem:[%s0 + $0x20] sm:$0xff]
  %v135 = vld [vmem:[%s0 + $0x28] sm:$0xff]
  %v136 = vld [vmem:[%s0 + $0x30] sm:$0xff]
  %v137 = vld [vmem:[%s0 + $0x38] sm:$0xff]
  %v138 = vld [vmem:[%s0 + $0x40] sm:$0xff]
  %v139 = vld [vmem:[%s0 + $0x48] sm:$0xff]
  %v140 = vld [vmem:[%s0 + $0x50] sm:$0xff]
  %v141 = vld [vmem:[%s0 + $0x58] sm:$0xff]
  %v142 = vld [vmem:[%s0 + $0x60] sm:$0xff]
  %v143 = vld [vmem:[%s0 + $0x68] sm:$0xff]
  %v144 = vld [vmem:[%s0 + $0x70] sm:$0xff]
  %v145 = vld [vmem:[%s0 + $0x78] sm:$0xff]
  %v146 = vld [vmem:[%s0 + $0x80] sm:$0xff]
  %v147 = vld [vmem:[%s0 + $0x88] sm:$0xff]
  %v148 = vld [vmem:[%s0 + $0x90] sm:$0xff]
  %v149 = vld [vmem:[%s0 + $0x98] sm:$0xff]
  %v150 = vld [vmem:[%s0 + $0xa0] sm:$0xff]
  %v151 = vld [vmem:[%s0 + $0xa8] sm:$0xff]
  %v152 = vld [vmem:[%s0 + $0xb0] sm:$0xff]
  %v153 = vld [vmem:[%s0 + $0xb8] sm:$0xff]
  %v154 = vld [vmem:[%s0 + $0xc0] sm:$0xff]
  %v155 = vld [vmem:[%s0 + $0xc8] sm:$0xff]
  %v156 = vld [vmem:[%s0 + $0xd0] sm:$0xff]
  %v157 = vld [vmem:[%s0 + $0xd8] sm:$0xff]
  %v158 = vld [vmem:[%s0 + $0xe0] sm:$0xff]
  %v159 = vld [vmem:[%s0 + $0xe8] sm:$0xff]
  %v160 = vld [vmem:[%s0 + $0xf0] sm:$0xff]
  %v161 = vld [vmem:[%s0 + $0xf8] sm:$0xff]
  %s162 = scalar_lea.vmem [#allocation2], 24
  %163 = vst.msk [vmem:[%s162 + $0x1] sm:$0xff] %vm20, %v130
  %164 = vst.msk [vmem:[%s162 + $0x9] sm:$0xff] %vm20, %v131
  %165 = vst.msk [vmem:[%s162 + $0x19] sm:$0xff] %vm20, %v132
  %166 = vst.msk [vmem:[%s162 + $0x21] sm:$0xff] %vm20, %v133
  %167 = vst.msk [vmem:[%s162 + $0x31] sm:$0xff] %vm20, %v134
  %168 = vst.msk [vmem:[%s162 + $0x39] sm:$0xff] %vm20, %v135
  %169 = vst.msk [vmem:[%s162 + $0x49] sm:$0xff] %vm20, %v136
  %170 = vst.msk [vmem:[%s162 + $0x51] sm:$0xff] %vm20, %v137
  %171 = vst.msk [vmem:[%s162 + $0x61] sm:$0xff] %vm20, %v138
  %172 = vst.msk [vmem:[%s162 + $0x69] sm:$0xff] %vm20, %v139
  %173 = vst.msk [vmem:[%s162 + $0x79] sm:$0xff] %vm20, %v140
  %174 = vst.msk [vmem:[%s162 + $0x81] sm:$0xff] %vm20, %v141
  %175 = vst.msk [vmem:[%s162 + $0x91] sm:$0xff] %vm20, %v142
  %176 = vst.msk [vmem:[%s162 + $0x99] sm:$0xff] %vm20, %v143
  %177 = vst.msk [vmem:[%s162 + $0xa9] sm:$0xff] %vm20, %v144
  %178 = vst.msk [vmem:[%s162 + $0xb1] sm:$0xff] %vm20, %v145
  %179 = vst.msk [vmem:[%s162 + $0xc1] sm:$0xff] %vm20, %v146
  %180 = vst.msk [vmem:[%s162 + $0xc9] sm:$0xff] %vm20, %v147
  %181 = vst.msk [vmem:[%s162 + $0xd9] sm:$0xff] %vm20, %v148
  %182 = vst.msk [vmem:[%s162 + $0xe1] sm:$0xff] %vm20, %v149
  %183 = vst.msk [vmem:[%s162 + $0xf1] sm:$0xff] %vm20, %v150
  %184 = vst.msk [vmem:[%s162 + $0xf9] sm:$0xff] %vm20, %v151
  %185 = vst.msk [vmem:[%s162 + $0x109] sm:$0xff] %vm20, %v152
  %186 = vst.msk [vmem:[%s162 + $0x111] sm:$0xff] %vm20, %v153
  %187 = vst.msk [vmem:[%s162 + $0x121] sm:$0xff] %vm20, %v154
  %188 = vst.msk [vmem:[%s162 + $0x129] sm:$0xff] %vm20, %v155
  %189 = vst.msk [vmem:[%s162 + $0x139] sm:$0xff] %vm20, %v156
  %190 = vst.msk [vmem:[%s162 + $0x141] sm:$0xff] %vm20, %v157
  %191 = vst.msk [vmem:[%s162 + $0x151] sm:$0xff] %vm20, %v158
  %192 = vst.msk [vmem:[%s162 + $0x159] sm:$0xff] %vm20, %v159
  %193 = vst.msk [vmem:[%s162 + $0x169] sm:$0xff] %vm20, %v160
  %194 = vst.msk [vmem:[%s162 + $0x171] sm:$0xff] %vm20, %v161
  %s195 = scalar_lea.vmem %s0, 256
  %v196 = vld [vmem:[%s195] sm:$0xff]
  %v197 = vld [vmem:[%s195 + $0x8] sm:$0xff]
  %v198 = vld [vmem:[%s195 + $0x10] sm:$0xff]
  %v199 = vld [vmem:[%s195 + $0x18] sm:$0xff]
  %v200 = vld [vmem:[%s195 + $0x20] sm:$0xff]
  %v201 = vld [vmem:[%s195 + $0x28] sm:$0xff]
  %v202 = vld [vmem:[%s195 + $0x30] sm:$0xff]
  %v203 = vld [vmem:[%s195 + $0x38] sm:$0xff]
  %v204 = vld [vmem:[%s195 + $0x40] sm:$0xff]
  %v205 = vld [vmem:[%s195 + $0x48] sm:$0xff]
  %v206 = vld [vmem:[%s195 + $0x50] sm:$0xff]
  %v207 = vld [vmem:[%s195 + $0x58] sm:$0xff]
  %v208 = vld [vmem:[%s195 + $0x60] sm:$0xff]
  %v209 = vld [vmem:[%s195 + $0x68] sm:$0xff]
  %v210 = vld [vmem:[%s195 + $0x70] sm:$0xff]
  %v211 = vld [vmem:[%s195 + $0x78] sm:$0xff]
  %v212 = vld [vmem:[%s195 + $0x80] sm:$0xff]
  %v213 = vld [vmem:[%s195 + $0x88] sm:$0xff]
  %v214 = vld [vmem:[%s195 + $0x90] sm:$0xff]
  %v215 = vld [vmem:[%s195 + $0x98] sm:$0xff]
  %v216 = vld [vmem:[%s195 + $0xa0] sm:$0xff]
  %v217 = vld [vmem:[%s195 + $0xa8] sm:$0xff]
  %v218 = vld [vmem:[%s195 + $0xb0] sm:$0xff]
  %v219 = vld [vmem:[%s195 + $0xb8] sm:$0xff]
  %v220 = vld [vmem:[%s195 + $0xc0] sm:$0xff]
  %v221 = vld [vmem:[%s195 + $0xc8] sm:$0xff]
  %v222 = vld [vmem:[%s195 + $0xd0] sm:$0xff]
  %v223 = vld [vmem:[%s195 + $0xd8] sm:$0xff]
  %v224 = vld [vmem:[%s195 + $0xe0] sm:$0xff]
  %v225 = vld [vmem:[%s195 + $0xe8] sm:$0xff]
  %v226 = vld [vmem:[%s195 + $0xf0] sm:$0xff]
  %v227 = vld [vmem:[%s195 + $0xf8] sm:$0xff]
  %s228 = scalar_lea.vmem [#allocation2], 456
  %229 = vst.msk [vmem:[%s228 + $0x1] sm:$0xff] %vm20, %v196
  %230 = vst.msk [vmem:[%s228 + $0x9] sm:$0xff] %vm20, %v197
  %231 = vst.msk [vmem:[%s228 + $0x19] sm:$0xff] %vm20, %v198
  %232 = vst.msk [vmem:[%s228 + $0x21] sm:$0xff] %vm20, %v199
  %233 = vst.msk [vmem:[%s228 + $0x31] sm:$0xff] %vm20, %v200
  %234 = vst.msk [vmem:[%s228 + $0x39] sm:$0xff] %vm20, %v201
  %235 = vst.msk [vmem:[%s228 + $0x49] sm:$0xff] %vm20, %v202
  %236 = vst.msk [vmem:[%s228 + $0x51] sm:$0xff] %vm20, %v203
  %237 = vst.msk [vmem:[%s228 + $0x61] sm:$0xff] %vm20, %v204
  %238 = vst.msk [vmem:[%s228 + $0x69] sm:$0xff] %vm20, %v205
  %239 = vst.msk [vmem:[%s228 + $0x79] sm:$0xff] %vm20, %v206
  %240 = vst.msk [vmem:[%s228 + $0x81] sm:$0xff] %vm20, %v207
  %241 = vst.msk [vmem:[%s228 + $0x91] sm:$0xff] %vm20, %v208
  %242 = vst.msk [vmem:[%s228 + $0x99] sm:$0xff] %vm20, %v209
  %243 = vst.msk [vmem:[%s228 + $0xa9] sm:$0xff] %vm20, %v210
  %244 = vst.msk [vmem:[%s228 + $0xb1] sm:$0xff] %vm20, %v211
  %245 = vst.msk [vmem:[%s228 + $0xc1] sm:$0xff] %vm20, %v212
  %246 = vst.msk [vmem:[%s228 + $0xc9] sm:$0xff] %vm20, %v213
  %247 = vst.msk [vmem:[%s228 + $0xd9] sm:$0xff] %vm20, %v214
  %248 = vst.msk [vmem:[%s228 + $0xe1] sm:$0xff] %vm20, %v215
  %249 = vst.msk [vmem:[%s228 + $0xf1] sm:$0xff] %vm20, %v216
  %250 = vst.msk [vmem:[%s228 + $0xf9] sm:$0xff] %vm20, %v217
  %251 = vst.msk [vmem:[%s228 + $0x109] sm:$0xff] %vm20, %v218
  %252 = vst.msk [vmem:[%s228 + $0x111] sm:$0xff] %vm20, %v219
  %253 = vst.msk [vmem:[%s228 + $0x121] sm:$0xff] %vm20, %v220
  %254 = vst.msk [vmem:[%s228 + $0x129] sm:$0xff] %vm20, %v221
  %255 = vst.msk [vmem:[%s228 + $0x139] sm:$0xff] %vm20, %v222
  %256 = vst.msk [vmem:[%s228 + $0x141] sm:$0xff] %vm20, %v223
  %257 = vst.msk [vmem:[%s228 + $0x151] sm:$0xff] %vm20, %v224
  %258 = vst.msk [vmem:[%s228 + $0x159] sm:$0xff] %vm20, %v225
  %259 = vst.msk [vmem:[%s228 + $0x169] sm:$0xff] %vm20, %v226
  %260 = vst.msk [vmem:[%s228 + $0x171] sm:$0xff] %vm20, %v227
  %v261 = vld [vmem:[#allocation2] sm:$0xff]
  %v262 = vld [vmem:[#allocation2 + $0x8] sm:$0xff]
  %v263 = vld [vmem:[#allocation2 + $0x18] sm:$0xff]
  %v264 = vld [vmem:[#allocation2 + $0x20] sm:$0xff]
  %v265 = vld [vmem:[#allocation2 + $0x30] sm:$0xff]
  %v266 = vld [vmem:[#allocation2 + $0x38] sm:$0xff]
  %v267 = vld [vmem:[#allocation2 + $0x48] sm:$0xff]
  %v268 = vld [vmem:[#allocation2 + $0x50] sm:$0xff]
  %v269 = vld [vmem:[#allocation2 + $0x60] sm:$0xff]
  %v270 = vld [vmem:[#allocation2 + $0x68] sm:$0xff]
  %v271 = vld [vmem:[#allocation2 + $0x78] sm:$0xff]
  %v272 = vld [vmem:[#allocation2 + $0x80] sm:$0xff]
  %v273 = vld [vmem:[#allocation2 + $0x90] sm:$0xff]
  %v274 = vld [vmem:[#allocation2 + $0x98] sm:$0xff]
  %v275 = vld [vmem:[#allocation2 + $0xa8] sm:$0xff]
  %v276 = vld [vmem:[#allocation2 + $0xb0] sm:$0xff]
  %v277 = vld [vmem:[#allocation2 + $0xc0] sm:$0xff]
  %v278 = vld [vmem:[#allocation2 + $0xc8] sm:$0xff]
  %v279 = vld [vmem:[#allocation2 + $0xd8] sm:$0xff]
  %v280 = vld [vmem:[#allocation2 + $0xe0] sm:$0xff]
  %v281 = vld [vmem:[#allocation2 + $0xf0] sm:$0xff]
  %v282 = vld [vmem:[#allocation2 + $0xf8] sm:$0xff]
  %v283 = vld [vmem:[#allocation2 + $0x108] sm:$0xff]
  %v284 = vld [vmem:[#allocation2 + $0x110] sm:$0xff]
  %v285 = vld [vmem:[#allocation2 + $0x120] sm:$0xff]
  %v286 = vld [vmem:[#allocation2 + $0x128] sm:$0xff]
  %v287 = vld [vmem:[#allocation2 + $0x138] sm:$0xff]
  %v288 = vld [vmem:[#allocation2 + $0x140] sm:$0xff]
  %v289 = vld [vmem:[#allocation2 + $0x150] sm:$0xff]
  %v290 = vld [vmem:[#allocation2 + $0x158] sm:$0xff]
  %v291 = vld [vmem:[#allocation2 + $0x168] sm:$0xff]
  %v292 = vld [vmem:[#allocation2 + $0x170] sm:$0xff]
  %s293 = scalar_lea.vmem [#allocation2], 432
  %v294 = vld [vmem:[%s293] sm:$0xff]
  %v295 = vld [vmem:[%s293 + $0x8] sm:$0xff]
  %v296 = vld [vmem:[%s293 + $0x18] sm:$0xff]
  %v297 = vld [vmem:[%s293 + $0x20] sm:$0xff]
  %v298 = vld [vmem:[%s293 + $0x30] sm:$0xff]
  %v299 = vld [vmem:[%s293 + $0x38] sm:$0xff]
  %v300 = vld [vmem:[%s293 + $0x48] sm:$0xff]
  %v301 = vld [vmem:[%s293 + $0x50] sm:$0xff]
  %v302 = vld [vmem:[%s293 + $0x60] sm:$0xff]
  %v303 = vld [vmem:[%s293 + $0x68] sm:$0xff]
  %v304 = vld [vmem:[%s293 + $0x78] sm:$0xff]
  %v305 = vld [vmem:[%s293 + $0x80] sm:$0xff]
  %v306 = vld [vmem:[%s293 + $0x90] sm:$0xff]
  %v307 = vld [vmem:[%s293 + $0x98] sm:$0xff]
  %v308 = vld [vmem:[%s293 + $0xa8] sm:$0xff]
  %v309 = vld [vmem:[%s293 + $0xb0] sm:$0xff]
  %v310 = vld [vmem:[%s293 + $0xc0] sm:$0xff]
  %v311 = vld [vmem:[%s293 + $0xc8] sm:$0xff]
  %v312 = vld [vmem:[%s293 + $0xd8] sm:$0xff]
  %v313 = vld [vmem:[%s293 + $0xe0] sm:$0xff]
  %v314 = vld [vmem:[%s293 + $0xf0] sm:$0xff]
  %v315 = vld [vmem:[%s293 + $0xf8] sm:$0xff]
  %v316 = vld [vmem:[%s293 + $0x108] sm:$0xff]
  %v317 = vld [vmem:[%s293 + $0x110] sm:$0xff]
  %v318 = vld [vmem:[%s293 + $0x120] sm:$0xff]
  %v319 = vld [vmem:[%s293 + $0x128] sm:$0xff]
  %v320 = vld [vmem:[%s293 + $0x138] sm:$0xff]
  %v321 = vld [vmem:[%s293 + $0x140] sm:$0xff]
  %v322 = vld [vmem:[%s293 + $0x150] sm:$0xff]
  %v323 = vld [vmem:[%s293 + $0x158] sm:$0xff]
  %v324 = vld [vmem:[%s293 + $0x168] sm:$0xff]
  %v325 = vld [vmem:[%s293 + $0x170] sm:$0xff]
  %v326 = vld [vmem:[%s1] sm:$0x7]
  %v327 = vld [vmem:[#allocation2 + $0x1] sm:$0xff]
  %v328 = vld [vmem:[#allocation2 + $0x9] sm:$0xff]
  %v329 = vld [vmem:[#allocation2 + $0x19] sm:$0xff]
  %v330 = vld [vmem:[#allocation2 + $0x21] sm:$0xff]
  %v331 = vld [vmem:[#allocation2 + $0x31] sm:$0xff]
  %v332 = vld [vmem:[#allocation2 + $0x39] sm:$0xff]
  %v333 = vld [vmem:[#allocation2 + $0x49] sm:$0xff]
  %v334 = vld [vmem:[#allocation2 + $0x51] sm:$0xff]
  %v335 = vld [vmem:[#allocation2 + $0x61] sm:$0xff]
  %v336 = vld [vmem:[#allocation2 + $0x69] sm:$0xff]
  %v337 = vld [vmem:[#allocation2 + $0x79] sm:$0xff]
  %v338 = vld [vmem:[#allocation2 + $0x81] sm:$0xff]
  %v339 = vld [vmem:[#allocation2 + $0x91] sm:$0xff]
  %v340 = vld [vmem:[#allocation2 + $0x99] sm:$0xff]
  %v341 = vld [vmem:[#allocation2 + $0xa9] sm:$0xff]
  %v342 = vld [vmem:[#allocation2 + $0xb1] sm:$0xff]
  %v343 = vld [vmem:[#allocation2 + $0xc1] sm:$0xff]
  %v344 = vld [vmem:[#allocation2 + $0xc9] sm:$0xff]
  %v345 = vld [vmem:[#allocation2 + $0xd9] sm:$0xff]
  %v346 = vld [vmem:[#allocation2 + $0xe1] sm:$0xff]
  %v347 = vld [vmem:[#allocation2 + $0xf1] sm:$0xff]
  %v348 = vld [vmem:[#allocation2 + $0xf9] sm:$0xff]
  %v349 = vld [vmem:[#allocation2 + $0x109] sm:$0xff]
  %v350 = vld [vmem:[#allocation2 + $0x111] sm:$0xff]
  %v351 = vld [vmem:[#allocation2 + $0x121] sm:$0xff]
  %v352 = vld [vmem:[#allocation2 + $0x129] sm:$0xff]
  %v353 = vld [vmem:[#allocation2 + $0x139] sm:$0xff]
  %v354 = vld [vmem:[#allocation2 + $0x141] sm:$0xff]
  %v355 = vld [vmem:[#allocation2 + $0x151] sm:$0xff]
  %v356 = vld [vmem:[#allocation2 + $0x159] sm:$0xff]
  %v357 = vld [vmem:[#allocation2 + $0x169] sm:$0xff]
  %v358 = vld [vmem:[#allocation2 + $0x171] sm:$0xff]
  %v359 = vld [vmem:[%s293 + $0x1] sm:$0xff]
  %v360 = vld [vmem:[%s293 + $0x9] sm:$0xff]
  %v361 = vld [vmem:[%s293 + $0x19] sm:$0xff]
  %v362 = vld [vmem:[%s293 + $0x21] sm:$0xff]
  %v363 = vld [vmem:[%s293 + $0x31] sm:$0xff]
  %v364 = vld [vmem:[%s293 + $0x39] sm:$0xff]
  %v365 = vld [vmem:[%s293 + $0x49] sm:$0xff]
  %v366 = vld [vmem:[%s293 + $0x51] sm:$0xff]
  %v367 = vld [vmem:[%s293 + $0x61] sm:$0xff]
  %v368 = vld [vmem:[%s293 + $0x69] sm:$0xff]
  %v369 = vld [vmem:[%s293 + $0x79] sm:$0xff]
  %v370 = vld [vmem:[%s293 + $0x81] sm:$0xff]
  %v371 = vld [vmem:[%s293 + $0x91] sm:$0xff]
  %v372 = vld [vmem:[%s293 + $0x99] sm:$0xff]
  %v373 = vld [vmem:[%s293 + $0xa9] sm:$0xff]
  %v374 = vld [vmem:[%s293 + $0xb1] sm:$0xff]
  %v375 = vld [vmem:[%s293 + $0xc1] sm:$0xff]
  %v376 = vld [vmem:[%s293 + $0xc9] sm:$0xff]
  %v377 = vld [vmem:[%s293 + $0xd9] sm:$0xff]
  %v378 = vld [vmem:[%s293 + $0xe1] sm:$0xff]
  %v379 = vld [vmem:[%s293 + $0xf1] sm:$0xff]
  %v380 = vld [vmem:[%s293 + $0xf9] sm:$0xff]
  %v381 = vld [vmem:[%s293 + $0x109] sm:$0xff]
  %v382 = vld [vmem:[%s293 + $0x111] sm:$0xff]
  %v383 = vld [vmem:[%s293 + $0x121] sm:$0xff]
  %v384 = vld [vmem:[%s293 + $0x129] sm:$0xff]
  %v385 = vld [vmem:[%s293 + $0x139] sm:$0xff]
  %v386 = vld [vmem:[%s293 + $0x141] sm:$0xff]
  %v387 = vld [vmem:[%s293 + $0x151] sm:$0xff]
  %v388 = vld [vmem:[%s293 + $0x159] sm:$0xff]
  %v389 = vld [vmem:[%s293 + $0x169] sm:$0xff]
  %v390 = vld [vmem:[%s293 + $0x171] sm:$0xff]
  %v391 = vld [vmem:[%s1 + $0x3] sm:$0x7]
  %v393 = vsel %vm20, %v327, 0
  %v396 = vsel %vm20, %v328, 0
  %v399 = vsel %vm20, %v329, 0
  %v402 = vsel %vm20, %v330, 0
  %v405 = vsel %vm20, %v331, 0
  %v408 = vsel %vm20, %v332, 0
  %v411 = vsel %vm20, %v333, 0
  %v414 = vsel %vm20, %v334, 0
  %v417 = vsel %vm20, %v335, 0
  %v420 = vsel %vm20, %v336, 0
  %v423 = vsel %vm20, %v337, 0
  %v426 = vsel %vm20, %v338, 0
  %v429 = vsel %vm20, %v339, 0
  %v432 = vsel %vm20, %v340, 0
  %v435 = vsel %vm20, %v341, 0
  %v438 = vsel %vm20, %v342, 0
  %v441 = vsel %vm20, %v343, 0
  %v444 = vsel %vm20, %v344, 0
  %v447 = vsel %vm20, %v345, 0
  %v450 = vsel %vm20, %v346, 0
  %v453 = vsel %vm20, %v347, 0
  %v456 = vsel %vm20, %v348, 0
  %v459 = vsel %vm20, %v349, 0
  %v462 = vsel %vm20, %v350, 0
  %v465 = vsel %vm20, %v351, 0
  %v468 = vsel %vm20, %v352, 0
  %v471 = vsel %vm20, %v353, 0
  %v474 = vsel %vm20, %v354, 0
  %v477 = vsel %vm20, %v355, 0
  %v480 = vsel %vm20, %v356, 0
  %v483 = vsel %vm20, %v357, 0
  %v486 = vsel %vm20, %v358, 0
  %v489 = vsel %vm20, %v359, 0
  %v492 = vsel %vm20, %v360, 0
  %v495 = vsel %vm20, %v361, 0
  %v498 = vsel %vm20, %v362, 0
  %v501 = vsel %vm20, %v363, 0
  %v504 = vsel %vm20, %v364, 0
  %v507 = vsel %vm20, %v365, 0
  %v510 = vsel %vm20, %v366, 0
  %v513 = vsel %vm20, %v367, 0
  %v516 = vsel %vm20, %v368, 0
  %v519 = vsel %vm20, %v369, 0
  %v522 = vsel %vm20, %v370, 0
  %v525 = vsel %vm20, %v371, 0
  %v528 = vsel %vm20, %v372, 0
  %v531 = vsel %vm20, %v373, 0
  %v534 = vsel %vm20, %v374, 0
  %v537 = vsel %vm20, %v375, 0
  %v540 = vsel %vm20, %v376, 0
  %v543 = vsel %vm20, %v377, 0
  %v546 = vsel %vm20, %v378, 0
  %v549 = vsel %vm20, %v379, 0
  %v552 = vsel %vm20, %v380, 0
  %v555 = vsel %vm20, %v381, 0
  %v558 = vsel %vm20, %v382, 0
  %v561 = vsel %vm20, %v383, 0
  %v564 = vsel %vm20, %v384, 0
  %v567 = vsel %vm20, %v385, 0
  %v570 = vsel %vm20, %v386, 0
  %v573 = vsel %vm20, %v387, 0
  %v576 = vsel %vm20, %v388, 0
  %v579 = vsel %vm20, %v389, 0
  %v582 = vsel %vm20, %v390, 0
  %vm584 = vcmask 1042432
  %v586 = vsel %vm584, %v391, 0
  %588 = vmatprep.subr.mxu0 0.0
  %589 = vmatpush1.msra.mxu0 %v586
  %590 = vmatprep.subr.mxu0 0.0
  %591 = vmatpush1.msra.mxu0 0.0
  %592 = vmatprep.subr.mxu0 0.0
  %593 = vmatpush1.msra.mxu0 0.0
  %594 = vmatprep.subr.mxu0 0.0
  %595 = vmatpush1.msra.mxu0 0.0
  %596 = vmatprep.subr.mxu0 0.0
  %597 = vmatpush1.msra.mxu0 0.0
  %598 = vmatprep.subr.mxu0 0.0
  %599 = vmatpush1.msra.mxu0 0.0
  %600 = vmatprep.subr.mxu0 0.0
  %601 = vmatpush1.msra.mxu0 0.0
  %602 = vmatprep.subr.mxu0 0.0
  %603 = vmatpush1.msra.mxu0 0.0
  %604 = vmatprep.subr.mxu0 0.0
  %605 = vmatpush1.msra.mxu0 0.0
  %606 = vmatprep.subr.mxu0 0.0
  %607 = vmatpush1.msra.mxu0 0.0
  %608 = vmatprep.subr.mxu0 0.0
  %609 = vmatpush1.msra.mxu0 0.0
  %610 = vmatprep.subr.mxu0 0.0
  %611 = vmatpush1.msra.mxu0 0.0
  %612 = vmatprep.subr.mxu0 0.0
  %613 = vmatpush1.msra.mxu0 0.0
  %614 = vmatprep.subr.mxu0 0.0
  %615 = vmatpush1.msra.mxu0 0.0
  %616 = vmatprep.subr.mxu0 0.0
  %617 = vmatpush1.msra.mxu0 0.0
  %618 = vmatprep.subr.mxu0 0.0
  %619 = vmatpush1.msra.mxu0 0.0
  %620 = vmatprep.subr.mxu0 0.0
  %621 = vmatpush1.msra.mxu0 0.0
  %622 = vmatprep.subr.mxu0 0.0
  %623 = vmatpush1.msra.mxu0 0.0
  %624 = vmatprep.subr.mxu0 0.0
  %625 = vmatpush1.msra.mxu0 0.0
  %626 = vmatprep.subr.mxu0 0.0
  %627 = vmatpush1.msra.mxu0 0.0
  %628 = vmatprep.subr.mxu0 0.0
  %629 = vmatpush1.msra.mxu0 0.0
  %630 = vmatprep.subr.mxu0 0.0
  %631 = vmatpush1.msra.mxu0 0.0
  %632 = vmatprep.subr.mxu0 0.0
  %633 = vmatpush1.msra.mxu0 0.0
  %634 = vmatprep.subr.mxu0 0.0
  %635 = vmatpush1.msra.mxu0 0.0
  %636 = vmatprep.subr.mxu0 0.0
  %637 = vmatpush1.msra.mxu0 0.0
  %638 = vmatprep.subr.mxu0 0.0
  %639 = vmatpush1.msra.mxu0 0.0
  %640 = vmatprep.subr.mxu0 0.0
  %641 = vmatpush1.msra.mxu0 0.0
  %642 = vmatprep.subr.mxu0 0.0
  %643 = vmatpush1.msra.mxu0 0.0
  %644 = vmatprep.subr.mxu0 0.0
  %645 = vmatpush1.msra.mxu0 0.0
  %646 = vmatprep.subr.mxu0 0.0
  %647 = vmatpush1.msra.mxu0 0.0
  %648 = vmatprep.subr.mxu0 0.0
  %649 = vmatpush1.msra.mxu0 0.0
  %650 = vmatprep.subr.mxu0 0.0
  %651 = vmatpush1.msra.mxu0 0.0
  %652 = vmatprep.mubr.f32.mxu0 0.0
  %653 = vmatmul.mubr.f32.gmra.mrb[0].mxu0 %v393
  %v654 = vpop.f32.mrb[0].mxu0
  %v655 = vadd.f32 0.0, %v654
  %v656 = vpop.f32.mrb[0].mxu0
  %657 = vmatprep.mubr.f32.mxu0 0.0
  %658 = vmatmul.mubr.f32.gmra.mrb[0].mxu0 %v396
  %v659 = vpop.f32.mrb[0].mxu0
  %v660 = vadd.f32 0.0, %v659
  %v661 = vpop.f32.mrb[0].mxu0
  %662 = vmatprep.mubr.f32.mxu0 0.0
  %663 = vmatmul.mubr.f32.gmra.mrb[0].mxu0 %v399
  %v664 = vpop.f32.mrb[0].mxu0
  %v665 = vadd.f32 0.0, %v664
  %v666 = vpop.f32.mrb[0].mxu0
  %667 = vmatprep.mubr.f32.mxu0 0.0
  %668 = vmatmul.mubr.f32.gmra.mrb[0].mxu0 %v402
  %v669 = vpop.f32.mrb[0].mxu0
  %v670 = vadd.f32 0.0, %v669
  %v671 = vpop.f32.mrb[0].mxu0
  %672 = vmatprep.mubr.f32.mxu0 0.0
  %673 = vmatmul.mubr.f32.gmra.mrb[0].mxu0 %v405
  %v674 = vpop.f32.mrb[0].mxu0
  %v675 = vadd.f32 0.0, %v674
  %v676 = vpop.f32.mrb[0].mxu0
  %677 = vmatprep.mubr.f32.mxu0 0.0
  %678 = vmatmul.mubr.f32.gmra.mrb[0].mxu0 %v408
  %v679 = vpop.f32.mrb[0].mxu0
  %v680 = vadd.f32 0.0, %v679
  %v681 = vpop.f32.mrb[0].mxu0
  %682 = vmatprep.mubr.f32.mxu0 0.0
  %683 = vmatmul.mubr.f32.gmra.mrb[0].mxu0 %v411
  %v684 = vpop.f32.mrb[0].mxu0
  %v685 = vadd.f32 0.0, %v684
  %v686 = vpop.f32.mrb[0].mxu0
  %687 = vmatprep.mubr.f32.mxu0 0.0
  %688 = vmatmul.mubr.f32.gmra.mrb[0].mxu0 %v414
  %v689 = vpop.f32.mrb[0].mxu0
  %v690 = vadd.f32 0.0, %v689
  %v691 = vpop.f32.mrb[0].mxu0
  %692 = vmatprep.mubr.f32.mxu0 0.0
  %693 = vmatmul.mubr.f32.gmra.mrb[0].mxu0 %v417
  %v694 = vpop.f32.mrb[0].mxu0
  %v695 = vadd.f32 0.0, %v694
  %v696 = vpop.f32.mrb[0].mxu0
  %697 = vmatprep.mubr.f32.mxu0 0.0
  %698 = vmatmul.mubr.f32.gmra.mrb[0].mxu0 %v420
  %v699 = vpop.f32.mrb[0].mxu0
  %v700 = vadd.f32 0.0, %v699
  %v701 = vpop.f32.mrb[0].mxu0
  %702 = vmatprep.mubr.f32.mxu0 0.0
  %703 = vmatmul.mubr.f32.gmra.mrb[0].mxu0 %v423
  %v704 = vpop.f32.mrb[0].mxu0
  %v705 = vadd.f32 0.0, %v704
  %v706 = vpop.f32.mrb[0].mxu0
  %707 = vmatprep.mubr.f32.mxu0 0.0
  %708 = vmatmul.mubr.f32.gmra.mrb[0].mxu0 %v426
  %v709 = vpop.f32.mrb[0].mxu0
  %v710 = vadd.f32 0.0, %v709
  %v711 = vpop.f32.mrb[0].mxu0
  %712 = vmatprep.mubr.f32.mxu0 0.0
  %713 = vmatmul.mubr.f32.gmra.mrb[0].mxu0 %v429
  %v714 = vpop.f32.mrb[0].mxu0
  %v715 = vadd.f32 0.0, %v714
  %v716 = vpop.f32.mrb[0].mxu0
  %717 = vmatprep.mubr.f32.mxu0 0.0
  %718 = vmatmul.mubr.f32.gmra.mrb[0].mxu0 %v432
  %v719 = vpop.f32.mrb[0].mxu0
  %v720 = vadd.f32 0.0, %v719
  %v721 = vpop.f32.mrb[0].mxu0
  %722 = vmatprep.mubr.f32.mxu0 0.0
  %723 = vmatmul.mubr.f32.gmra.mrb[0].mxu0 %v435
  %v724 = vpop.f32.mrb[0].mxu0
  %v725 = vadd.f32 0.0, %v724
  %v726 = vpop.f32.mrb[0].mxu0
  %727 = vmatprep.mubr.f32.mxu0 0.0
  %728 = vmatmul.mubr.f32.gmra.mrb[0].mxu0 %v438
  %v729 = vpop.f32.mrb[0].mxu0
  %v730 = vadd.f32 0.0, %v729
  %v731 = vpop.f32.mrb[0].mxu0
  %732 = vmatprep.mubr.f32.mxu0 0.0
  %733 = vmatmul.mubr.f32.gmra.mrb[0].mxu0 %v441
  %v734 = vpop.f32.mrb[0].mxu0
  %v735 = vadd.f32 0.0, %v734
  %v736 = vpop.f32.mrb[0].mxu0
  %737 = vmatprep.mubr.f32.mxu0 0.0
  %738 = vmatmul.mubr.f32.gmra.mrb[0].mxu0 %v444
  %v739 = vpop.f32.mrb[0].mxu0
  %v740 = vadd.f32 0.0, %v739
  %v741 = vpop.f32.mrb[0].mxu0
  %742 = vmatprep.mubr.f32.mxu0 0.0
  %743 = vmatmul.mubr.f32.gmra.mrb[0].mxu0 %v447
  %v744 = vpop.f32.mrb[0].mxu0
  %v745 = vadd.f32 0.0, %v744
  %v746 = vpop.f32.mrb[0].mxu0
  %747 = vmatprep.mubr.f32.mxu0 0.0
  %748 = vmatmul.mubr.f32.gmra.mrb[0].mxu0 %v450
  %v749 = vpop.f32.mrb[0].mxu0
  %v750 = vadd.f32 0.0, %v749
  %v751 = vpop.f32.mrb[0].mxu0
  %752 = vmatprep.mubr.f32.mxu0 0.0
  %753 = vmatmul.mubr.f32.gmra.mrb[0].mxu0 %v453
  %v754 = vpop.f32.mrb[0].mxu0
  %v755 = vadd.f32 0.0, %v754
  %v756 = vpop.f32.mrb[0].mxu0
  %757 = vmatprep.mubr.f32.mxu0 0.0
  %758 = vmatmul.mubr.f32.gmra.mrb[0].mxu0 %v456
  %v759 = vpop.f32.mrb[0].mxu0
  %v760 = vadd.f32 0.0, %v759
  %v761 = vpop.f32.mrb[0].mxu0
  %762 = vmatprep.mubr.f32.mxu0 0.0
  %763 = vmatmul.mubr.f32.gmra.mrb[0].mxu0 %v459
  %v764 = vpop.f32.mrb[0].mxu0
  %v765 = vadd.f32 0.0, %v764
  %v766 = vpop.f32.mrb[0].mxu0
  %767 = vmatprep.mubr.f32.mxu0 0.0
  %768 = vmatmul.mubr.f32.gmra.mrb[0].mxu0 %v462
  %v769 = vpop.f32.mrb[0].mxu0
  %v770 = vadd.f32 0.0, %v769
  %v771 = vpop.f32.mrb[0].mxu0
  %772 = vmatprep.mubr.f32.mxu0 0.0
  %773 = vmatmul.mubr.f32.gmra.mrb[0].mxu0 %v465
  %v774 = vpop.f32.mrb[0].mxu0
  %v775 = vadd.f32 0.0, %v774
  %v776 = vpop.f32.mrb[0].mxu0
  %777 = vmatprep.mubr.f32.mxu0 0.0
  %778 = vmatmul.mubr.f32.gmra.mrb[0].mxu0 %v468
  %v779 = vpop.f32.mrb[0].mxu0
  %v780 = vadd.f32 0.0, %v779
  %v781 = vpop.f32.mrb[0].mxu0
  %782 = vmatprep.mubr.f32.mxu0 0.0
  %783 = vmatmul.mubr.f32.gmra.mrb[0].mxu0 %v471
  %v784 = vpop.f32.mrb[0].mxu0
  %v785 = vadd.f32 0.0, %v784
  %v786 = vpop.f32.mrb[0].mxu0
  %787 = vmatprep.mubr.f32.mxu0 0.0
  %788 = vmatmul.mubr.f32.gmra.mrb[0].mxu0 %v474
  %v789 = vpop.f32.mrb[0].mxu0
  %v790 = vadd.f32 0.0, %v789
  %v791 = vpop.f32.mrb[0].mxu0
  %792 = vmatprep.mubr.f32.mxu0 0.0
  %793 = vmatmul.mubr.f32.gmra.mrb[0].mxu0 %v477
  %v794 = vpop.f32.mrb[0].mxu0
  %v795 = vadd.f32 0.0, %v794
  %v796 = vpop.f32.mrb[0].mxu0
  %797 = vmatprep.mubr.f32.mxu0 0.0
  %798 = vmatmul.mubr.f32.gmra.mrb[0].mxu0 %v480
  %v799 = vpop.f32.mrb[0].mxu0
  %v800 = vadd.f32 0.0, %v799
  %v801 = vpop.f32.mrb[0].mxu0
  %802 = vmatprep.mubr.f32.mxu0 0.0
  %803 = vmatmul.mubr.f32.gmra.mrb[0].mxu0 %v483
  %v804 = vpop.f32.mrb[0].mxu0
  %v805 = vadd.f32 0.0, %v804
  %v806 = vpop.f32.mrb[0].mxu0
  %807 = vmatprep.mubr.f32.mxu0 0.0
  %808 = vmatmul.mubr.f32.gmra.mrb[0].mxu0 %v486
  %v809 = vpop.f32.mrb[0].mxu0
  %v810 = vadd.f32 0.0, %v809
  %v811 = vpop.f32.mrb[0].mxu0
  %812 = vmatprep.mubr.f32.mxu0 0.0
  %813 = vmatmul.mubr.f32.gmra.mrb[0].mxu0 %v489
  %v814 = vpop.f32.mrb[0].mxu0
  %v815 = vadd.f32 0.0, %v814
  %v816 = vpop.f32.mrb[0].mxu0
  %817 = vmatprep.mubr.f32.mxu0 0.0
  %818 = vmatmul.mubr.f32.gmra.mrb[0].mxu0 %v492
  %v819 = vpop.f32.mrb[0].mxu0
  %v820 = vadd.f32 0.0, %v819
  %v821 = vpop.f32.mrb[0].mxu0
  %822 = vmatprep.mubr.f32.mxu0 0.0
  %823 = vmatmul.mubr.f32.gmra.mrb[0].mxu0 %v495
  %v824 = vpop.f32.mrb[0].mxu0
  %v825 = vadd.f32 0.0, %v824
  %v826 = vpop.f32.mrb[0].mxu0
  %827 = vmatprep.mubr.f32.mxu0 0.0
  %828 = vmatmul.mubr.f32.gmra.mrb[0].mxu0 %v498
  %v829 = vpop.f32.mrb[0].mxu0
  %v830 = vadd.f32 0.0, %v829
  %v831 = vpop.f32.mrb[0].mxu0
  %832 = vmatprep.mubr.f32.mxu0 0.0
  %833 = vmatmul.mubr.f32.gmra.mrb[0].mxu0 %v501
  %v834 = vpop.f32.mrb[0].mxu0
  %v835 = vadd.f32 0.0, %v834
  %v836 = vpop.f32.mrb[0].mxu0
  %837 = vmatprep.mubr.f32.mxu0 0.0
  %838 = vmatmul.mubr.f32.gmra.mrb[0].mxu0 %v504
  %v839 = vpop.f32.mrb[0].mxu0
  %v840 = vadd.f32 0.0, %v839
  %v841 = vpop.f32.mrb[0].mxu0
  %842 = vmatprep.mubr.f32.mxu0 0.0
  %843 = vmatmul.mubr.f32.gmra.mrb[0].mxu0 %v507
  %v844 = vpop.f32.mrb[0].mxu0
  %v845 = vadd.f32 0.0, %v844
  %v846 = vpop.f32.mrb[0].mxu0
  %847 = vmatprep.mubr.f32.mxu0 0.0
  %848 = vmatmul.mubr.f32.gmra.mrb[0].mxu0 %v510
  %v849 = vpop.f32.mrb[0].mxu0
  %v850 = vadd.f32 0.0, %v849
  %v851 = vpop.f32.mrb[0].mxu0
  %852 = vmatprep.mubr.f32.mxu0 0.0
  %853 = vmatmul.mubr.f32.gmra.mrb[0].mxu0 %v513
  %v854 = vpop.f32.mrb[0].mxu0
  %v855 = vadd.f32 0.0, %v854
  %v856 = vpop.f32.mrb[0].mxu0
  %857 = vmatprep.mubr.f32.mxu0 0.0
  %858 = vmatmul.mubr.f32.gmra.mrb[0].mxu0 %v516
  %v859 = vpop.f32.mrb[0].mxu0
  %v860 = vadd.f32 0.0, %v859
  %v861 = vpop.f32.mrb[0].mxu0
  %862 = vmatprep.mubr.f32.mxu0 0.0
  %863 = vmatmul.mubr.f32.gmra.mrb[0].mxu0 %v519
  %v864 = vpop.f32.mrb[0].mxu0
  %v865 = vadd.f32 0.0, %v864
  %v866 = vpop.f32.mrb[0].mxu0
  %867 = vmatprep.mubr.f32.mxu0 0.0
  %868 = vmatmul.mubr.f32.gmra.mrb[0].mxu0 %v522
  %v869 = vpop.f32.mrb[0].mxu0
  %v870 = vadd.f32 0.0, %v869
  %v871 = vpop.f32.mrb[0].mxu0
  %872 = vmatprep.mubr.f32.mxu0 0.0
  %873 = vmatmul.mubr.f32.gmra.mrb[0].mxu0 %v525
  %v874 = vpop.f32.mrb[0].mxu0
  %v875 = vadd.f32 0.0, %v874
  %v876 = vpop.f32.mrb[0].mxu0
  %877 = vmatprep.mubr.f32.mxu0 0.0
  %878 = vmatmul.mubr.f32.gmra.mrb[0].mxu0 %v528
  %v879 = vpop.f32.mrb[0].mxu0
  %v880 = vadd.f32 0.0, %v879
  %v881 = vpop.f32.mrb[0].mxu0
  %882 = vmatprep.mubr.f32.mxu0 0.0
  %883 = vmatmul.mubr.f32.gmra.mrb[0].mxu0 %v531
  %v884 = vpop.f32.mrb[0].mxu0
  %v885 = vadd.f32 0.0, %v884
  %v886 = vpop.f32.mrb[0].mxu0
  %887 = vmatprep.mubr.f32.mxu0 0.0
  %888 = vmatmul.mubr.f32.gmra.mrb[0].mxu0 %v534
  %v889 = vpop.f32.mrb[0].mxu0
  %v890 = vadd.f32 0.0, %v889
  %v891 = vpop.f32.mrb[0].mxu0
  %892 = vmatprep.mubr.f32.mxu0 0.0
  %893 = vmatmul.mubr.f32.gmra.mrb[0].mxu0 %v537
  %v894 = vpop.f32.mrb[0].mxu0
  %v895 = vadd.f32 0.0, %v894
  %v896 = vpop.f32.mrb[0].mxu0
  %897 = vmatprep.mubr.f32.mxu0 0.0
  %898 = vmatmul.mubr.f32.gmra.mrb[0].mxu0 %v540
  %v899 = vpop.f32.mrb[0].mxu0
  %v900 = vadd.f32 0.0, %v899
  %v901 = vpop.f32.mrb[0].mxu0
  %902 = vmatprep.mubr.f32.mxu0 0.0
  %903 = vmatmul.mubr.f32.gmra.mrb[0].mxu0 %v543
  %v904 = vpop.f32.mrb[0].mxu0
  %v905 = vadd.f32 0.0, %v904
  %v906 = vpop.f32.mrb[0].mxu0
  %907 = vmatprep.mubr.f32.mxu0 0.0
  %908 = vmatmul.mubr.f32.gmra.mrb[0].mxu0 %v546
  %v909 = vpop.f32.mrb[0].mxu0
  %v910 = vadd.f32 0.0, %v909
  %v911 = vpop.f32.mrb[0].mxu0
  %912 = vmatprep.mubr.f32.mxu0 0.0
  %913 = vmatmul.mubr.f32.gmra.mrb[0].mxu0 %v549
  %v914 = vpop.f32.mrb[0].mxu0
  %v915 = vadd.f32 0.0, %v914
  %v916 = vpop.f32.mrb[0].mxu0
  %917 = vmatprep.mubr.f32.mxu0 0.0
  %918 = vmatmul.mubr.f32.gmra.mrb[0].mxu0 %v552
  %v919 = vpop.f32.mrb[0].mxu0
  %v920 = vadd.f32 0.0, %v919
  %v921 = vpop.f32.mrb[0].mxu0
  %922 = vmatprep.mubr.f32.mxu0 0.0
  %923 = vmatmul.mubr.f32.gmra.mrb[0].mxu0 %v555
  %v924 = vpop.f32.mrb[0].mxu0
  %v925 = vadd.f32 0.0, %v924
  %v926 = vpop.f32.mrb[0].mxu0
  %927 = vmatprep.mubr.f32.mxu0 0.0
  %928 = vmatmul.mubr.f32.gmra.mrb[0].mxu0 %v558
  %v929 = vpop.f32.mrb[0].mxu0
  %v930 = vadd.f32 0.0, %v929
  %v931 = vpop.f32.mrb[0].mxu0
  %932 = vmatprep.mubr.f32.mxu0 0.0
  %933 = vmatmul.mubr.f32.gmra.mrb[0].mxu0 %v561
  %v934 = vpop.f32.mrb[0].mxu0
  %v935 = vadd.f32 0.0, %v934
  %v936 = vpop.f32.mrb[0].mxu0
  %937 = vmatprep.mubr.f32.mxu0 0.0
  %938 = vmatmul.mubr.f32.gmra.mrb[0].mxu0 %v564
  %v939 = vpop.f32.mrb[0].mxu0
  %v940 = vadd.f32 0.0, %v939
  %v941 = vpop.f32.mrb[0].mxu0
  %942 = vmatprep.mubr.f32.mxu0 0.0
  %943 = vmatmul.mubr.f32.gmra.mrb[0].mxu0 %v567
  %v944 = vpop.f32.mrb[0].mxu0
  %v945 = vadd.f32 0.0, %v944
  %v946 = vpop.f32.mrb[0].mxu0
  %947 = vmatprep.mubr.f32.mxu0 0.0
  %948 = vmatmul.mubr.f32.gmra.mrb[0].mxu0 %v570
  %v949 = vpop.f32.mrb[0].mxu0
  %v950 = vadd.f32 0.0, %v949
  %v951 = vpop.f32.mrb[0].mxu0
  %952 = vmatprep.mubr.f32.mxu0 0.0
  %953 = vmatmul.mubr.f32.gmra.mrb[0].mxu0 %v573
  %v954 = vpop.f32.mrb[0].mxu0
  %v955 = vadd.f32 0.0, %v954
  %v956 = vpop.f32.mrb[0].mxu0
  %957 = vmatprep.mubr.f32.mxu0 0.0
  %958 = vmatmul.mubr.f32.gmra.mrb[0].mxu0 %v576
  %v959 = vpop.f32.mrb[0].mxu0
  %v960 = vadd.f32 0.0, %v959
  %v961 = vpop.f32.mrb[0].mxu0
  %962 = vmatprep.mubr.f32.mxu0 0.0
  %963 = vmatmul.mubr.f32.gmra.mrb[0].mxu0 %v579
  %v964 = vpop.f32.mrb[0].mxu0
  %v965 = vadd.f32 0.0, %v964
  %v966 = vpop.f32.mrb[0].mxu0
  %967 = vmatprep.mubr.f32.mxu0 0.0
  %968 = vmatmul.mubr.f32.gmra.mrb[0].mxu0 %v582
  %v969 = vpop.f32.mrb[0].mxu0
  %v970 = vadd.f32 0.0, %v969
  %v971 = vpop.f32.mrb[0].mxu0
  %972 = vdwg.mxu0
  %v974 = vsel %vm20, %v261, 0
  %v977 = vsel %vm20, %v262, 0
  %v980 = vsel %vm20, %v263, 0
  %v983 = vsel %vm20, %v264, 0
  %v986 = vsel %vm20, %v265, 0
  %v989 = vsel %vm20, %v266, 0
  %v992 = vsel %vm20, %v267, 0
  %v995 = vsel %vm20, %v268, 0
  %v998 = vsel %vm20, %v269, 0
  %v1001 = vsel %vm20, %v270, 0
  %v1004 = vsel %vm20, %v271, 0
  %v1007 = vsel %vm20, %v272, 0
  %v1010 = vsel %vm20, %v273, 0
  %v1013 = vsel %vm20, %v274, 0
  %v1016 = vsel %vm20, %v275, 0
  %v1019 = vsel %vm20, %v276, 0
  %v1022 = vsel %vm20, %v277, 0
  %v1025 = vsel %vm20, %v278, 0
  %v1028 = vsel %vm20, %v279, 0
  %v1031 = vsel %vm20, %v280, 0
  %v1034 = vsel %vm20, %v281, 0
  %v1037 = vsel %vm20, %v282, 0
  %v1040 = vsel %vm20, %v283, 0
  %v1043 = vsel %vm20, %v284, 0
  %v1046 = vsel %vm20, %v285, 0
  %v1049 = vsel %vm20, %v286, 0
  %v1052 = vsel %vm20, %v287, 0
  %v1055 = vsel %vm20, %v288, 0
  %v1058 = vsel %vm20, %v289, 0
  %v1061 = vsel %vm20, %v290, 0
  %v1064 = vsel %vm20, %v291, 0
  %v1067 = vsel %vm20, %v292, 0
  %v1070 = vsel %vm20, %v294, 0
  %v1073 = vsel %vm20, %v295, 0
  %v1076 = vsel %vm20, %v296, 0
  %v1079 = vsel %vm20, %v297, 0
  %v1082 = vsel %vm20, %v298, 0
  %v1085 = vsel %vm20, %v299, 0
  %v1088 = vsel %vm20, %v300, 0
  %v1091 = vsel %vm20, %v301, 0
  %v1094 = vsel %vm20, %v302, 0
  %v1097 = vsel %vm20, %v303, 0
  %v1100 = vsel %vm20, %v304, 0
  %v1103 = vsel %vm20, %v305, 0
  %v1106 = vsel %vm20, %v306, 0
  %v1109 = vsel %vm20, %v307, 0
  %v1112 = vsel %vm20, %v308, 0
  %v1115 = vsel %vm20, %v309, 0
  %v1118 = vsel %vm20, %v310, 0
  %v1121 = vsel %vm20, %v311, 0
  %v1124 = vsel %vm20, %v312, 0
  %v1127 = vsel %vm20, %v313, 0
  %v1130 = vsel %vm20, %v314, 0
  %v1133 = vsel %vm20, %v315, 0
  %v1136 = vsel %vm20, %v316, 0
  %v1139 = vsel %vm20, %v317, 0
  %v1142 = vsel %vm20, %v318, 0
  %v1145 = vsel %vm20, %v319, 0
  %v1148 = vsel %vm20, %v320, 0
  %v1151 = vsel %vm20, %v321, 0
  %v1154 = vsel %vm20, %v322, 0
  %v1157 = vsel %vm20, %v323, 0
  %v1160 = vsel %vm20, %v324, 0
  %v1163 = vsel %vm20, %v325, 0
  %v1166 = vsel %vm584, %v326, 0
  %1168 = vmatprep.subr.mxu0 0.0
  %1169 = vmatpush1.msra.mxu0 %v1166
  %1170 = vmatprep.subr.mxu0 0.0
  %1171 = vmatpush1.msra.mxu0 0.0
  %1172 = vmatprep.subr.mxu0 0.0
  %1173 = vmatpush1.msra.mxu0 0.0
  %1174 = vmatprep.subr.mxu0 0.0
  %1175 = vmatpush1.msra.mxu0 0.0
  %1176 = vmatprep.subr.mxu0 0.0
  %1177 = vmatpush1.msra.mxu0 0.0
  %1178 = vmatprep.subr.mxu0 0.0
  %1179 = vmatpush1.msra.mxu0 0.0
  %1180 = vmatprep.subr.mxu0 0.0
  %1181 = vmatpush1.msra.mxu0 0.0
  %1182 = vmatprep.subr.mxu0 0.0
  %1183 = vmatpush1.msra.mxu0 0.0
  %1184 = vmatprep.subr.mxu0 0.0
  %1185 = vmatpush1.msra.mxu0 0.0
  %1186 = vmatprep.subr.mxu0 0.0
  %1187 = vmatpush1.msra.mxu0 0.0
  %1188 = vmatprep.subr.mxu0 0.0
  %1189 = vmatpush1.msra.mxu0 0.0
  %1190 = vmatprep.subr.mxu0 0.0
  %1191 = vmatpush1.msra.mxu0 0.0
  %1192 = vmatprep.subr.mxu0 0.0
  %1193 = vmatpush1.msra.mxu0 0.0
  %1194 = vmatprep.subr.mxu0 0.0
  %1195 = vmatpush1.msra.mxu0 0.0
  %1196 = vmatprep.subr.mxu0 0.0
  %1197 = vmatpush1.msra.mxu0 0.0
  %1198 = vmatprep.subr.mxu0 0.0
  %1199 = vmatpush1.msra.mxu0 0.0
  %1200 = vmatprep.subr.mxu0 0.0
  %1201 = vmatpush1.msra.mxu0 0.0
  %1202 = vmatprep.subr.mxu0 0.0
  %1203 = vmatpush1.msra.mxu0 0.0
  %1204 = vmatprep.subr.mxu0 0.0
  %1205 = vmatpush1.msra.mxu0 0.0
  %1206 = vmatprep.subr.mxu0 0.0
  %1207 = vmatpush1.msra.mxu0 0.0
  %1208 = vmatprep.subr.mxu0 0.0
  %1209 = vmatpush1.msra.mxu0 0.0
  %1210 = vmatprep.subr.mxu0 0.0
  %1211 = vmatpush1.msra.mxu0 0.0
  %1212 = vmatprep.subr.mxu0 0.0
  %1213 = vmatpush1.msra.mxu0 0.0
  %1214 = vmatprep.subr.mxu0 0.0
  %1215 = vmatpush1.msra.mxu0 0.0
  %1216 = vmatprep.subr.mxu0 0.0
  %1217 = vmatpush1.msra.mxu0 0.0
  %1218 = vmatprep.subr.mxu0 0.0
  %1219 = vmatpush1.msra.mxu0 0.0
  %1220 = vmatprep.subr.mxu0 0.0
  %1221 = vmatpush1.msra.mxu0 0.0
  %1222 = vmatprep.subr.mxu0 0.0
  %1223 = vmatpush1.msra.mxu0 0.0
  %1224 = vmatprep.subr.mxu0 0.0
  %1225 = vmatpush1.msra.mxu0 0.0
  %1226 = vmatprep.subr.mxu0 0.0
  %1227 = vmatpush1.msra.mxu0 0.0
  %1228 = vmatprep.subr.mxu0 0.0
  %1229 = vmatpush1.msra.mxu0 0.0
  %1230 = vmatprep.subr.mxu0 0.0
  %1231 = vmatpush1.msra.mxu0 0.0
  %1232 = vmatprep.mubr.f32.mxu0 0.0
  %1233 = vmatmul.mubr.f32.gmra.mrb[0].mxu0 %v974
  %v1234 = vpop.f32.mrb[0].mxu0
  %v1235 = vadd.f32 %v655, %v1234
  %v1236 = vpop.f32.mrb[0].mxu0
  %1237 = vmatprep.mubr.f32.mxu0 0.0
  %1238 = vmatmul.mubr.f32.gmra.mrb[0].mxu0 %v977
  %v1239 = vpop.f32.mrb[0].mxu0
  %v1240 = vadd.f32 %v660, %v1239
  %v1241 = vpop.f32.mrb[0].mxu0
  %1242 = vmatprep.mubr.f32.mxu0 0.0
  %1243 = vmatmul.mubr.f32.gmra.mrb[0].mxu0 %v980
  %v1244 = vpop.f32.mrb[0].mxu0
  %v1245 = vadd.f32 %v665, %v1244
  %v1246 = vpop.f32.mrb[0].mxu0
  %1247 = vmatprep.mubr.f32.mxu0 0.0
  %1248 = vmatmul.mubr.f32.gmra.mrb[0].mxu0 %v983
  %v1249 = vpop.f32.mrb[0].mxu0
  %v1250 = vadd.f32 %v670, %v1249
  %v1251 = vpop.f32.mrb[0].mxu0
  %1252 = vmatprep.mubr.f32.mxu0 0.0
  %1253 = vmatmul.mubr.f32.gmra.mrb[0].mxu0 %v986
  %v1254 = vpop.f32.mrb[0].mxu0
  %v1255 = vadd.f32 %v675, %v1254
  %v1256 = vpop.f32.mrb[0].mxu0
  %1257 = vmatprep.mubr.f32.mxu0 0.0
  %1258 = vmatmul.mubr.f32.gmra.mrb[0].mxu0 %v989
  %v1259 = vpop.f32.mrb[0].mxu0
  %v1260 = vadd.f32 %v680, %v1259
  %v1261 = vpop.f32.mrb[0].mxu0
  %1262 = vmatprep.mubr.f32.mxu0 0.0
  %1263 = vmatmul.mubr.f32.gmra.mrb[0].mxu0 %v992
  %v1264 = vpop.f32.mrb[0].mxu0
  %v1265 = vadd.f32 %v685, %v1264
  %v1266 = vpop.f32.mrb[0].mxu0
  %1267 = vmatprep.mubr.f32.mxu0 0.0
  %1268 = vmatmul.mubr.f32.gmra.mrb[0].mxu0 %v995
  %v1269 = vpop.f32.mrb[0].mxu0
  %v1270 = vadd.f32 %v690, %v1269
  %v1271 = vpop.f32.mrb[0].mxu0
  %1272 = vmatprep.mubr.f32.mxu0 0.0
  %1273 = vmatmul.mubr.f32.gmra.mrb[0].mxu0 %v998
  %v1274 = vpop.f32.mrb[0].mxu0
  %v1275 = vadd.f32 %v695, %v1274
  %v1276 = vpop.f32.mrb[0].mxu0
  %1277 = vmatprep.mubr.f32.mxu0 0.0
  %1278 = vmatmul.mubr.f32.gmra.mrb[0].mxu0 %v1001
  %v1279 = vpop.f32.mrb[0].mxu0
  %v1280 = vadd.f32 %v700, %v1279
  %v1281 = vpop.f32.mrb[0].mxu0
  %1282 = vmatprep.mubr.f32.mxu0 0.0
  %1283 = vmatmul.mubr.f32.gmra.mrb[0].mxu0 %v1004
  %v1284 = vpop.f32.mrb[0].mxu0
  %v1285 = vadd.f32 %v705, %v1284
  %v1286 = vpop.f32.mrb[0].mxu0
  %1287 = vmatprep.mubr.f32.mxu0 0.0
  %1288 = vmatmul.mubr.f32.gmra.mrb[0].mxu0 %v1007
  %v1289 = vpop.f32.mrb[0].mxu0
  %v1290 = vadd.f32 %v710, %v1289
  %v1291 = vpop.f32.mrb[0].mxu0
  %1292 = vmatprep.mubr.f32.mxu0 0.0
  %1293 = vmatmul.mubr.f32.gmra.mrb[0].mxu0 %v1010
  %v1294 = vpop.f32.mrb[0].mxu0
  %v1295 = vadd.f32 %v715, %v1294
  %v1296 = vpop.f32.mrb[0].mxu0
  %1297 = vmatprep.mubr.f32.mxu0 0.0
  %1298 = vmatmul.mubr.f32.gmra.mrb[0].mxu0 %v1013
  %v1299 = vpop.f32.mrb[0].mxu0
  %v1300 = vadd.f32 %v720, %v1299
  %v1301 = vpop.f32.mrb[0].mxu0
  %1302 = vmatprep.mubr.f32.mxu0 0.0
  %1303 = vmatmul.mubr.f32.gmra.mrb[0].mxu0 %v1016
  %v1304 = vpop.f32.mrb[0].mxu0
  %v1305 = vadd.f32 %v725, %v1304
  %v1306 = vpop.f32.mrb[0].mxu0
  %1307 = vmatprep.mubr.f32.mxu0 0.0
  %1308 = vmatmul.mubr.f32.gmra.mrb[0].mxu0 %v1019
  %v1309 = vpop.f32.mrb[0].mxu0
  %v1310 = vadd.f32 %v730, %v1309
  %v1311 = vpop.f32.mrb[0].mxu0
  %1312 = vmatprep.mubr.f32.mxu0 0.0
  %1313 = vmatmul.mubr.f32.gmra.mrb[0].mxu0 %v1022
  %v1314 = vpop.f32.mrb[0].mxu0
  %v1315 = vadd.f32 %v735, %v1314
  %v1316 = vpop.f32.mrb[0].mxu0
  %1317 = vmatprep.mubr.f32.mxu0 0.0
  %1318 = vmatmul.mubr.f32.gmra.mrb[0].mxu0 %v1025
  %v1319 = vpop.f32.mrb[0].mxu0
  %v1320 = vadd.f32 %v740, %v1319
  %v1321 = vpop.f32.mrb[0].mxu0
  %1322 = vmatprep.mubr.f32.mxu0 0.0
  %1323 = vmatmul.mubr.f32.gmra.mrb[0].mxu0 %v1028
  %v1324 = vpop.f32.mrb[0].mxu0
  %v1325 = vadd.f32 %v745, %v1324
  %v1326 = vpop.f32.mrb[0].mxu0
  %1327 = vmatprep.mubr.f32.mxu0 0.0
  %1328 = vmatmul.mubr.f32.gmra.mrb[0].mxu0 %v1031
  %v1329 = vpop.f32.mrb[0].mxu0
  %v1330 = vadd.f32 %v750, %v1329
  %v1331 = vpop.f32.mrb[0].mxu0
  %1332 = vmatprep.mubr.f32.mxu0 0.0
  %1333 = vmatmul.mubr.f32.gmra.mrb[0].mxu0 %v1034
  %v1334 = vpop.f32.mrb[0].mxu0
  %v1335 = vadd.f32 %v755, %v1334
  %v1336 = vpop.f32.mrb[0].mxu0
  %1337 = vmatprep.mubr.f32.mxu0 0.0
  %1338 = vmatmul.mubr.f32.gmra.mrb[0].mxu0 %v1037
  %v1339 = vpop.f32.mrb[0].mxu0
  %v1340 = vadd.f32 %v760, %v1339
  %v1341 = vpop.f32.mrb[0].mxu0
  %1342 = vmatprep.mubr.f32.mxu0 0.0
  %1343 = vmatmul.mubr.f32.gmra.mrb[0].mxu0 %v1040
  %v1344 = vpop.f32.mrb[0].mxu0
  %v1345 = vadd.f32 %v765, %v1344
  %v1346 = vpop.f32.mrb[0].mxu0
  %1347 = vmatprep.mubr.f32.mxu0 0.0
  %1348 = vmatmul.mubr.f32.gmra.mrb[0].mxu0 %v1043
  %v1349 = vpop.f32.mrb[0].mxu0
  %v1350 = vadd.f32 %v770, %v1349
  %v1351 = vpop.f32.mrb[0].mxu0
  %1352 = vmatprep.mubr.f32.mxu0 0.0
  %1353 = vmatmul.mubr.f32.gmra.mrb[0].mxu0 %v1046
  %v1354 = vpop.f32.mrb[0].mxu0
  %v1355 = vadd.f32 %v775, %v1354
  %v1356 = vpop.f32.mrb[0].mxu0
  %1357 = vmatprep.mubr.f32.mxu0 0.0
  %1358 = vmatmul.mubr.f32.gmra.mrb[0].mxu0 %v1049
  %v1359 = vpop.f32.mrb[0].mxu0
  %v1360 = vadd.f32 %v780, %v1359
  %v1361 = vpop.f32.mrb[0].mxu0
  %1362 = vmatprep.mubr.f32.mxu0 0.0
  %1363 = vmatmul.mubr.f32.gmra.mrb[0].mxu0 %v1052
  %v1364 = vpop.f32.mrb[0].mxu0
  %v1365 = vadd.f32 %v785, %v1364
  %v1366 = vpop.f32.mrb[0].mxu0
  %1367 = vmatprep.mubr.f32.mxu0 0.0
  %1368 = vmatmul.mubr.f32.gmra.mrb[0].mxu0 %v1055
  %v1369 = vpop.f32.mrb[0].mxu0
  %v1370 = vadd.f32 %v790, %v1369
  %v1371 = vpop.f32.mrb[0].mxu0
  %1372 = vmatprep.mubr.f32.mxu0 0.0
  %1373 = vmatmul.mubr.f32.gmra.mrb[0].mxu0 %v1058
  %v1374 = vpop.f32.mrb[0].mxu0
  %v1375 = vadd.f32 %v795, %v1374
  %v1376 = vpop.f32.mrb[0].mxu0
  %1377 = vmatprep.mubr.f32.mxu0 0.0
  %1378 = vmatmul.mubr.f32.gmra.mrb[0].mxu0 %v1061
  %v1379 = vpop.f32.mrb[0].mxu0
  %v1380 = vadd.f32 %v800, %v1379
  %v1381 = vpop.f32.mrb[0].mxu0
  %1382 = vmatprep.mubr.f32.mxu0 0.0
  %1383 = vmatmul.mubr.f32.gmra.mrb[0].mxu0 %v1064
  %v1384 = vpop.f32.mrb[0].mxu0
  %v1385 = vadd.f32 %v805, %v1384
  %v1386 = vpop.f32.mrb[0].mxu0
  %1387 = vmatprep.mubr.f32.mxu0 0.0
  %1388 = vmatmul.mubr.f32.gmra.mrb[0].mxu0 %v1067
  %v1389 = vpop.f32.mrb[0].mxu0
  %v1390 = vadd.f32 %v810, %v1389
  %v1391 = vpop.f32.mrb[0].mxu0
  %1392 = vmatprep.mubr.f32.mxu0 0.0
  %1393 = vmatmul.mubr.f32.gmra.mrb[0].mxu0 %v1070
  %v1394 = vpop.f32.mrb[0].mxu0
  %v1395 = vadd.f32 %v815, %v1394
  %v1396 = vpop.f32.mrb[0].mxu0
  %1397 = vmatprep.mubr.f32.mxu0 0.0
  %1398 = vmatmul.mubr.f32.gmra.mrb[0].mxu0 %v1073
  %v1399 = vpop.f32.mrb[0].mxu0
  %v1400 = vadd.f32 %v820, %v1399
  %v1401 = vpop.f32.mrb[0].mxu0
  %1402 = vmatprep.mubr.f32.mxu0 0.0
  %1403 = vmatmul.mubr.f32.gmra.mrb[0].mxu0 %v1076
  %v1404 = vpop.f32.mrb[0].mxu0
  %v1405 = vadd.f32 %v825, %v1404
  %v1406 = vpop.f32.mrb[0].mxu0
  %1407 = vmatprep.mubr.f32.mxu0 0.0
  %1408 = vmatmul.mubr.f32.gmra.mrb[0].mxu0 %v1079
  %v1409 = vpop.f32.mrb[0].mxu0
  %v1410 = vadd.f32 %v830, %v1409
  %v1411 = vpop.f32.mrb[0].mxu0
  %1412 = vmatprep.mubr.f32.mxu0 0.0
  %1413 = vmatmul.mubr.f32.gmra.mrb[0].mxu0 %v1082
  %v1414 = vpop.f32.mrb[0].mxu0
  %v1415 = vadd.f32 %v835, %v1414
  %v1416 = vpop.f32.mrb[0].mxu0
  %1417 = vmatprep.mubr.f32.mxu0 0.0
  %1418 = vmatmul.mubr.f32.gmra.mrb[0].mxu0 %v1085
  %v1419 = vpop.f32.mrb[0].mxu0
  %v1420 = vadd.f32 %v840, %v1419
  %v1421 = vpop.f32.mrb[0].mxu0
  %1422 = vmatprep.mubr.f32.mxu0 0.0
  %1423 = vmatmul.mubr.f32.gmra.mrb[0].mxu0 %v1088
  %v1424 = vpop.f32.mrb[0].mxu0
  %v1425 = vadd.f32 %v845, %v1424
  %v1426 = vpop.f32.mrb[0].mxu0
  %1427 = vmatprep.mubr.f32.mxu0 0.0
  %1428 = vmatmul.mubr.f32.gmra.mrb[0].mxu0 %v1091
  %v1429 = vpop.f32.mrb[0].mxu0
  %v1430 = vadd.f32 %v850, %v1429
  %v1431 = vpop.f32.mrb[0].mxu0
  %1432 = vmatprep.mubr.f32.mxu0 0.0
  %1433 = vmatmul.mubr.f32.gmra.mrb[0].mxu0 %v1094
  %v1434 = vpop.f32.mrb[0].mxu0
  %v1435 = vadd.f32 %v855, %v1434
  %v1436 = vpop.f32.mrb[0].mxu0
  %1437 = vmatprep.mubr.f32.mxu0 0.0
  %1438 = vmatmul.mubr.f32.gmra.mrb[0].mxu0 %v1097
  %v1439 = vpop.f32.mrb[0].mxu0
  %v1440 = vadd.f32 %v860, %v1439
  %v1441 = vpop.f32.mrb[0].mxu0
  %1442 = vmatprep.mubr.f32.mxu0 0.0
  %1443 = vmatmul.mubr.f32.gmra.mrb[0].mxu0 %v1100
  %v1444 = vpop.f32.mrb[0].mxu0
  %v1445 = vadd.f32 %v865, %v1444
  %v1446 = vpop.f32.mrb[0].mxu0
  %1447 = vmatprep.mubr.f32.mxu0 0.0
  %1448 = vmatmul.mubr.f32.gmra.mrb[0].mxu0 %v1103
  %v1449 = vpop.f32.mrb[0].mxu0
  %v1450 = vadd.f32 %v870, %v1449
  %v1451 = vpop.f32.mrb[0].mxu0
  %1452 = vmatprep.mubr.f32.mxu0 0.0
  %1453 = vmatmul.mubr.f32.gmra.mrb[0].mxu0 %v1106
  %v1454 = vpop.f32.mrb[0].mxu0
  %v1455 = vadd.f32 %v875, %v1454
  %v1456 = vpop.f32.mrb[0].mxu0
  %1457 = vmatprep.mubr.f32.mxu0 0.0
  %1458 = vmatmul.mubr.f32.gmra.mrb[0].mxu0 %v1109
  %v1459 = vpop.f32.mrb[0].mxu0
  %v1460 = vadd.f32 %v880, %v1459
  %v1461 = vpop.f32.mrb[0].mxu0
  %1462 = vmatprep.mubr.f32.mxu0 0.0
  %1463 = vmatmul.mubr.f32.gmra.mrb[0].mxu0 %v1112
  %v1464 = vpop.f32.mrb[0].mxu0
  %v1465 = vadd.f32 %v885, %v1464
  %v1466 = vpop.f32.mrb[0].mxu0
  %1467 = vmatprep.mubr.f32.mxu0 0.0
  %1468 = vmatmul.mubr.f32.gmra.mrb[0].mxu0 %v1115
  %v1469 = vpop.f32.mrb[0].mxu0
  %v1470 = vadd.f32 %v890, %v1469
  %v1471 = vpop.f32.mrb[0].mxu0
  %1472 = vmatprep.mubr.f32.mxu0 0.0
  %1473 = vmatmul.mubr.f32.gmra.mrb[0].mxu0 %v1118
  %v1474 = vpop.f32.mrb[0].mxu0
  %v1475 = vadd.f32 %v895, %v1474
  %v1476 = vpop.f32.mrb[0].mxu0
  %1477 = vmatprep.mubr.f32.mxu0 0.0
  %1478 = vmatmul.mubr.f32.gmra.mrb[0].mxu0 %v1121
  %v1479 = vpop.f32.mrb[0].mxu0
  %v1480 = vadd.f32 %v900, %v1479
  %v1481 = vpop.f32.mrb[0].mxu0
  %1482 = vmatprep.mubr.f32.mxu0 0.0
  %1483 = vmatmul.mubr.f32.gmra.mrb[0].mxu0 %v1124
  %v1484 = vpop.f32.mrb[0].mxu0
  %v1485 = vadd.f32 %v905, %v1484
  %v1486 = vpop.f32.mrb[0].mxu0
  %1487 = vmatprep.mubr.f32.mxu0 0.0
  %1488 = vmatmul.mubr.f32.gmra.mrb[0].mxu0 %v1127
  %v1489 = vpop.f32.mrb[0].mxu0
  %v1490 = vadd.f32 %v910, %v1489
  %v1491 = vpop.f32.mrb[0].mxu0
  %1492 = vmatprep.mubr.f32.mxu0 0.0
  %1493 = vmatmul.mubr.f32.gmra.mrb[0].mxu0 %v1130
  %v1494 = vpop.f32.mrb[0].mxu0
  %v1495 = vadd.f32 %v915, %v1494
  %v1496 = vpop.f32.mrb[0].mxu0
  %1497 = vmatprep.mubr.f32.mxu0 0.0
  %1498 = vmatmul.mubr.f32.gmra.mrb[0].mxu0 %v1133
  %v1499 = vpop.f32.mrb[0].mxu0
  %v1500 = vadd.f32 %v920, %v1499
  %v1501 = vpop.f32.mrb[0].mxu0
  %1502 = vmatprep.mubr.f32.mxu0 0.0
  %1503 = vmatmul.mubr.f32.gmra.mrb[0].mxu0 %v1136
  %v1504 = vpop.f32.mrb[0].mxu0
  %v1505 = vadd.f32 %v925, %v1504
  %v1506 = vpop.f32.mrb[0].mxu0
  %1507 = vmatprep.mubr.f32.mxu0 0.0
  %1508 = vmatmul.mubr.f32.gmra.mrb[0].mxu0 %v1139
  %v1509 = vpop.f32.mrb[0].mxu0
  %v1510 = vadd.f32 %v930, %v1509
  %v1511 = vpop.f32.mrb[0].mxu0
  %1512 = vmatprep.mubr.f32.mxu0 0.0
  %1513 = vmatmul.mubr.f32.gmra.mrb[0].mxu0 %v1142
  %v1514 = vpop.f32.mrb[0].mxu0
  %v1515 = vadd.f32 %v935, %v1514
  %v1516 = vpop.f32.mrb[0].mxu0
  %1517 = vmatprep.mubr.f32.mxu0 0.0
  %1518 = vmatmul.mubr.f32.gmra.mrb[0].mxu0 %v1145
  %v1519 = vpop.f32.mrb[0].mxu0
  %v1520 = vadd.f32 %v940, %v1519
  %v1521 = vpop.f32.mrb[0].mxu0
  %1522 = vmatprep.mubr.f32.mxu0 0.0
  %1523 = vmatmul.mubr.f32.gmra.mrb[0].mxu0 %v1148
  %v1524 = vpop.f32.mrb[0].mxu0
  %v1525 = vadd.f32 %v945, %v1524
  %v1526 = vpop.f32.mrb[0].mxu0
  %1527 = vmatprep.mubr.f32.mxu0 0.0
  %1528 = vmatmul.mubr.f32.gmra.mrb[0].mxu0 %v1151
  %v1529 = vpop.f32.mrb[0].mxu0
  %v1530 = vadd.f32 %v950, %v1529
  %v1531 = vpop.f32.mrb[0].mxu0
  %1532 = vmatprep.mubr.f32.mxu0 0.0
  %1533 = vmatmul.mubr.f32.gmra.mrb[0].mxu0 %v1154
  %v1534 = vpop.f32.mrb[0].mxu0
  %v1535 = vadd.f32 %v955, %v1534
  %v1536 = vpop.f32.mrb[0].mxu0
  %1537 = vmatprep.mubr.f32.mxu0 0.0
  %1538 = vmatmul.mubr.f32.gmra.mrb[0].mxu0 %v1157
  %v1539 = vpop.f32.mrb[0].mxu0
  %v1540 = vadd.f32 %v960, %v1539
  %v1541 = vpop.f32.mrb[0].mxu0
  %1542 = vmatprep.mubr.f32.mxu0 0.0
  %1543 = vmatmul.mubr.f32.gmra.mrb[0].mxu0 %v1160
  %v1544 = vpop.f32.mrb[0].mxu0
  %v1545 = vadd.f32 %v965, %v1544
  %v1546 = vpop.f32.mrb[0].mxu0
  %1547 = vmatprep.mubr.f32.mxu0 0.0
  %1548 = vmatmul.mubr.f32.gmra.mrb[0].mxu0 %v1163
  %v1549 = vpop.f32.mrb[0].mxu0
  %v1550 = vadd.f32 %v970, %v1549
  %v1551 = vpop.f32.mrb[0].mxu0
  %1552 = vdwg.mxu0
  %v1553 = vld [vmem:[#allocation2 + $0x2] sm:$0xff]
  %v1554 = vld [vmem:[#allocation2 + $0xa] sm:$0xff]
  %v1555 = vld [vmem:[#allocation2 + $0x1a] sm:$0xff]
  %v1556 = vld [vmem:[#allocation2 + $0x22] sm:$0xff]
  %v1557 = vld [vmem:[#allocation2 + $0x32] sm:$0xff]
  %v1558 = vld [vmem:[#allocation2 + $0x3a] sm:$0xff]
  %v1559 = vld [vmem:[#allocation2 + $0x4a] sm:$0xff]
  %v1560 = vld [vmem:[#allocation2 + $0x52] sm:$0xff]
  %v1561 = vld [vmem:[#allocation2 + $0x62] sm:$0xff]
  %v1562 = vld [vmem:[#allocation2 + $0x6a] sm:$0xff]
  %v1563 = vld [vmem:[#allocation2 + $0x7a] sm:$0xff]
  %v1564 = vld [vmem:[#allocation2 + $0x82] sm:$0xff]
  %v1565 = vld [vmem:[#allocation2 + $0x92] sm:$0xff]
  %v1566 = vld [vmem:[#allocation2 + $0x9a] sm:$0xff]
  %v1567 = vld [vmem:[#allocation2 + $0xaa] sm:$0xff]
  %v1568 = vld [vmem:[#allocation2 + $0xb2] sm:$0xff]
  %v1569 = vld [vmem:[#allocation2 + $0xc2] sm:$0xff]
  %v1570 = vld [vmem:[#allocation2 + $0xca] sm:$0xff]
  %v1571 = vld [vmem:[#allocation2 + $0xda] sm:$0xff]
  %v1572 = vld [vmem:[#allocation2 + $0xe2] sm:$0xff]
  %v1573 = vld [vmem:[#allocation2 + $0xf2] sm:$0xff]
  %v1574 = vld [vmem:[#allocation2 + $0xfa] sm:$0xff]
  %v1575 = vld [vmem:[#allocation2 + $0x10a] sm:$0xff]
  %v1576 = vld [vmem:[#allocation2 + $0x112] sm:$0xff]
  %v1577 = vld [vmem:[#allocation2 + $0x122] sm:$0xff]
  %v1578 = vld [vmem:[#allocation2 + $0x12a] sm:$0xff]
  %v1579 = vld [vmem:[#allocation2 + $0x13a] sm:$0xff]
  %v1580 = vld [vmem:[#allocation2 + $0x142] sm:$0xff]
  %v1581 = vld [vmem:[#allocation2 + $0x152] sm:$0xff]
  %v1582 = vld [vmem:[#allocation2 + $0x15a] sm:$0xff]
  %v1583 = vld [vmem:[#allocation2 + $0x16a] sm:$0xff]
  %v1584 = vld [vmem:[#allocation2 + $0x172] sm:$0xff]
  %v1585 = vld [vmem:[%s293 + $0x2] sm:$0xff]
  %v1586 = vld [vmem:[%s293 + $0xa] sm:$0xff]
  %v1587 = vld [vmem:[%s293 + $0x1a] sm:$0xff]
  %v1588 = vld [vmem:[%s293 + $0x22] sm:$0xff]
  %v1589 = vld [vmem:[%s293 + $0x32] sm:$0xff]
  %v1590 = vld [vmem:[%s293 + $0x3a] sm:$0xff]
  %v1591 = vld [vmem:[%s293 + $0x4a] sm:$0xff]
  %v1592 = vld [vmem:[%s293 + $0x52] sm:$0xff]
  %v1593 = vld [vmem:[%s293 + $0x62] sm:$0xff]
  %v1594 = vld [vmem:[%s293 + $0x6a] sm:$0xff]
  %v1595 = vld [vmem:[%s293 + $0x7a] sm:$0xff]
  %v1596 = vld [vmem:[%s293 + $0x82] sm:$0xff]
  %v1597 = vld [vmem:[%s293 + $0x92] sm:$0xff]
  %v1598 = vld [vmem:[%s293 + $0x9a] sm:$0xff]
  %v1599 = vld [vmem:[%s293 + $0xaa] sm:$0xff]
  %v1600 = vld [vmem:[%s293 + $0xb2] sm:$0xff]
  %v1601 = vld [vmem:[%s293 + $0xc2] sm:$0xff]
  %v1602 = vld [vmem:[%s293 + $0xca] sm:$0xff]
  %v1603 = vld [vmem:[%s293 + $0xda] sm:$0xff]
  %v1604 = vld [vmem:[%s293 + $0xe2] sm:$0xff]
  %v1605 = vld [vmem:[%s293 + $0xf2] sm:$0xff]
  %v1606 = vld [vmem:[%s293 + $0xfa] sm:$0xff]
  %v1607 = vld [vmem:[%s293 + $0x10a] sm:$0xff]
  %v1608 = vld [vmem:[%s293 + $0x112] sm:$0xff]
  %v1609 = vld [vmem:[%s293 + $0x122] sm:$0xff]
  %v1610 = vld [vmem:[%s293 + $0x12a] sm:$0xff]
  %v1611 = vld [vmem:[%s293 + $0x13a] sm:$0xff]
  %v1612 = vld [vmem:[%s293 + $0x142] sm:$0xff]
  %v1613 = vld [vmem:[%s293 + $0x152] sm:$0xff]
  %v1614 = vld [vmem:[%s293 + $0x15a] sm:$0xff]
  %v1615 = vld [vmem:[%s293 + $0x16a] sm:$0xff]
  %v1616 = vld [vmem:[%s293 + $0x172] sm:$0xff]
  %v1617 = vld [vmem:[%s1 + $0x6] sm:$0x7]
  %v1619 = vsel %vm20, %v1553, 0
  %v1622 = vsel %vm20, %v1554, 0
  %v1625 = vsel %vm20, %v1555, 0
  %v1628 = vsel %vm20, %v1556, 0
  %v1631 = vsel %vm20, %v1557, 0
  %v1634 = vsel %vm20, %v1558, 0
  %v1637 = vsel %vm20, %v1559, 0
  %v1640 = vsel %vm20, %v1560, 0
  %v1643 = vsel %vm20, %v1561, 0
  %v1646 = vsel %vm20, %v1562, 0
  %v1649 = vsel %vm20, %v1563, 0
  %v1652 = vsel %vm20, %v1564, 0
  %v1655 = vsel %vm20, %v1565, 0
  %v1658 = vsel %vm20, %v1566, 0
  %v1661 = vsel %vm20, %v1567, 0
  %v1664 = vsel %vm20, %v1568, 0
  %v1667 = vsel %vm20, %v1569, 0
  %v1670 = vsel %vm20, %v1570, 0
  %v1673 = vsel %vm20, %v1571, 0
  %v1676 = vsel %vm20, %v1572, 0
  %v1679 = vsel %vm20, %v1573, 0
  %v1682 = vsel %vm20, %v1574, 0
  %v1685 = vsel %vm20, %v1575, 0
  %v1688 = vsel %vm20, %v1576, 0
  %v1691 = vsel %vm20, %v1577, 0
  %v1694 = vsel %vm20, %v1578, 0
  %v1697 = vsel %vm20, %v1579, 0
  %v1700 = vsel %vm20, %v1580, 0
  %v1703 = vsel %vm20, %v1581, 0
  %v1706 = vsel %vm20, %v1582, 0
  %v1709 = vsel %vm20, %v1583, 0
  %v1712 = vsel %vm20, %v1584, 0
  %v1715 = vsel %vm20, %v1585, 0
  %v1718 = vsel %vm20, %v1586, 0
  %v1721 = vsel %vm20, %v1587, 0
  %v1724 = vsel %vm20, %v1588, 0
  %v1727 = vsel %vm20, %v1589, 0
  %v1730 = vsel %vm20, %v1590, 0
  %v1733 = vsel %vm20, %v1591, 0
  %v1736 = vsel %vm20, %v1592, 0
  %v1739 = vsel %vm20, %v1593, 0
  %v1742 = vsel %vm20, %v1594, 0
  %v1745 = vsel %vm20, %v1595, 0
  %v1748 = vsel %vm20, %v1596, 0
  %v1751 = vsel %vm20, %v1597, 0
  %v1754 = vsel %vm20, %v1598, 0
  %v1757 = vsel %vm20, %v1599, 0
  %v1760 = vsel %vm20, %v1600, 0
  %v1763 = vsel %vm20, %v1601, 0
  %v1766 = vsel %vm20, %v1602, 0
  %v1769 = vsel %vm20, %v1603, 0
  %v1772 = vsel %vm20, %v1604, 0
  %v1775 = vsel %vm20, %v1605, 0
  %v1778 = vsel %vm20, %v1606, 0
  %v1781 = vsel %vm20, %v1607, 0
  %v1784 = vsel %vm20, %v1608, 0
  %v1787 = vsel %vm20, %v1609, 0
  %v1790 = vsel %vm20, %v1610, 0
  %v1793 = vsel %vm20, %v1611, 0
  %v1796 = vsel %vm20, %v1612, 0
  %v1799 = vsel %vm20, %v1613, 0
  %v1802 = vsel %vm20, %v1614, 0
  %v1805 = vsel %vm20, %v1615, 0
  %v1808 = vsel %vm20, %v1616, 0
  %v1811 = vsel %vm584, %v1617, 0
  %1813 = vmatprep.subr.mxu0 0.0
  %1814 = vmatpush1.msra.mxu0 %v1811
  %1815 = vmatprep.subr.mxu0 0.0
  %1816 = vmatpush1.msra.mxu0 0.0
  %1817 = vmatprep.subr.mxu0 0.0
  %1818 = vmatpush1.msra.mxu0 0.0
  %1819 = vmatprep.subr.mxu0 0.0
  %1820 = vmatpush1.msra.mxu0 0.0
  %1821 = vmatprep.subr.mxu0 0.0
  %1822 = vmatpush1.msra.mxu0 0.0
  %1823 = vmatprep.subr.mxu0 0.0
  %1824 = vmatpush1.msra.mxu0 0.0
  %1825 = vmatprep.subr.mxu0 0.0
  %1826 = vmatpush1.msra.mxu0 0.0
  %1827 = vmatprep.subr.mxu0 0.0
  %1828 = vmatpush1.msra.mxu0 0.0
  %1829 = vmatprep.subr.mxu0 0.0
  %1830 = vmatpush1.msra.mxu0 0.0
  %1831 = vmatprep.subr.mxu0 0.0
  %1832 = vmatpush1.msra.mxu0 0.0
  %1833 = vmatprep.subr.mxu0 0.0
  %1834 = vmatpush1.msra.mxu0 0.0
  %1835 = vmatprep.subr.mxu0 0.0
  %1836 = vmatpush1.msra.mxu0 0.0
  %1837 = vmatprep.subr.mxu0 0.0
  %1838 = vmatpush1.msra.mxu0 0.0
  %1839 = vmatprep.subr.mxu0 0.0
  %1840 = vmatpush1.msra.mxu0 0.0
  %1841 = vmatprep.subr.mxu0 0.0
  %1842 = vmatpush1.msra.mxu0 0.0
  %1843 = vmatprep.subr.mxu0 0.0
  %1844 = vmatpush1.msra.mxu0 0.0
  %1845 = vmatprep.subr.mxu0 0.0
  %1846 = vmatpush1.msra.mxu0 0.0
  %1847 = vmatprep.subr.mxu0 0.0
  %1848 = vmatpush1.msra.mxu0 0.0
  %1849 = vmatprep.subr.mxu0 0.0
  %1850 = vmatpush1.msra.mxu0 0.0
  %1851 = vmatprep.subr.mxu0 0.0
  %1852 = vmatpush1.msra.mxu0 0.0
  %1853 = vmatprep.subr.mxu0 0.0
  %1854 = vmatpush1.msra.mxu0 0.0
  %1855 = vmatprep.subr.mxu0 0.0
  %1856 = vmatpush1.msra.mxu0 0.0
  %1857 = vmatprep.subr.mxu0 0.0
  %1858 = vmatpush1.msra.mxu0 0.0
  %1859 = vmatprep.subr.mxu0 0.0
  %1860 = vmatpush1.msra.mxu0 0.0
  %1861 = vmatprep.subr.mxu0 0.0
  %1862 = vmatpush1.msra.mxu0 0.0
  %1863 = vmatprep.subr.mxu0 0.0
  %1864 = vmatpush1.msra.mxu0 0.0
  %1865 = vmatprep.subr.mxu0 0.0
  %1866 = vmatpush1.msra.mxu0 0.0
  %1867 = vmatprep.subr.mxu0 0.0
  %1868 = vmatpush1.msra.mxu0 0.0
  %1869 = vmatprep.subr.mxu0 0.0
  %1870 = vmatpush1.msra.mxu0 0.0
  %1871 = vmatprep.subr.mxu0 0.0
  %1872 = vmatpush1.msra.mxu0 0.0
  %1873 = vmatprep.subr.mxu0 0.0
  %1874 = vmatpush1.msra.mxu0 0.0
  %1875 = vmatprep.subr.mxu0 0.0
  %1876 = vmatpush1.msra.mxu0 0.0
  %1877 = vmatprep.mubr.f32.mxu0 0.0
  %1878 = vmatmul.mubr.f32.gmra.mrb[0].mxu0 %v1619
  %v1879 = vpop.f32.mrb[0].mxu0
  %v1880 = vadd.f32 0.0, %v1879
  %v1881 = vpop.f32.mrb[0].mxu0
  %1882 = vmatprep.mubr.f32.mxu0 0.0
  %1883 = vmatmul.mubr.f32.gmra.mrb[0].mxu0 %v1622
  %v1884 = vpop.f32.mrb[0].mxu0
  %v1885 = vadd.f32 0.0, %v1884
  %v1886 = vpop.f32.mrb[0].mxu0
  %1887 = vmatprep.mubr.f32.mxu0 0.0
  %1888 = vmatmul.mubr.f32.gmra.mrb[0].mxu0 %v1625
  %v1889 = vpop.f32.mrb[0].mxu0
  %v1890 = vadd.f32 0.0, %v1889
  %v1891 = vpop.f32.mrb[0].mxu0
  %1892 = vmatprep.mubr.f32.mxu0 0.0
  %1893 = vmatmul.mubr.f32.gmra.mrb[0].mxu0 %v1628
  %v1894 = vpop.f32.mrb[0].mxu0
  %v1895 = vadd.f32 0.0, %v1894
  %v1896 = vpop.f32.mrb[0].mxu0
  %1897 = vmatprep.mubr.f32.mxu0 0.0
  %1898 = vmatmul.mubr.f32.gmra.mrb[0].mxu0 %v1631
  %v1899 = vpop.f32.mrb[0].mxu0
  %v1900 = vadd.f32 0.0, %v1899
  %v1901 = vpop.f32.mrb[0].mxu0
  %1902 = vmatprep.mubr.f32.mxu0 0.0
  %1903 = vmatmul.mubr.f32.gmra.mrb[0].mxu0 %v1634
  %v1904 = vpop.f32.mrb[0].mxu0
  %v1905 = vadd.f32 0.0, %v1904
  %v1906 = vpop.f32.mrb[0].mxu0
  %1907 = vmatprep.mubr.f32.mxu0 0.0
  %1908 = vmatmul.mubr.f32.gmra.mrb[0].mxu0 %v1637
  %v1909 = vpop.f32.mrb[0].mxu0
  %v1910 = vadd.f32 0.0, %v1909
  %v1911 = vpop.f32.mrb[0].mxu0
  %1912 = vmatprep.mubr.f32.mxu0 0.0
  %1913 = vmatmul.mubr.f32.gmra.mrb[0].mxu0 %v1640
  %v1914 = vpop.f32.mrb[0].mxu0
  %v1915 = vadd.f32 0.0, %v1914
  %v1916 = vpop.f32.mrb[0].mxu0
  %1917 = vmatprep.mubr.f32.mxu0 0.0
  %1918 = vmatmul.mubr.f32.gmra.mrb[0].mxu0 %v1643
  %v1919 = vpop.f32.mrb[0].mxu0
  %v1920 = vadd.f32 0.0, %v1919
  %v1921 = vpop.f32.mrb[0].mxu0
  %1922 = vmatprep.mubr.f32.mxu0 0.0
  %1923 = vmatmul.mubr.f32.gmra.mrb[0].mxu0 %v1646
  %v1924 = vpop.f32.mrb[0].mxu0
  %v1925 = vadd.f32 0.0, %v1924
  %v1926 = vpop.f32.mrb[0].mxu0
  %1927 = vmatprep.mubr.f32.mxu0 0.0
  %1928 = vmatmul.mubr.f32.gmra.mrb[0].mxu0 %v1649
  %v1929 = vpop.f32.mrb[0].mxu0
  %v1930 = vadd.f32 0.0, %v1929
  %v1931 = vpop.f32.mrb[0].mxu0
  %1932 = vmatprep.mubr.f32.mxu0 0.0
  %1933 = vmatmul.mubr.f32.gmra.mrb[0].mxu0 %v1652
  %v1934 = vpop.f32.mrb[0].mxu0
  %v1935 = vadd.f32 0.0, %v1934
  %v1936 = vpop.f32.mrb[0].mxu0
  %1937 = vmatprep.mubr.f32.mxu0 0.0
  %1938 = vmatmul.mubr.f32.gmra.mrb[0].mxu0 %v1655
  %v1939 = vpop.f32.mrb[0].mxu0
  %v1940 = vadd.f32 0.0, %v1939
  %v1941 = vpop.f32.mrb[0].mxu0
  %1942 = vmatprep.mubr.f32.mxu0 0.0
  %1943 = vmatmul.mubr.f32.gmra.mrb[0].mxu0 %v1658
  %v1944 = vpop.f32.mrb[0].mxu0
  %v1945 = vadd.f32 0.0, %v1944
  %v1946 = vpop.f32.mrb[0].mxu0
  %1947 = vmatprep.mubr.f32.mxu0 0.0
  %1948 = vmatmul.mubr.f32.gmra.mrb[0].mxu0 %v1661
  %v1949 = vpop.f32.mrb[0].mxu0
  %v1950 = vadd.f32 0.0, %v1949
  %v1951 = vpop.f32.mrb[0].mxu0
  %1952 = vmatprep.mubr.f32.mxu0 0.0
  %1953 = vmatmul.mubr.f32.gmra.mrb[0].mxu0 %v1664
  %v1954 = vpop.f32.mrb[0].mxu0
  %v1955 = vadd.f32 0.0, %v1954
  %v1956 = vpop.f32.mrb[0].mxu0
  %1957 = vmatprep.mubr.f32.mxu0 0.0
  %1958 = vmatmul.mubr.f32.gmra.mrb[0].mxu0 %v1667
  %v1959 = vpop.f32.mrb[0].mxu0
  %v1960 = vadd.f32 0.0, %v1959
  %v1961 = vpop.f32.mrb[0].mxu0
  %1962 = vmatprep.mubr.f32.mxu0 0.0
  %1963 = vmatmul.mubr.f32.gmra.mrb[0].mxu0 %v1670
  %v1964 = vpop.f32.mrb[0].mxu0
  %v1965 = vadd.f32 0.0, %v1964
  %v1966 = vpop.f32.mrb[0].mxu0
  %1967 = vmatprep.mubr.f32.mxu0 0.0
  %1968 = vmatmul.mubr.f32.gmra.mrb[0].mxu0 %v1673
  %v1969 = vpop.f32.mrb[0].mxu0
  %v1970 = vadd.f32 0.0, %v1969
  %v1971 = vpop.f32.mrb[0].mxu0
  %1972 = vmatprep.mubr.f32.mxu0 0.0
  %1973 = vmatmul.mubr.f32.gmra.mrb[0].mxu0 %v1676
  %v1974 = vpop.f32.mrb[0].mxu0
  %v1975 = vadd.f32 0.0, %v1974
  %v1976 = vpop.f32.mrb[0].mxu0
  %1977 = vmatprep.mubr.f32.mxu0 0.0
  %1978 = vmatmul.mubr.f32.gmra.mrb[0].mxu0 %v1679
  %v1979 = vpop.f32.mrb[0].mxu0
  %v1980 = vadd.f32 0.0, %v1979
  %v1981 = vpop.f32.mrb[0].mxu0
  %1982 = vmatprep.mubr.f32.mxu0 0.0
  %1983 = vmatmul.mubr.f32.gmra.mrb[0].mxu0 %v1682
  %v1984 = vpop.f32.mrb[0].mxu0
  %v1985 = vadd.f32 0.0, %v1984
  %v1986 = vpop.f32.mrb[0].mxu0
  %1987 = vmatprep.mubr.f32.mxu0 0.0
  %1988 = vmatmul.mubr.f32.gmra.mrb[0].mxu0 %v1685
  %v1989 = vpop.f32.mrb[0].mxu0
  %v1990 = vadd.f32 0.0, %v1989
  %v1991 = vpop.f32.mrb[0].mxu0
  %1992 = vmatprep.mubr.f32.mxu0 0.0
  %1993 = vmatmul.mubr.f32.gmra.mrb[0].mxu0 %v1688
  %v1994 = vpop.f32.mrb[0].mxu0
  %v1995 = vadd.f32 0.0, %v1994
  %v1996 = vpop.f32.mrb[0].mxu0
  %1997 = vmatprep.mubr.f32.mxu0 0.0
  %1998 = vmatmul.mubr.f32.gmra.mrb[0].mxu0 %v1691
  %v1999 = vpop.f32.mrb[0].mxu0
  %v2000 = vadd.f32 0.0, %v1999
  %v2001 = vpop.f32.mrb[0].mxu0
  %2002 = vmatprep.mubr.f32.mxu0 0.0
  %2003 = vmatmul.mubr.f32.gmra.mrb[0].mxu0 %v1694
  %v2004 = vpop.f32.mrb[0].mxu0
  %v2005 = vadd.f32 0.0, %v2004
  %v2006 = vpop.f32.mrb[0].mxu0
  %2007 = vmatprep.mubr.f32.mxu0 0.0
  %2008 = vmatmul.mubr.f32.gmra.mrb[0].mxu0 %v1697
  %v2009 = vpop.f32.mrb[0].mxu0
  %v2010 = vadd.f32 0.0, %v2009
  %v2011 = vpop.f32.mrb[0].mxu0
  %2012 = vmatprep.mubr.f32.mxu0 0.0
  %2013 = vmatmul.mubr.f32.gmra.mrb[0].mxu0 %v1700
  %v2014 = vpop.f32.mrb[0].mxu0
  %v2015 = vadd.f32 0.0, %v2014
  %v2016 = vpop.f32.mrb[0].mxu0
  %2017 = vmatprep.mubr.f32.mxu0 0.0
  %2018 = vmatmul.mubr.f32.gmra.mrb[0].mxu0 %v1703
  %v2019 = vpop.f32.mrb[0].mxu0
  %v2020 = vadd.f32 0.0, %v2019
  %v2021 = vpop.f32.mrb[0].mxu0
  %2022 = vmatprep.mubr.f32.mxu0 0.0
  %2023 = vmatmul.mubr.f32.gmra.mrb[0].mxu0 %v1706
  %v2024 = vpop.f32.mrb[0].mxu0
  %v2025 = vadd.f32 0.0, %v2024
  %v2026 = vpop.f32.mrb[0].mxu0
  %2027 = vmatprep.mubr.f32.mxu0 0.0
  %2028 = vmatmul.mubr.f32.gmra.mrb[0].mxu0 %v1709
  %v2029 = vpop.f32.mrb[0].mxu0
  %v2030 = vadd.f32 0.0, %v2029
  %v2031 = vpop.f32.mrb[0].mxu0
  %2032 = vmatprep.mubr.f32.mxu0 0.0
  %2033 = vmatmul.mubr.f32.gmra.mrb[0].mxu0 %v1712
  %v2034 = vpop.f32.mrb[0].mxu0
  %v2035 = vadd.f32 0.0, %v2034
  %v2036 = vpop.f32.mrb[0].mxu0
  %2037 = vmatprep.mubr.f32.mxu0 0.0
  %2038 = vmatmul.mubr.f32.gmra.mrb[0].mxu0 %v1715
  %v2039 = vpop.f32.mrb[0].mxu0
  %v2040 = vadd.f32 0.0, %v2039
  %v2041 = vpop.f32.mrb[0].mxu0
  %2042 = vmatprep.mubr.f32.mxu0 0.0
  %2043 = vmatmul.mubr.f32.gmra.mrb[0].mxu0 %v1718
  %v2044 = vpop.f32.mrb[0].mxu0
  %v2045 = vadd.f32 0.0, %v2044
  %v2046 = vpop.f32.mrb[0].mxu0
  %2047 = vmatprep.mubr.f32.mxu0 0.0
  %2048 = vmatmul.mubr.f32.gmra.mrb[0].mxu0 %v1721
  %v2049 = vpop.f32.mrb[0].mxu0
  %v2050 = vadd.f32 0.0, %v2049
  %v2051 = vpop.f32.mrb[0].mxu0
  %2052 = vmatprep.mubr.f32.mxu0 0.0
  %2053 = vmatmul.mubr.f32.gmra.mrb[0].mxu0 %v1724
  %v2054 = vpop.f32.mrb[0].mxu0
  %v2055 = vadd.f32 0.0, %v2054
  %v2056 = vpop.f32.mrb[0].mxu0
  %2057 = vmatprep.mubr.f32.mxu0 0.0
  %2058 = vmatmul.mubr.f32.gmra.mrb[0].mxu0 %v1727
  %v2059 = vpop.f32.mrb[0].mxu0
  %v2060 = vadd.f32 0.0, %v2059
  %v2061 = vpop.f32.mrb[0].mxu0
  %2062 = vmatprep.mubr.f32.mxu0 0.0
  %2063 = vmatmul.mubr.f32.gmra.mrb[0].mxu0 %v1730
  %v2064 = vpop.f32.mrb[0].mxu0
  %v2065 = vadd.f32 0.0, %v2064
  %v2066 = vpop.f32.mrb[0].mxu0
  %2067 = vmatprep.mubr.f32.mxu0 0.0
  %2068 = vmatmul.mubr.f32.gmra.mrb[0].mxu0 %v1733
  %v2069 = vpop.f32.mrb[0].mxu0
  %v2070 = vadd.f32 0.0, %v2069
  %v2071 = vpop.f32.mrb[0].mxu0
  %2072 = vmatprep.mubr.f32.mxu0 0.0
  %2073 = vmatmul.mubr.f32.gmra.mrb[0].mxu0 %v1736
  %v2074 = vpop.f32.mrb[0].mxu0
  %v2075 = vadd.f32 0.0, %v2074
  %v2076 = vpop.f32.mrb[0].mxu0
  %2077 = vmatprep.mubr.f32.mxu0 0.0
  %2078 = vmatmul.mubr.f32.gmra.mrb[0].mxu0 %v1739
  %v2079 = vpop.f32.mrb[0].mxu0
  %v2080 = vadd.f32 0.0, %v2079
  %v2081 = vpop.f32.mrb[0].mxu0
  %2082 = vmatprep.mubr.f32.mxu0 0.0
  %2083 = vmatmul.mubr.f32.gmra.mrb[0].mxu0 %v1742
  %v2084 = vpop.f32.mrb[0].mxu0
  %v2085 = vadd.f32 0.0, %v2084
  %v2086 = vpop.f32.mrb[0].mxu0
  %2087 = vmatprep.mubr.f32.mxu0 0.0
  %2088 = vmatmul.mubr.f32.gmra.mrb[0].mxu0 %v1745
  %v2089 = vpop.f32.mrb[0].mxu0
  %v2090 = vadd.f32 0.0, %v2089
  %v2091 = vpop.f32.mrb[0].mxu0
  %2092 = vmatprep.mubr.f32.mxu0 0.0
  %2093 = vmatmul.mubr.f32.gmra.mrb[0].mxu0 %v1748
  %v2094 = vpop.f32.mrb[0].mxu0
  %v2095 = vadd.f32 0.0, %v2094
  %v2096 = vpop.f32.mrb[0].mxu0
  %2097 = vmatprep.mubr.f32.mxu0 0.0
  %2098 = vmatmul.mubr.f32.gmra.mrb[0].mxu0 %v1751
  %v2099 = vpop.f32.mrb[0].mxu0
  %v2100 = vadd.f32 0.0, %v2099
  %v2101 = vpop.f32.mrb[0].mxu0
  %2102 = vmatprep.mubr.f32.mxu0 0.0
  %2103 = vmatmul.mubr.f32.gmra.mrb[0].mxu0 %v1754
  %v2104 = vpop.f32.mrb[0].mxu0
  %v2105 = vadd.f32 0.0, %v2104
  %v2106 = vpop.f32.mrb[0].mxu0
  %2107 = vmatprep.mubr.f32.mxu0 0.0
  %2108 = vmatmul.mubr.f32.gmra.mrb[0].mxu0 %v1757
  %v2109 = vpop.f32.mrb[0].mxu0
  %v2110 = vadd.f32 0.0, %v2109
  %v2111 = vpop.f32.mrb[0].mxu0
  %2112 = vmatprep.mubr.f32.mxu0 0.0
  %2113 = vmatmul.mubr.f32.gmra.mrb[0].mxu0 %v1760
  %v2114 = vpop.f32.mrb[0].mxu0
  %v2115 = vadd.f32 0.0, %v2114
  %v2116 = vpop.f32.mrb[0].mxu0
  %2117 = vmatprep.mubr.f32.mxu0 0.0
  %2118 = vmatmul.mubr.f32.gmra.mrb[0].mxu0 %v1763
  %v2119 = vpop.f32.mrb[0].mxu0
  %v2120 = vadd.f32 0.0, %v2119
  %v2121 = vpop.f32.mrb[0].mxu0
  %2122 = vmatprep.mubr.f32.mxu0 0.0
  %2123 = vmatmul.mubr.f32.gmra.mrb[0].mxu0 %v1766
  %v2124 = vpop.f32.mrb[0].mxu0
  %v2125 = vadd.f32 0.0, %v2124
  %v2126 = vpop.f32.mrb[0].mxu0
  %2127 = vmatprep.mubr.f32.mxu0 0.0
  %2128 = vmatmul.mubr.f32.gmra.mrb[0].mxu0 %v1769
  %v2129 = vpop.f32.mrb[0].mxu0
  %v2130 = vadd.f32 0.0, %v2129
  %v2131 = vpop.f32.mrb[0].mxu0
  %2132 = vmatprep.mubr.f32.mxu0 0.0
  %2133 = vmatmul.mubr.f32.gmra.mrb[0].mxu0 %v1772
  %v2134 = vpop.f32.mrb[0].mxu0
  %v2135 = vadd.f32 0.0, %v2134
  %v2136 = vpop.f32.mrb[0].mxu0
  %2137 = vmatprep.mubr.f32.mxu0 0.0
  %2138 = vmatmul.mubr.f32.gmra.mrb[0].mxu0 %v1775
  %v2139 = vpop.f32.mrb[0].mxu0
  %v2140 = vadd.f32 0.0, %v2139
  %v2141 = vpop.f32.mrb[0].mxu0
  %2142 = vmatprep.mubr.f32.mxu0 0.0
  %2143 = vmatmul.mubr.f32.gmra.mrb[0].mxu0 %v1778
  %v2144 = vpop.f32.mrb[0].mxu0
  %v2145 = vadd.f32 0.0, %v2144
  %v2146 = vpop.f32.mrb[0].mxu0
  %2147 = vmatprep.mubr.f32.mxu0 0.0
  %2148 = vmatmul.mubr.f32.gmra.mrb[0].mxu0 %v1781
  %v2149 = vpop.f32.mrb[0].mxu0
  %v2150 = vadd.f32 0.0, %v2149
  %v2151 = vpop.f32.mrb[0].mxu0
  %2152 = vmatprep.mubr.f32.mxu0 0.0
  %2153 = vmatmul.mubr.f32.gmra.mrb[0].mxu0 %v1784
  %v2154 = vpop.f32.mrb[0].mxu0
  %v2155 = vadd.f32 0.0, %v2154
  %v2156 = vpop.f32.mrb[0].mxu0
  %2157 = vmatprep.mubr.f32.mxu0 0.0
  %2158 = vmatmul.mubr.f32.gmra.mrb[0].mxu0 %v1787
  %v2159 = vpop.f32.mrb[0].mxu0
  %v2160 = vadd.f32 0.0, %v2159
  %v2161 = vpop.f32.mrb[0].mxu0
  %2162 = vmatprep.mubr.f32.mxu0 0.0
  %2163 = vmatmul.mubr.f32.gmra.mrb[0].mxu0 %v1790
  %v2164 = vpop.f32.mrb[0].mxu0
  %v2165 = vadd.f32 0.0, %v2164
  %v2166 = vpop.f32.mrb[0].mxu0
  %2167 = vmatprep.mubr.f32.mxu0 0.0
  %2168 = vmatmul.mubr.f32.gmra.mrb[0].mxu0 %v1793
  %v2169 = vpop.f32.mrb[0].mxu0
  %v2170 = vadd.f32 0.0, %v2169
  %v2171 = vpop.f32.mrb[0].mxu0
  %2172 = vmatprep.mubr.f32.mxu0 0.0
  %2173 = vmatmul.mubr.f32.gmra.mrb[0].mxu0 %v1796
  %v2174 = vpop.f32.mrb[0].mxu0
  %v2175 = vadd.f32 0.0, %v2174
  %v2176 = vpop.f32.mrb[0].mxu0
  %2177 = vmatprep.mubr.f32.mxu0 0.0
  %2178 = vmatmul.mubr.f32.gmra.mrb[0].mxu0 %v1799
  %v2179 = vpop.f32.mrb[0].mxu0
  %v2180 = vadd.f32 0.0, %v2179
  %v2181 = vpop.f32.mrb[0].mxu0
  %2182 = vmatprep.mubr.f32.mxu0 0.0
  %2183 = vmatmul.mubr.f32.gmra.mrb[0].mxu0 %v1802
  %v2184 = vpop.f32.mrb[0].mxu0
  %v2185 = vadd.f32 0.0, %v2184
  %v2186 = vpop.f32.mrb[0].mxu0
  %2187 = vmatprep.mubr.f32.mxu0 0.0
  %2188 = vmatmul.mubr.f32.gmra.mrb[0].mxu0 %v1805
  %v2189 = vpop.f32.mrb[0].mxu0
  %v2190 = vadd.f32 0.0, %v2189
  %v2191 = vpop.f32.mrb[0].mxu0
  %2192 = vmatprep.mubr.f32.mxu0 0.0
  %2193 = vmatmul.mubr.f32.gmra.mrb[0].mxu0 %v1808
  %v2194 = vpop.f32.mrb[0].mxu0
  %v2195 = vadd.f32 0.0, %v2194
  %v2196 = vpop.f32.mrb[0].mxu0
  %2197 = vdwg.mxu0
  %v2198 = vadd.f32 %v1235, %v1880
  %v2199 = vadd.f32 %v1240, %v1885
  %v2200 = vadd.f32 %v1245, %v1890
  %v2201 = vadd.f32 %v1250, %v1895
  %v2202 = vadd.f32 %v1255, %v1900
  %v2203 = vadd.f32 %v1260, %v1905
  %v2204 = vadd.f32 %v1265, %v1910
  %v2205 = vadd.f32 %v1270, %v1915
  %v2206 = vadd.f32 %v1275, %v1920
  %v2207 = vadd.f32 %v1280, %v1925
  %v2208 = vadd.f32 %v1285, %v1930
  %v2209 = vadd.f32 %v1290, %v1935
  %v2210 = vadd.f32 %v1295, %v1940
  %v2211 = vadd.f32 %v1300, %v1945
  %v2212 = vadd.f32 %v1305, %v1950
  %v2213 = vadd.f32 %v1310, %v1955
  %v2214 = vadd.f32 %v1315, %v1960
  %v2215 = vadd.f32 %v1320, %v1965
  %v2216 = vadd.f32 %v1325, %v1970
  %v2217 = vadd.f32 %v1330, %v1975
  %v2218 = vadd.f32 %v1335, %v1980
  %v2219 = vadd.f32 %v1340, %v1985
  %v2220 = vadd.f32 %v1345, %v1990
  %v2221 = vadd.f32 %v1350, %v1995
  %v2222 = vadd.f32 %v1355, %v2000
  %v2223 = vadd.f32 %v1360, %v2005
  %v2224 = vadd.f32 %v1365, %v2010
  %v2225 = vadd.f32 %v1370, %v2015
  %v2226 = vadd.f32 %v1375, %v2020
  %v2227 = vadd.f32 %v1380, %v2025
  %v2228 = vadd.f32 %v1385, %v2030
  %v2229 = vadd.f32 %v1390, %v2035
  %v2230 = vadd.f32 %v1395, %v2040
  %v2231 = vadd.f32 %v1400, %v2045
  %v2232 = vadd.f32 %v1405, %v2050
  %v2233 = vadd.f32 %v1410, %v2055
  %v2234 = vadd.f32 %v1415, %v2060
  %v2235 = vadd.f32 %v1420, %v2065
  %v2236 = vadd.f32 %v1425, %v2070
  %v2237 = vadd.f32 %v1430, %v2075
  %v2238 = vadd.f32 %v1435, %v2080
  %v2239 = vadd.f32 %v1440, %v2085
  %v2240 = vadd.f32 %v1445, %v2090
  %v2241 = vadd.f32 %v1450, %v2095
  %v2242 = vadd.f32 %v1455, %v2100
  %v2243 = vadd.f32 %v1460, %v2105
  %v2244 = vadd.f32 %v1465, %v2110
  %v2245 = vadd.f32 %v1470, %v2115
  %v2246 = vadd.f32 %v1475, %v2120
  %v2247 = vadd.f32 %v1480, %v2125
  %v2248 = vadd.f32 %v1485, %v2130
  %v2249 = vadd.f32 %v1490, %v2135
  %v2250 = vadd.f32 %v1495, %v2140
  %v2251 = vadd.f32 %v1500, %v2145
  %v2252 = vadd.f32 %v1505, %v2150
  %v2253 = vadd.f32 %v1510, %v2155
  %v2254 = vadd.f32 %v1515, %v2160
  %v2255 = vadd.f32 %v1520, %v2165
  %v2256 = vadd.f32 %v1525, %v2170
  %v2257 = vadd.f32 %v1530, %v2175
  %v2258 = vadd.f32 %v1535, %v2180
  %v2259 = vadd.f32 %v1540, %v2185
  %v2260 = vadd.f32 %v1545, %v2190
  %v2261 = vadd.f32 %v1550, %v2195
  %v2262 = vld [vmem:[%s162] sm:$0xff]
  %v2263 = vld [vmem:[%s162 + $0x8] sm:$0xff]
  %v2264 = vld [vmem:[%s162 + $0x18] sm:$0xff]
  %v2265 = vld [vmem:[%s162 + $0x20] sm:$0xff]
  %v2266 = vld [vmem:[%s162 + $0x30] sm:$0xff]
  %v2267 = vld [vmem:[%s162 + $0x38] sm:$0xff]
  %v2268 = vld [vmem:[%s162 + $0x48] sm:$0xff]
  %v2269 = vld [vmem:[%s162 + $0x50] sm:$0xff]
  %v2270 = vld [vmem:[%s162 + $0x60] sm:$0xff]
  %v2271 = vld [vmem:[%s162 + $0x68] sm:$0xff]
  %v2272 = vld [vmem:[%s162 + $0x78] sm:$0xff]
  %v2273 = vld [vmem:[%s162 + $0x80] sm:$0xff]
  %v2274 = vld [vmem:[%s162 + $0x90] sm:$0xff]
  %v2275 = vld [vmem:[%s162 + $0x98] sm:$0xff]
  %v2276 = vld [vmem:[%s162 + $0xa8] sm:$0xff]
  %v2277 = vld [vmem:[%s162 + $0xb0] sm:$0xff]
  %v2278 = vld [vmem:[%s162 + $0xc0] sm:$0xff]
  %v2279 = vld [vmem:[%s162 + $0xc8] sm:$0xff]
  %v2280 = vld [vmem:[%s162 + $0xd8] sm:$0xff]
  %v2281 = vld [vmem:[%s162 + $0xe0] sm:$0xff]
  %v2282 = vld [vmem:[%s162 + $0xf0] sm:$0xff]
  %v2283 = vld [vmem:[%s162 + $0xf8] sm:$0xff]
  %v2284 = vld [vmem:[%s162 + $0x108] sm:$0xff]
  %v2285 = vld [vmem:[%s162 + $0x110] sm:$0xff]
  %v2286 = vld [vmem:[%s162 + $0x120] sm:$0xff]
  %v2287 = vld [vmem:[%s162 + $0x128] sm:$0xff]
  %v2288 = vld [vmem:[%s162 + $0x138] sm:$0xff]
  %v2289 = vld [vmem:[%s162 + $0x140] sm:$0xff]
  %v2290 = vld [vmem:[%s162 + $0x150] sm:$0xff]
  %v2291 = vld [vmem:[%s162 + $0x158] sm:$0xff]
  %v2292 = vld [vmem:[%s162 + $0x168] sm:$0xff]
  %v2293 = vld [vmem:[%s162 + $0x170] sm:$0xff]
  %v2294 = vld [vmem:[%s228] sm:$0xff]
  %v2295 = vld [vmem:[%s228 + $0x8] sm:$0xff]
  %v2296 = vld [vmem:[%s228 + $0x18] sm:$0xff]
  %v2297 = vld [vmem:[%s228 + $0x20] sm:$0xff]
  %v2298 = vld [vmem:[%s228 + $0x30] sm:$0xff]
  %v2299 = vld [vmem:[%s228 + $0x38] sm:$0xff]
  %v2300 = vld [vmem:[%s228 + $0x48] sm:$0xff]
  %v2301 = vld [vmem:[%s228 + $0x50] sm:$0xff]
  %v2302 = vld [vmem:[%s228 + $0x60] sm:$0xff]
  %v2303 = vld [vmem:[%s228 + $0x68] sm:$0xff]
  %v2304 = vld [vmem:[%s228 + $0x78] sm:$0xff]
  %v2305 = vld [vmem:[%s228 + $0x80] sm:$0xff]
  %v2306 = vld [vmem:[%s228 + $0x90] sm:$0xff]
  %v2307 = vld [vmem:[%s228 + $0x98] sm:$0xff]
  %v2308 = vld [vmem:[%s228 + $0xa8] sm:$0xff]
  %v2309 = vld [vmem:[%s228 + $0xb0] sm:$0xff]
  %v2310 = vld [vmem:[%s228 + $0xc0] sm:$0xff]
  %v2311 = vld [vmem:[%s228 + $0xc8] sm:$0xff]
  %v2312 = vld [vmem:[%s228 + $0xd8] sm:$0xff]
  %v2313 = vld [vmem:[%s228 + $0xe0] sm:$0xff]
  %v2314 = vld [vmem:[%s228 + $0xf0] sm:$0xff]
  %v2315 = vld [vmem:[%s228 + $0xf8] sm:$0xff]
  %v2316 = vld [vmem:[%s228 + $0x108] sm:$0xff]
  %v2317 = vld [vmem:[%s228 + $0x110] sm:$0xff]
  %v2318 = vld [vmem:[%s228 + $0x120] sm:$0xff]
  %v2319 = vld [vmem:[%s228 + $0x128] sm:$0xff]
  %v2320 = vld [vmem:[%s228 + $0x138] sm:$0xff]
  %v2321 = vld [vmem:[%s228 + $0x140] sm:$0xff]
  %v2322 = vld [vmem:[%s228 + $0x150] sm:$0xff]
  %v2323 = vld [vmem:[%s228 + $0x158] sm:$0xff]
  %v2324 = vld [vmem:[%s228 + $0x168] sm:$0xff]
  %v2325 = vld [vmem:[%s228 + $0x170] sm:$0xff]
  %v2326 = vld [vmem:[%s1 + $0x9] sm:$0x7]
  %v2328 = vsel %vm20, %v2262, 0
  %v2331 = vsel %vm20, %v2263, 0
  %v2334 = vsel %vm20, %v2264, 0
  %v2337 = vsel %vm20, %v2265, 0
  %v2340 = vsel %vm20, %v2266, 0
  %v2343 = vsel %vm20, %v2267, 0
  %v2346 = vsel %vm20, %v2268, 0
  %v2349 = vsel %vm20, %v2269, 0
  %v2352 = vsel %vm20, %v2270, 0
  %v2355 = vsel %vm20, %v2271, 0
  %v2358 = vsel %vm20, %v2272, 0
  %v2361 = vsel %vm20, %v2273, 0
  %v2364 = vsel %vm20, %v2274, 0
  %v2367 = vsel %vm20, %v2275, 0
  %v2370 = vsel %vm20, %v2276, 0
  %v2373 = vsel %vm20, %v2277, 0
  %v2376 = vsel %vm20, %v2278, 0
  %v2379 = vsel %vm20, %v2279, 0
  %v2382 = vsel %vm20, %v2280, 0
  %v2385 = vsel %vm20, %v2281, 0
  %v2388 = vsel %vm20, %v2282, 0
  %v2391 = vsel %vm20, %v2283, 0
  %v2394 = vsel %vm20, %v2284, 0
  %v2397 = vsel %vm20, %v2285, 0
  %v2400 = vsel %vm20, %v2286, 0
  %v2403 = vsel %vm20, %v2287, 0
  %v2406 = vsel %vm20, %v2288, 0
  %v2409 = vsel %vm20, %v2289, 0
  %v2412 = vsel %vm20, %v2290, 0
  %v2415 = vsel %vm20, %v2291, 0
  %v2418 = vsel %vm20, %v2292, 0
  %v2421 = vsel %vm20, %v2293, 0
  %v2424 = vsel %vm20, %v2294, 0
  %v2427 = vsel %vm20, %v2295, 0
  %v2430 = vsel %vm20, %v2296, 0
  %v2433 = vsel %vm20, %v2297, 0
  %v2436 = vsel %vm20, %v2298, 0
  %v2439 = vsel %vm20, %v2299, 0
  %v2442 = vsel %vm20, %v2300, 0
  %v2445 = vsel %vm20, %v2301, 0
  %v2448 = vsel %vm20, %v2302, 0
  %v2451 = vsel %vm20, %v2303, 0
  %v2454 = vsel %vm20, %v2304, 0
  %v2457 = vsel %vm20, %v2305, 0
  %v2460 = vsel %vm20, %v2306, 0
  %v2463 = vsel %vm20, %v2307, 0
  %v2466 = vsel %vm20, %v2308, 0
  %v2469 = vsel %vm20, %v2309, 0
  %v2472 = vsel %vm20, %v2310, 0
  %v2475 = vsel %vm20, %v2311, 0
  %v2478 = vsel %vm20, %v2312, 0
  %v2481 = vsel %vm20, %v2313, 0
  %v2484 = vsel %vm20, %v2314, 0
  %v2487 = vsel %vm20, %v2315, 0
  %v2490 = vsel %vm20, %v2316, 0
  %v2493 = vsel %vm20, %v2317, 0
  %v2496 = vsel %vm20, %v2318, 0
  %v2499 = vsel %vm20, %v2319, 0
  %v2502 = vsel %vm20, %v2320, 0
  %v2505 = vsel %vm20, %v2321, 0
  %v2508 = vsel %vm20, %v2322, 0
  %v2511 = vsel %vm20, %v2323, 0
  %v2514 = vsel %vm20, %v2324, 0
  %v2517 = vsel %vm20, %v2325, 0
  %v2520 = vsel %vm584, %v2326, 0
  %2522 = vmatprep.subr.mxu0 0.0
  %2523 = vmatpush1.msra.mxu0 %v2520
  %2524 = vmatprep.subr.mxu0 0.0
  %2525 = vmatpush1.msra.mxu0 0.0
  %2526 = vmatprep.subr.mxu0 0.0
  %2527 = vmatpush1.msra.mxu0 0.0
  %2528 = vmatprep.subr.mxu0 0.0
  %2529 = vmatpush1.msra.mxu0 0.0
  %2530 = vmatprep.subr.mxu0 0.0
  %2531 = vmatpush1.msra.mxu0 0.0
  %2532 = vmatprep.subr.mxu0 0.0
  %2533 = vmatpush1.msra.mxu0 0.0
  %2534 = vmatprep.subr.mxu0 0.0
  %2535 = vmatpush1.msra.mxu0 0.0
  %2536 = vmatprep.subr.mxu0 0.0
  %2537 = vmatpush1.msra.mxu0 0.0
  %2538 = vmatprep.subr.mxu0 0.0
  %2539 = vmatpush1.msra.mxu0 0.0
  %2540 = vmatprep.subr.mxu0 0.0
  %2541 = vmatpush1.msra.mxu0 0.0
  %2542 = vmatprep.subr.mxu0 0.0
  %2543 = vmatpush1.msra.mxu0 0.0
  %2544 = vmatprep.subr.mxu0 0.0
  %2545 = vmatpush1.msra.mxu0 0.0
  %2546 = vmatprep.subr.mxu0 0.0
  %2547 = vmatpush1.msra.mxu0 0.0
  %2548 = vmatprep.subr.mxu0 0.0
  %2549 = vmatpush1.msra.mxu0 0.0
  %2550 = vmatprep.subr.mxu0 0.0
  %2551 = vmatpush1.msra.mxu0 0.0
  %2552 = vmatprep.subr.mxu0 0.0
  %2553 = vmatpush1.msra.mxu0 0.0
  %2554 = vmatprep.subr.mxu0 0.0
  %2555 = vmatpush1.msra.mxu0 0.0
  %2556 = vmatprep.subr.mxu0 0.0
  %2557 = vmatpush1.msra.mxu0 0.0
  %2558 = vmatprep.subr.mxu0 0.0
  %2559 = vmatpush1.msra.mxu0 0.0
  %2560 = vmatprep.subr.mxu0 0.0
  %2561 = vmatpush1.msra.mxu0 0.0
  %2562 = vmatprep.subr.mxu0 0.0
  %2563 = vmatpush1.msra.mxu0 0.0
  %2564 = vmatprep.subr.mxu0 0.0
  %2565 = vmatpush1.msra.mxu0 0.0
  %2566 = vmatprep.subr.mxu0 0.0
  %2567 = vmatpush1.msra.mxu0 0.0
  %2568 = vmatprep.subr.mxu0 0.0
  %2569 = vmatpush1.msra.mxu0 0.0
  %2570 = vmatprep.subr.mxu0 0.0
  %2571 = vmatpush1.msra.mxu0 0.0
  %2572 = vmatprep.subr.mxu0 0.0
  %2573 = vmatpush1.msra.mxu0 0.0
  %2574 = vmatprep.subr.mxu0 0.0
  %2575 = vmatpush1.msra.mxu0 0.0
  %2576 = vmatprep.subr.mxu0 0.0
  %2577 = vmatpush1.msra.mxu0 0.0
  %2578 = vmatprep.subr.mxu0 0.0
  %2579 = vmatpush1.msra.mxu0 0.0
  %2580 = vmatprep.subr.mxu0 0.0
  %2581 = vmatpush1.msra.mxu0 0.0
  %2582 = vmatprep.subr.mxu0 0.0
  %2583 = vmatpush1.msra.mxu0 0.0
  %2584 = vmatprep.subr.mxu0 0.0
  %2585 = vmatpush1.msra.mxu0 0.0
  %2586 = vmatprep.mubr.f32.mxu0 0.0
  %2587 = vmatmul.mubr.f32.gmra.mrb[0].mxu0 %v2328
  %v2588 = vpop.f32.mrb[0].mxu0
  %v2589 = vadd.f32 0.0, %v2588
  %v2590 = vpop.f32.mrb[0].mxu0
  %2591 = vmatprep.mubr.f32.mxu0 0.0
  %2592 = vmatmul.mubr.f32.gmra.mrb[0].mxu0 %v2331
  %v2593 = vpop.f32.mrb[0].mxu0
  %v2594 = vadd.f32 0.0, %v2593
  %v2595 = vpop.f32.mrb[0].mxu0
  %2596 = vmatprep.mubr.f32.mxu0 0.0
  %2597 = vmatmul.mubr.f32.gmra.mrb[0].mxu0 %v2334
  %v2598 = vpop.f32.mrb[0].mxu0
  %v2599 = vadd.f32 0.0, %v2598
  %v2600 = vpop.f32.mrb[0].mxu0
  %2601 = vmatprep.mubr.f32.mxu0 0.0
  %2602 = vmatmul.mubr.f32.gmra.mrb[0].mxu0 %v2337
  %v2603 = vpop.f32.mrb[0].mxu0
  %v2604 = vadd.f32 0.0, %v2603
  %v2605 = vpop.f32.mrb[0].mxu0
  %2606 = vmatprep.mubr.f32.mxu0 0.0
  %2607 = vmatmul.mubr.f32.gmra.mrb[0].mxu0 %v2340
  %v2608 = vpop.f32.mrb[0].mxu0
  %v2609 = vadd.f32 0.0, %v2608
  %v2610 = vpop.f32.mrb[0].mxu0
  %2611 = vmatprep.mubr.f32.mxu0 0.0
  %2612 = vmatmul.mubr.f32.gmra.mrb[0].mxu0 %v2343
  %v2613 = vpop.f32.mrb[0].mxu0
  %v2614 = vadd.f32 0.0, %v2613
  %v2615 = vpop.f32.mrb[0].mxu0
  %2616 = vmatprep.mubr.f32.mxu0 0.0
  %2617 = vmatmul.mubr.f32.gmra.mrb[0].mxu0 %v2346
  %v2618 = vpop.f32.mrb[0].mxu0
  %v2619 = vadd.f32 0.0, %v2618
  %v2620 = vpop.f32.mrb[0].mxu0
  %2621 = vmatprep.mubr.f32.mxu0 0.0
  %2622 = vmatmul.mubr.f32.gmra.mrb[0].mxu0 %v2349
  %v2623 = vpop.f32.mrb[0].mxu0
  %v2624 = vadd.f32 0.0, %v2623
  %v2625 = vpop.f32.mrb[0].mxu0
  %2626 = vmatprep.mubr.f32.mxu0 0.0
  %2627 = vmatmul.mubr.f32.gmra.mrb[0].mxu0 %v2352
  %v2628 = vpop.f32.mrb[0].mxu0
  %v2629 = vadd.f32 0.0, %v2628
  %v2630 = vpop.f32.mrb[0].mxu0
  %2631 = vmatprep.mubr.f32.mxu0 0.0
  %2632 = vmatmul.mubr.f32.gmra.mrb[0].mxu0 %v2355
  %v2633 = vpop.f32.mrb[0].mxu0
  %v2634 = vadd.f32 0.0, %v2633
  %v2635 = vpop.f32.mrb[0].mxu0
  %2636 = vmatprep.mubr.f32.mxu0 0.0
  %2637 = vmatmul.mubr.f32.gmra.mrb[0].mxu0 %v2358
  %v2638 = vpop.f32.mrb[0].mxu0
  %v2639 = vadd.f32 0.0, %v2638
  %v2640 = vpop.f32.mrb[0].mxu0
  %2641 = vmatprep.mubr.f32.mxu0 0.0
  %2642 = vmatmul.mubr.f32.gmra.mrb[0].mxu0 %v2361
  %v2643 = vpop.f32.mrb[0].mxu0
  %v2644 = vadd.f32 0.0, %v2643
  %v2645 = vpop.f32.mrb[0].mxu0
  %2646 = vmatprep.mubr.f32.mxu0 0.0
  %2647 = vmatmul.mubr.f32.gmra.mrb[0].mxu0 %v2364
  %v2648 = vpop.f32.mrb[0].mxu0
  %v2649 = vadd.f32 0.0, %v2648
  %v2650 = vpop.f32.mrb[0].mxu0
  %2651 = vmatprep.mubr.f32.mxu0 0.0
  %2652 = vmatmul.mubr.f32.gmra.mrb[0].mxu0 %v2367
  %v2653 = vpop.f32.mrb[0].mxu0
  %v2654 = vadd.f32 0.0, %v2653
  %v2655 = vpop.f32.mrb[0].mxu0
  %2656 = vmatprep.mubr.f32.mxu0 0.0
  %2657 = vmatmul.mubr.f32.gmra.mrb[0].mxu0 %v2370
  %v2658 = vpop.f32.mrb[0].mxu0
  %v2659 = vadd.f32 0.0, %v2658
  %v2660 = vpop.f32.mrb[0].mxu0
  %2661 = vmatprep.mubr.f32.mxu0 0.0
  %2662 = vmatmul.mubr.f32.gmra.mrb[0].mxu0 %v2373
  %v2663 = vpop.f32.mrb[0].mxu0
  %v2664 = vadd.f32 0.0, %v2663
  %v2665 = vpop.f32.mrb[0].mxu0
  %2666 = vmatprep.mubr.f32.mxu0 0.0
  %2667 = vmatmul.mubr.f32.gmra.mrb[0].mxu0 %v2376
  %v2668 = vpop.f32.mrb[0].mxu0
  %v2669 = vadd.f32 0.0, %v2668
  %v2670 = vpop.f32.mrb[0].mxu0
  %2671 = vmatprep.mubr.f32.mxu0 0.0
  %2672 = vmatmul.mubr.f32.gmra.mrb[0].mxu0 %v2379
  %v2673 = vpop.f32.mrb[0].mxu0
  %v2674 = vadd.f32 0.0, %v2673
  %v2675 = vpop.f32.mrb[0].mxu0
  %2676 = vmatprep.mubr.f32.mxu0 0.0
  %2677 = vmatmul.mubr.f32.gmra.mrb[0].mxu0 %v2382
  %v2678 = vpop.f32.mrb[0].mxu0
  %v2679 = vadd.f32 0.0, %v2678
  %v2680 = vpop.f32.mrb[0].mxu0
  %2681 = vmatprep.mubr.f32.mxu0 0.0
  %2682 = vmatmul.mubr.f32.gmra.mrb[0].mxu0 %v2385
  %v2683 = vpop.f32.mrb[0].mxu0
  %v2684 = vadd.f32 0.0, %v2683
  %v2685 = vpop.f32.mrb[0].mxu0
  %2686 = vmatprep.mubr.f32.mxu0 0.0
  %2687 = vmatmul.mubr.f32.gmra.mrb[0].mxu0 %v2388
  %v2688 = vpop.f32.mrb[0].mxu0
  %v2689 = vadd.f32 0.0, %v2688
  %v2690 = vpop.f32.mrb[0].mxu0
  %2691 = vmatprep.mubr.f32.mxu0 0.0
  %2692 = vmatmul.mubr.f32.gmra.mrb[0].mxu0 %v2391
  %v2693 = vpop.f32.mrb[0].mxu0
  %v2694 = vadd.f32 0.0, %v2693
  %v2695 = vpop.f32.mrb[0].mxu0
  %2696 = vmatprep.mubr.f32.mxu0 0.0
  %2697 = vmatmul.mubr.f32.gmra.mrb[0].mxu0 %v2394
  %v2698 = vpop.f32.mrb[0].mxu0
  %v2699 = vadd.f32 0.0, %v2698
  %v2700 = vpop.f32.mrb[0].mxu0
  %2701 = vmatprep.mubr.f32.mxu0 0.0
  %2702 = vmatmul.mubr.f32.gmra.mrb[0].mxu0 %v2397
  %v2703 = vpop.f32.mrb[0].mxu0
  %v2704 = vadd.f32 0.0, %v2703
  %v2705 = vpop.f32.mrb[0].mxu0
  %2706 = vmatprep.mubr.f32.mxu0 0.0
  %2707 = vmatmul.mubr.f32.gmra.mrb[0].mxu0 %v2400
  %v2708 = vpop.f32.mrb[0].mxu0
  %v2709 = vadd.f32 0.0, %v2708
  %v2710 = vpop.f32.mrb[0].mxu0
  %2711 = vmatprep.mubr.f32.mxu0 0.0
  %2712 = vmatmul.mubr.f32.gmra.mrb[0].mxu0 %v2403
  %v2713 = vpop.f32.mrb[0].mxu0
  %v2714 = vadd.f32 0.0, %v2713
  %v2715 = vpop.f32.mrb[0].mxu0
  %2716 = vmatprep.mubr.f32.mxu0 0.0
  %2717 = vmatmul.mubr.f32.gmra.mrb[0].mxu0 %v2406
  %v2718 = vpop.f32.mrb[0].mxu0
  %v2719 = vadd.f32 0.0, %v2718
  %v2720 = vpop.f32.mrb[0].mxu0
  %2721 = vmatprep.mubr.f32.mxu0 0.0
  %2722 = vmatmul.mubr.f32.gmra.mrb[0].mxu0 %v2409
  %v2723 = vpop.f32.mrb[0].mxu0
  %v2724 = vadd.f32 0.0, %v2723
  %v2725 = vpop.f32.mrb[0].mxu0
  %2726 = vmatprep.mubr.f32.mxu0 0.0
  %2727 = vmatmul.mubr.f32.gmra.mrb[0].mxu0 %v2412
  %v2728 = vpop.f32.mrb[0].mxu0
  %v2729 = vadd.f32 0.0, %v2728
  %v2730 = vpop.f32.mrb[0].mxu0
  %2731 = vmatprep.mubr.f32.mxu0 0.0
  %2732 = vmatmul.mubr.f32.gmra.mrb[0].mxu0 %v2415
  %v2733 = vpop.f32.mrb[0].mxu0
  %v2734 = vadd.f32 0.0, %v2733
  %v2735 = vpop.f32.mrb[0].mxu0
  %2736 = vmatprep.mubr.f32.mxu0 0.0
  %2737 = vmatmul.mubr.f32.gmra.mrb[0].mxu0 %v2418
  %v2738 = vpop.f32.mrb[0].mxu0
  %v2739 = vadd.f32 0.0, %v2738
  %v2740 = vpop.f32.mrb[0].mxu0
  %2741 = vmatprep.mubr.f32.mxu0 0.0
  %2742 = vmatmul.mubr.f32.gmra.mrb[0].mxu0 %v2421
  %v2743 = vpop.f32.mrb[0].mxu0
  %v2744 = vadd.f32 0.0, %v2743
  %v2745 = vpop.f32.mrb[0].mxu0
  %2746 = vmatprep.mubr.f32.mxu0 0.0
  %2747 = vmatmul.mubr.f32.gmra.mrb[0].mxu0 %v2424
  %v2748 = vpop.f32.mrb[0].mxu0
  %v2749 = vadd.f32 0.0, %v2748
  %v2750 = vpop.f32.mrb[0].mxu0
  %2751 = vmatprep.mubr.f32.mxu0 0.0
  %2752 = vmatmul.mubr.f32.gmra.mrb[0].mxu0 %v2427
  %v2753 = vpop.f32.mrb[0].mxu0
  %v2754 = vadd.f32 0.0, %v2753
  %v2755 = vpop.f32.mrb[0].mxu0
  %2756 = vmatprep.mubr.f32.mxu0 0.0
  %2757 = vmatmul.mubr.f32.gmra.mrb[0].mxu0 %v2430
  %v2758 = vpop.f32.mrb[0].mxu0
  %v2759 = vadd.f32 0.0, %v2758
  %v2760 = vpop.f32.mrb[0].mxu0
  %2761 = vmatprep.mubr.f32.mxu0 0.0
  %2762 = vmatmul.mubr.f32.gmra.mrb[0].mxu0 %v2433
  %v2763 = vpop.f32.mrb[0].mxu0
  %v2764 = vadd.f32 0.0, %v2763
  %v2765 = vpop.f32.mrb[0].mxu0
  %2766 = vmatprep.mubr.f32.mxu0 0.0
  %2767 = vmatmul.mubr.f32.gmra.mrb[0].mxu0 %v2436
  %v2768 = vpop.f32.mrb[0].mxu0
  %v2769 = vadd.f32 0.0, %v2768
  %v2770 = vpop.f32.mrb[0].mxu0
  %2771 = vmatprep.mubr.f32.mxu0 0.0
  %2772 = vmatmul.mubr.f32.gmra.mrb[0].mxu0 %v2439
  %v2773 = vpop.f32.mrb[0].mxu0
  %v2774 = vadd.f32 0.0, %v2773
  %v2775 = vpop.f32.mrb[0].mxu0
  %2776 = vmatprep.mubr.f32.mxu0 0.0
  %2777 = vmatmul.mubr.f32.gmra.mrb[0].mxu0 %v2442
  %v2778 = vpop.f32.mrb[0].mxu0
  %v2779 = vadd.f32 0.0, %v2778
  %v2780 = vpop.f32.mrb[0].mxu0
  %2781 = vmatprep.mubr.f32.mxu0 0.0
  %2782 = vmatmul.mubr.f32.gmra.mrb[0].mxu0 %v2445
  %v2783 = vpop.f32.mrb[0].mxu0
  %v2784 = vadd.f32 0.0, %v2783
  %v2785 = vpop.f32.mrb[0].mxu0
  %2786 = vmatprep.mubr.f32.mxu0 0.0
  %2787 = vmatmul.mubr.f32.gmra.mrb[0].mxu0 %v2448
  %v2788 = vpop.f32.mrb[0].mxu0
  %v2789 = vadd.f32 0.0, %v2788
  %v2790 = vpop.f32.mrb[0].mxu0
  %2791 = vmatprep.mubr.f32.mxu0 0.0
  %2792 = vmatmul.mubr.f32.gmra.mrb[0].mxu0 %v2451
  %v2793 = vpop.f32.mrb[0].mxu0
  %v2794 = vadd.f32 0.0, %v2793
  %v2795 = vpop.f32.mrb[0].mxu0
  %2796 = vmatprep.mubr.f32.mxu0 0.0
  %2797 = vmatmul.mubr.f32.gmra.mrb[0].mxu0 %v2454
  %v2798 = vpop.f32.mrb[0].mxu0
  %v2799 = vadd.f32 0.0, %v2798
  %v2800 = vpop.f32.mrb[0].mxu0
  %2801 = vmatprep.mubr.f32.mxu0 0.0
  %2802 = vmatmul.mubr.f32.gmra.mrb[0].mxu0 %v2457
  %v2803 = vpop.f32.mrb[0].mxu0
  %v2804 = vadd.f32 0.0, %v2803
  %v2805 = vpop.f32.mrb[0].mxu0
  %2806 = vmatprep.mubr.f32.mxu0 0.0
  %2807 = vmatmul.mubr.f32.gmra.mrb[0].mxu0 %v2460
  %v2808 = vpop.f32.mrb[0].mxu0
  %v2809 = vadd.f32 0.0, %v2808
  %v2810 = vpop.f32.mrb[0].mxu0
  %2811 = vmatprep.mubr.f32.mxu0 0.0
  %2812 = vmatmul.mubr.f32.gmra.mrb[0].mxu0 %v2463
  %v2813 = vpop.f32.mrb[0].mxu0
  %v2814 = vadd.f32 0.0, %v2813
  %v2815 = vpop.f32.mrb[0].mxu0
  %2816 = vmatprep.mubr.f32.mxu0 0.0
  %2817 = vmatmul.mubr.f32.gmra.mrb[0].mxu0 %v2466
  %v2818 = vpop.f32.mrb[0].mxu0
  %v2819 = vadd.f32 0.0, %v2818
  %v2820 = vpop.f32.mrb[0].mxu0
  %2821 = vmatprep.mubr.f32.mxu0 0.0
  %2822 = vmatmul.mubr.f32.gmra.mrb[0].mxu0 %v2469
  %v2823 = vpop.f32.mrb[0].mxu0
  %v2824 = vadd.f32 0.0, %v2823
  %v2825 = vpop.f32.mrb[0].mxu0
  %2826 = vmatprep.mubr.f32.mxu0 0.0
  %2827 = vmatmul.mubr.f32.gmra.mrb[0].mxu0 %v2472
  %v2828 = vpop.f32.mrb[0].mxu0
  %v2829 = vadd.f32 0.0, %v2828
  %v2830 = vpop.f32.mrb[0].mxu0
  %2831 = vmatprep.mubr.f32.mxu0 0.0
  %2832 = vmatmul.mubr.f32.gmra.mrb[0].mxu0 %v2475
  %v2833 = vpop.f32.mrb[0].mxu0
  %v2834 = vadd.f32 0.0, %v2833
  %v2835 = vpop.f32.mrb[0].mxu0
  %2836 = vmatprep.mubr.f32.mxu0 0.0
  %2837 = vmatmul.mubr.f32.gmra.mrb[0].mxu0 %v2478
  %v2838 = vpop.f32.mrb[0].mxu0
  %v2839 = vadd.f32 0.0, %v2838
  %v2840 = vpop.f32.mrb[0].mxu0
  %2841 = vmatprep.mubr.f32.mxu0 0.0
  %2842 = vmatmul.mubr.f32.gmra.mrb[0].mxu0 %v2481
  %v2843 = vpop.f32.mrb[0].mxu0
  %v2844 = vadd.f32 0.0, %v2843
  %v2845 = vpop.f32.mrb[0].mxu0
  %2846 = vmatprep.mubr.f32.mxu0 0.0
  %2847 = vmatmul.mubr.f32.gmra.mrb[0].mxu0 %v2484
  %v2848 = vpop.f32.mrb[0].mxu0
  %v2849 = vadd.f32 0.0, %v2848
  %v2850 = vpop.f32.mrb[0].mxu0
  %2851 = vmatprep.mubr.f32.mxu0 0.0
  %2852 = vmatmul.mubr.f32.gmra.mrb[0].mxu0 %v2487
  %v2853 = vpop.f32.mrb[0].mxu0
  %v2854 = vadd.f32 0.0, %v2853
  %v2855 = vpop.f32.mrb[0].mxu0
  %2856 = vmatprep.mubr.f32.mxu0 0.0
  %2857 = vmatmul.mubr.f32.gmra.mrb[0].mxu0 %v2490
  %v2858 = vpop.f32.mrb[0].mxu0
  %v2859 = vadd.f32 0.0, %v2858
  %v2860 = vpop.f32.mrb[0].mxu0
  %2861 = vmatprep.mubr.f32.mxu0 0.0
  %2862 = vmatmul.mubr.f32.gmra.mrb[0].mxu0 %v2493
  %v2863 = vpop.f32.mrb[0].mxu0
  %v2864 = vadd.f32 0.0, %v2863
  %v2865 = vpop.f32.mrb[0].mxu0
  %2866 = vmatprep.mubr.f32.mxu0 0.0
  %2867 = vmatmul.mubr.f32.gmra.mrb[0].mxu0 %v2496
  %v2868 = vpop.f32.mrb[0].mxu0
  %v2869 = vadd.f32 0.0, %v2868
  %v2870 = vpop.f32.mrb[0].mxu0
  %2871 = vmatprep.mubr.f32.mxu0 0.0
  %2872 = vmatmul.mubr.f32.gmra.mrb[0].mxu0 %v2499
  %v2873 = vpop.f32.mrb[0].mxu0
  %v2874 = vadd.f32 0.0, %v2873
  %v2875 = vpop.f32.mrb[0].mxu0
  %2876 = vmatprep.mubr.f32.mxu0 0.0
  %2877 = vmatmul.mubr.f32.gmra.mrb[0].mxu0 %v2502
  %v2878 = vpop.f32.mrb[0].mxu0
  %v2879 = vadd.f32 0.0, %v2878
  %v2880 = vpop.f32.mrb[0].mxu0
  %2881 = vmatprep.mubr.f32.mxu0 0.0
  %2882 = vmatmul.mubr.f32.gmra.mrb[0].mxu0 %v2505
  %v2883 = vpop.f32.mrb[0].mxu0
  %v2884 = vadd.f32 0.0, %v2883
  %v2885 = vpop.f32.mrb[0].mxu0
  %2886 = vmatprep.mubr.f32.mxu0 0.0
  %2887 = vmatmul.mubr.f32.gmra.mrb[0].mxu0 %v2508
  %v2888 = vpop.f32.mrb[0].mxu0
  %v2889 = vadd.f32 0.0, %v2888
  %v2890 = vpop.f32.mrb[0].mxu0
  %2891 = vmatprep.mubr.f32.mxu0 0.0
  %2892 = vmatmul.mubr.f32.gmra.mrb[0].mxu0 %v2511
  %v2893 = vpop.f32.mrb[0].mxu0
  %v2894 = vadd.f32 0.0, %v2893
  %v2895 = vpop.f32.mrb[0].mxu0
  %2896 = vmatprep.mubr.f32.mxu0 0.0
  %2897 = vmatmul.mubr.f32.gmra.mrb[0].mxu0 %v2514
  %v2898 = vpop.f32.mrb[0].mxu0
  %v2899 = vadd.f32 0.0, %v2898
  %v2900 = vpop.f32.mrb[0].mxu0
  %2901 = vmatprep.mubr.f32.mxu0 0.0
  %2902 = vmatmul.mubr.f32.gmra.mrb[0].mxu0 %v2517
  %v2903 = vpop.f32.mrb[0].mxu0
  %v2904 = vadd.f32 0.0, %v2903
  %v2905 = vpop.f32.mrb[0].mxu0
  %2906 = vdwg.mxu0
  %v2907 = vadd.f32 %v2198, %v2589
  %v2908 = vadd.f32 %v2199, %v2594
  %v2909 = vadd.f32 %v2200, %v2599
  %v2910 = vadd.f32 %v2201, %v2604
  %v2911 = vadd.f32 %v2202, %v2609
  %v2912 = vadd.f32 %v2203, %v2614
  %v2913 = vadd.f32 %v2204, %v2619
  %v2914 = vadd.f32 %v2205, %v2624
  %v2915 = vadd.f32 %v2206, %v2629
  %v2916 = vadd.f32 %v2207, %v2634
  %v2917 = vadd.f32 %v2208, %v2639
  %v2918 = vadd.f32 %v2209, %v2644
  %v2919 = vadd.f32 %v2210, %v2649
  %v2920 = vadd.f32 %v2211, %v2654
  %v2921 = vadd.f32 %v2212, %v2659
  %v2922 = vadd.f32 %v2213, %v2664
  %v2923 = vadd.f32 %v2214, %v2669
  %v2924 = vadd.f32 %v2215, %v2674
  %v2925 = vadd.f32 %v2216, %v2679
  %v2926 = vadd.f32 %v2217, %v2684
  %v2927 = vadd.f32 %v2218, %v2689
  %v2928 = vadd.f32 %v2219, %v2694
  %v2929 = vadd.f32 %v2220, %v2699
  %v2930 = vadd.f32 %v2221, %v2704
  %v2931 = vadd.f32 %v2222, %v2709
  %v2932 = vadd.f32 %v2223, %v2714
  %v2933 = vadd.f32 %v2224, %v2719
  %v2934 = vadd.f32 %v2225, %v2724
  %v2935 = vadd.f32 %v2226, %v2729
  %v2936 = vadd.f32 %v2227, %v2734
  %v2937 = vadd.f32 %v2228, %v2739
  %v2938 = vadd.f32 %v2229, %v2744
  %v2939 = vadd.f32 %v2230, %v2749
  %v2940 = vadd.f32 %v2231, %v2754
  %v2941 = vadd.f32 %v2232, %v2759
  %v2942 = vadd.f32 %v2233, %v2764
  %v2943 = vadd.f32 %v2234, %v2769
  %v2944 = vadd.f32 %v2235, %v2774
  %v2945 = vadd.f32 %v2236, %v2779
  %v2946 = vadd.f32 %v2237, %v2784
  %v2947 = vadd.f32 %v2238, %v2789
  %v2948 = vadd.f32 %v2239, %v2794
  %v2949 = vadd.f32 %v2240, %v2799
  %v2950 = vadd.f32 %v2241, %v2804
  %v2951 = vadd.f32 %v2242, %v2809
  %v2952 = vadd.f32 %v2243, %v2814
  %v2953 = vadd.f32 %v2244, %v2819
  %v2954 = vadd.f32 %v2245, %v2824
  %v2955 = vadd.f32 %v2246, %v2829
  %v2956 = vadd.f32 %v2247, %v2834
  %v2957 = vadd.f32 %v2248, %v2839
  %v2958 = vadd.f32 %v2249, %v2844
  %v2959 = vadd.f32 %v2250, %v2849
  %v2960 = vadd.f32 %v2251, %v2854
  %v2961 = vadd.f32 %v2252, %v2859
  %v2962 = vadd.f32 %v2253, %v2864
  %v2963 = vadd.f32 %v2254, %v2869
  %v2964 = vadd.f32 %v2255, %v2874
  %v2965 = vadd.f32 %v2256, %v2879
  %v2966 = vadd.f32 %v2257, %v2884
  %v2967 = vadd.f32 %v2258, %v2889
  %v2968 = vadd.f32 %v2259, %v2894
  %v2969 = vadd.f32 %v2260, %v2899
  %v2970 = vadd.f32 %v2261, %v2904
  %v2971 = vld [vmem:[%s162 + $0x1] sm:$0xff]
  %v2972 = vld [vmem:[%s162 + $0x9] sm:$0xff]
  %v2973 = vld [vmem:[%s162 + $0x19] sm:$0xff]
  %v2974 = vld [vmem:[%s162 + $0x21] sm:$0xff]
  %v2975 = vld [vmem:[%s162 + $0x31] sm:$0xff]
  %v2976 = vld [vmem:[%s162 + $0x39] sm:$0xff]
  %v2977 = vld [vmem:[%s162 + $0x49] sm:$0xff]
  %v2978 = vld [vmem:[%s162 + $0x51] sm:$0xff]
  %v2979 = vld [vmem:[%s162 + $0x61] sm:$0xff]
  %v2980 = vld [vmem:[%s162 + $0x69] sm:$0xff]
  %v2981 = vld [vmem:[%s162 + $0x79] sm:$0xff]
  %v2982 = vld [vmem:[%s162 + $0x81] sm:$0xff]
  %v2983 = vld [vmem:[%s162 + $0x91] sm:$0xff]
  %v2984 = vld [vmem:[%s162 + $0x99] sm:$0xff]
  %v2985 = vld [vmem:[%s162 + $0xa9] sm:$0xff]
  %v2986 = vld [vmem:[%s162 + $0xb1] sm:$0xff]
  %v2987 = vld [vmem:[%s162 + $0xc1] sm:$0xff]
  %v2988 = vld [vmem:[%s162 + $0xc9] sm:$0xff]
  %v2989 = vld [vmem:[%s162 + $0xd9] sm:$0xff]
  %v2990 = vld [vmem:[%s162 + $0xe1] sm:$0xff]
  %v2991 = vld [vmem:[%s162 + $0xf1] sm:$0xff]
  %v2992 = vld [vmem:[%s162 + $0xf9] sm:$0xff]
  %v2993 = vld [vmem:[%s162 + $0x109] sm:$0xff]
  %v2994 = vld [vmem:[%s162 + $0x111] sm:$0xff]
  %v2995 = vld [vmem:[%s162 + $0x121] sm:$0xff]
  %v2996 = vld [vmem:[%s162 + $0x129] sm:$0xff]
  %v2997 = vld [vmem:[%s162 + $0x139] sm:$0xff]
  %v2998 = vld [vmem:[%s162 + $0x141] sm:$0xff]
  %v2999 = vld [vmem:[%s162 + $0x151] sm:$0xff]
  %v3000 = vld [vmem:[%s162 + $0x159] sm:$0xff]
  %v3001 = vld [vmem:[%s162 + $0x169] sm:$0xff]
  %v3002 = vld [vmem:[%s162 + $0x171] sm:$0xff]
  %v3003 = vld [vmem:[%s228 + $0x1] sm:$0xff]
  %v3004 = vld [vmem:[%s228 + $0x9] sm:$0xff]
  %v3005 = vld [vmem:[%s228 + $0x19] sm:$0xff]
  %v3006 = vld [vmem:[%s228 + $0x21] sm:$0xff]
  %v3007 = vld [vmem:[%s228 + $0x31] sm:$0xff]
  %v3008 = vld [vmem:[%s228 + $0x39] sm:$0xff]
  %v3009 = vld [vmem:[%s228 + $0x49] sm:$0xff]
  %v3010 = vld [vmem:[%s228 + $0x51] sm:$0xff]
  %v3011 = vld [vmem:[%s228 + $0x61] sm:$0xff]
  %v3012 = vld [vmem:[%s228 + $0x69] sm:$0xff]
  %v3013 = vld [vmem:[%s228 + $0x79] sm:$0xff]
  %v3014 = vld [vmem:[%s228 + $0x81] sm:$0xff]
  %v3015 = vld [vmem:[%s228 + $0x91] sm:$0xff]
  %v3016 = vld [vmem:[%s228 + $0x99] sm:$0xff]
  %v3017 = vld [vmem:[%s228 + $0xa9] sm:$0xff]
  %v3018 = vld [vmem:[%s228 + $0xb1] sm:$0xff]
  %v3019 = vld [vmem:[%s228 + $0xc1] sm:$0xff]
  %v3020 = vld [vmem:[%s228 + $0xc9] sm:$0xff]
  %v3021 = vld [vmem:[%s228 + $0xd9] sm:$0xff]
  %v3022 = vld [vmem:[%s228 + $0xe1] sm:$0xff]
  %v3023 = vld [vmem:[%s228 + $0xf1] sm:$0xff]
  %v3024 = vld [vmem:[%s228 + $0xf9] sm:$0xff]
  %v3025 = vld [vmem:[%s228 + $0x109] sm:$0xff]
  %v3026 = vld [vmem:[%s228 + $0x111] sm:$0xff]
  %v3027 = vld [vmem:[%s228 + $0x121] sm:$0xff]
  %v3028 = vld [vmem:[%s228 + $0x129] sm:$0xff]
  %v3029 = vld [vmem:[%s228 + $0x139] sm:$0xff]
  %v3030 = vld [vmem:[%s228 + $0x141] sm:$0xff]
  %v3031 = vld [vmem:[%s228 + $0x151] sm:$0xff]
  %v3032 = vld [vmem:[%s228 + $0x159] sm:$0xff]
  %v3033 = vld [vmem:[%s228 + $0x169] sm:$0xff]
  %v3034 = vld [vmem:[%s228 + $0x171] sm:$0xff]
  %v3035 = vld [vmem:[%s1 + $0xc] sm:$0x7]
  %v3037 = vsel %vm20, %v2971, 0
  %v3040 = vsel %vm20, %v2972, 0
  %v3043 = vsel %vm20, %v2973, 0
  %v3046 = vsel %vm20, %v2974, 0
  %v3049 = vsel %vm20, %v2975, 0
  %v3052 = vsel %vm20, %v2976, 0
  %v3055 = vsel %vm20, %v2977, 0
  %v3058 = vsel %vm20, %v2978, 0
  %v3061 = vsel %vm20, %v2979, 0
  %v3064 = vsel %vm20, %v2980, 0
  %v3067 = vsel %vm20, %v2981, 0
  %v3070 = vsel %vm20, %v2982, 0
  %v3073 = vsel %vm20, %v2983, 0
  %v3076 = vsel %vm20, %v2984, 0
  %v3079 = vsel %vm20, %v2985, 0
  %v3082 = vsel %vm20, %v2986, 0
  %v3085 = vsel %vm20, %v2987, 0
  %v3088 = vsel %vm20, %v2988, 0
  %v3091 = vsel %vm20, %v2989, 0
  %v3094 = vsel %vm20, %v2990, 0
  %v3097 = vsel %vm20, %v2991, 0
  %v3100 = vsel %vm20, %v2992, 0
  %v3103 = vsel %vm20, %v2993, 0
  %v3106 = vsel %vm20, %v2994, 0
  %v3109 = vsel %vm20, %v2995, 0
  %v3112 = vsel %vm20, %v2996, 0
  %v3115 = vsel %vm20, %v2997, 0
  %v3118 = vsel %vm20, %v2998, 0
  %v3121 = vsel %vm20, %v2999, 0
  %v3124 = vsel %vm20, %v3000, 0
  %v3127 = vsel %vm20, %v3001, 0
  %v3130 = vsel %vm20, %v3002, 0
  %v3133 = vsel %vm20, %v3003, 0
  %v3136 = vsel %vm20, %v3004, 0
  %v3139 = vsel %vm20, %v3005, 0
  %v3142 = vsel %vm20, %v3006, 0
  %v3145 = vsel %vm20, %v3007, 0
  %v3148 = vsel %vm20, %v3008, 0
  %v3151 = vsel %vm20, %v3009, 0
  %v3154 = vsel %vm20, %v3010, 0
  %v3157 = vsel %vm20, %v3011, 0
  %v3160 = vsel %vm20, %v3012, 0
  %v3163 = vsel %vm20, %v3013, 0
  %v3166 = vsel %vm20, %v3014, 0
  %v3169 = vsel %vm20, %v3015, 0
  %v3172 = vsel %vm20, %v3016, 0
  %v3175 = vsel %vm20, %v3017, 0
  %v3178 = vsel %vm20, %v3018, 0
  %v3181 = vsel %vm20, %v3019, 0
  %v3184 = vsel %vm20, %v3020, 0
  %v3187 = vsel %vm20, %v3021, 0
  %v3190 = vsel %vm20, %v3022, 0
  %v3193 = vsel %vm20, %v3023, 0
  %v3196 = vsel %vm20, %v3024, 0
  %v3199 = vsel %vm20, %v3025, 0
  %v3202 = vsel %vm20, %v3026, 0
  %v3205 = vsel %vm20, %v3027, 0
  %v3208 = vsel %vm20, %v3028, 0
  %v3211 = vsel %vm20, %v3029, 0
  %v3214 = vsel %vm20, %v3030, 0
  %v3217 = vsel %vm20, %v3031, 0
  %v3220 = vsel %vm20, %v3032, 0
  %v3223 = vsel %vm20, %v3033, 0
  %v3226 = vsel %vm20, %v3034, 0
  %v3229 = vsel %vm584, %v3035, 0
  %3231 = vmatprep.subr.mxu0 0.0
  %3232 = vmatpush1.msra.mxu0 %v3229
  %3233 = vmatprep.subr.mxu0 0.0
  %3234 = vmatpush1.msra.mxu0 0.0
  %3235 = vmatprep.subr.mxu0 0.0
  %3236 = vmatpush1.msra.mxu0 0.0
  %3237 = vmatprep.subr.mxu0 0.0
  %3238 = vmatpush1.msra.mxu0 0.0
  %3239 = vmatprep.subr.mxu0 0.0
  %3240 = vmatpush1.msra.mxu0 0.0
  %3241 = vmatprep.subr.mxu0 0.0
  %3242 = vmatpush1.msra.mxu0 0.0
  %3243 = vmatprep.subr.mxu0 0.0
  %3244 = vmatpush1.msra.mxu0 0.0
  %3245 = vmatprep.subr.mxu0 0.0
  %3246 = vmatpush1.msra.mxu0 0.0
  %3247 = vmatprep.subr.mxu0 0.0
  %3248 = vmatpush1.msra.mxu0 0.0
  %3249 = vmatprep.subr.mxu0 0.0
  %3250 = vmatpush1.msra.mxu0 0.0
  %3251 = vmatprep.subr.mxu0 0.0
  %3252 = vmatpush1.msra.mxu0 0.0
  %3253 = vmatprep.subr.mxu0 0.0
  %3254 = vmatpush1.msra.mxu0 0.0
  %3255 = vmatprep.subr.mxu0 0.0
  %3256 = vmatpush1.msra.mxu0 0.0
  %3257 = vmatprep.subr.mxu0 0.0
  %3258 = vmatpush1.msra.mxu0 0.0
  %3259 = vmatprep.subr.mxu0 0.0
  %3260 = vmatpush1.msra.mxu0 0.0
  %3261 = vmatprep.subr.mxu0 0.0
  %3262 = vmatpush1.msra.mxu0 0.0
  %3263 = vmatprep.subr.mxu0 0.0
  %3264 = vmatpush1.msra.mxu0 0.0
  %3265 = vmatprep.subr.mxu0 0.0
  %3266 = vmatpush1.msra.mxu0 0.0
  %3267 = vmatprep.subr.mxu0 0.0
  %3268 = vmatpush1.msra.mxu0 0.0
  %3269 = vmatprep.subr.mxu0 0.0
  %3270 = vmatpush1.msra.mxu0 0.0
  %3271 = vmatprep.subr.mxu0 0.0
  %3272 = vmatpush1.msra.mxu0 0.0
  %3273 = vmatprep.subr.mxu0 0.0
  %3274 = vmatpush1.msra.mxu0 0.0
  %3275 = vmatprep.subr.mxu0 0.0
  %3276 = vmatpush1.msra.mxu0 0.0
  %3277 = vmatprep.subr.mxu0 0.0
  %3278 = vmatpush1.msra.mxu0 0.0
  %3279 = vmatprep.subr.mxu0 0.0
  %3280 = vmatpush1.msra.mxu0 0.0
  %3281 = vmatprep.subr.mxu0 0.0
  %3282 = vmatpush1.msra.mxu0 0.0
  %3283 = vmatprep.subr.mxu0 0.0
  %3284 = vmatpush1.msra.mxu0 0.0
  %3285 = vmatprep.subr.mxu0 0.0
  %3286 = vmatpush1.msra.mxu0 0.0
  %3287 = vmatprep.subr.mxu0 0.0
  %3288 = vmatpush1.msra.mxu0 0.0
  %3289 = vmatprep.subr.mxu0 0.0
  %3290 = vmatpush1.msra.mxu0 0.0
  %3291 = vmatprep.subr.mxu0 0.0
  %3292 = vmatpush1.msra.mxu0 0.0
  %3293 = vmatprep.subr.mxu0 0.0
  %3294 = vmatpush1.msra.mxu0 0.0
  %3295 = vmatprep.mubr.f32.mxu0 0.0
  %3296 = vmatmul.mubr.f32.gmra.mrb[0].mxu0 %v3037
  %v3297 = vpop.f32.mrb[0].mxu0
  %v3298 = vadd.f32 0.0, %v3297
  %v3299 = vpop.f32.mrb[0].mxu0
  %3300 = vmatprep.mubr.f32.mxu0 0.0
  %3301 = vmatmul.mubr.f32.gmra.mrb[0].mxu0 %v3040
  %v3302 = vpop.f32.mrb[0].mxu0
  %v3303 = vadd.f32 0.0, %v3302
  %v3304 = vpop.f32.mrb[0].mxu0
  %3305 = vmatprep.mubr.f32.mxu0 0.0
  %3306 = vmatmul.mubr.f32.gmra.mrb[0].mxu0 %v3043
  %v3307 = vpop.f32.mrb[0].mxu0
  %v3308 = vadd.f32 0.0, %v3307
  %v3309 = vpop.f32.mrb[0].mxu0
  %3310 = vmatprep.mubr.f32.mxu0 0.0
  %3311 = vmatmul.mubr.f32.gmra.mrb[0].mxu0 %v3046
  %v3312 = vpop.f32.mrb[0].mxu0
  %v3313 = vadd.f32 0.0, %v3312
  %v3314 = vpop.f32.mrb[0].mxu0
  %3315 = vmatprep.mubr.f32.mxu0 0.0
  %3316 = vmatmul.mubr.f32.gmra.mrb[0].mxu0 %v3049
  %v3317 = vpop.f32.mrb[0].mxu0
  %v3318 = vadd.f32 0.0, %v3317
  %v3319 = vpop.f32.mrb[0].mxu0
  %3320 = vmatprep.mubr.f32.mxu0 0.0
  %3321 = vmatmul.mubr.f32.gmra.mrb[0].mxu0 %v3052
  %v3322 = vpop.f32.mrb[0].mxu0
  %v3323 = vadd.f32 0.0, %v3322
  %v3324 = vpop.f32.mrb[0].mxu0
  %3325 = vmatprep.mubr.f32.mxu0 0.0
  %3326 = vmatmul.mubr.f32.gmra.mrb[0].mxu0 %v3055
  %v3327 = vpop.f32.mrb[0].mxu0
  %v3328 = vadd.f32 0.0, %v3327
  %v3329 = vpop.f32.mrb[0].mxu0
  %3330 = vmatprep.mubr.f32.mxu0 0.0
  %3331 = vmatmul.mubr.f32.gmra.mrb[0].mxu0 %v3058
  %v3332 = vpop.f32.mrb[0].mxu0
  %v3333 = vadd.f32 0.0, %v3332
  %v3334 = vpop.f32.mrb[0].mxu0
  %3335 = vmatprep.mubr.f32.mxu0 0.0
  %3336 = vmatmul.mubr.f32.gmra.mrb[0].mxu0 %v3061
  %v3337 = vpop.f32.mrb[0].mxu0
  %v3338 = vadd.f32 0.0, %v3337
  %v3339 = vpop.f32.mrb[0].mxu0
  %3340 = vmatprep.mubr.f32.mxu0 0.0
  %3341 = vmatmul.mubr.f32.gmra.mrb[0].mxu0 %v3064
  %v3342 = vpop.f32.mrb[0].mxu0
  %v3343 = vadd.f32 0.0, %v3342
  %v3344 = vpop.f32.mrb[0].mxu0
  %3345 = vmatprep.mubr.f32.mxu0 0.0
  %3346 = vmatmul.mubr.f32.gmra.mrb[0].mxu0 %v3067
  %v3347 = vpop.f32.mrb[0].mxu0
  %v3348 = vadd.f32 0.0, %v3347
  %v3349 = vpop.f32.mrb[0].mxu0
  %3350 = vmatprep.mubr.f32.mxu0 0.0
  %3351 = vmatmul.mubr.f32.gmra.mrb[0].mxu0 %v3070
  %v3352 = vpop.f32.mrb[0].mxu0
  %v3353 = vadd.f32 0.0, %v3352
  %v3354 = vpop.f32.mrb[0].mxu0
  %3355 = vmatprep.mubr.f32.mxu0 0.0
  %3356 = vmatmul.mubr.f32.gmra.mrb[0].mxu0 %v3073
  %v3357 = vpop.f32.mrb[0].mxu0
  %v3358 = vadd.f32 0.0, %v3357
  %v3359 = vpop.f32.mrb[0].mxu0
  %3360 = vmatprep.mubr.f32.mxu0 0.0
  %3361 = vmatmul.mubr.f32.gmra.mrb[0].mxu0 %v3076
  %v3362 = vpop.f32.mrb[0].mxu0
  %v3363 = vadd.f32 0.0, %v3362
  %v3364 = vpop.f32.mrb[0].mxu0
  %3365 = vmatprep.mubr.f32.mxu0 0.0
  %3366 = vmatmul.mubr.f32.gmra.mrb[0].mxu0 %v3079
  %v3367 = vpop.f32.mrb[0].mxu0
  %v3368 = vadd.f32 0.0, %v3367
  %v3369 = vpop.f32.mrb[0].mxu0
  %3370 = vmatprep.mubr.f32.mxu0 0.0
  %3371 = vmatmul.mubr.f32.gmra.mrb[0].mxu0 %v3082
  %v3372 = vpop.f32.mrb[0].mxu0
  %v3373 = vadd.f32 0.0, %v3372
  %v3374 = vpop.f32.mrb[0].mxu0
  %3375 = vmatprep.mubr.f32.mxu0 0.0
  %3376 = vmatmul.mubr.f32.gmra.mrb[0].mxu0 %v3085
  %v3377 = vpop.f32.mrb[0].mxu0
  %v3378 = vadd.f32 0.0, %v3377
  %v3379 = vpop.f32.mrb[0].mxu0
  %3380 = vmatprep.mubr.f32.mxu0 0.0
  %3381 = vmatmul.mubr.f32.gmra.mrb[0].mxu0 %v3088
  %v3382 = vpop.f32.mrb[0].mxu0
  %v3383 = vadd.f32 0.0, %v3382
  %v3384 = vpop.f32.mrb[0].mxu0
  %3385 = vmatprep.mubr.f32.mxu0 0.0
  %3386 = vmatmul.mubr.f32.gmra.mrb[0].mxu0 %v3091
  %v3387 = vpop.f32.mrb[0].mxu0
  %v3388 = vadd.f32 0.0, %v3387
  %v3389 = vpop.f32.mrb[0].mxu0
  %3390 = vmatprep.mubr.f32.mxu0 0.0
  %3391 = vmatmul.mubr.f32.gmra.mrb[0].mxu0 %v3094
  %v3392 = vpop.f32.mrb[0].mxu0
  %v3393 = vadd.f32 0.0, %v3392
  %v3394 = vpop.f32.mrb[0].mxu0
  %3395 = vmatprep.mubr.f32.mxu0 0.0
  %3396 = vmatmul.mubr.f32.gmra.mrb[0].mxu0 %v3097
  %v3397 = vpop.f32.mrb[0].mxu0
  %v3398 = vadd.f32 0.0, %v3397
  %v3399 = vpop.f32.mrb[0].mxu0
  %3400 = vmatprep.mubr.f32.mxu0 0.0
  %3401 = vmatmul.mubr.f32.gmra.mrb[0].mxu0 %v3100
  %v3402 = vpop.f32.mrb[0].mxu0
  %v3403 = vadd.f32 0.0, %v3402
  %v3404 = vpop.f32.mrb[0].mxu0
  %3405 = vmatprep.mubr.f32.mxu0 0.0
  %3406 = vmatmul.mubr.f32.gmra.mrb[0].mxu0 %v3103
  %v3407 = vpop.f32.mrb[0].mxu0
  %v3408 = vadd.f32 0.0, %v3407
  %v3409 = vpop.f32.mrb[0].mxu0
  %3410 = vmatprep.mubr.f32.mxu0 0.0
  %3411 = vmatmul.mubr.f32.gmra.mrb[0].mxu0 %v3106
  %v3412 = vpop.f32.mrb[0].mxu0
  %v3413 = vadd.f32 0.0, %v3412
  %v3414 = vpop.f32.mrb[0].mxu0
  %3415 = vmatprep.mubr.f32.mxu0 0.0
  %3416 = vmatmul.mubr.f32.gmra.mrb[0].mxu0 %v3109
  %v3417 = vpop.f32.mrb[0].mxu0
  %v3418 = vadd.f32 0.0, %v3417
  %v3419 = vpop.f32.mrb[0].mxu0
  %3420 = vmatprep.mubr.f32.mxu0 0.0
  %3421 = vmatmul.mubr.f32.gmra.mrb[0].mxu0 %v3112
  %v3422 = vpop.f32.mrb[0].mxu0
  %v3423 = vadd.f32 0.0, %v3422
  %v3424 = vpop.f32.mrb[0].mxu0
  %3425 = vmatprep.mubr.f32.mxu0 0.0
  %3426 = vmatmul.mubr.f32.gmra.mrb[0].mxu0 %v3115
  %v3427 = vpop.f32.mrb[0].mxu0
  %v3428 = vadd.f32 0.0, %v3427
  %v3429 = vpop.f32.mrb[0].mxu0
  %3430 = vmatprep.mubr.f32.mxu0 0.0
  %3431 = vmatmul.mubr.f32.gmra.mrb[0].mxu0 %v3118
  %v3432 = vpop.f32.mrb[0].mxu0
  %v3433 = vadd.f32 0.0, %v3432
  %v3434 = vpop.f32.mrb[0].mxu0
  %3435 = vmatprep.mubr.f32.mxu0 0.0
  %3436 = vmatmul.mubr.f32.gmra.mrb[0].mxu0 %v3121
  %v3437 = vpop.f32.mrb[0].mxu0
  %v3438 = vadd.f32 0.0, %v3437
  %v3439 = vpop.f32.mrb[0].mxu0
  %3440 = vmatprep.mubr.f32.mxu0 0.0
  %3441 = vmatmul.mubr.f32.gmra.mrb[0].mxu0 %v3124
  %v3442 = vpop.f32.mrb[0].mxu0
  %v3443 = vadd.f32 0.0, %v3442
  %v3444 = vpop.f32.mrb[0].mxu0
  %3445 = vmatprep.mubr.f32.mxu0 0.0
  %3446 = vmatmul.mubr.f32.gmra.mrb[0].mxu0 %v3127
  %v3447 = vpop.f32.mrb[0].mxu0
  %v3448 = vadd.f32 0.0, %v3447
  %v3449 = vpop.f32.mrb[0].mxu0
  %3450 = vmatprep.mubr.f32.mxu0 0.0
  %3451 = vmatmul.mubr.f32.gmra.mrb[0].mxu0 %v3130
  %v3452 = vpop.f32.mrb[0].mxu0
  %v3453 = vadd.f32 0.0, %v3452
  %v3454 = vpop.f32.mrb[0].mxu0
  %3455 = vmatprep.mubr.f32.mxu0 0.0
  %3456 = vmatmul.mubr.f32.gmra.mrb[0].mxu0 %v3133
  %v3457 = vpop.f32.mrb[0].mxu0
  %v3458 = vadd.f32 0.0, %v3457
  %v3459 = vpop.f32.mrb[0].mxu0
  %3460 = vmatprep.mubr.f32.mxu0 0.0
  %3461 = vmatmul.mubr.f32.gmra.mrb[0].mxu0 %v3136
  %v3462 = vpop.f32.mrb[0].mxu0
  %v3463 = vadd.f32 0.0, %v3462
  %v3464 = vpop.f32.mrb[0].mxu0
  %3465 = vmatprep.mubr.f32.mxu0 0.0
  %3466 = vmatmul.mubr.f32.gmra.mrb[0].mxu0 %v3139
  %v3467 = vpop.f32.mrb[0].mxu0
  %v3468 = vadd.f32 0.0, %v3467
  %v3469 = vpop.f32.mrb[0].mxu0
  %3470 = vmatprep.mubr.f32.mxu0 0.0
  %3471 = vmatmul.mubr.f32.gmra.mrb[0].mxu0 %v3142
  %v3472 = vpop.f32.mrb[0].mxu0
  %v3473 = vadd.f32 0.0, %v3472
  %v3474 = vpop.f32.mrb[0].mxu0
  %3475 = vmatprep.mubr.f32.mxu0 0.0
  %3476 = vmatmul.mubr.f32.gmra.mrb[0].mxu0 %v3145
  %v3477 = vpop.f32.mrb[0].mxu0
  %v3478 = vadd.f32 0.0, %v3477
  %v3479 = vpop.f32.mrb[0].mxu0
  %3480 = vmatprep.mubr.f32.mxu0 0.0
  %3481 = vmatmul.mubr.f32.gmra.mrb[0].mxu0 %v3148
  %v3482 = vpop.f32.mrb[0].mxu0
  %v3483 = vadd.f32 0.0, %v3482
  %v3484 = vpop.f32.mrb[0].mxu0
  %3485 = vmatprep.mubr.f32.mxu0 0.0
  %3486 = vmatmul.mubr.f32.gmra.mrb[0].mxu0 %v3151
  %v3487 = vpop.f32.mrb[0].mxu0
  %v3488 = vadd.f32 0.0, %v3487
  %v3489 = vpop.f32.mrb[0].mxu0
  %3490 = vmatprep.mubr.f32.mxu0 0.0
  %3491 = vmatmul.mubr.f32.gmra.mrb[0].mxu0 %v3154
  %v3492 = vpop.f32.mrb[0].mxu0
  %v3493 = vadd.f32 0.0, %v3492
  %v3494 = vpop.f32.mrb[0].mxu0
  %3495 = vmatprep.mubr.f32.mxu0 0.0
  %3496 = vmatmul.mubr.f32.gmra.mrb[0].mxu0 %v3157
  %v3497 = vpop.f32.mrb[0].mxu0
  %v3498 = vadd.f32 0.0, %v3497
  %v3499 = vpop.f32.mrb[0].mxu0
  %3500 = vmatprep.mubr.f32.mxu0 0.0
  %3501 = vmatmul.mubr.f32.gmra.mrb[0].mxu0 %v3160
  %v3502 = vpop.f32.mrb[0].mxu0
  %v3503 = vadd.f32 0.0, %v3502
  %v3504 = vpop.f32.mrb[0].mxu0
  %3505 = vmatprep.mubr.f32.mxu0 0.0
  %3506 = vmatmul.mubr.f32.gmra.mrb[0].mxu0 %v3163
  %v3507 = vpop.f32.mrb[0].mxu0
  %v3508 = vadd.f32 0.0, %v3507
  %v3509 = vpop.f32.mrb[0].mxu0
  %3510 = vmatprep.mubr.f32.mxu0 0.0
  %3511 = vmatmul.mubr.f32.gmra.mrb[0].mxu0 %v3166
  %v3512 = vpop.f32.mrb[0].mxu0
  %v3513 = vadd.f32 0.0, %v3512
  %v3514 = vpop.f32.mrb[0].mxu0
  %3515 = vmatprep.mubr.f32.mxu0 0.0
  %3516 = vmatmul.mubr.f32.gmra.mrb[0].mxu0 %v3169
  %v3517 = vpop.f32.mrb[0].mxu0
  %v3518 = vadd.f32 0.0, %v3517
  %v3519 = vpop.f32.mrb[0].mxu0
  %3520 = vmatprep.mubr.f32.mxu0 0.0
  %3521 = vmatmul.mubr.f32.gmra.mrb[0].mxu0 %v3172
  %v3522 = vpop.f32.mrb[0].mxu0
  %v3523 = vadd.f32 0.0, %v3522
  %v3524 = vpop.f32.mrb[0].mxu0
  %3525 = vmatprep.mubr.f32.mxu0 0.0
  %3526 = vmatmul.mubr.f32.gmra.mrb[0].mxu0 %v3175
  %v3527 = vpop.f32.mrb[0].mxu0
  %v3528 = vadd.f32 0.0, %v3527
  %v3529 = vpop.f32.mrb[0].mxu0
  %3530 = vmatprep.mubr.f32.mxu0 0.0
  %3531 = vmatmul.mubr.f32.gmra.mrb[0].mxu0 %v3178
  %v3532 = vpop.f32.mrb[0].mxu0
  %v3533 = vadd.f32 0.0, %v3532
  %v3534 = vpop.f32.mrb[0].mxu0
  %3535 = vmatprep.mubr.f32.mxu0 0.0
  %3536 = vmatmul.mubr.f32.gmra.mrb[0].mxu0 %v3181
  %v3537 = vpop.f32.mrb[0].mxu0
  %v3538 = vadd.f32 0.0, %v3537
  %v3539 = vpop.f32.mrb[0].mxu0
  %3540 = vmatprep.mubr.f32.mxu0 0.0
  %3541 = vmatmul.mubr.f32.gmra.mrb[0].mxu0 %v3184
  %v3542 = vpop.f32.mrb[0].mxu0
  %v3543 = vadd.f32 0.0, %v3542
  %v3544 = vpop.f32.mrb[0].mxu0
  %3545 = vmatprep.mubr.f32.mxu0 0.0
  %3546 = vmatmul.mubr.f32.gmra.mrb[0].mxu0 %v3187
  %v3547 = vpop.f32.mrb[0].mxu0
  %v3548 = vadd.f32 0.0, %v3547
  %v3549 = vpop.f32.mrb[0].mxu0
  %3550 = vmatprep.mubr.f32.mxu0 0.0
  %3551 = vmatmul.mubr.f32.gmra.mrb[0].mxu0 %v3190
  %v3552 = vpop.f32.mrb[0].mxu0
  %v3553 = vadd.f32 0.0, %v3552
  %v3554 = vpop.f32.mrb[0].mxu0
  %3555 = vmatprep.mubr.f32.mxu0 0.0
  %3556 = vmatmul.mubr.f32.gmra.mrb[0].mxu0 %v3193
  %v3557 = vpop.f32.mrb[0].mxu0
  %v3558 = vadd.f32 0.0, %v3557
  %v3559 = vpop.f32.mrb[0].mxu0
  %3560 = vmatprep.mubr.f32.mxu0 0.0
  %3561 = vmatmul.mubr.f32.gmra.mrb[0].mxu0 %v3196
  %v3562 = vpop.f32.mrb[0].mxu0
  %v3563 = vadd.f32 0.0, %v3562
  %v3564 = vpop.f32.mrb[0].mxu0
  %3565 = vmatprep.mubr.f32.mxu0 0.0
  %3566 = vmatmul.mubr.f32.gmra.mrb[0].mxu0 %v3199
  %v3567 = vpop.f32.mrb[0].mxu0
  %v3568 = vadd.f32 0.0, %v3567
  %v3569 = vpop.f32.mrb[0].mxu0
  %3570 = vmatprep.mubr.f32.mxu0 0.0
  %3571 = vmatmul.mubr.f32.gmra.mrb[0].mxu0 %v3202
  %v3572 = vpop.f32.mrb[0].mxu0
  %v3573 = vadd.f32 0.0, %v3572
  %v3574 = vpop.f32.mrb[0].mxu0
  %3575 = vmatprep.mubr.f32.mxu0 0.0
  %3576 = vmatmul.mubr.f32.gmra.mrb[0].mxu0 %v3205
  %v3577 = vpop.f32.mrb[0].mxu0
  %v3578 = vadd.f32 0.0, %v3577
  %v3579 = vpop.f32.mrb[0].mxu0
  %3580 = vmatprep.mubr.f32.mxu0 0.0
  %3581 = vmatmul.mubr.f32.gmra.mrb[0].mxu0 %v3208
  %v3582 = vpop.f32.mrb[0].mxu0
  %v3583 = vadd.f32 0.0, %v3582
  %v3584 = vpop.f32.mrb[0].mxu0
  %3585 = vmatprep.mubr.f32.mxu0 0.0
  %3586 = vmatmul.mubr.f32.gmra.mrb[0].mxu0 %v3211
  %v3587 = vpop.f32.mrb[0].mxu0
  %v3588 = vadd.f32 0.0, %v3587
  %v3589 = vpop.f32.mrb[0].mxu0
  %3590 = vmatprep.mubr.f32.mxu0 0.0
  %3591 = vmatmul.mubr.f32.gmra.mrb[0].mxu0 %v3214
  %v3592 = vpop.f32.mrb[0].mxu0
  %v3593 = vadd.f32 0.0, %v3592
  %v3594 = vpop.f32.mrb[0].mxu0
  %3595 = vmatprep.mubr.f32.mxu0 0.0
  %3596 = vmatmul.mubr.f32.gmra.mrb[0].mxu0 %v3217
  %v3597 = vpop.f32.mrb[0].mxu0
  %v3598 = vadd.f32 0.0, %v3597
  %v3599 = vpop.f32.mrb[0].mxu0
  %3600 = vmatprep.mubr.f32.mxu0 0.0
  %3601 = vmatmul.mubr.f32.gmra.mrb[0].mxu0 %v3220
  %v3602 = vpop.f32.mrb[0].mxu0
  %v3603 = vadd.f32 0.0, %v3602
  %v3604 = vpop.f32.mrb[0].mxu0
  %3605 = vmatprep.mubr.f32.mxu0 0.0
  %3606 = vmatmul.mubr.f32.gmra.mrb[0].mxu0 %v3223
  %v3607 = vpop.f32.mrb[0].mxu0
  %v3608 = vadd.f32 0.0, %v3607
  %v3609 = vpop.f32.mrb[0].mxu0
  %3610 = vmatprep.mubr.f32.mxu0 0.0
  %3611 = vmatmul.mubr.f32.gmra.mrb[0].mxu0 %v3226
  %v3612 = vpop.f32.mrb[0].mxu0
  %v3613 = vadd.f32 0.0, %v3612
  %v3614 = vpop.f32.mrb[0].mxu0
  %3615 = vdwg.mxu0
  %v3616 = vadd.f32 %v2907, %v3298
  %v3617 = vadd.f32 %v2908, %v3303
  %v3618 = vadd.f32 %v2909, %v3308
  %v3619 = vadd.f32 %v2910, %v3313
  %v3620 = vadd.f32 %v2911, %v3318
  %v3621 = vadd.f32 %v2912, %v3323
  %v3622 = vadd.f32 %v2913, %v3328
  %v3623 = vadd.f32 %v2914, %v3333
  %v3624 = vadd.f32 %v2915, %v3338
  %v3625 = vadd.f32 %v2916, %v3343
  %v3626 = vadd.f32 %v2917, %v3348
  %v3627 = vadd.f32 %v2918, %v3353
  %v3628 = vadd.f32 %v2919, %v3358
  %v3629 = vadd.f32 %v2920, %v3363
  %v3630 = vadd.f32 %v2921, %v3368
  %v3631 = vadd.f32 %v2922, %v3373
  %v3632 = vadd.f32 %v2923, %v3378
  %v3633 = vadd.f32 %v2924, %v3383
  %v3634 = vadd.f32 %v2925, %v3388
  %v3635 = vadd.f32 %v2926, %v3393
  %v3636 = vadd.f32 %v2927, %v3398
  %v3637 = vadd.f32 %v2928, %v3403
  %v3638 = vadd.f32 %v2929, %v3408
  %v3639 = vadd.f32 %v2930, %v3413
  %v3640 = vadd.f32 %v2931, %v3418
  %v3641 = vadd.f32 %v2932, %v3423
  %v3642 = vadd.f32 %v2933, %v3428
  %v3643 = vadd.f32 %v2934, %v3433
  %v3644 = vadd.f32 %v2935, %v3438
  %v3645 = vadd.f32 %v2936, %v3443
  %v3646 = vadd.f32 %v2937, %v3448
  %v3647 = vadd.f32 %v2938, %v3453
  %v3648 = vadd.f32 %v2939, %v3458
  %v3649 = vadd.f32 %v2940, %v3463
  %v3650 = vadd.f32 %v2941, %v3468
  %v3651 = vadd.f32 %v2942, %v3473
  %v3652 = vadd.f32 %v2943, %v3478
  %v3653 = vadd.f32 %v2944, %v3483
  %v3654 = vadd.f32 %v2945, %v3488
  %v3655 = vadd.f32 %v2946, %v3493
  %v3656 = vadd.f32 %v2947, %v3498
  %v3657 = vadd.f32 %v2948, %v3503
  %v3658 = vadd.f32 %v2949, %v3508
  %v3659 = vadd.f32 %v2950, %v3513
  %v3660 = vadd.f32 %v2951, %v3518
  %v3661 = vadd.f32 %v2952, %v3523
  %v3662 = vadd.f32 %v2953, %v3528
  %v3663 = vadd.f32 %v2954, %v3533
  %v3664 = vadd.f32 %v2955, %v3538
  %v3665 = vadd.f32 %v2956, %v3543
  %v3666 = vadd.f32 %v2957, %v3548
  %v3667 = vadd.f32 %v2958, %v3553
  %v3668 = vadd.f32 %v2959, %v3558
  %v3669 = vadd.f32 %v2960, %v3563
  %v3670 = vadd.f32 %v2961, %v3568
  %v3671 = vadd.f32 %v2962, %v3573
  %v3672 = vadd.f32 %v2963, %v3578
  %v3673 = vadd.f32 %v2964, %v3583
  %v3674 = vadd.f32 %v2965, %v3588
  %v3675 = vadd.f32 %v2966, %v3593
  %v3676 = vadd.f32 %v2967, %v3598
  %v3677 = vadd.f32 %v2968, %v3603
  %v3678 = vadd.f32 %v2969, %v3608
  %v3679 = vadd.f32 %v2970, %v3613
  %v3680 = vld [vmem:[%s162 + $0x2] sm:$0xff]
  %v3681 = vld [vmem:[%s162 + $0xa] sm:$0xff]
  %v3682 = vld [vmem:[%s162 + $0x1a] sm:$0xff]
  %v3683 = vld [vmem:[%s162 + $0x22] sm:$0xff]
  %v3684 = vld [vmem:[%s162 + $0x32] sm:$0xff]
  %v3685 = vld [vmem:[%s162 + $0x3a] sm:$0xff]
  %v3686 = vld [vmem:[%s162 + $0x4a] sm:$0xff]
  %v3687 = vld [vmem:[%s162 + $0x52] sm:$0xff]
  %v3688 = vld [vmem:[%s162 + $0x62] sm:$0xff]
  %v3689 = vld [vmem:[%s162 + $0x6a] sm:$0xff]
  %v3690 = vld [vmem:[%s162 + $0x7a] sm:$0xff]
  %v3691 = vld [vmem:[%s162 + $0x82] sm:$0xff]
  %v3692 = vld [vmem:[%s162 + $0x92] sm:$0xff]
  %v3693 = vld [vmem:[%s162 + $0x9a] sm:$0xff]
  %v3694 = vld [vmem:[%s162 + $0xaa] sm:$0xff]
  %v3695 = vld [vmem:[%s162 + $0xb2] sm:$0xff]
  %v3696 = vld [vmem:[%s162 + $0xc2] sm:$0xff]
  %v3697 = vld [vmem:[%s162 + $0xca] sm:$0xff]
  %v3698 = vld [vmem:[%s162 + $0xda] sm:$0xff]
  %v3699 = vld [vmem:[%s162 + $0xe2] sm:$0xff]
  %v3700 = vld [vmem:[%s162 + $0xf2] sm:$0xff]
  %v3701 = vld [vmem:[%s162 + $0xfa] sm:$0xff]
  %v3702 = vld [vmem:[%s162 + $0x10a] sm:$0xff]
  %v3703 = vld [vmem:[%s162 + $0x112] sm:$0xff]
  %v3704 = vld [vmem:[%s162 + $0x122] sm:$0xff]
  %v3705 = vld [vmem:[%s162 + $0x12a] sm:$0xff]
  %v3706 = vld [vmem:[%s162 + $0x13a] sm:$0xff]
  %v3707 = vld [vmem:[%s162 + $0x142] sm:$0xff]
  %v3708 = vld [vmem:[%s162 + $0x152] sm:$0xff]
  %v3709 = vld [vmem:[%s162 + $0x15a] sm:$0xff]
  %v3710 = vld [vmem:[%s162 + $0x16a] sm:$0xff]
  %v3711 = vld [vmem:[%s162 + $0x172] sm:$0xff]
  %v3712 = vld [vmem:[%s228 + $0x2] sm:$0xff]
  %v3713 = vld [vmem:[%s228 + $0xa] sm:$0xff]
  %v3714 = vld [vmem:[%s228 + $0x1a] sm:$0xff]
  %v3715 = vld [vmem:[%s228 + $0x22] sm:$0xff]
  %v3716 = vld [vmem:[%s228 + $0x32] sm:$0xff]
  %v3717 = vld [vmem:[%s228 + $0x3a] sm:$0xff]
  %v3718 = vld [vmem:[%s228 + $0x4a] sm:$0xff]
  %v3719 = vld [vmem:[%s228 + $0x52] sm:$0xff]
  %v3720 = vld [vmem:[%s228 + $0x62] sm:$0xff]
  %v3721 = vld [vmem:[%s228 + $0x6a] sm:$0xff]
  %v3722 = vld [vmem:[%s228 + $0x7a] sm:$0xff]
  %v3723 = vld [vmem:[%s228 + $0x82] sm:$0xff]
  %v3724 = vld [vmem:[%s228 + $0x92] sm:$0xff]
  %v3725 = vld [vmem:[%s228 + $0x9a] sm:$0xff]
  %v3726 = vld [vmem:[%s228 + $0xaa] sm:$0xff]
  %v3727 = vld [vmem:[%s228 + $0xb2] sm:$0xff]
  %v3728 = vld [vmem:[%s228 + $0xc2] sm:$0xff]
  %v3729 = vld [vmem:[%s228 + $0xca] sm:$0xff]
  %v3730 = vld [vmem:[%s228 + $0xda] sm:$0xff]
  %v3731 = vld [vmem:[%s228 + $0xe2] sm:$0xff]
  %v3732 = vld [vmem:[%s228 + $0xf2] sm:$0xff]
  %v3733 = vld [vmem:[%s228 + $0xfa] sm:$0xff]
  %v3734 = vld [vmem:[%s228 + $0x10a] sm:$0xff]
  %v3735 = vld [vmem:[%s228 + $0x112] sm:$0xff]
  %v3736 = vld [vmem:[%s228 + $0x122] sm:$0xff]
  %v3737 = vld [vmem:[%s228 + $0x12a] sm:$0xff]
  %v3738 = vld [vmem:[%s228 + $0x13a] sm:$0xff]
  %v3739 = vld [vmem:[%s228 + $0x142] sm:$0xff]
  %v3740 = vld [vmem:[%s228 + $0x152] sm:$0xff]
  %v3741 = vld [vmem:[%s228 + $0x15a] sm:$0xff]
  %v3742 = vld [vmem:[%s228 + $0x16a] sm:$0xff]
  %v3743 = vld [vmem:[%s228 + $0x172] sm:$0xff]
  %v3744 = vld [vmem:[%s1 + $0xf] sm:$0x7]
  %v3746 = vsel %vm20, %v3680, 0
  %v3749 = vsel %vm20, %v3681, 0
  %v3752 = vsel %vm20, %v3682, 0
  %v3755 = vsel %vm20, %v3683, 0
  %v3758 = vsel %vm20, %v3684, 0
  %v3761 = vsel %vm20, %v3685, 0
  %v3764 = vsel %vm20, %v3686, 0
  %v3767 = vsel %vm20, %v3687, 0
  %v3770 = vsel %vm20, %v3688, 0
  %v3773 = vsel %vm20, %v3689, 0
  %v3776 = vsel %vm20, %v3690, 0
  %v3779 = vsel %vm20, %v3691, 0
  %v3782 = vsel %vm20, %v3692, 0
  %v3785 = vsel %vm20, %v3693, 0
  %v3788 = vsel %vm20, %v3694, 0
  %v3791 = vsel %vm20, %v3695, 0
  %v3794 = vsel %vm20, %v3696, 0
  %v3797 = vsel %vm20, %v3697, 0
  %v3800 = vsel %vm20, %v3698, 0
  %v3803 = vsel %vm20, %v3699, 0
  %v3806 = vsel %vm20, %v3700, 0
  %v3809 = vsel %vm20, %v3701, 0
  %v3812 = vsel %vm20, %v3702, 0
  %v3815 = vsel %vm20, %v3703, 0
  %v3818 = vsel %vm20, %v3704, 0
  %v3821 = vsel %vm20, %v3705, 0
  %v3824 = vsel %vm20, %v3706, 0
  %v3827 = vsel %vm20, %v3707, 0
  %v3830 = vsel %vm20, %v3708, 0
  %v3833 = vsel %vm20, %v3709, 0
  %v3836 = vsel %vm20, %v3710, 0
  %v3839 = vsel %vm20, %v3711, 0
  %v3842 = vsel %vm20, %v3712, 0
  %v3845 = vsel %vm20, %v3713, 0
  %v3848 = vsel %vm20, %v3714, 0
  %v3851 = vsel %vm20, %v3715, 0
  %v3854 = vsel %vm20, %v3716, 0
  %v3857 = vsel %vm20, %v3717, 0
  %v3860 = vsel %vm20, %v3718, 0
  %v3863 = vsel %vm20, %v3719, 0
  %v3866 = vsel %vm20, %v3720, 0
  %v3869 = vsel %vm20, %v3721, 0
  %v3872 = vsel %vm20, %v3722, 0
  %v3875 = vsel %vm20, %v3723, 0
  %v3878 = vsel %vm20, %v3724, 0
  %v3881 = vsel %vm20, %v3725, 0
  %v3884 = vsel %vm20, %v3726, 0
  %v3887 = vsel %vm20, %v3727, 0
  %v3890 = vsel %vm20, %v3728, 0
  %v3893 = vsel %vm20, %v3729, 0
  %v3896 = vsel %vm20, %v3730, 0
  %v3899 = vsel %vm20, %v3731, 0
  %v3902 = vsel %vm20, %v3732, 0
  %v3905 = vsel %vm20, %v3733, 0
  %v3908 = vsel %vm20, %v3734, 0
  %v3911 = vsel %vm20, %v3735, 0
  %v3914 = vsel %vm20, %v3736, 0
  %v3917 = vsel %vm20, %v3737, 0
  %v3920 = vsel %vm20, %v3738, 0
  %v3923 = vsel %vm20, %v3739, 0
  %v3926 = vsel %vm20, %v3740, 0
  %v3929 = vsel %vm20, %v3741, 0
  %v3932 = vsel %vm20, %v3742, 0
  %v3935 = vsel %vm20, %v3743, 0
  %v3938 = vsel %vm584, %v3744, 0
  %3940 = vmatprep.subr.mxu0 0.0
  %3941 = vmatpush1.msra.mxu0 %v3938
  %3942 = vmatprep.subr.mxu0 0.0
  %3943 = vmatpush1.msra.mxu0 0.0
  %3944 = vmatprep.subr.mxu0 0.0
  %3945 = vmatpush1.msra.mxu0 0.0
  %3946 = vmatprep.subr.mxu0 0.0
  %3947 = vmatpush1.msra.mxu0 0.0
  %3948 = vmatprep.subr.mxu0 0.0
  %3949 = vmatpush1.msra.mxu0 0.0
  %3950 = vmatprep.subr.mxu0 0.0
  %3951 = vmatpush1.msra.mxu0 0.0
  %3952 = vmatprep.subr.mxu0 0.0
  %3953 = vmatpush1.msra.mxu0 0.0
  %3954 = vmatprep.subr.mxu0 0.0
  %3955 = vmatpush1.msra.mxu0 0.0
  %3956 = vmatprep.subr.mxu0 0.0
  %3957 = vmatpush1.msra.mxu0 0.0
  %3958 = vmatprep.subr.mxu0 0.0
  %3959 = vmatpush1.msra.mxu0 0.0
  %3960 = vmatprep.subr.mxu0 0.0
  %3961 = vmatpush1.msra.mxu0 0.0
  %3962 = vmatprep.subr.mxu0 0.0
  %3963 = vmatpush1.msra.mxu0 0.0
  %3964 = vmatprep.subr.mxu0 0.0
  %3965 = vmatpush1.msra.mxu0 0.0
  %3966 = vmatprep.subr.mxu0 0.0
  %3967 = vmatpush1.msra.mxu0 0.0
  %3968 = vmatprep.subr.mxu0 0.0
  %3969 = vmatpush1.msra.mxu0 0.0
  %3970 = vmatprep.subr.mxu0 0.0
  %3971 = vmatpush1.msra.mxu0 0.0
  %3972 = vmatprep.subr.mxu0 0.0
  %3973 = vmatpush1.msra.mxu0 0.0
  %3974 = vmatprep.subr.mxu0 0.0
  %3975 = vmatpush1.msra.mxu0 0.0
  %3976 = vmatprep.subr.mxu0 0.0
  %3977 = vmatpush1.msra.mxu0 0.0
  %3978 = vmatprep.subr.mxu0 0.0
  %3979 = vmatpush1.msra.mxu0 0.0
  %3980 = vmatprep.subr.mxu0 0.0
  %3981 = vmatpush1.msra.mxu0 0.0
  %3982 = vmatprep.subr.mxu0 0.0
  %3983 = vmatpush1.msra.mxu0 0.0
  %3984 = vmatprep.subr.mxu0 0.0
  %3985 = vmatpush1.msra.mxu0 0.0
  %3986 = vmatprep.subr.mxu0 0.0
  %3987 = vmatpush1.msra.mxu0 0.0
  %3988 = vmatprep.subr.mxu0 0.0
  %3989 = vmatpush1.msra.mxu0 0.0
  %3990 = vmatprep.subr.mxu0 0.0
  %3991 = vmatpush1.msra.mxu0 0.0
  %3992 = vmatprep.subr.mxu0 0.0
  %3993 = vmatpush1.msra.mxu0 0.0
  %3994 = vmatprep.subr.mxu0 0.0
  %3995 = vmatpush1.msra.mxu0 0.0
  %3996 = vmatprep.subr.mxu0 0.0
  %3997 = vmatpush1.msra.mxu0 0.0
  %3998 = vmatprep.subr.mxu0 0.0
  %3999 = vmatpush1.msra.mxu0 0.0
  %4000 = vmatprep.subr.mxu0 0.0
  %4001 = vmatpush1.msra.mxu0 0.0
  %4002 = vmatprep.subr.mxu0 0.0
  %4003 = vmatpush1.msra.mxu0 0.0
  %4004 = vmatprep.mubr.f32.mxu0 0.0
  %4005 = vmatmul.mubr.f32.gmra.mrb[0].mxu0 %v3746
  %v4006 = vpop.f32.mrb[0].mxu0
  %v4007 = vadd.f32 0.0, %v4006
  %v4008 = vpop.f32.mrb[0].mxu0
  %4009 = vmatprep.mubr.f32.mxu0 0.0
  %4010 = vmatmul.mubr.f32.gmra.mrb[0].mxu0 %v3749
  %v4011 = vpop.f32.mrb[0].mxu0
  %v4012 = vadd.f32 0.0, %v4011
  %v4013 = vpop.f32.mrb[0].mxu0
  %4014 = vmatprep.mubr.f32.mxu0 0.0
  %4015 = vmatmul.mubr.f32.gmra.mrb[0].mxu0 %v3752
  %v4016 = vpop.f32.mrb[0].mxu0
  %v4017 = vadd.f32 0.0, %v4016
  %v4018 = vpop.f32.mrb[0].mxu0
  %4019 = vmatprep.mubr.f32.mxu0 0.0
  %4020 = vmatmul.mubr.f32.gmra.mrb[0].mxu0 %v3755
  %v4021 = vpop.f32.mrb[0].mxu0
  %v4022 = vadd.f32 0.0, %v4021
  %v4023 = vpop.f32.mrb[0].mxu0
  %4024 = vmatprep.mubr.f32.mxu0 0.0
  %4025 = vmatmul.mubr.f32.gmra.mrb[0].mxu0 %v3758
  %v4026 = vpop.f32.mrb[0].mxu0
  %v4027 = vadd.f32 0.0, %v4026
  %v4028 = vpop.f32.mrb[0].mxu0
  %4029 = vmatprep.mubr.f32.mxu0 0.0
  %4030 = vmatmul.mubr.f32.gmra.mrb[0].mxu0 %v3761
  %v4031 = vpop.f32.mrb[0].mxu0
  %v4032 = vadd.f32 0.0, %v4031
  %v4033 = vpop.f32.mrb[0].mxu0
  %4034 = vmatprep.mubr.f32.mxu0 0.0
  %4035 = vmatmul.mubr.f32.gmra.mrb[0].mxu0 %v3764
  %v4036 = vpop.f32.mrb[0].mxu0
  %v4037 = vadd.f32 0.0, %v4036
  %v4038 = vpop.f32.mrb[0].mxu0
  %4039 = vmatprep.mubr.f32.mxu0 0.0
  %4040 = vmatmul.mubr.f32.gmra.mrb[0].mxu0 %v3767
  %v4041 = vpop.f32.mrb[0].mxu0
  %v4042 = vadd.f32 0.0, %v4041
  %v4043 = vpop.f32.mrb[0].mxu0
  %4044 = vmatprep.mubr.f32.mxu0 0.0
  %4045 = vmatmul.mubr.f32.gmra.mrb[0].mxu0 %v3770
  %v4046 = vpop.f32.mrb[0].mxu0
  %v4047 = vadd.f32 0.0, %v4046
  %v4048 = vpop.f32.mrb[0].mxu0
  %4049 = vmatprep.mubr.f32.mxu0 0.0
  %4050 = vmatmul.mubr.f32.gmra.mrb[0].mxu0 %v3773
  %v4051 = vpop.f32.mrb[0].mxu0
  %v4052 = vadd.f32 0.0, %v4051
  %v4053 = vpop.f32.mrb[0].mxu0
  %4054 = vmatprep.mubr.f32.mxu0 0.0
  %4055 = vmatmul.mubr.f32.gmra.mrb[0].mxu0 %v3776
  %v4056 = vpop.f32.mrb[0].mxu0
  %v4057 = vadd.f32 0.0, %v4056
  %v4058 = vpop.f32.mrb[0].mxu0
  %4059 = vmatprep.mubr.f32.mxu0 0.0
  %4060 = vmatmul.mubr.f32.gmra.mrb[0].mxu0 %v3779
  %v4061 = vpop.f32.mrb[0].mxu0
  %v4062 = vadd.f32 0.0, %v4061
  %v4063 = vpop.f32.mrb[0].mxu0
  %4064 = vmatprep.mubr.f32.mxu0 0.0
  %4065 = vmatmul.mubr.f32.gmra.mrb[0].mxu0 %v3782
  %v4066 = vpop.f32.mrb[0].mxu0
  %v4067 = vadd.f32 0.0, %v4066
  %v4068 = vpop.f32.mrb[0].mxu0
  %4069 = vmatprep.mubr.f32.mxu0 0.0
  %4070 = vmatmul.mubr.f32.gmra.mrb[0].mxu0 %v3785
  %v4071 = vpop.f32.mrb[0].mxu0
  %v4072 = vadd.f32 0.0, %v4071
  %v4073 = vpop.f32.mrb[0].mxu0
  %4074 = vmatprep.mubr.f32.mxu0 0.0
  %4075 = vmatmul.mubr.f32.gmra.mrb[0].mxu0 %v3788
  %v4076 = vpop.f32.mrb[0].mxu0
  %v4077 = vadd.f32 0.0, %v4076
  %v4078 = vpop.f32.mrb[0].mxu0
  %4079 = vmatprep.mubr.f32.mxu0 0.0
  %4080 = vmatmul.mubr.f32.gmra.mrb[0].mxu0 %v3791
  %v4081 = vpop.f32.mrb[0].mxu0
  %v4082 = vadd.f32 0.0, %v4081
  %v4083 = vpop.f32.mrb[0].mxu0
  %4084 = vmatprep.mubr.f32.mxu0 0.0
  %4085 = vmatmul.mubr.f32.gmra.mrb[0].mxu0 %v3794
  %v4086 = vpop.f32.mrb[0].mxu0
  %v4087 = vadd.f32 0.0, %v4086
  %v4088 = vpop.f32.mrb[0].mxu0
  %4089 = vmatprep.mubr.f32.mxu0 0.0
  %4090 = vmatmul.mubr.f32.gmra.mrb[0].mxu0 %v3797
  %v4091 = vpop.f32.mrb[0].mxu0
  %v4092 = vadd.f32 0.0, %v4091
  %v4093 = vpop.f32.mrb[0].mxu0
  %4094 = vmatprep.mubr.f32.mxu0 0.0
  %4095 = vmatmul.mubr.f32.gmra.mrb[0].mxu0 %v3800
  %v4096 = vpop.f32.mrb[0].mxu0
  %v4097 = vadd.f32 0.0, %v4096
  %v4098 = vpop.f32.mrb[0].mxu0
  %4099 = vmatprep.mubr.f32.mxu0 0.0
  %4100 = vmatmul.mubr.f32.gmra.mrb[0].mxu0 %v3803
  %v4101 = vpop.f32.mrb[0].mxu0
  %v4102 = vadd.f32 0.0, %v4101
  %v4103 = vpop.f32.mrb[0].mxu0
  %4104 = vmatprep.mubr.f32.mxu0 0.0
  %4105 = vmatmul.mubr.f32.gmra.mrb[0].mxu0 %v3806
  %v4106 = vpop.f32.mrb[0].mxu0
  %v4107 = vadd.f32 0.0, %v4106
  %v4108 = vpop.f32.mrb[0].mxu0
  %4109 = vmatprep.mubr.f32.mxu0 0.0
  %4110 = vmatmul.mubr.f32.gmra.mrb[0].mxu0 %v3809
  %v4111 = vpop.f32.mrb[0].mxu0
  %v4112 = vadd.f32 0.0, %v4111
  %v4113 = vpop.f32.mrb[0].mxu0
  %4114 = vmatprep.mubr.f32.mxu0 0.0
  %4115 = vmatmul.mubr.f32.gmra.mrb[0].mxu0 %v3812
  %v4116 = vpop.f32.mrb[0].mxu0
  %v4117 = vadd.f32 0.0, %v4116
  %v4118 = vpop.f32.mrb[0].mxu0
  %4119 = vmatprep.mubr.f32.mxu0 0.0
  %4120 = vmatmul.mubr.f32.gmra.mrb[0].mxu0 %v3815
  %v4121 = vpop.f32.mrb[0].mxu0
  %v4122 = vadd.f32 0.0, %v4121
  %v4123 = vpop.f32.mrb[0].mxu0
  %4124 = vmatprep.mubr.f32.mxu0 0.0
  %4125 = vmatmul.mubr.f32.gmra.mrb[0].mxu0 %v3818
  %v4126 = vpop.f32.mrb[0].mxu0
  %v4127 = vadd.f32 0.0, %v4126
  %v4128 = vpop.f32.mrb[0].mxu0
  %4129 = vmatprep.mubr.f32.mxu0 0.0
  %4130 = vmatmul.mubr.f32.gmra.mrb[0].mxu0 %v3821
  %v4131 = vpop.f32.mrb[0].mxu0
  %v4132 = vadd.f32 0.0, %v4131
  %v4133 = vpop.f32.mrb[0].mxu0
  %4134 = vmatprep.mubr.f32.mxu0 0.0
  %4135 = vmatmul.mubr.f32.gmra.mrb[0].mxu0 %v3824
  %v4136 = vpop.f32.mrb[0].mxu0
  %v4137 = vadd.f32 0.0, %v4136
  %v4138 = vpop.f32.mrb[0].mxu0
  %4139 = vmatprep.mubr.f32.mxu0 0.0
  %4140 = vmatmul.mubr.f32.gmra.mrb[0].mxu0 %v3827
  %v4141 = vpop.f32.mrb[0].mxu0
  %v4142 = vadd.f32 0.0, %v4141
  %v4143 = vpop.f32.mrb[0].mxu0
  %4144 = vmatprep.mubr.f32.mxu0 0.0
  %4145 = vmatmul.mubr.f32.gmra.mrb[0].mxu0 %v3830
  %v4146 = vpop.f32.mrb[0].mxu0
  %v4147 = vadd.f32 0.0, %v4146
  %v4148 = vpop.f32.mrb[0].mxu0
  %4149 = vmatprep.mubr.f32.mxu0 0.0
  %4150 = vmatmul.mubr.f32.gmra.mrb[0].mxu0 %v3833
  %v4151 = vpop.f32.mrb[0].mxu0
  %v4152 = vadd.f32 0.0, %v4151
  %v4153 = vpop.f32.mrb[0].mxu0
  %4154 = vmatprep.mubr.f32.mxu0 0.0
  %4155 = vmatmul.mubr.f32.gmra.mrb[0].mxu0 %v3836
  %v4156 = vpop.f32.mrb[0].mxu0
  %v4157 = vadd.f32 0.0, %v4156
  %v4158 = vpop.f32.mrb[0].mxu0
  %4159 = vmatprep.mubr.f32.mxu0 0.0
  %4160 = vmatmul.mubr.f32.gmra.mrb[0].mxu0 %v3839
  %v4161 = vpop.f32.mrb[0].mxu0
  %v4162 = vadd.f32 0.0, %v4161
  %v4163 = vpop.f32.mrb[0].mxu0
  %4164 = vmatprep.mubr.f32.mxu0 0.0
  %4165 = vmatmul.mubr.f32.gmra.mrb[0].mxu0 %v3842
  %v4166 = vpop.f32.mrb[0].mxu0
  %v4167 = vadd.f32 0.0, %v4166
  %v4168 = vpop.f32.mrb[0].mxu0
  %4169 = vmatprep.mubr.f32.mxu0 0.0
  %4170 = vmatmul.mubr.f32.gmra.mrb[0].mxu0 %v3845
  %v4171 = vpop.f32.mrb[0].mxu0
  %v4172 = vadd.f32 0.0, %v4171
  %v4173 = vpop.f32.mrb[0].mxu0
  %4174 = vmatprep.mubr.f32.mxu0 0.0
  %4175 = vmatmul.mubr.f32.gmra.mrb[0].mxu0 %v3848
  %v4176 = vpop.f32.mrb[0].mxu0
  %v4177 = vadd.f32 0.0, %v4176
  %v4178 = vpop.f32.mrb[0].mxu0
  %4179 = vmatprep.mubr.f32.mxu0 0.0
  %4180 = vmatmul.mubr.f32.gmra.mrb[0].mxu0 %v3851
  %v4181 = vpop.f32.mrb[0].mxu0
  %v4182 = vadd.f32 0.0, %v4181
  %v4183 = vpop.f32.mrb[0].mxu0
  %4184 = vmatprep.mubr.f32.mxu0 0.0
  %4185 = vmatmul.mubr.f32.gmra.mrb[0].mxu0 %v3854
  %v4186 = vpop.f32.mrb[0].mxu0
  %v4187 = vadd.f32 0.0, %v4186
  %v4188 = vpop.f32.mrb[0].mxu0
  %4189 = vmatprep.mubr.f32.mxu0 0.0
  %4190 = vmatmul.mubr.f32.gmra.mrb[0].mxu0 %v3857
  %v4191 = vpop.f32.mrb[0].mxu0
  %v4192 = vadd.f32 0.0, %v4191
  %v4193 = vpop.f32.mrb[0].mxu0
  %4194 = vmatprep.mubr.f32.mxu0 0.0
  %4195 = vmatmul.mubr.f32.gmra.mrb[0].mxu0 %v3860
  %v4196 = vpop.f32.mrb[0].mxu0
  %v4197 = vadd.f32 0.0, %v4196
  %v4198 = vpop.f32.mrb[0].mxu0
  %4199 = vmatprep.mubr.f32.mxu0 0.0
  %4200 = vmatmul.mubr.f32.gmra.mrb[0].mxu0 %v3863
  %v4201 = vpop.f32.mrb[0].mxu0
  %v4202 = vadd.f32 0.0, %v4201
  %v4203 = vpop.f32.mrb[0].mxu0
  %4204 = vmatprep.mubr.f32.mxu0 0.0
  %4205 = vmatmul.mubr.f32.gmra.mrb[0].mxu0 %v3866
  %v4206 = vpop.f32.mrb[0].mxu0
  %v4207 = vadd.f32 0.0, %v4206
  %v4208 = vpop.f32.mrb[0].mxu0
  %4209 = vmatprep.mubr.f32.mxu0 0.0
  %4210 = vmatmul.mubr.f32.gmra.mrb[0].mxu0 %v3869
  %v4211 = vpop.f32.mrb[0].mxu0
  %v4212 = vadd.f32 0.0, %v4211
  %v4213 = vpop.f32.mrb[0].mxu0
  %4214 = vmatprep.mubr.f32.mxu0 0.0
  %4215 = vmatmul.mubr.f32.gmra.mrb[0].mxu0 %v3872
  %v4216 = vpop.f32.mrb[0].mxu0
  %v4217 = vadd.f32 0.0, %v4216
  %v4218 = vpop.f32.mrb[0].mxu0
  %4219 = vmatprep.mubr.f32.mxu0 0.0
  %4220 = vmatmul.mubr.f32.gmra.mrb[0].mxu0 %v3875
  %v4221 = vpop.f32.mrb[0].mxu0
  %v4222 = vadd.f32 0.0, %v4221
  %v4223 = vpop.f32.mrb[0].mxu0
  %4224 = vmatprep.mubr.f32.mxu0 0.0
  %4225 = vmatmul.mubr.f32.gmra.mrb[0].mxu0 %v3878
  %v4226 = vpop.f32.mrb[0].mxu0
  %v4227 = vadd.f32 0.0, %v4226
  %v4228 = vpop.f32.mrb[0].mxu0
  %4229 = vmatprep.mubr.f32.mxu0 0.0
  %4230 = vmatmul.mubr.f32.gmra.mrb[0].mxu0 %v3881
  %v4231 = vpop.f32.mrb[0].mxu0
  %v4232 = vadd.f32 0.0, %v4231
  %v4233 = vpop.f32.mrb[0].mxu0
  %4234 = vmatprep.mubr.f32.mxu0 0.0
  %4235 = vmatmul.mubr.f32.gmra.mrb[0].mxu0 %v3884
  %v4236 = vpop.f32.mrb[0].mxu0
  %v4237 = vadd.f32 0.0, %v4236
  %v4238 = vpop.f32.mrb[0].mxu0
  %4239 = vmatprep.mubr.f32.mxu0 0.0
  %4240 = vmatmul.mubr.f32.gmra.mrb[0].mxu0 %v3887
  %v4241 = vpop.f32.mrb[0].mxu0
  %v4242 = vadd.f32 0.0, %v4241
  %v4243 = vpop.f32.mrb[0].mxu0
  %4244 = vmatprep.mubr.f32.mxu0 0.0
  %4245 = vmatmul.mubr.f32.gmra.mrb[0].mxu0 %v3890
  %v4246 = vpop.f32.mrb[0].mxu0
  %v4247 = vadd.f32 0.0, %v4246
  %v4248 = vpop.f32.mrb[0].mxu0
  %4249 = vmatprep.mubr.f32.mxu0 0.0
  %4250 = vmatmul.mubr.f32.gmra.mrb[0].mxu0 %v3893
  %v4251 = vpop.f32.mrb[0].mxu0
  %v4252 = vadd.f32 0.0, %v4251
  %v4253 = vpop.f32.mrb[0].mxu0
  %4254 = vmatprep.mubr.f32.mxu0 0.0
  %4255 = vmatmul.mubr.f32.gmra.mrb[0].mxu0 %v3896
  %v4256 = vpop.f32.mrb[0].mxu0
  %v4257 = vadd.f32 0.0, %v4256
  %v4258 = vpop.f32.mrb[0].mxu0
  %4259 = vmatprep.mubr.f32.mxu0 0.0
  %4260 = vmatmul.mubr.f32.gmra.mrb[0].mxu0 %v3899
  %v4261 = vpop.f32.mrb[0].mxu0
  %v4262 = vadd.f32 0.0, %v4261
  %v4263 = vpop.f32.mrb[0].mxu0
  %4264 = vmatprep.mubr.f32.mxu0 0.0
  %4265 = vmatmul.mubr.f32.gmra.mrb[0].mxu0 %v3902
  %v4266 = vpop.f32.mrb[0].mxu0
  %v4267 = vadd.f32 0.0, %v4266
  %v4268 = vpop.f32.mrb[0].mxu0
  %4269 = vmatprep.mubr.f32.mxu0 0.0
  %4270 = vmatmul.mubr.f32.gmra.mrb[0].mxu0 %v3905
  %v4271 = vpop.f32.mrb[0].mxu0
  %v4272 = vadd.f32 0.0, %v4271
  %v4273 = vpop.f32.mrb[0].mxu0
  %4274 = vmatprep.mubr.f32.mxu0 0.0
  %4275 = vmatmul.mubr.f32.gmra.mrb[0].mxu0 %v3908
  %v4276 = vpop.f32.mrb[0].mxu0
  %v4277 = vadd.f32 0.0, %v4276
  %v4278 = vpop.f32.mrb[0].mxu0
  %4279 = vmatprep.mubr.f32.mxu0 0.0
  %4280 = vmatmul.mubr.f32.gmra.mrb[0].mxu0 %v3911
  %v4281 = vpop.f32.mrb[0].mxu0
  %v4282 = vadd.f32 0.0, %v4281
  %v4283 = vpop.f32.mrb[0].mxu0
  %4284 = vmatprep.mubr.f32.mxu0 0.0
  %4285 = vmatmul.mubr.f32.gmra.mrb[0].mxu0 %v3914
  %v4286 = vpop.f32.mrb[0].mxu0
  %v4287 = vadd.f32 0.0, %v4286
  %v4288 = vpop.f32.mrb[0].mxu0
  %4289 = vmatprep.mubr.f32.mxu0 0.0
  %4290 = vmatmul.mubr.f32.gmra.mrb[0].mxu0 %v3917
  %v4291 = vpop.f32.mrb[0].mxu0
  %v4292 = vadd.f32 0.0, %v4291
  %v4293 = vpop.f32.mrb[0].mxu0
  %4294 = vmatprep.mubr.f32.mxu0 0.0
  %4295 = vmatmul.mubr.f32.gmra.mrb[0].mxu0 %v3920
  %v4296 = vpop.f32.mrb[0].mxu0
  %v4297 = vadd.f32 0.0, %v4296
  %v4298 = vpop.f32.mrb[0].mxu0
  %4299 = vmatprep.mubr.f32.mxu0 0.0
  %4300 = vmatmul.mubr.f32.gmra.mrb[0].mxu0 %v3923
  %v4301 = vpop.f32.mrb[0].mxu0
  %v4302 = vadd.f32 0.0, %v4301
  %v4303 = vpop.f32.mrb[0].mxu0
  %4304 = vmatprep.mubr.f32.mxu0 0.0
  %4305 = vmatmul.mubr.f32.gmra.mrb[0].mxu0 %v3926
  %v4306 = vpop.f32.mrb[0].mxu0
  %v4307 = vadd.f32 0.0, %v4306
  %v4308 = vpop.f32.mrb[0].mxu0
  %4309 = vmatprep.mubr.f32.mxu0 0.0
  %4310 = vmatmul.mubr.f32.gmra.mrb[0].mxu0 %v3929
  %v4311 = vpop.f32.mrb[0].mxu0
  %v4312 = vadd.f32 0.0, %v4311
  %v4313 = vpop.f32.mrb[0].mxu0
  %4314 = vmatprep.mubr.f32.mxu0 0.0
  %4315 = vmatmul.mubr.f32.gmra.mrb[0].mxu0 %v3932
  %v4316 = vpop.f32.mrb[0].mxu0
  %v4317 = vadd.f32 0.0, %v4316
  %v4318 = vpop.f32.mrb[0].mxu0
  %4319 = vmatprep.mubr.f32.mxu0 0.0
  %4320 = vmatmul.mubr.f32.gmra.mrb[0].mxu0 %v3935
  %v4321 = vpop.f32.mrb[0].mxu0
  %v4322 = vadd.f32 0.0, %v4321
  %v4323 = vpop.f32.mrb[0].mxu0
  %4324 = vdwg.mxu0
  %v4325 = vadd.f32 %v3616, %v4007
  %v4326 = vadd.f32 %v3617, %v4012
  %v4327 = vadd.f32 %v3618, %v4017
  %v4328 = vadd.f32 %v3619, %v4022
  %v4329 = vadd.f32 %v3620, %v4027
  %v4330 = vadd.f32 %v3621, %v4032
  %v4331 = vadd.f32 %v3622, %v4037
  %v4332 = vadd.f32 %v3623, %v4042
  %v4333 = vadd.f32 %v3624, %v4047
  %v4334 = vadd.f32 %v3625, %v4052
  %v4335 = vadd.f32 %v3626, %v4057
  %v4336 = vadd.f32 %v3627, %v4062
  %v4337 = vadd.f32 %v3628, %v4067
  %v4338 = vadd.f32 %v3629, %v4072
  %v4339 = vadd.f32 %v3630, %v4077
  %v4340 = vadd.f32 %v3631, %v4082
  %v4341 = vadd.f32 %v3632, %v4087
  %v4342 = vadd.f32 %v3633, %v4092
  %v4343 = vadd.f32 %v3634, %v4097
  %v4344 = vadd.f32 %v3635, %v4102
  %v4345 = vadd.f32 %v3636, %v4107
  %v4346 = vadd.f32 %v3637, %v4112
  %v4347 = vadd.f32 %v3638, %v4117
  %v4348 = vadd.f32 %v3639, %v4122
  %v4349 = vadd.f32 %v3640, %v4127
  %v4350 = vadd.f32 %v3641, %v4132
  %v4351 = vadd.f32 %v3642, %v4137
  %v4352 = vadd.f32 %v3643, %v4142
  %v4353 = vadd.f32 %v3644, %v4147
  %v4354 = vadd.f32 %v3645, %v4152
  %v4355 = vadd.f32 %v3646, %v4157
  %v4356 = vadd.f32 %v3647, %v4162
  %v4357 = vadd.f32 %v3648, %v4167
  %v4358 = vadd.f32 %v3649, %v4172
  %v4359 = vadd.f32 %v3650, %v4177
  %v4360 = vadd.f32 %v3651, %v4182
  %v4361 = vadd.f32 %v3652, %v4187
  %v4362 = vadd.f32 %v3653, %v4192
  %v4363 = vadd.f32 %v3654, %v4197
  %v4364 = vadd.f32 %v3655, %v4202
  %v4365 = vadd.f32 %v3656, %v4207
  %v4366 = vadd.f32 %v3657, %v4212
  %v4367 = vadd.f32 %v3658, %v4217
  %v4368 = vadd.f32 %v3659, %v4222
  %v4369 = vadd.f32 %v3660, %v4227
  %v4370 = vadd.f32 %v3661, %v4232
  %v4371 = vadd.f32 %v3662, %v4237
  %v4372 = vadd.f32 %v3663, %v4242
  %v4373 = vadd.f32 %v3664, %v4247
  %v4374 = vadd.f32 %v3665, %v4252
  %v4375 = vadd.f32 %v3666, %v4257
  %v4376 = vadd.f32 %v3667, %v4262
  %v4377 = vadd.f32 %v3668, %v4267
  %v4378 = vadd.f32 %v3669, %v4272
  %v4379 = vadd.f32 %v3670, %v4277
  %v4380 = vadd.f32 %v3671, %v4282
  %v4381 = vadd.f32 %v3672, %v4287
  %v4382 = vadd.f32 %v3673, %v4292
  %v4383 = vadd.f32 %v3674, %v4297
  %v4384 = vadd.f32 %v3675, %v4302
  %v4385 = vadd.f32 %v3676, %v4307
  %v4386 = vadd.f32 %v3677, %v4312
  %v4387 = vadd.f32 %v3678, %v4317
  %v4388 = vadd.f32 %v3679, %v4322
  %s4389 = scalar_lea.vmem [#allocation2], 48
  %v4390 = vld [vmem:[%s4389] sm:$0xff]
  %v4391 = vld [vmem:[%s4389 + $0x8] sm:$0xff]
  %v4392 = vld [vmem:[%s4389 + $0x18] sm:$0xff]
  %v4393 = vld [vmem:[%s4389 + $0x20] sm:$0xff]
  %v4394 = vld [vmem:[%s4389 + $0x30] sm:$0xff]
  %v4395 = vld [vmem:[%s4389 + $0x38] sm:$0xff]
  %v4396 = vld [vmem:[%s4389 + $0x48] sm:$0xff]
  %v4397 = vld [vmem:[%s4389 + $0x50] sm:$0xff]
  %v4398 = vld [vmem:[%s4389 + $0x60] sm:$0xff]
  %v4399 = vld [vmem:[%s4389 + $0x68] sm:$0xff]
  %v4400 = vld [vmem:[%s4389 + $0x78] sm:$0xff]
  %v4401 = vld [vmem:[%s4389 + $0x80] sm:$0xff]
  %v4402 = vld [vmem:[%s4389 + $0x90] sm:$0xff]
  %v4403 = vld [vmem:[%s4389 + $0x98] sm:$0xff]
  %v4404 = vld [vmem:[%s4389 + $0xa8] sm:$0xff]
  %v4405 = vld [vmem:[%s4389 + $0xb0] sm:$0xff]
  %v4406 = vld [vmem:[%s4389 + $0xc0] sm:$0xff]
  %v4407 = vld [vmem:[%s4389 + $0xc8] sm:$0xff]
  %v4408 = vld [vmem:[%s4389 + $0xd8] sm:$0xff]
  %v4409 = vld [vmem:[%s4389 + $0xe0] sm:$0xff]
  %v4410 = vld [vmem:[%s4389 + $0xf0] sm:$0xff]
  %v4411 = vld [vmem:[%s4389 + $0xf8] sm:$0xff]
  %v4412 = vld [vmem:[%s4389 + $0x108] sm:$0xff]
  %v4413 = vld [vmem:[%s4389 + $0x110] sm:$0xff]
  %v4414 = vld [vmem:[%s4389 + $0x120] sm:$0xff]
  %v4415 = vld [vmem:[%s4389 + $0x128] sm:$0xff]
  %v4416 = vld [vmem:[%s4389 + $0x138] sm:$0xff]
  %v4417 = vld [vmem:[%s4389 + $0x140] sm:$0xff]
  %v4418 = vld [vmem:[%s4389 + $0x150] sm:$0xff]
  %v4419 = vld [vmem:[%s4389 + $0x158] sm:$0xff]
  %v4420 = vld [vmem:[%s4389 + $0x168] sm:$0xff]
  %v4421 = vld [vmem:[%s4389 + $0x170] sm:$0xff]
  %s4422 = scalar_lea.vmem [#allocation2], 480
  %v4423 = vld [vmem:[%s4422] sm:$0xff]
  %v4424 = vld [vmem:[%s4422 + $0x8] sm:$0xff]
  %v4425 = vld [vmem:[%s4422 + $0x18] sm:$0xff]
  %v4426 = vld [vmem:[%s4422 + $0x20] sm:$0xff]
  %v4427 = vld [vmem:[%s4422 + $0x30] sm:$0xff]
  %v4428 = vld [vmem:[%s4422 + $0x38] sm:$0xff]
  %v4429 = vld [vmem:[%s4422 + $0x48] sm:$0xff]
  %v4430 = vld [vmem:[%s4422 + $0x50] sm:$0xff]
  %v4431 = vld [vmem:[%s4422 + $0x60] sm:$0xff]
  %v4432 = vld [vmem:[%s4422 + $0x68] sm:$0xff]
  %v4433 = vld [vmem:[%s4422 + $0x78] sm:$0xff]
  %v4434 = vld [vmem:[%s4422 + $0x80] sm:$0xff]
  %v4435 = vld [vmem:[%s4422 + $0x90] sm:$0xff]
  %v4436 = vld [vmem:[%s4422 + $0x98] sm:$0xff]
  %v4437 = vld [vmem:[%s4422 + $0xa8] sm:$0xff]
  %v4438 = vld [vmem:[%s4422 + $0xb0] sm:$0xff]
  %v4439 = vld [vmem:[%s4422 + $0xc0] sm:$0xff]
  %v4440 = vld [vmem:[%s4422 + $0xc8] sm:$0xff]
  %v4441 = vld [vmem:[%s4422 + $0xd8] sm:$0xff]
  %v4442 = vld [vmem:[%s4422 + $0xe0] sm:$0xff]
  %v4443 = vld [vmem:[%s4422 + $0xf0] sm:$0xff]
  %v4444 = vld [vmem:[%s4422 + $0xf8] sm:$0xff]
  %v4445 = vld [vmem:[%s4422 + $0x108] sm:$0xff]
  %v4446 = vld [vmem:[%s4422 + $0x110] sm:$0xff]
  %v4447 = vld [vmem:[%s4422 + $0x120] sm:$0xff]
  %v4448 = vld [vmem:[%s4422 + $0x128] sm:$0xff]
  %v4449 = vld [vmem:[%s4422 + $0x138] sm:$0xff]
  %v4450 = vld [vmem:[%s4422 + $0x140] sm:$0xff]
  %v4451 = vld [vmem:[%s4422 + $0x150] sm:$0xff]
  %v4452 = vld [vmem:[%s4422 + $0x158] sm:$0xff]
  %v4453 = vld [vmem:[%s4422 + $0x168] sm:$0xff]
  %v4454 = vld [vmem:[%s4422 + $0x170] sm:$0xff]
  %v4455 = vld [vmem:[%s1 + $0x12] sm:$0x7]
  %v4457 = vsel %vm20, %v4390, 0
  %v4460 = vsel %vm20, %v4391, 0
  %v4463 = vsel %vm20, %v4392, 0
  %v4466 = vsel %vm20, %v4393, 0
  %v4469 = vsel %vm20, %v4394, 0
  %v4472 = vsel %vm20, %v4395, 0
  %v4475 = vsel %vm20, %v4396, 0
  %v4478 = vsel %vm20, %v4397, 0
  %v4481 = vsel %vm20, %v4398, 0
  %v4484 = vsel %vm20, %v4399, 0
  %v4487 = vsel %vm20, %v4400, 0
  %v4490 = vsel %vm20, %v4401, 0
  %v4493 = vsel %vm20, %v4402, 0
  %v4496 = vsel %vm20, %v4403, 0
  %v4499 = vsel %vm20, %v4404, 0
  %v4502 = vsel %vm20, %v4405, 0
  %v4505 = vsel %vm20, %v4406, 0
  %v4508 = vsel %vm20, %v4407, 0
  %v4511 = vsel %vm20, %v4408, 0
  %v4514 = vsel %vm20, %v4409, 0
  %v4517 = vsel %vm20, %v4410, 0
  %v4520 = vsel %vm20, %v4411, 0
  %v4523 = vsel %vm20, %v4412, 0
  %v4526 = vsel %vm20, %v4413, 0
  %v4529 = vsel %vm20, %v4414, 0
  %v4532 = vsel %vm20, %v4415, 0
  %v4535 = vsel %vm20, %v4416, 0
  %v4538 = vsel %vm20, %v4417, 0
  %v4541 = vsel %vm20, %v4418, 0
  %v4544 = vsel %vm20, %v4419, 0
  %v4547 = vsel %vm20, %v4420, 0
  %v4550 = vsel %vm20, %v4421, 0
  %v4553 = vsel %vm20, %v4423, 0
  %v4556 = vsel %vm20, %v4424, 0
  %v4559 = vsel %vm20, %v4425, 0
  %v4562 = vsel %vm20, %v4426, 0
  %v4565 = vsel %vm20, %v4427, 0
  %v4568 = vsel %vm20, %v4428, 0
  %v4571 = vsel %vm20, %v4429, 0
  %v4574 = vsel %vm20, %v4430, 0
  %v4577 = vsel %vm20, %v4431, 0
  %v4580 = vsel %vm20, %v4432, 0
  %v4583 = vsel %vm20, %v4433, 0
  %v4586 = vsel %vm20, %v4434, 0
  %v4589 = vsel %vm20, %v4435, 0
  %v4592 = vsel %vm20, %v4436, 0
  %v4595 = vsel %vm20, %v4437, 0
  %v4598 = vsel %vm20, %v4438, 0
  %v4601 = vsel %vm20, %v4439, 0
  %v4604 = vsel %vm20, %v4440, 0
  %v4607 = vsel %vm20, %v4441, 0
  %v4610 = vsel %vm20, %v4442, 0
  %v4613 = vsel %vm20, %v4443, 0
  %v4616 = vsel %vm20, %v4444, 0
  %v4619 = vsel %vm20, %v4445, 0
  %v4622 = vsel %vm20, %v4446, 0
  %v4625 = vsel %vm20, %v4447, 0
  %v4628 = vsel %vm20, %v4448, 0
  %v4631 = vsel %vm20, %v4449, 0
  %v4634 = vsel %vm20, %v4450, 0
  %v4637 = vsel %vm20, %v4451, 0
  %v4640 = vsel %vm20, %v4452, 0
  %v4643 = vsel %vm20, %v4453, 0
  %v4646 = vsel %vm20, %v4454, 0
  %v4649 = vsel %vm584, %v4455, 0
  %4651 = vmatprep.subr.mxu0 0.0
  %4652 = vmatpush1.msra.mxu0 %v4649
  %4653 = vmatprep.subr.mxu0 0.0
  %4654 = vmatpush1.msra.mxu0 0.0
  %4655 = vmatprep.subr.mxu0 0.0
  %4656 = vmatpush1.msra.mxu0 0.0
  %4657 = vmatprep.subr.mxu0 0.0
  %4658 = vmatpush1.msra.mxu0 0.0
  %4659 = vmatprep.subr.mxu0 0.0
  %4660 = vmatpush1.msra.mxu0 0.0
  %4661 = vmatprep.subr.mxu0 0.0
  %4662 = vmatpush1.msra.mxu0 0.0
  %4663 = vmatprep.subr.mxu0 0.0
  %4664 = vmatpush1.msra.mxu0 0.0
  %4665 = vmatprep.subr.mxu0 0.0
  %4666 = vmatpush1.msra.mxu0 0.0
  %4667 = vmatprep.subr.mxu0 0.0
  %4668 = vmatpush1.msra.mxu0 0.0
  %4669 = vmatprep.subr.mxu0 0.0
  %4670 = vmatpush1.msra.mxu0 0.0
  %4671 = vmatprep.subr.mxu0 0.0
  %4672 = vmatpush1.msra.mxu0 0.0
  %4673 = vmatprep.subr.mxu0 0.0
  %4674 = vmatpush1.msra.mxu0 0.0
  %4675 = vmatprep.subr.mxu0 0.0
  %4676 = vmatpush1.msra.mxu0 0.0
  %4677 = vmatprep.subr.mxu0 0.0
  %4678 = vmatpush1.msra.mxu0 0.0
  %4679 = vmatprep.subr.mxu0 0.0
  %4680 = vmatpush1.msra.mxu0 0.0
  %4681 = vmatprep.subr.mxu0 0.0
  %4682 = vmatpush1.msra.mxu0 0.0
  %4683 = vmatprep.subr.mxu0 0.0
  %4684 = vmatpush1.msra.mxu0 0.0
  %4685 = vmatprep.subr.mxu0 0.0
  %4686 = vmatpush1.msra.mxu0 0.0
  %4687 = vmatprep.subr.mxu0 0.0
  %4688 = vmatpush1.msra.mxu0 0.0
  %4689 = vmatprep.subr.mxu0 0.0
  %4690 = vmatpush1.msra.mxu0 0.0
  %4691 = vmatprep.subr.mxu0 0.0
  %4692 = vmatpush1.msra.mxu0 0.0
  %4693 = vmatprep.subr.mxu0 0.0
  %4694 = vmatpush1.msra.mxu0 0.0
  %4695 = vmatprep.subr.mxu0 0.0
  %4696 = vmatpush1.msra.mxu0 0.0
  %4697 = vmatprep.subr.mxu0 0.0
  %4698 = vmatpush1.msra.mxu0 0.0
  %4699 = vmatprep.subr.mxu0 0.0
  %4700 = vmatpush1.msra.mxu0 0.0
  %4701 = vmatprep.subr.mxu0 0.0
  %4702 = vmatpush1.msra.mxu0 0.0
  %4703 = vmatprep.subr.mxu0 0.0
  %4704 = vmatpush1.msra.mxu0 0.0
  %4705 = vmatprep.subr.mxu0 0.0
  %4706 = vmatpush1.msra.mxu0 0.0
  %4707 = vmatprep.subr.mxu0 0.0
  %4708 = vmatpush1.msra.mxu0 0.0
  %4709 = vmatprep.subr.mxu0 0.0
  %4710 = vmatpush1.msra.mxu0 0.0
  %4711 = vmatprep.subr.mxu0 0.0
  %4712 = vmatpush1.msra.mxu0 0.0
  %4713 = vmatprep.subr.mxu0 0.0
  %4714 = vmatpush1.msra.mxu0 0.0
  %4715 = vmatprep.mubr.f32.mxu0 0.0
  %4716 = vmatmul.mubr.f32.gmra.mrb[0].mxu0 %v4457
  %v4717 = vpop.f32.mrb[0].mxu0
  %v4718 = vadd.f32 0.0, %v4717
  %v4719 = vpop.f32.mrb[0].mxu0
  %4720 = vmatprep.mubr.f32.mxu0 0.0
  %4721 = vmatmul.mubr.f32.gmra.mrb[0].mxu0 %v4460
  %v4722 = vpop.f32.mrb[0].mxu0
  %v4723 = vadd.f32 0.0, %v4722
  %v4724 = vpop.f32.mrb[0].mxu0
  %4725 = vmatprep.mubr.f32.mxu0 0.0
  %4726 = vmatmul.mubr.f32.gmra.mrb[0].mxu0 %v4463
  %v4727 = vpop.f32.mrb[0].mxu0
  %v4728 = vadd.f32 0.0, %v4727
  %v4729 = vpop.f32.mrb[0].mxu0
  %4730 = vmatprep.mubr.f32.mxu0 0.0
  %4731 = vmatmul.mubr.f32.gmra.mrb[0].mxu0 %v4466
  %v4732 = vpop.f32.mrb[0].mxu0
  %v4733 = vadd.f32 0.0, %v4732
  %v4734 = vpop.f32.mrb[0].mxu0
  %4735 = vmatprep.mubr.f32.mxu0 0.0
  %4736 = vmatmul.mubr.f32.gmra.mrb[0].mxu0 %v4469
  %v4737 = vpop.f32.mrb[0].mxu0
  %v4738 = vadd.f32 0.0, %v4737
  %v4739 = vpop.f32.mrb[0].mxu0
  %4740 = vmatprep.mubr.f32.mxu0 0.0
  %4741 = vmatmul.mubr.f32.gmra.mrb[0].mxu0 %v4472
  %v4742 = vpop.f32.mrb[0].mxu0
  %v4743 = vadd.f32 0.0, %v4742
  %v4744 = vpop.f32.mrb[0].mxu0
  %4745 = vmatprep.mubr.f32.mxu0 0.0
  %4746 = vmatmul.mubr.f32.gmra.mrb[0].mxu0 %v4475
  %v4747 = vpop.f32.mrb[0].mxu0
  %v4748 = vadd.f32 0.0, %v4747
  %v4749 = vpop.f32.mrb[0].mxu0
  %4750 = vmatprep.mubr.f32.mxu0 0.0
  %4751 = vmatmul.mubr.f32.gmra.mrb[0].mxu0 %v4478
  %v4752 = vpop.f32.mrb[0].mxu0
  %v4753 = vadd.f32 0.0, %v4752
  %v4754 = vpop.f32.mrb[0].mxu0
  %4755 = vmatprep.mubr.f32.mxu0 0.0
  %4756 = vmatmul.mubr.f32.gmra.mrb[0].mxu0 %v4481
  %v4757 = vpop.f32.mrb[0].mxu0
  %v4758 = vadd.f32 0.0, %v4757
  %v4759 = vpop.f32.mrb[0].mxu0
  %4760 = vmatprep.mubr.f32.mxu0 0.0
  %4761 = vmatmul.mubr.f32.gmra.mrb[0].mxu0 %v4484
  %v4762 = vpop.f32.mrb[0].mxu0
  %v4763 = vadd.f32 0.0, %v4762
  %v4764 = vpop.f32.mrb[0].mxu0
  %4765 = vmatprep.mubr.f32.mxu0 0.0
  %4766 = vmatmul.mubr.f32.gmra.mrb[0].mxu0 %v4487
  %v4767 = vpop.f32.mrb[0].mxu0
  %v4768 = vadd.f32 0.0, %v4767
  %v4769 = vpop.f32.mrb[0].mxu0
  %4770 = vmatprep.mubr.f32.mxu0 0.0
  %4771 = vmatmul.mubr.f32.gmra.mrb[0].mxu0 %v4490
  %v4772 = vpop.f32.mrb[0].mxu0
  %v4773 = vadd.f32 0.0, %v4772
  %v4774 = vpop.f32.mrb[0].mxu0
  %4775 = vmatprep.mubr.f32.mxu0 0.0
  %4776 = vmatmul.mubr.f32.gmra.mrb[0].mxu0 %v4493
  %v4777 = vpop.f32.mrb[0].mxu0
  %v4778 = vadd.f32 0.0, %v4777
  %v4779 = vpop.f32.mrb[0].mxu0
  %4780 = vmatprep.mubr.f32.mxu0 0.0
  %4781 = vmatmul.mubr.f32.gmra.mrb[0].mxu0 %v4496
  %v4782 = vpop.f32.mrb[0].mxu0
  %v4783 = vadd.f32 0.0, %v4782
  %v4784 = vpop.f32.mrb[0].mxu0
  %4785 = vmatprep.mubr.f32.mxu0 0.0
  %4786 = vmatmul.mubr.f32.gmra.mrb[0].mxu0 %v4499
  %v4787 = vpop.f32.mrb[0].mxu0
  %v4788 = vadd.f32 0.0, %v4787
  %v4789 = vpop.f32.mrb[0].mxu0
  %4790 = vmatprep.mubr.f32.mxu0 0.0
  %4791 = vmatmul.mubr.f32.gmra.mrb[0].mxu0 %v4502
  %v4792 = vpop.f32.mrb[0].mxu0
  %v4793 = vadd.f32 0.0, %v4792
  %v4794 = vpop.f32.mrb[0].mxu0
  %4795 = vmatprep.mubr.f32.mxu0 0.0
  %4796 = vmatmul.mubr.f32.gmra.mrb[0].mxu0 %v4505
  %v4797 = vpop.f32.mrb[0].mxu0
  %v4798 = vadd.f32 0.0, %v4797
  %v4799 = vpop.f32.mrb[0].mxu0
  %4800 = vmatprep.mubr.f32.mxu0 0.0
  %4801 = vmatmul.mubr.f32.gmra.mrb[0].mxu0 %v4508
  %v4802 = vpop.f32.mrb[0].mxu0
  %v4803 = vadd.f32 0.0, %v4802
  %v4804 = vpop.f32.mrb[0].mxu0
  %4805 = vmatprep.mubr.f32.mxu0 0.0
  %4806 = vmatmul.mubr.f32.gmra.mrb[0].mxu0 %v4511
  %v4807 = vpop.f32.mrb[0].mxu0
  %v4808 = vadd.f32 0.0, %v4807
  %v4809 = vpop.f32.mrb[0].mxu0
  %4810 = vmatprep.mubr.f32.mxu0 0.0
  %4811 = vmatmul.mubr.f32.gmra.mrb[0].mxu0 %v4514
  %v4812 = vpop.f32.mrb[0].mxu0
  %v4813 = vadd.f32 0.0, %v4812
  %v4814 = vpop.f32.mrb[0].mxu0
  %4815 = vmatprep.mubr.f32.mxu0 0.0
  %4816 = vmatmul.mubr.f32.gmra.mrb[0].mxu0 %v4517
  %v4817 = vpop.f32.mrb[0].mxu0
  %v4818 = vadd.f32 0.0, %v4817
  %v4819 = vpop.f32.mrb[0].mxu0
  %4820 = vmatprep.mubr.f32.mxu0 0.0
  %4821 = vmatmul.mubr.f32.gmra.mrb[0].mxu0 %v4520
  %v4822 = vpop.f32.mrb[0].mxu0
  %v4823 = vadd.f32 0.0, %v4822
  %v4824 = vpop.f32.mrb[0].mxu0
  %4825 = vmatprep.mubr.f32.mxu0 0.0
  %4826 = vmatmul.mubr.f32.gmra.mrb[0].mxu0 %v4523
  %v4827 = vpop.f32.mrb[0].mxu0
  %v4828 = vadd.f32 0.0, %v4827
  %v4829 = vpop.f32.mrb[0].mxu0
  %4830 = vmatprep.mubr.f32.mxu0 0.0
  %4831 = vmatmul.mubr.f32.gmra.mrb[0].mxu0 %v4526
  %v4832 = vpop.f32.mrb[0].mxu0
  %v4833 = vadd.f32 0.0, %v4832
  %v4834 = vpop.f32.mrb[0].mxu0
  %4835 = vmatprep.mubr.f32.mxu0 0.0
  %4836 = vmatmul.mubr.f32.gmra.mrb[0].mxu0 %v4529
  %v4837 = vpop.f32.mrb[0].mxu0
  %v4838 = vadd.f32 0.0, %v4837
  %v4839 = vpop.f32.mrb[0].mxu0
  %4840 = vmatprep.mubr.f32.mxu0 0.0
  %4841 = vmatmul.mubr.f32.gmra.mrb[0].mxu0 %v4532
  %v4842 = vpop.f32.mrb[0].mxu0
  %v4843 = vadd.f32 0.0, %v4842
  %v4844 = vpop.f32.mrb[0].mxu0
  %4845 = vmatprep.mubr.f32.mxu0 0.0
  %4846 = vmatmul.mubr.f32.gmra.mrb[0].mxu0 %v4535
  %v4847 = vpop.f32.mrb[0].mxu0
  %v4848 = vadd.f32 0.0, %v4847
  %v4849 = vpop.f32.mrb[0].mxu0
  %4850 = vmatprep.mubr.f32.mxu0 0.0
  %4851 = vmatmul.mubr.f32.gmra.mrb[0].mxu0 %v4538
  %v4852 = vpop.f32.mrb[0].mxu0
  %v4853 = vadd.f32 0.0, %v4852
  %v4854 = vpop.f32.mrb[0].mxu0
  %4855 = vmatprep.mubr.f32.mxu0 0.0
  %4856 = vmatmul.mubr.f32.gmra.mrb[0].mxu0 %v4541
  %v4857 = vpop.f32.mrb[0].mxu0
  %v4858 = vadd.f32 0.0, %v4857
  %v4859 = vpop.f32.mrb[0].mxu0
  %4860 = vmatprep.mubr.f32.mxu0 0.0
  %4861 = vmatmul.mubr.f32.gmra.mrb[0].mxu0 %v4544
  %v4862 = vpop.f32.mrb[0].mxu0
  %v4863 = vadd.f32 0.0, %v4862
  %v4864 = vpop.f32.mrb[0].mxu0
  %4865 = vmatprep.mubr.f32.mxu0 0.0
  %4866 = vmatmul.mubr.f32.gmra.mrb[0].mxu0 %v4547
  %v4867 = vpop.f32.mrb[0].mxu0
  %v4868 = vadd.f32 0.0, %v4867
  %v4869 = vpop.f32.mrb[0].mxu0
  %4870 = vmatprep.mubr.f32.mxu0 0.0
  %4871 = vmatmul.mubr.f32.gmra.mrb[0].mxu0 %v4550
  %v4872 = vpop.f32.mrb[0].mxu0
  %v4873 = vadd.f32 0.0, %v4872
  %v4874 = vpop.f32.mrb[0].mxu0
  %4875 = vmatprep.mubr.f32.mxu0 0.0
  %4876 = vmatmul.mubr.f32.gmra.mrb[0].mxu0 %v4553
  %v4877 = vpop.f32.mrb[0].mxu0
  %v4878 = vadd.f32 0.0, %v4877
  %v4879 = vpop.f32.mrb[0].mxu0
  %4880 = vmatprep.mubr.f32.mxu0 0.0
  %4881 = vmatmul.mubr.f32.gmra.mrb[0].mxu0 %v4556
  %v4882 = vpop.f32.mrb[0].mxu0
  %v4883 = vadd.f32 0.0, %v4882
  %v4884 = vpop.f32.mrb[0].mxu0
  %4885 = vmatprep.mubr.f32.mxu0 0.0
  %4886 = vmatmul.mubr.f32.gmra.mrb[0].mxu0 %v4559
  %v4887 = vpop.f32.mrb[0].mxu0
  %v4888 = vadd.f32 0.0, %v4887
  %v4889 = vpop.f32.mrb[0].mxu0
  %4890 = vmatprep.mubr.f32.mxu0 0.0
  %4891 = vmatmul.mubr.f32.gmra.mrb[0].mxu0 %v4562
  %v4892 = vpop.f32.mrb[0].mxu0
  %v4893 = vadd.f32 0.0, %v4892
  %v4894 = vpop.f32.mrb[0].mxu0
  %4895 = vmatprep.mubr.f32.mxu0 0.0
  %4896 = vmatmul.mubr.f32.gmra.mrb[0].mxu0 %v4565
  %v4897 = vpop.f32.mrb[0].mxu0
  %v4898 = vadd.f32 0.0, %v4897
  %v4899 = vpop.f32.mrb[0].mxu0
  %4900 = vmatprep.mubr.f32.mxu0 0.0
  %4901 = vmatmul.mubr.f32.gmra.mrb[0].mxu0 %v4568
  %v4902 = vpop.f32.mrb[0].mxu0
  %v4903 = vadd.f32 0.0, %v4902
  %v4904 = vpop.f32.mrb[0].mxu0
  %4905 = vmatprep.mubr.f32.mxu0 0.0
  %4906 = vmatmul.mubr.f32.gmra.mrb[0].mxu0 %v4571
  %v4907 = vpop.f32.mrb[0].mxu0
  %v4908 = vadd.f32 0.0, %v4907
  %v4909 = vpop.f32.mrb[0].mxu0
  %4910 = vmatprep.mubr.f32.mxu0 0.0
  %4911 = vmatmul.mubr.f32.gmra.mrb[0].mxu0 %v4574
  %v4912 = vpop.f32.mrb[0].mxu0
  %v4913 = vadd.f32 0.0, %v4912
  %v4914 = vpop.f32.mrb[0].mxu0
  %4915 = vmatprep.mubr.f32.mxu0 0.0
  %4916 = vmatmul.mubr.f32.gmra.mrb[0].mxu0 %v4577
  %v4917 = vpop.f32.mrb[0].mxu0
  %v4918 = vadd.f32 0.0, %v4917
  %v4919 = vpop.f32.mrb[0].mxu0
  %4920 = vmatprep.mubr.f32.mxu0 0.0
  %4921 = vmatmul.mubr.f32.gmra.mrb[0].mxu0 %v4580
  %v4922 = vpop.f32.mrb[0].mxu0
  %v4923 = vadd.f32 0.0, %v4922
  %v4924 = vpop.f32.mrb[0].mxu0
  %4925 = vmatprep.mubr.f32.mxu0 0.0
  %4926 = vmatmul.mubr.f32.gmra.mrb[0].mxu0 %v4583
  %v4927 = vpop.f32.mrb[0].mxu0
  %v4928 = vadd.f32 0.0, %v4927
  %v4929 = vpop.f32.mrb[0].mxu0
  %4930 = vmatprep.mubr.f32.mxu0 0.0
  %4931 = vmatmul.mubr.f32.gmra.mrb[0].mxu0 %v4586
  %v4932 = vpop.f32.mrb[0].mxu0
  %v4933 = vadd.f32 0.0, %v4932
  %v4934 = vpop.f32.mrb[0].mxu0
  %4935 = vmatprep.mubr.f32.mxu0 0.0
  %4936 = vmatmul.mubr.f32.gmra.mrb[0].mxu0 %v4589
  %v4937 = vpop.f32.mrb[0].mxu0
  %v4938 = vadd.f32 0.0, %v4937
  %v4939 = vpop.f32.mrb[0].mxu0
  %4940 = vmatprep.mubr.f32.mxu0 0.0
  %4941 = vmatmul.mubr.f32.gmra.mrb[0].mxu0 %v4592
  %v4942 = vpop.f32.mrb[0].mxu0
  %v4943 = vadd.f32 0.0, %v4942
  %v4944 = vpop.f32.mrb[0].mxu0
  %4945 = vmatprep.mubr.f32.mxu0 0.0
  %4946 = vmatmul.mubr.f32.gmra.mrb[0].mxu0 %v4595
  %v4947 = vpop.f32.mrb[0].mxu0
  %v4948 = vadd.f32 0.0, %v4947
  %v4949 = vpop.f32.mrb[0].mxu0
  %4950 = vmatprep.mubr.f32.mxu0 0.0
  %4951 = vmatmul.mubr.f32.gmra.mrb[0].mxu0 %v4598
  %v4952 = vpop.f32.mrb[0].mxu0
  %v4953 = vadd.f32 0.0, %v4952
  %v4954 = vpop.f32.mrb[0].mxu0
  %4955 = vmatprep.mubr.f32.mxu0 0.0
  %4956 = vmatmul.mubr.f32.gmra.mrb[0].mxu0 %v4601
  %v4957 = vpop.f32.mrb[0].mxu0
  %v4958 = vadd.f32 0.0, %v4957
  %v4959 = vpop.f32.mrb[0].mxu0
  %4960 = vmatprep.mubr.f32.mxu0 0.0
  %4961 = vmatmul.mubr.f32.gmra.mrb[0].mxu0 %v4604
  %v4962 = vpop.f32.mrb[0].mxu0
  %v4963 = vadd.f32 0.0, %v4962
  %v4964 = vpop.f32.mrb[0].mxu0
  %4965 = vmatprep.mubr.f32.mxu0 0.0
  %4966 = vmatmul.mubr.f32.gmra.mrb[0].mxu0 %v4607
  %v4967 = vpop.f32.mrb[0].mxu0
  %v4968 = vadd.f32 0.0, %v4967
  %v4969 = vpop.f32.mrb[0].mxu0
  %4970 = vmatprep.mubr.f32.mxu0 0.0
  %4971 = vmatmul.mubr.f32.gmra.mrb[0].mxu0 %v4610
  %v4972 = vpop.f32.mrb[0].mxu0
  %v4973 = vadd.f32 0.0, %v4972
  %v4974 = vpop.f32.mrb[0].mxu0
  %4975 = vmatprep.mubr.f32.mxu0 0.0
  %4976 = vmatmul.mubr.f32.gmra.mrb[0].mxu0 %v4613
  %v4977 = vpop.f32.mrb[0].mxu0
  %v4978 = vadd.f32 0.0, %v4977
  %v4979 = vpop.f32.mrb[0].mxu0
  %4980 = vmatprep.mubr.f32.mxu0 0.0
  %4981 = vmatmul.mubr.f32.gmra.mrb[0].mxu0 %v4616
  %v4982 = vpop.f32.mrb[0].mxu0
  %v4983 = vadd.f32 0.0, %v4982
  %v4984 = vpop.f32.mrb[0].mxu0
  %4985 = vmatprep.mubr.f32.mxu0 0.0
  %4986 = vmatmul.mubr.f32.gmra.mrb[0].mxu0 %v4619
  %v4987 = vpop.f32.mrb[0].mxu0
  %v4988 = vadd.f32 0.0, %v4987
  %v4989 = vpop.f32.mrb[0].mxu0
  %4990 = vmatprep.mubr.f32.mxu0 0.0
  %4991 = vmatmul.mubr.f32.gmra.mrb[0].mxu0 %v4622
  %v4992 = vpop.f32.mrb[0].mxu0
  %v4993 = vadd.f32 0.0, %v4992
  %v4994 = vpop.f32.mrb[0].mxu0
  %4995 = vmatprep.mubr.f32.mxu0 0.0
  %4996 = vmatmul.mubr.f32.gmra.mrb[0].mxu0 %v4625
  %v4997 = vpop.f32.mrb[0].mxu0
  %v4998 = vadd.f32 0.0, %v4997
  %v4999 = vpop.f32.mrb[0].mxu0
  %5000 = vmatprep.mubr.f32.mxu0 0.0
  %5001 = vmatmul.mubr.f32.gmra.mrb[0].mxu0 %v4628
  %v5002 = vpop.f32.mrb[0].mxu0
  %v5003 = vadd.f32 0.0, %v5002
  %v5004 = vpop.f32.mrb[0].mxu0
  %5005 = vmatprep.mubr.f32.mxu0 0.0
  %5006 = vmatmul.mubr.f32.gmra.mrb[0].mxu0 %v4631
  %v5007 = vpop.f32.mrb[0].mxu0
  %v5008 = vadd.f32 0.0, %v5007
  %v5009 = vpop.f32.mrb[0].mxu0
  %5010 = vmatprep.mubr.f32.mxu0 0.0
  %5011 = vmatmul.mubr.f32.gmra.mrb[0].mxu0 %v4634
  %v5012 = vpop.f32.mrb[0].mxu0
  %v5013 = vadd.f32 0.0, %v5012
  %v5014 = vpop.f32.mrb[0].mxu0
  %5015 = vmatprep.mubr.f32.mxu0 0.0
  %5016 = vmatmul.mubr.f32.gmra.mrb[0].mxu0 %v4637
  %v5017 = vpop.f32.mrb[0].mxu0
  %v5018 = vadd.f32 0.0, %v5017
  %v5019 = vpop.f32.mrb[0].mxu0
  %5020 = vmatprep.mubr.f32.mxu0 0.0
  %5021 = vmatmul.mubr.f32.gmra.mrb[0].mxu0 %v4640
  %v5022 = vpop.f32.mrb[0].mxu0
  %v5023 = vadd.f32 0.0, %v5022
  %v5024 = vpop.f32.mrb[0].mxu0
  %5025 = vmatprep.mubr.f32.mxu0 0.0
  %5026 = vmatmul.mubr.f32.gmra.mrb[0].mxu0 %v4643
  %v5027 = vpop.f32.mrb[0].mxu0
  %v5028 = vadd.f32 0.0, %v5027
  %v5029 = vpop.f32.mrb[0].mxu0
  %5030 = vmatprep.mubr.f32.mxu0 0.0
  %5031 = vmatmul.mubr.f32.gmra.mrb[0].mxu0 %v4646
  %v5032 = vpop.f32.mrb[0].mxu0
  %v5033 = vadd.f32 0.0, %v5032
  %v5034 = vpop.f32.mrb[0].mxu0
  %5035 = vdwg.mxu0
  %v5036 = vadd.f32 %v4325, %v4718
  %v5037 = vadd.f32 %v4326, %v4723
  %v5038 = vadd.f32 %v4327, %v4728
  %v5039 = vadd.f32 %v4328, %v4733
  %v5040 = vadd.f32 %v4329, %v4738
  %v5041 = vadd.f32 %v4330, %v4743
  %v5042 = vadd.f32 %v4331, %v4748
  %v5043 = vadd.f32 %v4332, %v4753
  %v5044 = vadd.f32 %v4333, %v4758
  %v5045 = vadd.f32 %v4334, %v4763
  %v5046 = vadd.f32 %v4335, %v4768
  %v5047 = vadd.f32 %v4336, %v4773
  %v5048 = vadd.f32 %v4337, %v4778
  %v5049 = vadd.f32 %v4338, %v4783
  %v5050 = vadd.f32 %v4339, %v4788
  %v5051 = vadd.f32 %v4340, %v4793
  %v5052 = vadd.f32 %v4341, %v4798
  %v5053 = vadd.f32 %v4342, %v4803
  %v5054 = vadd.f32 %v4343, %v4808
  %v5055 = vadd.f32 %v4344, %v4813
  %v5056 = vadd.f32 %v4345, %v4818
  %v5057 = vadd.f32 %v4346, %v4823
  %v5058 = vadd.f32 %v4347, %v4828
  %v5059 = vadd.f32 %v4348, %v4833
  %v5060 = vadd.f32 %v4349, %v4838
  %v5061 = vadd.f32 %v4350, %v4843
  %v5062 = vadd.f32 %v4351, %v4848
  %v5063 = vadd.f32 %v4352, %v4853
  %v5064 = vadd.f32 %v4353, %v4858
  %v5065 = vadd.f32 %v4354, %v4863
  %v5066 = vadd.f32 %v4355, %v4868
  %v5067 = vadd.f32 %v4356, %v4873
  %v5068 = vadd.f32 %v4357, %v4878
  %v5069 = vadd.f32 %v4358, %v4883
  %v5070 = vadd.f32 %v4359, %v4888
  %v5071 = vadd.f32 %v4360, %v4893
  %v5072 = vadd.f32 %v4361, %v4898
  %v5073 = vadd.f32 %v4362, %v4903
  %v5074 = vadd.f32 %v4363, %v4908
  %v5075 = vadd.f32 %v4364, %v4913
  %v5076 = vadd.f32 %v4365, %v4918
  %v5077 = vadd.f32 %v4366, %v4923
  %v5078 = vadd.f32 %v4367, %v4928
  %v5079 = vadd.f32 %v4368, %v4933
  %v5080 = vadd.f32 %v4369, %v4938
  %v5081 = vadd.f32 %v4370, %v4943
  %v5082 = vadd.f32 %v4371, %v4948
  %v5083 = vadd.f32 %v4372, %v4953
  %v5084 = vadd.f32 %v4373, %v4958
  %v5085 = vadd.f32 %v4374, %v4963
  %v5086 = vadd.f32 %v4375, %v4968
  %v5087 = vadd.f32 %v4376, %v4973
  %v5088 = vadd.f32 %v4377, %v4978
  %v5089 = vadd.f32 %v4378, %v4983
  %v5090 = vadd.f32 %v4379, %v4988
  %v5091 = vadd.f32 %v4380, %v4993
  %v5092 = vadd.f32 %v4381, %v4998
  %v5093 = vadd.f32 %v4382, %v5003
  %v5094 = vadd.f32 %v4383, %v5008
  %v5095 = vadd.f32 %v4384, %v5013
  %v5096 = vadd.f32 %v4385, %v5018
  %v5097 = vadd.f32 %v4386, %v5023
  %v5098 = vadd.f32 %v4387, %v5028
  %v5099 = vadd.f32 %v4388, %v5033
  %v5100 = vld [vmem:[%s4389 + $0x1] sm:$0xff]
  %v5101 = vld [vmem:[%s4389 + $0x9] sm:$0xff]
  %v5102 = vld [vmem:[%s4389 + $0x19] sm:$0xff]
  %v5103 = vld [vmem:[%s4389 + $0x21] sm:$0xff]
  %v5104 = vld [vmem:[%s4389 + $0x31] sm:$0xff]
  %v5105 = vld [vmem:[%s4389 + $0x39] sm:$0xff]
  %v5106 = vld [vmem:[%s4389 + $0x49] sm:$0xff]
  %v5107 = vld [vmem:[%s4389 + $0x51] sm:$0xff]
  %v5108 = vld [vmem:[%s4389 + $0x61] sm:$0xff]
  %v5109 = vld [vmem:[%s4389 + $0x69] sm:$0xff]
  %v5110 = vld [vmem:[%s4389 + $0x79] sm:$0xff]
  %v5111 = vld [vmem:[%s4389 + $0x81] sm:$0xff]
  %v5112 = vld [vmem:[%s4389 + $0x91] sm:$0xff]
  %v5113 = vld [vmem:[%s4389 + $0x99] sm:$0xff]
  %v5114 = vld [vmem:[%s4389 + $0xa9] sm:$0xff]
  %v5115 = vld [vmem:[%s4389 + $0xb1] sm:$0xff]
  %v5116 = vld [vmem:[%s4389 + $0xc1] sm:$0xff]
  %v5117 = vld [vmem:[%s4389 + $0xc9] sm:$0xff]
  %v5118 = vld [vmem:[%s4389 + $0xd9] sm:$0xff]
  %v5119 = vld [vmem:[%s4389 + $0xe1] sm:$0xff]
  %v5120 = vld [vmem:[%s4389 + $0xf1] sm:$0xff]
  %v5121 = vld [vmem:[%s4389 + $0xf9] sm:$0xff]
  %v5122 = vld [vmem:[%s4389 + $0x109] sm:$0xff]
  %v5123 = vld [vmem:[%s4389 + $0x111] sm:$0xff]
  %v5124 = vld [vmem:[%s4389 + $0x121] sm:$0xff]
  %v5125 = vld [vmem:[%s4389 + $0x129] sm:$0xff]
  %v5126 = vld [vmem:[%s4389 + $0x139] sm:$0xff]
  %v5127 = vld [vmem:[%s4389 + $0x141] sm:$0xff]
  %v5128 = vld [vmem:[%s4389 + $0x151] sm:$0xff]
  %v5129 = vld [vmem:[%s4389 + $0x159] sm:$0xff]
  %v5130 = vld [vmem:[%s4389 + $0x169] sm:$0xff]
  %v5131 = vld [vmem:[%s4389 + $0x171] sm:$0xff]
  %v5132 = vld [vmem:[%s4422 + $0x1] sm:$0xff]
  %v5133 = vld [vmem:[%s4422 + $0x9] sm:$0xff]
  %v5134 = vld [vmem:[%s4422 + $0x19] sm:$0xff]
  %v5135 = vld [vmem:[%s4422 + $0x21] sm:$0xff]
  %v5136 = vld [vmem:[%s4422 + $0x31] sm:$0xff]
  %v5137 = vld [vmem:[%s4422 + $0x39] sm:$0xff]
  %v5138 = vld [vmem:[%s4422 + $0x49] sm:$0xff]
  %v5139 = vld [vmem:[%s4422 + $0x51] sm:$0xff]
  %v5140 = vld [vmem:[%s4422 + $0x61] sm:$0xff]
  %v5141 = vld [vmem:[%s4422 + $0x69] sm:$0xff]
  %v5142 = vld [vmem:[%s4422 + $0x79] sm:$0xff]
  %v5143 = vld [vmem:[%s4422 + $0x81] sm:$0xff]
  %v5144 = vld [vmem:[%s4422 + $0x91] sm:$0xff]
  %v5145 = vld [vmem:[%s4422 + $0x99] sm:$0xff]
  %v5146 = vld [vmem:[%s4422 + $0xa9] sm:$0xff]
  %v5147 = vld [vmem:[%s4422 + $0xb1] sm:$0xff]
  %v5148 = vld [vmem:[%s4422 + $0xc1] sm:$0xff]
  %v5149 = vld [vmem:[%s4422 + $0xc9] sm:$0xff]
  %v5150 = vld [vmem:[%s4422 + $0xd9] sm:$0xff]
  %v5151 = vld [vmem:[%s4422 + $0xe1] sm:$0xff]
  %v5152 = vld [vmem:[%s4422 + $0xf1] sm:$0xff]
  %v5153 = vld [vmem:[%s4422 + $0xf9] sm:$0xff]
  %v5154 = vld [vmem:[%s4422 + $0x109] sm:$0xff]
  %v5155 = vld [vmem:[%s4422 + $0x111] sm:$0xff]
  %v5156 = vld [vmem:[%s4422 + $0x121] sm:$0xff]
  %v5157 = vld [vmem:[%s4422 + $0x129] sm:$0xff]
  %v5158 = vld [vmem:[%s4422 + $0x139] sm:$0xff]
  %v5159 = vld [vmem:[%s4422 + $0x141] sm:$0xff]
  %v5160 = vld [vmem:[%s4422 + $0x151] sm:$0xff]
  %v5161 = vld [vmem:[%s4422 + $0x159] sm:$0xff]
  %v5162 = vld [vmem:[%s4422 + $0x169] sm:$0xff]
  %v5163 = vld [vmem:[%s4422 + $0x171] sm:$0xff]
  %v5164 = vld [vmem:[%s1 + $0x15] sm:$0x7]
  %v5166 = vsel %vm20, %v5100, 0
  %v5169 = vsel %vm20, %v5101, 0
  %v5172 = vsel %vm20, %v5102, 0
  %v5175 = vsel %vm20, %v5103, 0
  %v5178 = vsel %vm20, %v5104, 0
  %v5181 = vsel %vm20, %v5105, 0
  %v5184 = vsel %vm20, %v5106, 0
  %v5187 = vsel %vm20, %v5107, 0
  %v5190 = vsel %vm20, %v5108, 0
  %v5193 = vsel %vm20, %v5109, 0
  %v5196 = vsel %vm20, %v5110, 0
  %v5199 = vsel %vm20, %v5111, 0
  %v5202 = vsel %vm20, %v5112, 0
  %v5205 = vsel %vm20, %v5113, 0
  %v5208 = vsel %vm20, %v5114, 0
  %v5211 = vsel %vm20, %v5115, 0
  %v5214 = vsel %vm20, %v5116, 0
  %v5217 = vsel %vm20, %v5117, 0
  %v5220 = vsel %vm20, %v5118, 0
  %v5223 = vsel %vm20, %v5119, 0
  %v5226 = vsel %vm20, %v5120, 0
  %v5229 = vsel %vm20, %v5121, 0
  %v5232 = vsel %vm20, %v5122, 0
  %v5235 = vsel %vm20, %v5123, 0
  %v5238 = vsel %vm20, %v5124, 0
  %v5241 = vsel %vm20, %v5125, 0
  %v5244 = vsel %vm20, %v5126, 0
  %v5247 = vsel %vm20, %v5127, 0
  %v5250 = vsel %vm20, %v5128, 0
  %v5253 = vsel %vm20, %v5129, 0
  %v5256 = vsel %vm20, %v5130, 0
  %v5259 = vsel %vm20, %v5131, 0
  %v5262 = vsel %vm20, %v5132, 0
  %v5265 = vsel %vm20, %v5133, 0
  %v5268 = vsel %vm20, %v5134, 0
  %v5271 = vsel %vm20, %v5135, 0
  %v5274 = vsel %vm20, %v5136, 0
  %v5277 = vsel %vm20, %v5137, 0
  %v5280 = vsel %vm20, %v5138, 0
  %v5283 = vsel %vm20, %v5139, 0
  %v5286 = vsel %vm20, %v5140, 0
  %v5289 = vsel %vm20, %v5141, 0
  %v5292 = vsel %vm20, %v5142, 0
  %v5295 = vsel %vm20, %v5143, 0
  %v5298 = vsel %vm20, %v5144, 0
  %v5301 = vsel %vm20, %v5145, 0
  %v5304 = vsel %vm20, %v5146, 0
  %v5307 = vsel %vm20, %v5147, 0
  %v5310 = vsel %vm20, %v5148, 0
  %v5313 = vsel %vm20, %v5149, 0
  %v5316 = vsel %vm20, %v5150, 0
  %v5319 = vsel %vm20, %v5151, 0
  %v5322 = vsel %vm20, %v5152, 0
  %v5325 = vsel %vm20, %v5153, 0
  %v5328 = vsel %vm20, %v5154, 0
  %v5331 = vsel %vm20, %v5155, 0
  %v5334 = vsel %vm20, %v5156, 0
  %v5337 = vsel %vm20, %v5157, 0
  %v5340 = vsel %vm20, %v5158, 0
  %v5343 = vsel %vm20, %v5159, 0
  %v5346 = vsel %vm20, %v5160, 0
  %v5349 = vsel %vm20, %v5161, 0
  %v5352 = vsel %vm20, %v5162, 0
  %v5355 = vsel %vm20, %v5163, 0
  %v5358 = vsel %vm584, %v5164, 0
  %5360 = vmatprep.subr.mxu0 0.0
  %5361 = vmatpush1.msra.mxu0 %v5358
  %5362 = vmatprep.subr.mxu0 0.0
  %5363 = vmatpush1.msra.mxu0 0.0
  %5364 = vmatprep.subr.mxu0 0.0
  %5365 = vmatpush1.msra.mxu0 0.0
  %5366 = vmatprep.subr.mxu0 0.0
  %5367 = vmatpush1.msra.mxu0 0.0
  %5368 = vmatprep.subr.mxu0 0.0
  %5369 = vmatpush1.msra.mxu0 0.0
  %5370 = vmatprep.subr.mxu0 0.0
  %5371 = vmatpush1.msra.mxu0 0.0
  %5372 = vmatprep.subr.mxu0 0.0
  %5373 = vmatpush1.msra.mxu0 0.0
  %5374 = vmatprep.subr.mxu0 0.0
  %5375 = vmatpush1.msra.mxu0 0.0
  %5376 = vmatprep.subr.mxu0 0.0
  %5377 = vmatpush1.msra.mxu0 0.0
  %5378 = vmatprep.subr.mxu0 0.0
  %5379 = vmatpush1.msra.mxu0 0.0
  %5380 = vmatprep.subr.mxu0 0.0
  %5381 = vmatpush1.msra.mxu0 0.0
  %5382 = vmatprep.subr.mxu0 0.0
  %5383 = vmatpush1.msra.mxu0 0.0
  %5384 = vmatprep.subr.mxu0 0.0
  %5385 = vmatpush1.msra.mxu0 0.0
  %5386 = vmatprep.subr.mxu0 0.0
  %5387 = vmatpush1.msra.mxu0 0.0
  %5388 = vmatprep.subr.mxu0 0.0
  %5389 = vmatpush1.msra.mxu0 0.0
  %5390 = vmatprep.subr.mxu0 0.0
  %5391 = vmatpush1.msra.mxu0 0.0
  %5392 = vmatprep.subr.mxu0 0.0
  %5393 = vmatpush1.msra.mxu0 0.0
  %5394 = vmatprep.subr.mxu0 0.0
  %5395 = vmatpush1.msra.mxu0 0.0
  %5396 = vmatprep.subr.mxu0 0.0
  %5397 = vmatpush1.msra.mxu0 0.0
  %5398 = vmatprep.subr.mxu0 0.0
  %5399 = vmatpush1.msra.mxu0 0.0
  %5400 = vmatprep.subr.mxu0 0.0
  %5401 = vmatpush1.msra.mxu0 0.0
  %5402 = vmatprep.subr.mxu0 0.0
  %5403 = vmatpush1.msra.mxu0 0.0
  %5404 = vmatprep.subr.mxu0 0.0
  %5405 = vmatpush1.msra.mxu0 0.0
  %5406 = vmatprep.subr.mxu0 0.0
  %5407 = vmatpush1.msra.mxu0 0.0
  %5408 = vmatprep.subr.mxu0 0.0
  %5409 = vmatpush1.msra.mxu0 0.0
  %5410 = vmatprep.subr.mxu0 0.0
  %5411 = vmatpush1.msra.mxu0 0.0
  %5412 = vmatprep.subr.mxu0 0.0
  %5413 = vmatpush1.msra.mxu0 0.0
  %5414 = vmatprep.subr.mxu0 0.0
  %5415 = vmatpush1.msra.mxu0 0.0
  %5416 = vmatprep.subr.mxu0 0.0
  %5417 = vmatpush1.msra.mxu0 0.0
  %5418 = vmatprep.subr.mxu0 0.0
  %5419 = vmatpush1.msra.mxu0 0.0
  %5420 = vmatprep.subr.mxu0 0.0
  %5421 = vmatpush1.msra.mxu0 0.0
  %5422 = vmatprep.subr.mxu0 0.0
  %5423 = vmatpush1.msra.mxu0 0.0
  %5424 = vmatprep.mubr.f32.mxu0 0.0
  %5425 = vmatmul.mubr.f32.gmra.mrb[0].mxu0 %v5166
  %v5426 = vpop.f32.mrb[0].mxu0
  %v5427 = vadd.f32 0.0, %v5426
  %v5428 = vpop.f32.mrb[0].mxu0
  %5429 = vmatprep.mubr.f32.mxu0 0.0
  %5430 = vmatmul.mubr.f32.gmra.mrb[0].mxu0 %v5169
  %v5431 = vpop.f32.mrb[0].mxu0
  %v5432 = vadd.f32 0.0, %v5431
  %v5433 = vpop.f32.mrb[0].mxu0
  %5434 = vmatprep.mubr.f32.mxu0 0.0
  %5435 = vmatmul.mubr.f32.gmra.mrb[0].mxu0 %v5172
  %v5436 = vpop.f32.mrb[0].mxu0
  %v5437 = vadd.f32 0.0, %v5436
  %v5438 = vpop.f32.mrb[0].mxu0
  %5439 = vmatprep.mubr.f32.mxu0 0.0
  %5440 = vmatmul.mubr.f32.gmra.mrb[0].mxu0 %v5175
  %v5441 = vpop.f32.mrb[0].mxu0
  %v5442 = vadd.f32 0.0, %v5441
  %v5443 = vpop.f32.mrb[0].mxu0
  %5444 = vmatprep.mubr.f32.mxu0 0.0
  %5445 = vmatmul.mubr.f32.gmra.mrb[0].mxu0 %v5178
  %v5446 = vpop.f32.mrb[0].mxu0
  %v5447 = vadd.f32 0.0, %v5446
  %v5448 = vpop.f32.mrb[0].mxu0
  %5449 = vmatprep.mubr.f32.mxu0 0.0
  %5450 = vmatmul.mubr.f32.gmra.mrb[0].mxu0 %v5181
  %v5451 = vpop.f32.mrb[0].mxu0
  %v5452 = vadd.f32 0.0, %v5451
  %v5453 = vpop.f32.mrb[0].mxu0
  %5454 = vmatprep.mubr.f32.mxu0 0.0
  %5455 = vmatmul.mubr.f32.gmra.mrb[0].mxu0 %v5184
  %v5456 = vpop.f32.mrb[0].mxu0
  %v5457 = vadd.f32 0.0, %v5456
  %v5458 = vpop.f32.mrb[0].mxu0
  %5459 = vmatprep.mubr.f32.mxu0 0.0
  %5460 = vmatmul.mubr.f32.gmra.mrb[0].mxu0 %v5187
  %v5461 = vpop.f32.mrb[0].mxu0
  %v5462 = vadd.f32 0.0, %v5461
  %v5463 = vpop.f32.mrb[0].mxu0
  %5464 = vmatprep.mubr.f32.mxu0 0.0
  %5465 = vmatmul.mubr.f32.gmra.mrb[0].mxu0 %v5190
  %v5466 = vpop.f32.mrb[0].mxu0
  %v5467 = vadd.f32 0.0, %v5466
  %v5468 = vpop.f32.mrb[0].mxu0
  %5469 = vmatprep.mubr.f32.mxu0 0.0
  %5470 = vmatmul.mubr.f32.gmra.mrb[0].mxu0 %v5193
  %v5471 = vpop.f32.mrb[0].mxu0
  %v5472 = vadd.f32 0.0, %v5471
  %v5473 = vpop.f32.mrb[0].mxu0
  %5474 = vmatprep.mubr.f32.mxu0 0.0
  %5475 = vmatmul.mubr.f32.gmra.mrb[0].mxu0 %v5196
  %v5476 = vpop.f32.mrb[0].mxu0
  %v5477 = vadd.f32 0.0, %v5476
  %v5478 = vpop.f32.mrb[0].mxu0
  %5479 = vmatprep.mubr.f32.mxu0 0.0
  %5480 = vmatmul.mubr.f32.gmra.mrb[0].mxu0 %v5199
  %v5481 = vpop.f32.mrb[0].mxu0
  %v5482 = vadd.f32 0.0, %v5481
  %v5483 = vpop.f32.mrb[0].mxu0
  %5484 = vmatprep.mubr.f32.mxu0 0.0
  %5485 = vmatmul.mubr.f32.gmra.mrb[0].mxu0 %v5202
  %v5486 = vpop.f32.mrb[0].mxu0
  %v5487 = vadd.f32 0.0, %v5486
  %v5488 = vpop.f32.mrb[0].mxu0
  %5489 = vmatprep.mubr.f32.mxu0 0.0
  %5490 = vmatmul.mubr.f32.gmra.mrb[0].mxu0 %v5205
  %v5491 = vpop.f32.mrb[0].mxu0
  %v5492 = vadd.f32 0.0, %v5491
  %v5493 = vpop.f32.mrb[0].mxu0
  %5494 = vmatprep.mubr.f32.mxu0 0.0
  %5495 = vmatmul.mubr.f32.gmra.mrb[0].mxu0 %v5208
  %v5496 = vpop.f32.mrb[0].mxu0
  %v5497 = vadd.f32 0.0, %v5496
  %v5498 = vpop.f32.mrb[0].mxu0
  %5499 = vmatprep.mubr.f32.mxu0 0.0
  %5500 = vmatmul.mubr.f32.gmra.mrb[0].mxu0 %v5211
  %v5501 = vpop.f32.mrb[0].mxu0
  %v5502 = vadd.f32 0.0, %v5501
  %v5503 = vpop.f32.mrb[0].mxu0
  %5504 = vmatprep.mubr.f32.mxu0 0.0
  %5505 = vmatmul.mubr.f32.gmra.mrb[0].mxu0 %v5214
  %v5506 = vpop.f32.mrb[0].mxu0
  %v5507 = vadd.f32 0.0, %v5506
  %v5508 = vpop.f32.mrb[0].mxu0
  %5509 = vmatprep.mubr.f32.mxu0 0.0
  %5510 = vmatmul.mubr.f32.gmra.mrb[0].mxu0 %v5217
  %v5511 = vpop.f32.mrb[0].mxu0
  %v5512 = vadd.f32 0.0, %v5511
  %v5513 = vpop.f32.mrb[0].mxu0
  %5514 = vmatprep.mubr.f32.mxu0 0.0
  %5515 = vmatmul.mubr.f32.gmra.mrb[0].mxu0 %v5220
  %v5516 = vpop.f32.mrb[0].mxu0
  %v5517 = vadd.f32 0.0, %v5516
  %v5518 = vpop.f32.mrb[0].mxu0
  %5519 = vmatprep.mubr.f32.mxu0 0.0
  %5520 = vmatmul.mubr.f32.gmra.mrb[0].mxu0 %v5223
  %v5521 = vpop.f32.mrb[0].mxu0
  %v5522 = vadd.f32 0.0, %v5521
  %v5523 = vpop.f32.mrb[0].mxu0
  %5524 = vmatprep.mubr.f32.mxu0 0.0
  %5525 = vmatmul.mubr.f32.gmra.mrb[0].mxu0 %v5226
  %v5526 = vpop.f32.mrb[0].mxu0
  %v5527 = vadd.f32 0.0, %v5526
  %v5528 = vpop.f32.mrb[0].mxu0
  %5529 = vmatprep.mubr.f32.mxu0 0.0
  %5530 = vmatmul.mubr.f32.gmra.mrb[0].mxu0 %v5229
  %v5531 = vpop.f32.mrb[0].mxu0
  %v5532 = vadd.f32 0.0, %v5531
  %v5533 = vpop.f32.mrb[0].mxu0
  %5534 = vmatprep.mubr.f32.mxu0 0.0
  %5535 = vmatmul.mubr.f32.gmra.mrb[0].mxu0 %v5232
  %v5536 = vpop.f32.mrb[0].mxu0
  %v5537 = vadd.f32 0.0, %v5536
  %v5538 = vpop.f32.mrb[0].mxu0
  %5539 = vmatprep.mubr.f32.mxu0 0.0
  %5540 = vmatmul.mubr.f32.gmra.mrb[0].mxu0 %v5235
  %v5541 = vpop.f32.mrb[0].mxu0
  %v5542 = vadd.f32 0.0, %v5541
  %v5543 = vpop.f32.mrb[0].mxu0
  %5544 = vmatprep.mubr.f32.mxu0 0.0
  %5545 = vmatmul.mubr.f32.gmra.mrb[0].mxu0 %v5238
  %v5546 = vpop.f32.mrb[0].mxu0
  %v5547 = vadd.f32 0.0, %v5546
  %v5548 = vpop.f32.mrb[0].mxu0
  %5549 = vmatprep.mubr.f32.mxu0 0.0
  %5550 = vmatmul.mubr.f32.gmra.mrb[0].mxu0 %v5241
  %v5551 = vpop.f32.mrb[0].mxu0
  %v5552 = vadd.f32 0.0, %v5551
  %v5553 = vpop.f32.mrb[0].mxu0
  %5554 = vmatprep.mubr.f32.mxu0 0.0
  %5555 = vmatmul.mubr.f32.gmra.mrb[0].mxu0 %v5244
  %v5556 = vpop.f32.mrb[0].mxu0
  %v5557 = vadd.f32 0.0, %v5556
  %v5558 = vpop.f32.mrb[0].mxu0
  %5559 = vmatprep.mubr.f32.mxu0 0.0
  %5560 = vmatmul.mubr.f32.gmra.mrb[0].mxu0 %v5247
  %v5561 = vpop.f32.mrb[0].mxu0
  %v5562 = vadd.f32 0.0, %v5561
  %v5563 = vpop.f32.mrb[0].mxu0
  %5564 = vmatprep.mubr.f32.mxu0 0.0
  %5565 = vmatmul.mubr.f32.gmra.mrb[0].mxu0 %v5250
  %v5566 = vpop.f32.mrb[0].mxu0
  %v5567 = vadd.f32 0.0, %v5566
  %v5568 = vpop.f32.mrb[0].mxu0
  %5569 = vmatprep.mubr.f32.mxu0 0.0
  %5570 = vmatmul.mubr.f32.gmra.mrb[0].mxu0 %v5253
  %v5571 = vpop.f32.mrb[0].mxu0
  %v5572 = vadd.f32 0.0, %v5571
  %v5573 = vpop.f32.mrb[0].mxu0
  %5574 = vmatprep.mubr.f32.mxu0 0.0
  %5575 = vmatmul.mubr.f32.gmra.mrb[0].mxu0 %v5256
  %v5576 = vpop.f32.mrb[0].mxu0
  %v5577 = vadd.f32 0.0, %v5576
  %v5578 = vpop.f32.mrb[0].mxu0
  %5579 = vmatprep.mubr.f32.mxu0 0.0
  %5580 = vmatmul.mubr.f32.gmra.mrb[0].mxu0 %v5259
  %v5581 = vpop.f32.mrb[0].mxu0
  %v5582 = vadd.f32 0.0, %v5581
  %v5583 = vpop.f32.mrb[0].mxu0
  %5584 = vmatprep.mubr.f32.mxu0 0.0
  %5585 = vmatmul.mubr.f32.gmra.mrb[0].mxu0 %v5262
  %v5586 = vpop.f32.mrb[0].mxu0
  %v5587 = vadd.f32 0.0, %v5586
  %v5588 = vpop.f32.mrb[0].mxu0
  %5589 = vmatprep.mubr.f32.mxu0 0.0
  %5590 = vmatmul.mubr.f32.gmra.mrb[0].mxu0 %v5265
  %v5591 = vpop.f32.mrb[0].mxu0
  %v5592 = vadd.f32 0.0, %v5591
  %v5593 = vpop.f32.mrb[0].mxu0
  %5594 = vmatprep.mubr.f32.mxu0 0.0
  %5595 = vmatmul.mubr.f32.gmra.mrb[0].mxu0 %v5268
  %v5596 = vpop.f32.mrb[0].mxu0
  %v5597 = vadd.f32 0.0, %v5596
  %v5598 = vpop.f32.mrb[0].mxu0
  %5599 = vmatprep.mubr.f32.mxu0 0.0
  %5600 = vmatmul.mubr.f32.gmra.mrb[0].mxu0 %v5271
  %v5601 = vpop.f32.mrb[0].mxu0
  %v5602 = vadd.f32 0.0, %v5601
  %v5603 = vpop.f32.mrb[0].mxu0
  %5604 = vmatprep.mubr.f32.mxu0 0.0
  %5605 = vmatmul.mubr.f32.gmra.mrb[0].mxu0 %v5274
  %v5606 = vpop.f32.mrb[0].mxu0
  %v5607 = vadd.f32 0.0, %v5606
  %v5608 = vpop.f32.mrb[0].mxu0
  %5609 = vmatprep.mubr.f32.mxu0 0.0
  %5610 = vmatmul.mubr.f32.gmra.mrb[0].mxu0 %v5277
  %v5611 = vpop.f32.mrb[0].mxu0
  %v5612 = vadd.f32 0.0, %v5611
  %v5613 = vpop.f32.mrb[0].mxu0
  %5614 = vmatprep.mubr.f32.mxu0 0.0
  %5615 = vmatmul.mubr.f32.gmra.mrb[0].mxu0 %v5280
  %v5616 = vpop.f32.mrb[0].mxu0
  %v5617 = vadd.f32 0.0, %v5616
  %v5618 = vpop.f32.mrb[0].mxu0
  %5619 = vmatprep.mubr.f32.mxu0 0.0
  %5620 = vmatmul.mubr.f32.gmra.mrb[0].mxu0 %v5283
  %v5621 = vpop.f32.mrb[0].mxu0
  %v5622 = vadd.f32 0.0, %v5621
  %v5623 = vpop.f32.mrb[0].mxu0
  %5624 = vmatprep.mubr.f32.mxu0 0.0
  %5625 = vmatmul.mubr.f32.gmra.mrb[0].mxu0 %v5286
  %v5626 = vpop.f32.mrb[0].mxu0
  %v5627 = vadd.f32 0.0, %v5626
  %v5628 = vpop.f32.mrb[0].mxu0
  %5629 = vmatprep.mubr.f32.mxu0 0.0
  %5630 = vmatmul.mubr.f32.gmra.mrb[0].mxu0 %v5289
  %v5631 = vpop.f32.mrb[0].mxu0
  %v5632 = vadd.f32 0.0, %v5631
  %v5633 = vpop.f32.mrb[0].mxu0
  %5634 = vmatprep.mubr.f32.mxu0 0.0
  %5635 = vmatmul.mubr.f32.gmra.mrb[0].mxu0 %v5292
  %v5636 = vpop.f32.mrb[0].mxu0
  %v5637 = vadd.f32 0.0, %v5636
  %v5638 = vpop.f32.mrb[0].mxu0
  %5639 = vmatprep.mubr.f32.mxu0 0.0
  %5640 = vmatmul.mubr.f32.gmra.mrb[0].mxu0 %v5295
  %v5641 = vpop.f32.mrb[0].mxu0
  %v5642 = vadd.f32 0.0, %v5641
  %v5643 = vpop.f32.mrb[0].mxu0
  %5644 = vmatprep.mubr.f32.mxu0 0.0
  %5645 = vmatmul.mubr.f32.gmra.mrb[0].mxu0 %v5298
  %v5646 = vpop.f32.mrb[0].mxu0
  %v5647 = vadd.f32 0.0, %v5646
  %v5648 = vpop.f32.mrb[0].mxu0
  %5649 = vmatprep.mubr.f32.mxu0 0.0
  %5650 = vmatmul.mubr.f32.gmra.mrb[0].mxu0 %v5301
  %v5651 = vpop.f32.mrb[0].mxu0
  %v5652 = vadd.f32 0.0, %v5651
  %v5653 = vpop.f32.mrb[0].mxu0
  %5654 = vmatprep.mubr.f32.mxu0 0.0
  %5655 = vmatmul.mubr.f32.gmra.mrb[0].mxu0 %v5304
  %v5656 = vpop.f32.mrb[0].mxu0
  %v5657 = vadd.f32 0.0, %v5656
  %v5658 = vpop.f32.mrb[0].mxu0
  %5659 = vmatprep.mubr.f32.mxu0 0.0
  %5660 = vmatmul.mubr.f32.gmra.mrb[0].mxu0 %v5307
  %v5661 = vpop.f32.mrb[0].mxu0
  %v5662 = vadd.f32 0.0, %v5661
  %v5663 = vpop.f32.mrb[0].mxu0
  %5664 = vmatprep.mubr.f32.mxu0 0.0
  %5665 = vmatmul.mubr.f32.gmra.mrb[0].mxu0 %v5310
  %v5666 = vpop.f32.mrb[0].mxu0
  %v5667 = vadd.f32 0.0, %v5666
  %v5668 = vpop.f32.mrb[0].mxu0
  %5669 = vmatprep.mubr.f32.mxu0 0.0
  %5670 = vmatmul.mubr.f32.gmra.mrb[0].mxu0 %v5313
  %v5671 = vpop.f32.mrb[0].mxu0
  %v5672 = vadd.f32 0.0, %v5671
  %v5673 = vpop.f32.mrb[0].mxu0
  %5674 = vmatprep.mubr.f32.mxu0 0.0
  %5675 = vmatmul.mubr.f32.gmra.mrb[0].mxu0 %v5316
  %v5676 = vpop.f32.mrb[0].mxu0
  %v5677 = vadd.f32 0.0, %v5676
  %v5678 = vpop.f32.mrb[0].mxu0
  %5679 = vmatprep.mubr.f32.mxu0 0.0
  %5680 = vmatmul.mubr.f32.gmra.mrb[0].mxu0 %v5319
  %v5681 = vpop.f32.mrb[0].mxu0
  %v5682 = vadd.f32 0.0, %v5681
  %v5683 = vpop.f32.mrb[0].mxu0
  %5684 = vmatprep.mubr.f32.mxu0 0.0
  %5685 = vmatmul.mubr.f32.gmra.mrb[0].mxu0 %v5322
  %v5686 = vpop.f32.mrb[0].mxu0
  %v5687 = vadd.f32 0.0, %v5686
  %v5688 = vpop.f32.mrb[0].mxu0
  %5689 = vmatprep.mubr.f32.mxu0 0.0
  %5690 = vmatmul.mubr.f32.gmra.mrb[0].mxu0 %v5325
  %v5691 = vpop.f32.mrb[0].mxu0
  %v5692 = vadd.f32 0.0, %v5691
  %v5693 = vpop.f32.mrb[0].mxu0
  %5694 = vmatprep.mubr.f32.mxu0 0.0
  %5695 = vmatmul.mubr.f32.gmra.mrb[0].mxu0 %v5328
  %v5696 = vpop.f32.mrb[0].mxu0
  %v5697 = vadd.f32 0.0, %v5696
  %v5698 = vpop.f32.mrb[0].mxu0
  %5699 = vmatprep.mubr.f32.mxu0 0.0
  %5700 = vmatmul.mubr.f32.gmra.mrb[0].mxu0 %v5331
  %v5701 = vpop.f32.mrb[0].mxu0
  %v5702 = vadd.f32 0.0, %v5701
  %v5703 = vpop.f32.mrb[0].mxu0
  %5704 = vmatprep.mubr.f32.mxu0 0.0
  %5705 = vmatmul.mubr.f32.gmra.mrb[0].mxu0 %v5334
  %v5706 = vpop.f32.mrb[0].mxu0
  %v5707 = vadd.f32 0.0, %v5706
  %v5708 = vpop.f32.mrb[0].mxu0
  %5709 = vmatprep.mubr.f32.mxu0 0.0
  %5710 = vmatmul.mubr.f32.gmra.mrb[0].mxu0 %v5337
  %v5711 = vpop.f32.mrb[0].mxu0
  %v5712 = vadd.f32 0.0, %v5711
  %v5713 = vpop.f32.mrb[0].mxu0
  %5714 = vmatprep.mubr.f32.mxu0 0.0
  %5715 = vmatmul.mubr.f32.gmra.mrb[0].mxu0 %v5340
  %v5716 = vpop.f32.mrb[0].mxu0
  %v5717 = vadd.f32 0.0, %v5716
  %v5718 = vpop.f32.mrb[0].mxu0
  %5719 = vmatprep.mubr.f32.mxu0 0.0
  %5720 = vmatmul.mubr.f32.gmra.mrb[0].mxu0 %v5343
  %v5721 = vpop.f32.mrb[0].mxu0
  %v5722 = vadd.f32 0.0, %v5721
  %v5723 = vpop.f32.mrb[0].mxu0
  %5724 = vmatprep.mubr.f32.mxu0 0.0
  %5725 = vmatmul.mubr.f32.gmra.mrb[0].mxu0 %v5346
  %v5726 = vpop.f32.mrb[0].mxu0
  %v5727 = vadd.f32 0.0, %v5726
  %v5728 = vpop.f32.mrb[0].mxu0
  %5729 = vmatprep.mubr.f32.mxu0 0.0
  %5730 = vmatmul.mubr.f32.gmra.mrb[0].mxu0 %v5349
  %v5731 = vpop.f32.mrb[0].mxu0
  %v5732 = vadd.f32 0.0, %v5731
  %v5733 = vpop.f32.mrb[0].mxu0
  %5734 = vmatprep.mubr.f32.mxu0 0.0
  %5735 = vmatmul.mubr.f32.gmra.mrb[0].mxu0 %v5352
  %v5736 = vpop.f32.mrb[0].mxu0
  %v5737 = vadd.f32 0.0, %v5736
  %v5738 = vpop.f32.mrb[0].mxu0
  %5739 = vmatprep.mubr.f32.mxu0 0.0
  %5740 = vmatmul.mubr.f32.gmra.mrb[0].mxu0 %v5355
  %v5741 = vpop.f32.mrb[0].mxu0
  %v5742 = vadd.f32 0.0, %v5741
  %v5743 = vpop.f32.mrb[0].mxu0
  %5744 = vdwg.mxu0
  %v5745 = vadd.f32 %v5036, %v5427
  %v5746 = vadd.f32 %v5037, %v5432
  %v5747 = vadd.f32 %v5038, %v5437
  %v5748 = vadd.f32 %v5039, %v5442
  %v5749 = vadd.f32 %v5040, %v5447
  %v5750 = vadd.f32 %v5041, %v5452
  %v5751 = vadd.f32 %v5042, %v5457
  %v5752 = vadd.f32 %v5043, %v5462
  %v5753 = vadd.f32 %v5044, %v5467
  %v5754 = vadd.f32 %v5045, %v5472
  %v5755 = vadd.f32 %v5046, %v5477
  %v5756 = vadd.f32 %v5047, %v5482
  %v5757 = vadd.f32 %v5048, %v5487
  %v5758 = vadd.f32 %v5049, %v5492
  %v5759 = vadd.f32 %v5050, %v5497
  %v5760 = vadd.f32 %v5051, %v5502
  %v5761 = vadd.f32 %v5052, %v5507
  %v5762 = vadd.f32 %v5053, %v5512
  %v5763 = vadd.f32 %v5054, %v5517
  %v5764 = vadd.f32 %v5055, %v5522
  %v5765 = vadd.f32 %v5056, %v5527
  %v5766 = vadd.f32 %v5057, %v5532
  %v5767 = vadd.f32 %v5058, %v5537
  %v5768 = vadd.f32 %v5059, %v5542
  %v5769 = vadd.f32 %v5060, %v5547
  %v5770 = vadd.f32 %v5061, %v5552
  %v5771 = vadd.f32 %v5062, %v5557
  %v5772 = vadd.f32 %v5063, %v5562
  %v5773 = vadd.f32 %v5064, %v5567
  %v5774 = vadd.f32 %v5065, %v5572
  %v5775 = vadd.f32 %v5066, %v5577
  %v5776 = vadd.f32 %v5067, %v5582
  %v5777 = vadd.f32 %v5068, %v5587
  %v5778 = vadd.f32 %v5069, %v5592
  %v5779 = vadd.f32 %v5070, %v5597
  %v5780 = vadd.f32 %v5071, %v5602
  %v5781 = vadd.f32 %v5072, %v5607
  %v5782 = vadd.f32 %v5073, %v5612
  %v5783 = vadd.f32 %v5074, %v5617
  %v5784 = vadd.f32 %v5075, %v5622
  %v5785 = vadd.f32 %v5076, %v5627
  %v5786 = vadd.f32 %v5077, %v5632
  %v5787 = vadd.f32 %v5078, %v5637
  %v5788 = vadd.f32 %v5079, %v5642
  %v5789 = vadd.f32 %v5080, %v5647
  %v5790 = vadd.f32 %v5081, %v5652
  %v5791 = vadd.f32 %v5082, %v5657
  %v5792 = vadd.f32 %v5083, %v5662
  %v5793 = vadd.f32 %v5084, %v5667
  %v5794 = vadd.f32 %v5085, %v5672
  %v5795 = vadd.f32 %v5086, %v5677
  %v5796 = vadd.f32 %v5087, %v5682
  %v5797 = vadd.f32 %v5088, %v5687
  %v5798 = vadd.f32 %v5089, %v5692
  %v5799 = vadd.f32 %v5090, %v5697
  %v5800 = vadd.f32 %v5091, %v5702
  %v5801 = vadd.f32 %v5092, %v5707
  %v5802 = vadd.f32 %v5093, %v5712
  %v5803 = vadd.f32 %v5094, %v5717
  %v5804 = vadd.f32 %v5095, %v5722
  %v5805 = vadd.f32 %v5096, %v5727
  %v5806 = vadd.f32 %v5097, %v5732
  %v5807 = vadd.f32 %v5098, %v5737
  %v5808 = vadd.f32 %v5099, %v5742
  %v5809 = vld [vmem:[%s4389 + $0x2] sm:$0xff]
  %v5810 = vld [vmem:[%s4389 + $0xa] sm:$0xff]
  %v5811 = vld [vmem:[%s4389 + $0x1a] sm:$0xff]
  %v5812 = vld [vmem:[%s4389 + $0x22] sm:$0xff]
  %v5813 = vld [vmem:[%s4389 + $0x32] sm:$0xff]
  %v5814 = vld [vmem:[%s4389 + $0x3a] sm:$0xff]
  %v5815 = vld [vmem:[%s4389 + $0x4a] sm:$0xff]
  %v5816 = vld [vmem:[%s4389 + $0x52] sm:$0xff]
  %v5817 = vld [vmem:[%s4389 + $0x62] sm:$0xff]
  %v5818 = vld [vmem:[%s4389 + $0x6a] sm:$0xff]
  %v5819 = vld [vmem:[%s4389 + $0x7a] sm:$0xff]
  %v5820 = vld [vmem:[%s4389 + $0x82] sm:$0xff]
  %v5821 = vld [vmem:[%s4389 + $0x92] sm:$0xff]
  %v5822 = vld [vmem:[%s4389 + $0x9a] sm:$0xff]
  %v5823 = vld [vmem:[%s4389 + $0xaa] sm:$0xff]
  %v5824 = vld [vmem:[%s4389 + $0xb2] sm:$0xff]
  %v5825 = vld [vmem:[%s4389 + $0xc2] sm:$0xff]
  %v5826 = vld [vmem:[%s4389 + $0xca] sm:$0xff]
  %v5827 = vld [vmem:[%s4389 + $0xda] sm:$0xff]
  %v5828 = vld [vmem:[%s4389 + $0xe2] sm:$0xff]
  %v5829 = vld [vmem:[%s4389 + $0xf2] sm:$0xff]
  %v5830 = vld [vmem:[%s4389 + $0xfa] sm:$0xff]
  %v5831 = vld [vmem:[%s4389 + $0x10a] sm:$0xff]
  %v5832 = vld [vmem:[%s4389 + $0x112] sm:$0xff]
  %v5833 = vld [vmem:[%s4389 + $0x122] sm:$0xff]
  %v5834 = vld [vmem:[%s4389 + $0x12a] sm:$0xff]
  %v5835 = vld [vmem:[%s4389 + $0x13a] sm:$0xff]
  %v5836 = vld [vmem:[%s4389 + $0x142] sm:$0xff]
  %v5837 = vld [vmem:[%s4389 + $0x152] sm:$0xff]
  %v5838 = vld [vmem:[%s4389 + $0x15a] sm:$0xff]
  %v5839 = vld [vmem:[%s4389 + $0x16a] sm:$0xff]
  %v5840 = vld [vmem:[%s4389 + $0x172] sm:$0xff]
  %v5841 = vld [vmem:[%s4422 + $0x2] sm:$0xff]
  %v5842 = vld [vmem:[%s4422 + $0xa] sm:$0xff]
  %v5843 = vld [vmem:[%s4422 + $0x1a] sm:$0xff]
  %v5844 = vld [vmem:[%s4422 + $0x22] sm:$0xff]
  %v5845 = vld [vmem:[%s4422 + $0x32] sm:$0xff]
  %v5846 = vld [vmem:[%s4422 + $0x3a] sm:$0xff]
  %v5847 = vld [vmem:[%s4422 + $0x4a] sm:$0xff]
  %v5848 = vld [vmem:[%s4422 + $0x52] sm:$0xff]
  %v5849 = vld [vmem:[%s4422 + $0x62] sm:$0xff]
  %v5850 = vld [vmem:[%s4422 + $0x6a] sm:$0xff]
  %v5851 = vld [vmem:[%s4422 + $0x7a] sm:$0xff]
  %v5852 = vld [vmem:[%s4422 + $0x82] sm:$0xff]
  %v5853 = vld [vmem:[%s4422 + $0x92] sm:$0xff]
  %v5854 = vld [vmem:[%s4422 + $0x9a] sm:$0xff]
  %v5855 = vld [vmem:[%s4422 + $0xaa] sm:$0xff]
  %v5856 = vld [vmem:[%s4422 + $0xb2] sm:$0xff]
  %v5857 = vld [vmem:[%s4422 + $0xc2] sm:$0xff]
  %v5858 = vld [vmem:[%s4422 + $0xca] sm:$0xff]
  %v5859 = vld [vmem:[%s4422 + $0xda] sm:$0xff]
  %v5860 = vld [vmem:[%s4422 + $0xe2] sm:$0xff]
  %v5861 = vld [vmem:[%s4422 + $0xf2] sm:$0xff]
  %v5862 = vld [vmem:[%s4422 + $0xfa] sm:$0xff]
  %v5863 = vld [vmem:[%s4422 + $0x10a] sm:$0xff]
  %v5864 = vld [vmem:[%s4422 + $0x112] sm:$0xff]
  %v5865 = vld [vmem:[%s4422 + $0x122] sm:$0xff]
  %v5866 = vld [vmem:[%s4422 + $0x12a] sm:$0xff]
  %v5867 = vld [vmem:[%s4422 + $0x13a] sm:$0xff]
  %v5868 = vld [vmem:[%s4422 + $0x142] sm:$0xff]
  %v5869 = vld [vmem:[%s4422 + $0x152] sm:$0xff]
  %v5870 = vld [vmem:[%s4422 + $0x15a] sm:$0xff]
  %v5871 = vld [vmem:[%s4422 + $0x16a] sm:$0xff]
  %v5872 = vld [vmem:[%s4422 + $0x172] sm:$0xff]
  %v5873 = vld [vmem:[%s1 + $0x18] sm:$0x7]
  %v5875 = vsel %vm20, %v5809, 0
  %v5878 = vsel %vm20, %v5810, 0
  %v5881 = vsel %vm20, %v5811, 0
  %v5884 = vsel %vm20, %v5812, 0
  %v5887 = vsel %vm20, %v5813, 0
  %v5890 = vsel %vm20, %v5814, 0
  %v5893 = vsel %vm20, %v5815, 0
  %v5896 = vsel %vm20, %v5816, 0
  %v5899 = vsel %vm20, %v5817, 0
  %v5902 = vsel %vm20, %v5818, 0
  %v5905 = vsel %vm20, %v5819, 0
  %v5908 = vsel %vm20, %v5820, 0
  %v5911 = vsel %vm20, %v5821, 0
  %v5914 = vsel %vm20, %v5822, 0
  %v5917 = vsel %vm20, %v5823, 0
  %v5920 = vsel %vm20, %v5824, 0
  %v5923 = vsel %vm20, %v5825, 0
  %v5926 = vsel %vm20, %v5826, 0
  %v5929 = vsel %vm20, %v5827, 0
  %v5932 = vsel %vm20, %v5828, 0
  %v5935 = vsel %vm20, %v5829, 0
  %v5938 = vsel %vm20, %v5830, 0
  %v5941 = vsel %vm20, %v5831, 0
  %v5944 = vsel %vm20, %v5832, 0
  %v5947 = vsel %vm20, %v5833, 0
  %v5950 = vsel %vm20, %v5834, 0
  %v5953 = vsel %vm20, %v5835, 0
  %v5956 = vsel %vm20, %v5836, 0
  %v5959 = vsel %vm20, %v5837, 0
  %v5962 = vsel %vm20, %v5838, 0
  %v5965 = vsel %vm20, %v5839, 0
  %v5968 = vsel %vm20, %v5840, 0
  %v5971 = vsel %vm20, %v5841, 0
  %v5974 = vsel %vm20, %v5842, 0
  %v5977 = vsel %vm20, %v5843, 0
  %v5980 = vsel %vm20, %v5844, 0
  %v5983 = vsel %vm20, %v5845, 0
  %v5986 = vsel %vm20, %v5846, 0
  %v5989 = vsel %vm20, %v5847, 0
  %v5992 = vsel %vm20, %v5848, 0
  %v5995 = vsel %vm20, %v5849, 0
  %v5998 = vsel %vm20, %v5850, 0
  %v6001 = vsel %vm20, %v5851, 0
  %v6004 = vsel %vm20, %v5852, 0
  %v6007 = vsel %vm20, %v5853, 0
  %v6010 = vsel %vm20, %v5854, 0
  %v6013 = vsel %vm20, %v5855, 0
  %v6016 = vsel %vm20, %v5856, 0
  %v6019 = vsel %vm20, %v5857, 0
  %v6022 = vsel %vm20, %v5858, 0
  %v6025 = vsel %vm20, %v5859, 0
  %v6028 = vsel %vm20, %v5860, 0
  %v6031 = vsel %vm20, %v5861, 0
  %v6034 = vsel %vm20, %v5862, 0
  %v6037 = vsel %vm20, %v5863, 0
  %v6040 = vsel %vm20, %v5864, 0
  %v6043 = vsel %vm20, %v5865, 0
  %v6046 = vsel %vm20, %v5866, 0
  %v6049 = vsel %vm20, %v5867, 0
  %v6052 = vsel %vm20, %v5868, 0
  %v6055 = vsel %vm20, %v5869, 0
  %v6058 = vsel %vm20, %v5870, 0
  %v6061 = vsel %vm20, %v5871, 0
  %v6064 = vsel %vm20, %v5872, 0
  %v6067 = vsel %vm584, %v5873, 0
  %6069 = vmatprep.subr.mxu0 0.0
  %6070 = vmatpush1.msra.mxu0 %v6067
  %6071 = vmatprep.subr.mxu0 0.0
  %6072 = vmatpush1.msra.mxu0 0.0
  %6073 = vmatprep.subr.mxu0 0.0
  %6074 = vmatpush1.msra.mxu0 0.0
  %6075 = vmatprep.subr.mxu0 0.0
  %6076 = vmatpush1.msra.mxu0 0.0
  %6077 = vmatprep.subr.mxu0 0.0
  %6078 = vmatpush1.msra.mxu0 0.0
  %6079 = vmatprep.subr.mxu0 0.0
  %6080 = vmatpush1.msra.mxu0 0.0
  %6081 = vmatprep.subr.mxu0 0.0
  %6082 = vmatpush1.msra.mxu0 0.0
  %6083 = vmatprep.subr.mxu0 0.0
  %6084 = vmatpush1.msra.mxu0 0.0
  %6085 = vmatprep.subr.mxu0 0.0
  %6086 = vmatpush1.msra.mxu0 0.0
  %6087 = vmatprep.subr.mxu0 0.0
  %6088 = vmatpush1.msra.mxu0 0.0
  %6089 = vmatprep.subr.mxu0 0.0
  %6090 = vmatpush1.msra.mxu0 0.0
  %6091 = vmatprep.subr.mxu0 0.0
  %6092 = vmatpush1.msra.mxu0 0.0
  %6093 = vmatprep.subr.mxu0 0.0
  %6094 = vmatpush1.msra.mxu0 0.0
  %6095 = vmatprep.subr.mxu0 0.0
  %6096 = vmatpush1.msra.mxu0 0.0
  %6097 = vmatprep.subr.mxu0 0.0
  %6098 = vmatpush1.msra.mxu0 0.0
  %6099 = vmatprep.subr.mxu0 0.0
  %6100 = vmatpush1.msra.mxu0 0.0
  %6101 = vmatprep.subr.mxu0 0.0
  %6102 = vmatpush1.msra.mxu0 0.0
  %6103 = vmatprep.subr.mxu0 0.0
  %6104 = vmatpush1.msra.mxu0 0.0
  %6105 = vmatprep.subr.mxu0 0.0
  %6106 = vmatpush1.msra.mxu0 0.0
  %6107 = vmatprep.subr.mxu0 0.0
  %6108 = vmatpush1.msra.mxu0 0.0
  %6109 = vmatprep.subr.mxu0 0.0
  %6110 = vmatpush1.msra.mxu0 0.0
  %6111 = vmatprep.subr.mxu0 0.0
  %6112 = vmatpush1.msra.mxu0 0.0
  %6113 = vmatprep.subr.mxu0 0.0
  %6114 = vmatpush1.msra.mxu0 0.0
  %6115 = vmatprep.subr.mxu0 0.0
  %6116 = vmatpush1.msra.mxu0 0.0
  %6117 = vmatprep.subr.mxu0 0.0
  %6118 = vmatpush1.msra.mxu0 0.0
  %6119 = vmatprep.subr.mxu0 0.0
  %6120 = vmatpush1.msra.mxu0 0.0
  %6121 = vmatprep.subr.mxu0 0.0
  %6122 = vmatpush1.msra.mxu0 0.0
  %6123 = vmatprep.subr.mxu0 0.0
  %6124 = vmatpush1.msra.mxu0 0.0
  %6125 = vmatprep.subr.mxu0 0.0
  %6126 = vmatpush1.msra.mxu0 0.0
  %6127 = vmatprep.subr.mxu0 0.0
  %6128 = vmatpush1.msra.mxu0 0.0
  %6129 = vmatprep.subr.mxu0 0.0
  %6130 = vmatpush1.msra.mxu0 0.0
  %6131 = vmatprep.subr.mxu0 0.0
  %6132 = vmatpush1.msra.mxu0 0.0
  %6133 = vmatprep.mubr.f32.mxu0 0.0
  %6134 = vmatmul.mubr.f32.gmra.mrb[0].mxu0 %v5875
  %v6135 = vpop.f32.mrb[0].mxu0
  %v6136 = vadd.f32 0.0, %v6135
  %v6137 = vpop.f32.mrb[0].mxu0
  %6138 = vmatprep.mubr.f32.mxu0 0.0
  %6139 = vmatmul.mubr.f32.gmra.mrb[0].mxu0 %v5878
  %v6140 = vpop.f32.mrb[0].mxu0
  %v6141 = vadd.f32 0.0, %v6140
  %v6142 = vpop.f32.mrb[0].mxu0
  %6143 = vmatprep.mubr.f32.mxu0 0.0
  %6144 = vmatmul.mubr.f32.gmra.mrb[0].mxu0 %v5881
  %v6145 = vpop.f32.mrb[0].mxu0
  %v6146 = vadd.f32 0.0, %v6145
  %v6147 = vpop.f32.mrb[0].mxu0
  %6148 = vmatprep.mubr.f32.mxu0 0.0
  %6149 = vmatmul.mubr.f32.gmra.mrb[0].mxu0 %v5884
  %v6150 = vpop.f32.mrb[0].mxu0
  %v6151 = vadd.f32 0.0, %v6150
  %v6152 = vpop.f32.mrb[0].mxu0
  %6153 = vmatprep.mubr.f32.mxu0 0.0
  %6154 = vmatmul.mubr.f32.gmra.mrb[0].mxu0 %v5887
  %v6155 = vpop.f32.mrb[0].mxu0
  %v6156 = vadd.f32 0.0, %v6155
  %v6157 = vpop.f32.mrb[0].mxu0
  %6158 = vmatprep.mubr.f32.mxu0 0.0
  %6159 = vmatmul.mubr.f32.gmra.mrb[0].mxu0 %v5890
  %v6160 = vpop.f32.mrb[0].mxu0
  %v6161 = vadd.f32 0.0, %v6160
  %v6162 = vpop.f32.mrb[0].mxu0
  %6163 = vmatprep.mubr.f32.mxu0 0.0
  %6164 = vmatmul.mubr.f32.gmra.mrb[0].mxu0 %v5893
  %v6165 = vpop.f32.mrb[0].mxu0
  %v6166 = vadd.f32 0.0, %v6165
  %v6167 = vpop.f32.mrb[0].mxu0
  %6168 = vmatprep.mubr.f32.mxu0 0.0
  %6169 = vmatmul.mubr.f32.gmra.mrb[0].mxu0 %v5896
  %v6170 = vpop.f32.mrb[0].mxu0
  %v6171 = vadd.f32 0.0, %v6170
  %v6172 = vpop.f32.mrb[0].mxu0
  %6173 = vmatprep.mubr.f32.mxu0 0.0
  %6174 = vmatmul.mubr.f32.gmra.mrb[0].mxu0 %v5899
  %v6175 = vpop.f32.mrb[0].mxu0
  %v6176 = vadd.f32 0.0, %v6175
  %v6177 = vpop.f32.mrb[0].mxu0
  %6178 = vmatprep.mubr.f32.mxu0 0.0
  %6179 = vmatmul.mubr.f32.gmra.mrb[0].mxu0 %v5902
  %v6180 = vpop.f32.mrb[0].mxu0
  %v6181 = vadd.f32 0.0, %v6180
  %v6182 = vpop.f32.mrb[0].mxu0
  %6183 = vmatprep.mubr.f32.mxu0 0.0
  %6184 = vmatmul.mubr.f32.gmra.mrb[0].mxu0 %v5905
  %v6185 = vpop.f32.mrb[0].mxu0
  %v6186 = vadd.f32 0.0, %v6185
  %v6187 = vpop.f32.mrb[0].mxu0
  %6188 = vmatprep.mubr.f32.mxu0 0.0
  %6189 = vmatmul.mubr.f32.gmra.mrb[0].mxu0 %v5908
  %v6190 = vpop.f32.mrb[0].mxu0
  %v6191 = vadd.f32 0.0, %v6190
  %v6192 = vpop.f32.mrb[0].mxu0
  %6193 = vmatprep.mubr.f32.mxu0 0.0
  %6194 = vmatmul.mubr.f32.gmra.mrb[0].mxu0 %v5911
  %v6195 = vpop.f32.mrb[0].mxu0
  %v6196 = vadd.f32 0.0, %v6195
  %v6197 = vpop.f32.mrb[0].mxu0
  %6198 = vmatprep.mubr.f32.mxu0 0.0
  %6199 = vmatmul.mubr.f32.gmra.mrb[0].mxu0 %v5914
  %v6200 = vpop.f32.mrb[0].mxu0
  %v6201 = vadd.f32 0.0, %v6200
  %v6202 = vpop.f32.mrb[0].mxu0
  %6203 = vmatprep.mubr.f32.mxu0 0.0
  %6204 = vmatmul.mubr.f32.gmra.mrb[0].mxu0 %v5917
  %v6205 = vpop.f32.mrb[0].mxu0
  %v6206 = vadd.f32 0.0, %v6205
  %v6207 = vpop.f32.mrb[0].mxu0
  %6208 = vmatprep.mubr.f32.mxu0 0.0
  %6209 = vmatmul.mubr.f32.gmra.mrb[0].mxu0 %v5920
  %v6210 = vpop.f32.mrb[0].mxu0
  %v6211 = vadd.f32 0.0, %v6210
  %v6212 = vpop.f32.mrb[0].mxu0
  %6213 = vmatprep.mubr.f32.mxu0 0.0
  %6214 = vmatmul.mubr.f32.gmra.mrb[0].mxu0 %v5923
  %v6215 = vpop.f32.mrb[0].mxu0
  %v6216 = vadd.f32 0.0, %v6215
  %v6217 = vpop.f32.mrb[0].mxu0
  %6218 = vmatprep.mubr.f32.mxu0 0.0
  %6219 = vmatmul.mubr.f32.gmra.mrb[0].mxu0 %v5926
  %v6220 = vpop.f32.mrb[0].mxu0
  %v6221 = vadd.f32 0.0, %v6220
  %v6222 = vpop.f32.mrb[0].mxu0
  %6223 = vmatprep.mubr.f32.mxu0 0.0
  %6224 = vmatmul.mubr.f32.gmra.mrb[0].mxu0 %v5929
  %v6225 = vpop.f32.mrb[0].mxu0
  %v6226 = vadd.f32 0.0, %v6225
  %v6227 = vpop.f32.mrb[0].mxu0
  %6228 = vmatprep.mubr.f32.mxu0 0.0
  %6229 = vmatmul.mubr.f32.gmra.mrb[0].mxu0 %v5932
  %v6230 = vpop.f32.mrb[0].mxu0
  %v6231 = vadd.f32 0.0, %v6230
  %v6232 = vpop.f32.mrb[0].mxu0
  %6233 = vmatprep.mubr.f32.mxu0 0.0
  %6234 = vmatmul.mubr.f32.gmra.mrb[0].mxu0 %v5935
  %v6235 = vpop.f32.mrb[0].mxu0
  %v6236 = vadd.f32 0.0, %v6235
  %v6237 = vpop.f32.mrb[0].mxu0
  %6238 = vmatprep.mubr.f32.mxu0 0.0
  %6239 = vmatmul.mubr.f32.gmra.mrb[0].mxu0 %v5938
  %v6240 = vpop.f32.mrb[0].mxu0
  %v6241 = vadd.f32 0.0, %v6240
  %v6242 = vpop.f32.mrb[0].mxu0
  %6243 = vmatprep.mubr.f32.mxu0 0.0
  %6244 = vmatmul.mubr.f32.gmra.mrb[0].mxu0 %v5941
  %v6245 = vpop.f32.mrb[0].mxu0
  %v6246 = vadd.f32 0.0, %v6245
  %v6247 = vpop.f32.mrb[0].mxu0
  %6248 = vmatprep.mubr.f32.mxu0 0.0
  %6249 = vmatmul.mubr.f32.gmra.mrb[0].mxu0 %v5944
  %v6250 = vpop.f32.mrb[0].mxu0
  %v6251 = vadd.f32 0.0, %v6250
  %v6252 = vpop.f32.mrb[0].mxu0
  %6253 = vmatprep.mubr.f32.mxu0 0.0
  %6254 = vmatmul.mubr.f32.gmra.mrb[0].mxu0 %v5947
  %v6255 = vpop.f32.mrb[0].mxu0
  %v6256 = vadd.f32 0.0, %v6255
  %v6257 = vpop.f32.mrb[0].mxu0
  %6258 = vmatprep.mubr.f32.mxu0 0.0
  %6259 = vmatmul.mubr.f32.gmra.mrb[0].mxu0 %v5950
  %v6260 = vpop.f32.mrb[0].mxu0
  %v6261 = vadd.f32 0.0, %v6260
  %v6262 = vpop.f32.mrb[0].mxu0
  %6263 = vmatprep.mubr.f32.mxu0 0.0
  %6264 = vmatmul.mubr.f32.gmra.mrb[0].mxu0 %v5953
  %v6265 = vpop.f32.mrb[0].mxu0
  %v6266 = vadd.f32 0.0, %v6265
  %v6267 = vpop.f32.mrb[0].mxu0
  %6268 = vmatprep.mubr.f32.mxu0 0.0
  %6269 = vmatmul.mubr.f32.gmra.mrb[0].mxu0 %v5956
  %v6270 = vpop.f32.mrb[0].mxu0
  %v6271 = vadd.f32 0.0, %v6270
  %v6272 = vpop.f32.mrb[0].mxu0
  %6273 = vmatprep.mubr.f32.mxu0 0.0
  %6274 = vmatmul.mubr.f32.gmra.mrb[0].mxu0 %v5959
  %v6275 = vpop.f32.mrb[0].mxu0
  %v6276 = vadd.f32 0.0, %v6275
  %v6277 = vpop.f32.mrb[0].mxu0
  %6278 = vmatprep.mubr.f32.mxu0 0.0
  %6279 = vmatmul.mubr.f32.gmra.mrb[0].mxu0 %v5962
  %v6280 = vpop.f32.mrb[0].mxu0
  %v6281 = vadd.f32 0.0, %v6280
  %v6282 = vpop.f32.mrb[0].mxu0
  %6283 = vmatprep.mubr.f32.mxu0 0.0
  %6284 = vmatmul.mubr.f32.gmra.mrb[0].mxu0 %v5965
  %v6285 = vpop.f32.mrb[0].mxu0
  %v6286 = vadd.f32 0.0, %v6285
  %v6287 = vpop.f32.mrb[0].mxu0
  %6288 = vmatprep.mubr.f32.mxu0 0.0
  %6289 = vmatmul.mubr.f32.gmra.mrb[0].mxu0 %v5968
  %v6290 = vpop.f32.mrb[0].mxu0
  %v6291 = vadd.f32 0.0, %v6290
  %v6292 = vpop.f32.mrb[0].mxu0
  %6293 = vmatprep.mubr.f32.mxu0 0.0
  %6294 = vmatmul.mubr.f32.gmra.mrb[0].mxu0 %v5971
  %v6295 = vpop.f32.mrb[0].mxu0
  %v6296 = vadd.f32 0.0, %v6295
  %v6297 = vpop.f32.mrb[0].mxu0
  %6298 = vmatprep.mubr.f32.mxu0 0.0
  %6299 = vmatmul.mubr.f32.gmra.mrb[0].mxu0 %v5974
  %v6300 = vpop.f32.mrb[0].mxu0
  %v6301 = vadd.f32 0.0, %v6300
  %v6302 = vpop.f32.mrb[0].mxu0
  %6303 = vmatprep.mubr.f32.mxu0 0.0
  %6304 = vmatmul.mubr.f32.gmra.mrb[0].mxu0 %v5977
  %v6305 = vpop.f32.mrb[0].mxu0
  %v6306 = vadd.f32 0.0, %v6305
  %v6307 = vpop.f32.mrb[0].mxu0
  %6308 = vmatprep.mubr.f32.mxu0 0.0
  %6309 = vmatmul.mubr.f32.gmra.mrb[0].mxu0 %v5980
  %v6310 = vpop.f32.mrb[0].mxu0
  %v6311 = vadd.f32 0.0, %v6310
  %v6312 = vpop.f32.mrb[0].mxu0
  %6313 = vmatprep.mubr.f32.mxu0 0.0
  %6314 = vmatmul.mubr.f32.gmra.mrb[0].mxu0 %v5983
  %v6315 = vpop.f32.mrb[0].mxu0
  %v6316 = vadd.f32 0.0, %v6315
  %v6317 = vpop.f32.mrb[0].mxu0
  %6318 = vmatprep.mubr.f32.mxu0 0.0
  %6319 = vmatmul.mubr.f32.gmra.mrb[0].mxu0 %v5986
  %v6320 = vpop.f32.mrb[0].mxu0
  %v6321 = vadd.f32 0.0, %v6320
  %v6322 = vpop.f32.mrb[0].mxu0
  %6323 = vmatprep.mubr.f32.mxu0 0.0
  %6324 = vmatmul.mubr.f32.gmra.mrb[0].mxu0 %v5989
  %v6325 = vpop.f32.mrb[0].mxu0
  %v6326 = vadd.f32 0.0, %v6325
  %v6327 = vpop.f32.mrb[0].mxu0
  %6328 = vmatprep.mubr.f32.mxu0 0.0
  %6329 = vmatmul.mubr.f32.gmra.mrb[0].mxu0 %v5992
  %v6330 = vpop.f32.mrb[0].mxu0
  %v6331 = vadd.f32 0.0, %v6330
  %v6332 = vpop.f32.mrb[0].mxu0
  %6333 = vmatprep.mubr.f32.mxu0 0.0
  %6334 = vmatmul.mubr.f32.gmra.mrb[0].mxu0 %v5995
  %v6335 = vpop.f32.mrb[0].mxu0
  %v6336 = vadd.f32 0.0, %v6335
  %v6337 = vpop.f32.mrb[0].mxu0
  %6338 = vmatprep.mubr.f32.mxu0 0.0
  %6339 = vmatmul.mubr.f32.gmra.mrb[0].mxu0 %v5998
  %v6340 = vpop.f32.mrb[0].mxu0
  %v6341 = vadd.f32 0.0, %v6340
  %v6342 = vpop.f32.mrb[0].mxu0
  %6343 = vmatprep.mubr.f32.mxu0 0.0
  %6344 = vmatmul.mubr.f32.gmra.mrb[0].mxu0 %v6001
  %v6345 = vpop.f32.mrb[0].mxu0
  %v6346 = vadd.f32 0.0, %v6345
  %v6347 = vpop.f32.mrb[0].mxu0
  %6348 = vmatprep.mubr.f32.mxu0 0.0
  %6349 = vmatmul.mubr.f32.gmra.mrb[0].mxu0 %v6004
  %v6350 = vpop.f32.mrb[0].mxu0
  %v6351 = vadd.f32 0.0, %v6350
  %v6352 = vpop.f32.mrb[0].mxu0
  %6353 = vmatprep.mubr.f32.mxu0 0.0
  %6354 = vmatmul.mubr.f32.gmra.mrb[0].mxu0 %v6007
  %v6355 = vpop.f32.mrb[0].mxu0
  %v6356 = vadd.f32 0.0, %v6355
  %v6357 = vpop.f32.mrb[0].mxu0
  %6358 = vmatprep.mubr.f32.mxu0 0.0
  %6359 = vmatmul.mubr.f32.gmra.mrb[0].mxu0 %v6010
  %v6360 = vpop.f32.mrb[0].mxu0
  %v6361 = vadd.f32 0.0, %v6360
  %v6362 = vpop.f32.mrb[0].mxu0
  %6363 = vmatprep.mubr.f32.mxu0 0.0
  %6364 = vmatmul.mubr.f32.gmra.mrb[0].mxu0 %v6013
  %v6365 = vpop.f32.mrb[0].mxu0
  %v6366 = vadd.f32 0.0, %v6365
  %v6367 = vpop.f32.mrb[0].mxu0
  %6368 = vmatprep.mubr.f32.mxu0 0.0
  %6369 = vmatmul.mubr.f32.gmra.mrb[0].mxu0 %v6016
  %v6370 = vpop.f32.mrb[0].mxu0
  %v6371 = vadd.f32 0.0, %v6370
  %v6372 = vpop.f32.mrb[0].mxu0
  %6373 = vmatprep.mubr.f32.mxu0 0.0
  %6374 = vmatmul.mubr.f32.gmra.mrb[0].mxu0 %v6019
  %v6375 = vpop.f32.mrb[0].mxu0
  %v6376 = vadd.f32 0.0, %v6375
  %v6377 = vpop.f32.mrb[0].mxu0
  %6378 = vmatprep.mubr.f32.mxu0 0.0
  %6379 = vmatmul.mubr.f32.gmra.mrb[0].mxu0 %v6022
  %v6380 = vpop.f32.mrb[0].mxu0
  %v6381 = vadd.f32 0.0, %v6380
  %v6382 = vpop.f32.mrb[0].mxu0
  %6383 = vmatprep.mubr.f32.mxu0 0.0
  %6384 = vmatmul.mubr.f32.gmra.mrb[0].mxu0 %v6025
  %v6385 = vpop.f32.mrb[0].mxu0
  %v6386 = vadd.f32 0.0, %v6385
  %v6387 = vpop.f32.mrb[0].mxu0
  %6388 = vmatprep.mubr.f32.mxu0 0.0
  %6389 = vmatmul.mubr.f32.gmra.mrb[0].mxu0 %v6028
  %v6390 = vpop.f32.mrb[0].mxu0
  %v6391 = vadd.f32 0.0, %v6390
  %v6392 = vpop.f32.mrb[0].mxu0
  %6393 = vmatprep.mubr.f32.mxu0 0.0
  %6394 = vmatmul.mubr.f32.gmra.mrb[0].mxu0 %v6031
  %v6395 = vpop.f32.mrb[0].mxu0
  %v6396 = vadd.f32 0.0, %v6395
  %v6397 = vpop.f32.mrb[0].mxu0
  %6398 = vmatprep.mubr.f32.mxu0 0.0
  %6399 = vmatmul.mubr.f32.gmra.mrb[0].mxu0 %v6034
  %v6400 = vpop.f32.mrb[0].mxu0
  %v6401 = vadd.f32 0.0, %v6400
  %v6402 = vpop.f32.mrb[0].mxu0
  %6403 = vmatprep.mubr.f32.mxu0 0.0
  %6404 = vmatmul.mubr.f32.gmra.mrb[0].mxu0 %v6037
  %v6405 = vpop.f32.mrb[0].mxu0
  %v6406 = vadd.f32 0.0, %v6405
  %v6407 = vpop.f32.mrb[0].mxu0
  %6408 = vmatprep.mubr.f32.mxu0 0.0
  %6409 = vmatmul.mubr.f32.gmra.mrb[0].mxu0 %v6040
  %v6410 = vpop.f32.mrb[0].mxu0
  %v6411 = vadd.f32 0.0, %v6410
  %v6412 = vpop.f32.mrb[0].mxu0
  %6413 = vmatprep.mubr.f32.mxu0 0.0
  %6414 = vmatmul.mubr.f32.gmra.mrb[0].mxu0 %v6043
  %v6415 = vpop.f32.mrb[0].mxu0
  %v6416 = vadd.f32 0.0, %v6415
  %v6417 = vpop.f32.mrb[0].mxu0
  %6418 = vmatprep.mubr.f32.mxu0 0.0
  %6419 = vmatmul.mubr.f32.gmra.mrb[0].mxu0 %v6046
  %v6420 = vpop.f32.mrb[0].mxu0
  %v6421 = vadd.f32 0.0, %v6420
  %v6422 = vpop.f32.mrb[0].mxu0
  %6423 = vmatprep.mubr.f32.mxu0 0.0
  %6424 = vmatmul.mubr.f32.gmra.mrb[0].mxu0 %v6049
  %v6425 = vpop.f32.mrb[0].mxu0
  %v6426 = vadd.f32 0.0, %v6425
  %v6427 = vpop.f32.mrb[0].mxu0
  %6428 = vmatprep.mubr.f32.mxu0 0.0
  %6429 = vmatmul.mubr.f32.gmra.mrb[0].mxu0 %v6052
  %v6430 = vpop.f32.mrb[0].mxu0
  %v6431 = vadd.f32 0.0, %v6430
  %v6432 = vpop.f32.mrb[0].mxu0
  %6433 = vmatprep.mubr.f32.mxu0 0.0
  %6434 = vmatmul.mubr.f32.gmra.mrb[0].mxu0 %v6055
  %v6435 = vpop.f32.mrb[0].mxu0
  %v6436 = vadd.f32 0.0, %v6435
  %v6437 = vpop.f32.mrb[0].mxu0
  %6438 = vmatprep.mubr.f32.mxu0 0.0
  %6439 = vmatmul.mubr.f32.gmra.mrb[0].mxu0 %v6058
  %v6440 = vpop.f32.mrb[0].mxu0
  %v6441 = vadd.f32 0.0, %v6440
  %v6442 = vpop.f32.mrb[0].mxu0
  %6443 = vmatprep.mubr.f32.mxu0 0.0
  %6444 = vmatmul.mubr.f32.gmra.mrb[0].mxu0 %v6061
  %v6445 = vpop.f32.mrb[0].mxu0
  %v6446 = vadd.f32 0.0, %v6445
  %v6447 = vpop.f32.mrb[0].mxu0
  %6448 = vmatprep.mubr.f32.mxu0 0.0
  %6449 = vmatmul.mubr.f32.gmra.mrb[0].mxu0 %v6064
  %v6450 = vpop.f32.mrb[0].mxu0
  %v6451 = vadd.f32 0.0, %v6450
  %v6452 = vpop.f32.mrb[0].mxu0
  %6453 = vdwg.mxu0
  %v6454 = vadd.f32 %v5745, %v6136
  %v6455 = vadd.f32 %v5746, %v6141
  %v6456 = vadd.f32 %v5747, %v6146
  %v6457 = vadd.f32 %v5748, %v6151
  %v6458 = vadd.f32 %v5749, %v6156
  %v6459 = vadd.f32 %v5750, %v6161
  %v6460 = vadd.f32 %v5751, %v6166
  %v6461 = vadd.f32 %v5752, %v6171
  %v6462 = vadd.f32 %v5753, %v6176
  %v6463 = vadd.f32 %v5754, %v6181
  %v6464 = vadd.f32 %v5755, %v6186
  %v6465 = vadd.f32 %v5756, %v6191
  %v6466 = vadd.f32 %v5757, %v6196
  %v6467 = vadd.f32 %v5758, %v6201
  %v6468 = vadd.f32 %v5759, %v6206
  %v6469 = vadd.f32 %v5760, %v6211
  %v6470 = vadd.f32 %v5761, %v6216
  %v6471 = vadd.f32 %v5762, %v6221
  %v6472 = vadd.f32 %v5763, %v6226
  %v6473 = vadd.f32 %v5764, %v6231
  %v6474 = vadd.f32 %v5765, %v6236
  %v6475 = vadd.f32 %v5766, %v6241
  %v6476 = vadd.f32 %v5767, %v6246
  %v6477 = vadd.f32 %v5768, %v6251
  %v6478 = vadd.f32 %v5769, %v6256
  %v6479 = vadd.f32 %v5770, %v6261
  %v6480 = vadd.f32 %v5771, %v6266
  %v6481 = vadd.f32 %v5772, %v6271
  %v6482 = vadd.f32 %v5773, %v6276
  %v6483 = vadd.f32 %v5774, %v6281
  %v6484 = vadd.f32 %v5775, %v6286
  %v6485 = vadd.f32 %v5776, %v6291
  %v6486 = vadd.f32 %v5777, %v6296
  %v6487 = vadd.f32 %v5778, %v6301
  %v6488 = vadd.f32 %v5779, %v6306
  %v6489 = vadd.f32 %v5780, %v6311
  %v6490 = vadd.f32 %v5781, %v6316
  %v6491 = vadd.f32 %v5782, %v6321
  %v6492 = vadd.f32 %v5783, %v6326
  %v6493 = vadd.f32 %v5784, %v6331
  %v6494 = vadd.f32 %v5785, %v6336
  %v6495 = vadd.f32 %v5786, %v6341
  %v6496 = vadd.f32 %v5787, %v6346
  %v6497 = vadd.f32 %v5788, %v6351
  %v6498 = vadd.f32 %v5789, %v6356
  %v6499 = vadd.f32 %v5790, %v6361
  %v6500 = vadd.f32 %v5791, %v6366
  %v6501 = vadd.f32 %v5792, %v6371
  %v6502 = vadd.f32 %v5793, %v6376
  %v6503 = vadd.f32 %v5794, %v6381
  %v6504 = vadd.f32 %v5795, %v6386
  %v6505 = vadd.f32 %v5796, %v6391
  %v6506 = vadd.f32 %v5797, %v6396
  %v6507 = vadd.f32 %v5798, %v6401
  %v6508 = vadd.f32 %v5799, %v6406
  %v6509 = vadd.f32 %v5800, %v6411
  %v6510 = vadd.f32 %v5801, %v6416
  %v6511 = vadd.f32 %v5802, %v6421
  %v6512 = vadd.f32 %v5803, %v6426
  %v6513 = vadd.f32 %v5804, %v6431
  %v6514 = vadd.f32 %v5805, %v6436
  %v6515 = vadd.f32 %v5806, %v6441
  %v6516 = vadd.f32 %v5807, %v6446
  %v6517 = vadd.f32 %v5808, %v6451
  %v6518 = vld [vmem:[%s2] sm:$0x1]
  %v6520 = vlaneseq
  %v6521 = vshrl.u32 %v6520, 7
  %v6522 = vsub.s32 0, %v6521
  %v6523 = vrot.slane %v6518, %v6522
  %v6525 = vadd.f32 %v6454, %v6523
  %v6526 = vadd.f32 %v6455, %v6523
  %v6527 = vadd.f32 %v6456, %v6523
  %v6528 = vadd.f32 %v6457, %v6523
  %v6529 = vadd.f32 %v6458, %v6523
  %v6530 = vadd.f32 %v6459, %v6523
  %v6531 = vadd.f32 %v6460, %v6523
  %v6532 = vadd.f32 %v6461, %v6523
  %v6533 = vadd.f32 %v6462, %v6523
  %v6534 = vadd.f32 %v6463, %v6523
  %v6535 = vadd.f32 %v6464, %v6523
  %v6536 = vadd.f32 %v6465, %v6523
  %v6537 = vadd.f32 %v6466, %v6523
  %v6538 = vadd.f32 %v6467, %v6523
  %v6539 = vadd.f32 %v6468, %v6523
  %v6540 = vadd.f32 %v6469, %v6523
  %v6541 = vadd.f32 %v6470, %v6523
  %v6542 = vadd.f32 %v6471, %v6523
  %v6543 = vadd.f32 %v6472, %v6523
  %v6544 = vadd.f32 %v6473, %v6523
  %v6545 = vadd.f32 %v6474, %v6523
  %v6546 = vadd.f32 %v6475, %v6523
  %v6547 = vadd.f32 %v6476, %v6523
  %v6548 = vadd.f32 %v6477, %v6523
  %v6549 = vadd.f32 %v6478, %v6523
  %v6550 = vadd.f32 %v6479, %v6523
  %v6551 = vadd.f32 %v6480, %v6523
  %v6552 = vadd.f32 %v6481, %v6523
  %v6553 = vadd.f32 %v6482, %v6523
  %v6554 = vadd.f32 %v6483, %v6523
  %v6555 = vadd.f32 %v6484, %v6523
  %v6556 = vadd.f32 %v6485, %v6523
  %v6557 = vadd.f32 %v6486, %v6523
  %v6558 = vadd.f32 %v6487, %v6523
  %v6559 = vadd.f32 %v6488, %v6523
  %v6560 = vadd.f32 %v6489, %v6523
  %v6561 = vadd.f32 %v6490, %v6523
  %v6562 = vadd.f32 %v6491, %v6523
  %v6563 = vadd.f32 %v6492, %v6523
  %v6564 = vadd.f32 %v6493, %v6523
  %v6565 = vadd.f32 %v6494, %v6523
  %v6566 = vadd.f32 %v6495, %v6523
  %v6567 = vadd.f32 %v6496, %v6523
  %v6568 = vadd.f32 %v6497, %v6523
  %v6569 = vadd.f32 %v6498, %v6523
  %v6570 = vadd.f32 %v6499, %v6523
  %v6571 = vadd.f32 %v6500, %v6523
  %v6572 = vadd.f32 %v6501, %v6523
  %v6573 = vadd.f32 %v6502, %v6523
  %v6574 = vadd.f32 %v6503, %v6523
  %v6575 = vadd.f32 %v6504, %v6523
  %v6576 = vadd.f32 %v6505, %v6523
  %v6577 = vadd.f32 %v6506, %v6523
  %v6578 = vadd.f32 %v6507, %v6523
  %v6579 = vadd.f32 %v6508, %v6523
  %v6580 = vadd.f32 %v6509, %v6523
  %v6581 = vadd.f32 %v6510, %v6523
  %v6582 = vadd.f32 %v6511, %v6523
  %v6583 = vadd.f32 %v6512, %v6523
  %v6584 = vadd.f32 %v6513, %v6523
  %v6585 = vadd.f32 %v6514, %v6523
  %v6586 = vadd.f32 %v6515, %v6523
  %v6587 = vadd.f32 %v6516, %v6523
  %v6588 = vadd.f32 %v6517, %v6523
  %v6589 = vmax.f32 %v6525, 0.0
  %v6590 = vmax.f32 %v6526, 0.0
  %v6591 = vmax.f32 %v6527, 0.0
  %v6592 = vmax.f32 %v6528, 0.0
  %v6593 = vmax.f32 %v6529, 0.0
  %v6594 = vmax.f32 %v6530, 0.0
  %v6595 = vmax.f32 %v6531, 0.0
  %v6596 = vmax.f32 %v6532, 0.0
  %v6597 = vmax.f32 %v6533, 0.0
  %v6598 = vmax.f32 %v6534, 0.0
  %v6599 = vmax.f32 %v6535, 0.0
  %v6600 = vmax.f32 %v6536, 0.0
  %v6601 = vmax.f32 %v6537, 0.0
  %v6602 = vmax.f32 %v6538, 0.0
  %v6603 = vmax.f32 %v6539, 0.0
  %v6604 = vmax.f32 %v6540, 0.0
  %v6605 = vmax.f32 %v6541, 0.0
  %v6606 = vmax.f32 %v6542, 0.0
  %v6607 = vmax.f32 %v6543, 0.0
  %v6608 = vmax.f32 %v6544, 0.0
  %v6609 = vmax.f32 %v6545, 0.0
  %v6610 = vmax.f32 %v6546, 0.0
  %v6611 = vmax.f32 %v6547, 0.0
  %v6612 = vmax.f32 %v6548, 0.0
  %v6613 = vmax.f32 %v6549, 0.0
  %v6614 = vmax.f32 %v6550, 0.0
  %v6615 = vmax.f32 %v6551, 0.0
  %v6616 = vmax.f32 %v6552, 0.0
  %v6617 = vmax.f32 %v6553, 0.0
  %v6618 = vmax.f32 %v6554, 0.0
  %v6619 = vmax.f32 %v6555, 0.0
  %v6620 = vmax.f32 %v6556, 0.0
  %v6621 = vmax.f32 %v6557, 0.0
  %v6622 = vmax.f32 %v6558, 0.0
  %v6623 = vmax.f32 %v6559, 0.0
  %v6624 = vmax.f32 %v6560, 0.0
  %v6625 = vmax.f32 %v6561, 0.0
  %v6626 = vmax.f32 %v6562, 0.0
  %v6627 = vmax.f32 %v6563, 0.0
  %v6628 = vmax.f32 %v6564, 0.0
  %v6629 = vmax.f32 %v6565, 0.0
  %v6630 = vmax.f32 %v6566, 0.0
  %v6631 = vmax.f32 %v6567, 0.0
  %v6632 = vmax.f32 %v6568, 0.0
  %v6633 = vmax.f32 %v6569, 0.0
  %v6634 = vmax.f32 %v6570, 0.0
  %v6635 = vmax.f32 %v6571, 0.0
  %v6636 = vmax.f32 %v6572, 0.0
  %v6637 = vmax.f32 %v6573, 0.0
  %v6638 = vmax.f32 %v6574, 0.0
  %v6639 = vmax.f32 %v6575, 0.0
  %v6640 = vmax.f32 %v6576, 0.0
  %v6641 = vmax.f32 %v6577, 0.0
  %v6642 = vmax.f32 %v6578, 0.0
  %v6643 = vmax.f32 %v6579, 0.0
  %v6644 = vmax.f32 %v6580, 0.0
  %v6645 = vmax.f32 %v6581, 0.0
  %v6646 = vmax.f32 %v6582, 0.0
  %v6647 = vmax.f32 %v6583, 0.0
  %v6648 = vmax.f32 %v6584, 0.0
  %v6649 = vmax.f32 %v6585, 0.0
  %v6650 = vmax.f32 %v6586, 0.0
  %v6651 = vmax.f32 %v6587, 0.0
  %v6652 = vmax.f32 %v6588, 0.0
  %vm6653 = vcmask 130048
  %6654 = vst.msk [vmem:[#allocation3] sm:$0xff] %vm6653, %v6589
  %6655 = vst.msk [vmem:[#allocation3 + $0x8] sm:$0xff] %vm6653, %v6590
  %6656 = vst.msk [vmem:[#allocation3 + $0x10] sm:$0xff] %vm6653, %v6591
  %6657 = vst.msk [vmem:[#allocation3 + $0x18] sm:$0xff] %vm6653, %v6592
  %6658 = vst.msk [vmem:[#allocation3 + $0x20] sm:$0xff] %vm6653, %v6593
  %6659 = vst.msk [vmem:[#allocation3 + $0x28] sm:$0xff] %vm6653, %v6594
  %6660 = vst.msk [vmem:[#allocation3 + $0x30] sm:$0xff] %vm6653, %v6595
  %6661 = vst.msk [vmem:[#allocation3 + $0x38] sm:$0xff] %vm6653, %v6596
  %6662 = vst.msk [vmem:[#allocation3 + $0x40] sm:$0xff] %vm6653, %v6597
  %6663 = vst.msk [vmem:[#allocation3 + $0x48] sm:$0xff] %vm6653, %v6598
  %6664 = vst.msk [vmem:[#allocation3 + $0x50] sm:$0xff] %vm6653, %v6599
  %6665 = vst.msk [vmem:[#allocation3 + $0x58] sm:$0xff] %vm6653, %v6600
  %6666 = vst.msk [vmem:[#allocation3 + $0x60] sm:$0xff] %vm6653, %v6601
  %6667 = vst.msk [vmem:[#allocation3 + $0x68] sm:$0xff] %vm6653, %v6602
  %6668 = vst.msk [vmem:[#allocation3 + $0x70] sm:$0xff] %vm6653, %v6603
  %6669 = vst.msk [vmem:[#allocation3 + $0x78] sm:$0xff] %vm6653, %v6604
  %6670 = vst.msk [vmem:[#allocation3 + $0x80] sm:$0xff] %vm6653, %v6605
  %6671 = vst.msk [vmem:[#allocation3 + $0x88] sm:$0xff] %vm6653, %v6606
  %6672 = vst.msk [vmem:[#allocation3 + $0x90] sm:$0xff] %vm6653, %v6607
  %6673 = vst.msk [vmem:[#allocation3 + $0x98] sm:$0xff] %vm6653, %v6608
  %6674 = vst.msk [vmem:[#allocation3 + $0xa0] sm:$0xff] %vm6653, %v6609
  %6675 = vst.msk [vmem:[#allocation3 + $0xa8] sm:$0xff] %vm6653, %v6610
  %6676 = vst.msk [vmem:[#allocation3 + $0xb0] sm:$0xff] %vm6653, %v6611
  %6677 = vst.msk [vmem:[#allocation3 + $0xb8] sm:$0xff] %vm6653, %v6612
  %6678 = vst.msk [vmem:[#allocation3 + $0xc0] sm:$0xff] %vm6653, %v6613
  %6679 = vst.msk [vmem:[#allocation3 + $0xc8] sm:$0xff] %vm6653, %v6614
  %6680 = vst.msk [vmem:[#allocation3 + $0xd0] sm:$0xff] %vm6653, %v6615
  %6681 = vst.msk [vmem:[#allocation3 + $0xd8] sm:$0xff] %vm6653, %v6616
  %6682 = vst.msk [vmem:[#allocation3 + $0xe0] sm:$0xff] %vm6653, %v6617
  %6683 = vst.msk [vmem:[#allocation3 + $0xe8] sm:$0xff] %vm6653, %v6618
  %6684 = vst.msk [vmem:[#allocation3 + $0xf0] sm:$0xff] %vm6653, %v6619
  %6685 = vst.msk [vmem:[#allocation3 + $0xf8] sm:$0xff] %vm6653, %v6620
  %6686 = vst.msk [vmem:[#allocation3 + $0x100] sm:$0xff] %vm6653, %v6621
  %6687 = vst.msk [vmem:[#allocation3 + $0x108] sm:$0xff] %vm6653, %v6622
  %6688 = vst.msk [vmem:[#allocation3 + $0x110] sm:$0xff] %vm6653, %v6623
  %6689 = vst.msk [vmem:[#allocation3 + $0x118] sm:$0xff] %vm6653, %v6624
  %6690 = vst.msk [vmem:[#allocation3 + $0x120] sm:$0xff] %vm6653, %v6625
  %6691 = vst.msk [vmem:[#allocation3 + $0x128] sm:$0xff] %vm6653, %v6626
  %6692 = vst.msk [vmem:[#allocation3 + $0x130] sm:$0xff] %vm6653, %v6627
  %6693 = vst.msk [vmem:[#allocation3 + $0x138] sm:$0xff] %vm6653, %v6628
  %6694 = vst.msk [vmem:[#allocation3 + $0x140] sm:$0xff] %vm6653, %v6629
  %6695 = vst.msk [vmem:[#allocation3 + $0x148] sm:$0xff] %vm6653, %v6630
  %6696 = vst.msk [vmem:[#allocation3 + $0x150] sm:$0xff] %vm6653, %v6631
  %6697 = vst.msk [vmem:[#allocation3 + $0x158] sm:$0xff] %vm6653, %v6632
  %6698 = vst.msk [vmem:[#allocation3 + $0x160] sm:$0xff] %vm6653, %v6633
  %6699 = vst.msk [vmem:[#allocation3 + $0x168] sm:$0xff] %vm6653, %v6634
  %6700 = vst.msk [vmem:[#allocation3 + $0x170] sm:$0xff] %vm6653, %v6635
  %6701 = vst.msk [vmem:[#allocation3 + $0x178] sm:$0xff] %vm6653, %v6636
  %6702 = vst.msk [vmem:[#allocation3 + $0x180] sm:$0xff] %vm6653, %v6637
  %6703 = vst.msk [vmem:[#allocation3 + $0x188] sm:$0xff] %vm6653, %v6638
  %6704 = vst.msk [vmem:[#allocation3 + $0x190] sm:$0xff] %vm6653, %v6639
  %6705 = vst.msk [vmem:[#allocation3 + $0x198] sm:$0xff] %vm6653, %v6640
  %6706 = vst.msk [vmem:[#allocation3 + $0x1a0] sm:$0xff] %vm6653, %v6641
  %6707 = vst.msk [vmem:[#allocation3 + $0x1a8] sm:$0xff] %vm6653, %v6642
  %6708 = vst.msk [vmem:[#allocation3 + $0x1b0] sm:$0xff] %vm6653, %v6643
  %6709 = vst.msk [vmem:[#allocation3 + $0x1b8] sm:$0xff] %vm6653, %v6644
  %6710 = vst.msk [vmem:[#allocation3 + $0x1c0] sm:$0xff] %vm6653, %v6645
  %6711 = vst.msk [vmem:[#allocation3 + $0x1c8] sm:$0xff] %vm6653, %v6646
  %6712 = vst.msk [vmem:[#allocation3 + $0x1d0] sm:$0xff] %vm6653, %v6647
  %6713 = vst.msk [vmem:[#allocation3 + $0x1d8] sm:$0xff] %vm6653, %v6648
  %6714 = vst.msk [vmem:[#allocation3 + $0x1e0] sm:$0xff] %vm6653, %v6649
  %6715 = vst.msk [vmem:[#allocation3 + $0x1e8] sm:$0xff] %vm6653, %v6650
  %6716 = vst.msk [vmem:[#allocation3 + $0x1f0] sm:$0xff] %vm6653, %v6651
  %6717 = vst.msk [vmem:[#allocation3 + $0x1f8] sm:$0xff] %vm6653, %v6652
  %v6718 = vld [vmem:[#allocation3] sm:$0xff]
  %v6719 = vld [vmem:[#allocation3 + $0x8] sm:$0xff]
  %v6720 = vld [vmem:[#allocation3 + $0x20] sm:$0xff]
  %v6721 = vld [vmem:[#allocation3 + $0x28] sm:$0xff]
  %v6722 = vld [vmem:[#allocation3 + $0x40] sm:$0xff]
  %v6723 = vld [vmem:[#allocation3 + $0x48] sm:$0xff]
  %v6724 = vld [vmem:[#allocation3 + $0x60] sm:$0xff]
  %v6725 = vld [vmem:[#allocation3 + $0x68] sm:$0xff]
  %v6726 = vld [vmem:[#allocation3 + $0x80] sm:$0xff]
  %v6727 = vld [vmem:[#allocation3 + $0x88] sm:$0xff]
  %v6728 = vld [vmem:[#allocation3 + $0xa0] sm:$0xff]
  %v6729 = vld [vmem:[#allocation3 + $0xa8] sm:$0xff]
  %v6730 = vld [vmem:[#allocation3 + $0xc0] sm:$0xff]
  %v6731 = vld [vmem:[#allocation3 + $0xc8] sm:$0xff]
  %v6732 = vld [vmem:[#allocation3 + $0xe0] sm:$0xff]
  %v6733 = vld [vmem:[#allocation3 + $0xe8] sm:$0xff]
  %v6734 = vld [vmem:[#allocation3 + $0x100] sm:$0xff]
  %v6735 = vld [vmem:[#allocation3 + $0x108] sm:$0xff]
  %v6736 = vld [vmem:[#allocation3 + $0x120] sm:$0xff]
  %v6737 = vld [vmem:[#allocation3 + $0x128] sm:$0xff]
  %v6738 = vld [vmem:[#allocation3 + $0x140] sm:$0xff]
  %v6739 = vld [vmem:[#allocation3 + $0x148] sm:$0xff]
  %v6740 = vld [vmem:[#allocation3 + $0x160] sm:$0xff]
  %v6741 = vld [vmem:[#allocation3 + $0x168] sm:$0xff]
  %v6742 = vld [vmem:[#allocation3 + $0x180] sm:$0xff]
  %v6743 = vld [vmem:[#allocation3 + $0x188] sm:$0xff]
  %v6744 = vld [vmem:[#allocation3 + $0x1a0] sm:$0xff]
  %v6745 = vld [vmem:[#allocation3 + $0x1a8] sm:$0xff]
  %v6746 = vld [vmem:[#allocation3 + $0x1c0] sm:$0xff]
  %v6747 = vld [vmem:[#allocation3 + $0x1c8] sm:$0xff]
  %v6748 = vld [vmem:[#allocation3 + $0x1e0] sm:$0xff]
  %v6749 = vld [vmem:[#allocation3 + $0x1e8] sm:$0xff]
  %s6750 = scalar_lea.vmem [#allocation3], 16
  %v6751 = vld [vmem:[%s6750] sm:$0xff]
  %v6752 = vld [vmem:[%s6750 + $0x8] sm:$0xff]
  %v6753 = vld [vmem:[%s6750 + $0x20] sm:$0xff]
  %v6754 = vld [vmem:[%s6750 + $0x28] sm:$0xff]
  %v6755 = vld [vmem:[%s6750 + $0x40] sm:$0xff]
  %v6756 = vld [vmem:[%s6750 + $0x48] sm:$0xff]
  %v6757 = vld [vmem:[%s6750 + $0x60] sm:$0xff]
  %v6758 = vld [vmem:[%s6750 + $0x68] sm:$0xff]
  %v6759 = vld [vmem:[%s6750 + $0x80] sm:$0xff]
  %v6760 = vld [vmem:[%s6750 + $0x88] sm:$0xff]
  %v6761 = vld [vmem:[%s6750 + $0xa0] sm:$0xff]
  %v6762 = vld [vmem:[%s6750 + $0xa8] sm:$0xff]
  %v6763 = vld [vmem:[%s6750 + $0xc0] sm:$0xff]
  %v6764 = vld [vmem:[%s6750 + $0xc8] sm:$0xff]
  %v6765 = vld [vmem:[%s6750 + $0xe0] sm:$0xff]
  %v6766 = vld [vmem:[%s6750 + $0xe8] sm:$0xff]
  %v6767 = vld [vmem:[%s6750 + $0x100] sm:$0xff]
  %v6768 = vld [vmem:[%s6750 + $0x108] sm:$0xff]
  %v6769 = vld [vmem:[%s6750 + $0x120] sm:$0xff]
  %v6770 = vld [vmem:[%s6750 + $0x128] sm:$0xff]
  %v6771 = vld [vmem:[%s6750 + $0x140] sm:$0xff]
  %v6772 = vld [vmem:[%s6750 + $0x148] sm:$0xff]
  %v6773 = vld [vmem:[%s6750 + $0x160] sm:$0xff]
  %v6774 = vld [vmem:[%s6750 + $0x168] sm:$0xff]
  %v6775 = vld [vmem:[%s6750 + $0x180] sm:$0xff]
  %v6776 = vld [vmem:[%s6750 + $0x188] sm:$0xff]
  %v6777 = vld [vmem:[%s6750 + $0x1a0] sm:$0xff]
  %v6778 = vld [vmem:[%s6750 + $0x1a8] sm:$0xff]
  %v6779 = vld [vmem:[%s6750 + $0x1c0] sm:$0xff]
  %v6780 = vld [vmem:[%s6750 + $0x1c8] sm:$0xff]
  %v6781 = vld [vmem:[%s6750 + $0x1e0] sm:$0xff]
  %v6782 = vld [vmem:[%s6750 + $0x1e8] sm:$0xff]
  %v6783 = vmax.f32 %v6718, %v6751
  %v6784 = vmax.f32 %v6719, %v6752
  %v6785 = vmax.f32 %v6720, %v6753
  %v6786 = vmax.f32 %v6721, %v6754
  %v6787 = vmax.f32 %v6722, %v6755
  %v6788 = vmax.f32 %v6723, %v6756
  %v6789 = vmax.f32 %v6724, %v6757
  %v6790 = vmax.f32 %v6725, %v6758
  %v6791 = vmax.f32 %v6726, %v6759
  %v6792 = vmax.f32 %v6727, %v6760
  %v6793 = vmax.f32 %v6728, %v6761
  %v6794 = vmax.f32 %v6729, %v6762
  %v6795 = vmax.f32 %v6730, %v6763
  %v6796 = vmax.f32 %v6731, %v6764
  %v6797 = vmax.f32 %v6732, %v6765
  %v6798 = vmax.f32 %v6733, %v6766
  %v6799 = vmax.f32 %v6734, %v6767
  %v6800 = vmax.f32 %v6735, %v6768
  %v6801 = vmax.f32 %v6736, %v6769
  %v6802 = vmax.f32 %v6737, %v6770
  %v6803 = vmax.f32 %v6738, %v6771
  %v6804 = vmax.f32 %v6739, %v6772
  %v6805 = vmax.f32 %v6740, %v6773
  %v6806 = vmax.f32 %v6741, %v6774
  %v6807 = vmax.f32 %v6742, %v6775
  %v6808 = vmax.f32 %v6743, %v6776
  %v6809 = vmax.f32 %v6744, %v6777
  %v6810 = vmax.f32 %v6745, %v6778
  %v6811 = vmax.f32 %v6746, %v6779
  %v6812 = vmax.f32 %v6747, %v6780
  %v6813 = vmax.f32 %v6748, %v6781
  %v6814 = vmax.f32 %v6749, %v6782
  %6815 = vst.msk [vmem:[#allocation4] sm:$0xff] %vm6653, %v6783
  %6816 = vst.msk [vmem:[#allocation4 + $0x8] sm:$0xff] %vm6653, %v6784
  %6817 = vst.msk [vmem:[#allocation4 + $0x10] sm:$0xff] %vm6653, %v6785
  %6818 = vst.msk [vmem:[#allocation4 + $0x18] sm:$0xff] %vm6653, %v6786
  %6819 = vst.msk [vmem:[#allocation4 + $0x20] sm:$0xff] %vm6653, %v6787
  %6820 = vst.msk [vmem:[#allocation4 + $0x28] sm:$0xff] %vm6653, %v6788
  %6821 = vst.msk [vmem:[#allocation4 + $0x30] sm:$0xff] %vm6653, %v6789
  %6822 = vst.msk [vmem:[#allocation4 + $0x38] sm:$0xff] %vm6653, %v6790
  %6823 = vst.msk [vmem:[#allocation4 + $0x40] sm:$0xff] %vm6653, %v6791
  %6824 = vst.msk [vmem:[#allocation4 + $0x48] sm:$0xff] %vm6653, %v6792
  %6825 = vst.msk [vmem:[#allocation4 + $0x50] sm:$0xff] %vm6653, %v6793
  %6826 = vst.msk [vmem:[#allocation4 + $0x58] sm:$0xff] %vm6653, %v6794
  %6827 = vst.msk [vmem:[#allocation4 + $0x60] sm:$0xff] %vm6653, %v6795
  %6828 = vst.msk [vmem:[#allocation4 + $0x68] sm:$0xff] %vm6653, %v6796
  %6829 = vst.msk [vmem:[#allocation4 + $0x70] sm:$0xff] %vm6653, %v6797
  %6830 = vst.msk [vmem:[#allocation4 + $0x78] sm:$0xff] %vm6653, %v6798
  %6831 = vst.msk [vmem:[#allocation4 + $0x80] sm:$0xff] %vm6653, %v6799
  %6832 = vst.msk [vmem:[#allocation4 + $0x88] sm:$0xff] %vm6653, %v6800
  %6833 = vst.msk [vmem:[#allocation4 + $0x90] sm:$0xff] %vm6653, %v6801
  %6834 = vst.msk [vmem:[#allocation4 + $0x98] sm:$0xff] %vm6653, %v6802
  %6835 = vst.msk [vmem:[#allocation4 + $0xa0] sm:$0xff] %vm6653, %v6803
  %6836 = vst.msk [vmem:[#allocation4 + $0xa8] sm:$0xff] %vm6653, %v6804
  %6837 = vst.msk [vmem:[#allocation4 + $0xb0] sm:$0xff] %vm6653, %v6805
  %6838 = vst.msk [vmem:[#allocation4 + $0xb8] sm:$0xff] %vm6653, %v6806
  %6839 = vst.msk [vmem:[#allocation4 + $0xc0] sm:$0xff] %vm6653, %v6807
  %6840 = vst.msk [vmem:[#allocation4 + $0xc8] sm:$0xff] %vm6653, %v6808
  %6841 = vst.msk [vmem:[#allocation4 + $0xd0] sm:$0xff] %vm6653, %v6809
  %6842 = vst.msk [vmem:[#allocation4 + $0xd8] sm:$0xff] %vm6653, %v6810
  %6843 = vst.msk [vmem:[#allocation4 + $0xe0] sm:$0xff] %vm6653, %v6811
  %6844 = vst.msk [vmem:[#allocation4 + $0xe8] sm:$0xff] %vm6653, %v6812
  %6845 = vst.msk [vmem:[#allocation4 + $0xf0] sm:$0xff] %vm6653, %v6813
  %6846 = vst.msk [vmem:[#allocation4 + $0xf8] sm:$0xff] %vm6653, %v6814
  %v6847 = vld [vmem:[#allocation4] ss:$2 sm:$0xff]
  %s6848 = scalar_lea.vmem [#allocation4], 16
  %v6849 = vld [vmem:[%s6848] ss:$2 sm:$0xff]
  %s6850 = scalar_lea.vmem [#allocation4], 32
  %v6851 = vld [vmem:[%s6850] ss:$2 sm:$0xff]
  %s6852 = scalar_lea.vmem [#allocation4], 48
  %v6853 = vld [vmem:[%s6852] ss:$2 sm:$0xff]
  %s6854 = scalar_lea.vmem [#allocation4], 64
  %v6855 = vld [vmem:[%s6854] ss:$2 sm:$0xff]
  %s6856 = scalar_lea.vmem [#allocation4], 80
  %v6857 = vld [vmem:[%s6856] ss:$2 sm:$0xff]
  %s6858 = scalar_lea.vmem [#allocation4], 96
  %v6859 = vld [vmem:[%s6858] ss:$2 sm:$0xff]
  %s6860 = scalar_lea.vmem [#allocation4], 112
  %v6861 = vld [vmem:[%s6860] ss:$2 sm:$0xff]
  %s6862 = scalar_lea.vmem [#allocation4], 128
  %v6863 = vld [vmem:[%s6862] ss:$2 sm:$0xff]
  %s6864 = scalar_lea.vmem [#allocation4], 144
  %v6865 = vld [vmem:[%s6864] ss:$2 sm:$0xff]
  %s6866 = scalar_lea.vmem [#allocation4], 160
  %v6867 = vld [vmem:[%s6866] ss:$2 sm:$0xff]
  %s6868 = scalar_lea.vmem [#allocation4], 176
  %v6869 = vld [vmem:[%s6868] ss:$2 sm:$0xff]
  %s6870 = scalar_lea.vmem [#allocation4], 192
  %v6871 = vld [vmem:[%s6870] ss:$2 sm:$0xff]
  %s6872 = scalar_lea.vmem [#allocation4], 208
  %v6873 = vld [vmem:[%s6872] ss:$2 sm:$0xff]
  %s6874 = scalar_lea.vmem [#allocation4], 224
  %v6875 = vld [vmem:[%s6874] ss:$2 sm:$0xff]
  %s6876 = scalar_lea.vmem [#allocation4], 240
  %v6877 = vld [vmem:[%s6876] ss:$2 sm:$0xff]
  %s6878 = scalar_lea.vmem [#allocation4], 1
  %v6879 = vld [vmem:[%s6878] ss:$2 sm:$0xff]
  %s6880 = scalar_lea.vmem [#allocation4], 17
  %v6881 = vld [vmem:[%s6880] ss:$2 sm:$0xff]
  %s6882 = scalar_lea.vmem [#allocation4], 33
  %v6883 = vld [vmem:[%s6882] ss:$2 sm:$0xff]
  %s6884 = scalar_lea.vmem [#allocation4], 49
  %v6885 = vld [vmem:[%s6884] ss:$2 sm:$0xff]
  %s6886 = scalar_lea.vmem [#allocation4], 65
  %v6887 = vld [vmem:[%s6886] ss:$2 sm:$0xff]
  %s6888 = scalar_lea.vmem [#allocation4], 81
  %v6889 = vld [vmem:[%s6888] ss:$2 sm:$0xff]
  %s6890 = scalar_lea.vmem [#allocation4], 97
  %v6891 = vld [vmem:[%s6890] ss:$2 sm:$0xff]
  %s6892 = scalar_lea.vmem [#allocation4], 113
  %v6893 = vld [vmem:[%s6892] ss:$2 sm:$0xff]
  %s6894 = scalar_lea.vmem [#allocation4], 129
  %v6895 = vld [vmem:[%s6894] ss:$2 sm:$0xff]
  %s6896 = scalar_lea.vmem [#allocation4], 145
  %v6897 = vld [vmem:[%s6896] ss:$2 sm:$0xff]
  %s6898 = scalar_lea.vmem [#allocation4], 161
  %v6899 = vld [vmem:[%s6898] ss:$2 sm:$0xff]
  %s6900 = scalar_lea.vmem [#allocation4], 177
  %v6901 = vld [vmem:[%s6900] ss:$2 sm:$0xff]
  %s6902 = scalar_lea.vmem [#allocation4], 193
  %v6903 = vld [vmem:[%s6902] ss:$2 sm:$0xff]
  %s6904 = scalar_lea.vmem [#allocation4], 209
  %v6905 = vld [vmem:[%s6904] ss:$2 sm:$0xff]
  %s6906 = scalar_lea.vmem [#allocation4], 225
  %v6907 = vld [vmem:[%s6906] ss:$2 sm:$0xff]
  %s6908 = scalar_lea.vmem [#allocation4], 241
  %v6909 = vld [vmem:[%s6908] ss:$2 sm:$0xff]
  %v6910 = vmax.f32 %v6847, %v6879
  %v6911 = vmax.f32 %v6849, %v6881
  %v6912 = vmax.f32 %v6851, %v6883
  %v6913 = vmax.f32 %v6853, %v6885
  %v6914 = vmax.f32 %v6855, %v6887
  %v6915 = vmax.f32 %v6857, %v6889
  %v6916 = vmax.f32 %v6859, %v6891
  %v6917 = vmax.f32 %v6861, %v6893
  %v6918 = vmax.f32 %v6863, %v6895
  %v6919 = vmax.f32 %v6865, %v6897
  %v6920 = vmax.f32 %v6867, %v6899
  %v6921 = vmax.f32 %v6869, %v6901
  %v6922 = vmax.f32 %v6871, %v6903
  %v6923 = vmax.f32 %v6873, %v6905
  %v6924 = vmax.f32 %v6875, %v6907
  %v6925 = vmax.f32 %v6877, %v6909
  %6926 = vst.msk [vmem:[#allocation5] sm:$0xff] %vm6653, 0.0
  %vm6927 = vcmask 123904
  %6928 = vst.msk [vmem:[#allocation5 + $0x8] sm:$0x3] %vm6927, 0.0
  %6929 = vst.msk [vmem:[#allocation5 + $0x10] sm:$0xff] %vm6653, 0.0
  %6930 = vst.msk [vmem:[#allocation5 + $0x18] sm:$0x3] %vm6927, 0.0
  %6931 = vst.msk [vmem:[#allocation5 + $0x20] sm:$0xff] %vm6653, 0.0
  %6932 = vst.msk [vmem:[#allocation5 + $0x28] sm:$0x3] %vm6927, 0.0
  %6933 = vst.msk [vmem:[#allocation5 + $0x30] sm:$0xff] %vm6653, 0.0
  %6934 = vst.msk [vmem:[#allocation5 + $0x38] sm:$0x3] %vm6927, 0.0
  %6935 = vst.msk [vmem:[#allocation5 + $0x40] sm:$0xff] %vm6653, 0.0
  %6936 = vst.msk [vmem:[#allocation5 + $0x48] sm:$0x3] %vm6927, 0.0
  %6937 = vst.msk [vmem:[#allocation5 + $0x50] sm:$0xff] %vm6653, 0.0
  %6938 = vst.msk [vmem:[#allocation5 + $0x58] sm:$0x3] %vm6927, 0.0
  %6939 = vst.msk [vmem:[#allocation5 + $0x60] sm:$0xff] %vm6653, 0.0
  %6940 = vst.msk [vmem:[#allocation5 + $0x68] sm:$0x3] %vm6927, 0.0
  %6941 = vst.msk [vmem:[#allocation5 + $0x70] sm:$0xff] %vm6653, 0.0
  %6942 = vst.msk [vmem:[#allocation5 + $0x78] sm:$0x3] %vm6927, 0.0
  %6943 = vst.msk [vmem:[#allocation5 + $0x80] sm:$0xff] %vm6653, 0.0
  %6944 = vst.msk [vmem:[#allocation5 + $0x88] sm:$0x3] %vm6927, 0.0
  %6945 = vst.msk [vmem:[#allocation5 + $0x90] sm:$0xff] %vm6653, 0.0
  %6946 = vst.msk [vmem:[#allocation5 + $0x98] sm:$0x3] %vm6927, 0.0
  %6947 = vst.msk [vmem:[#allocation5 + $0xa0] sm:$0xff] %vm6653, 0.0
  %6948 = vst.msk [vmem:[#allocation5 + $0xa8] sm:$0x3] %vm6927, 0.0
  %6949 = vst.msk [vmem:[#allocation5 + $0xb0] sm:$0xff] %vm6653, 0.0
  %6950 = vst.msk [vmem:[#allocation5 + $0xb8] sm:$0x3] %vm6927, 0.0
  %6951 = vst.msk [vmem:[#allocation5 + $0xc0] sm:$0xff] %vm6653, 0.0
  %6952 = vst.msk [vmem:[#allocation5 + $0xc8] sm:$0x3] %vm6927, 0.0
  %6953 = vst.msk [vmem:[#allocation5 + $0xd0] sm:$0xff] %vm6653, 0.0
  %6954 = vst.msk [vmem:[#allocation5 + $0xd8] sm:$0x3] %vm6927, 0.0
  %6955 = vst.msk [vmem:[#allocation5 + $0xe0] sm:$0xff] %vm6653, 0.0
  %6956 = vst.msk [vmem:[#allocation5 + $0xe8] sm:$0x3] %vm6927, 0.0
  %6957 = vst.msk [vmem:[#allocation5 + $0xf0] sm:$0xff] %vm6653, 0.0
  %6958 = vst.msk [vmem:[#allocation5 + $0xf8] sm:$0x3] %vm6927, 0.0
  %6959 = vst.msk [vmem:[#allocation5 + $0x100] sm:$0xff] %vm6653, 0.0
  %6960 = vst.msk [vmem:[#allocation5 + $0x108] sm:$0x3] %vm6927, 0.0
  %6961 = vst.msk [vmem:[#allocation5 + $0x110] sm:$0xff] %vm6653, 0.0
  %6962 = vst.msk [vmem:[#allocation5 + $0x118] sm:$0x3] %vm6927, 0.0
  %6963 = vst.msk [vmem:[#allocation5 + $0x120] sm:$0xff] %vm6653, 0.0
  %6964 = vst.msk [vmem:[#allocation5 + $0x128] sm:$0x3] %vm6927, 0.0
  %6965 = vst.msk [vmem:[#allocation5 + $0x130] sm:$0xff] %vm6653, 0.0
  %6966 = vst.msk [vmem:[#allocation5 + $0x138] sm:$0x3] %vm6927, 0.0
  %s6967 = scalar_lea.vmem [#allocation5], 16
  %6968 = vst.msk [vmem:[%s6967 + $0x1] sm:$0xff] %vm6653, %v6910
  %6969 = vst.msk [vmem:[%s6967 + $0x11] sm:$0xff] %vm6653, %v6911
  %6970 = vst.msk [vmem:[%s6967 + $0x21] sm:$0xff] %vm6653, %v6912
  %6971 = vst.msk [vmem:[%s6967 + $0x31] sm:$0xff] %vm6653, %v6913
  %6972 = vst.msk [vmem:[%s6967 + $0x41] sm:$0xff] %vm6653, %v6914
  %6973 = vst.msk [vmem:[%s6967 + $0x51] sm:$0xff] %vm6653, %v6915
  %6974 = vst.msk [vmem:[%s6967 + $0x61] sm:$0xff] %vm6653, %v6916
  %6975 = vst.msk [vmem:[%s6967 + $0x71] sm:$0xff] %vm6653, %v6917
  %s6976 = scalar_lea.vmem [#allocation5], 176
  %6977 = vst.msk [vmem:[%s6976 + $0x1] sm:$0xff] %vm6653, %v6918
  %6978 = vst.msk [vmem:[%s6976 + $0x11] sm:$0xff] %vm6653, %v6919
  %6979 = vst.msk [vmem:[%s6976 + $0x21] sm:$0xff] %vm6653, %v6920
  %6980 = vst.msk [vmem:[%s6976 + $0x31] sm:$0xff] %vm6653, %v6921
  %6981 = vst.msk [vmem:[%s6976 + $0x41] sm:$0xff] %vm6653, %v6922
  %6982 = vst.msk [vmem:[%s6976 + $0x51] sm:$0xff] %vm6653, %v6923
  %6983 = vst.msk [vmem:[%s6976 + $0x61] sm:$0xff] %vm6653, %v6924
  %6984 = vst.msk [vmem:[%s6976 + $0x71] sm:$0xff] %vm6653, %v6925
  %v6985 = vld [vmem:[#allocation5] sm:$0xff]
  %v6986 = vld [vmem:[#allocation5 + $0x10] sm:$0xff]
  %v6987 = vld [vmem:[#allocation5 + $0x20] sm:$0xff]
  %v6988 = vld [vmem:[#allocation5 + $0x30] sm:$0xff]
  %v6989 = vld [vmem:[#allocation5 + $0x40] sm:$0xff]
  %v6990 = vld [vmem:[#allocation5 + $0x50] sm:$0xff]
  %v6991 = vld [vmem:[#allocation5 + $0x60] sm:$0xff]
  %v6992 = vld [vmem:[#allocation5 + $0x70] sm:$0xff]
  %s6993 = scalar_lea.vmem [#allocation5], 160
  %v6994 = vld [vmem:[%s6993] sm:$0xff]
  %v6995 = vld [vmem:[%s6993 + $0x10] sm:$0xff]
  %v6996 = vld [vmem:[%s6993 + $0x20] sm:$0xff]
  %v6997 = vld [vmem:[%s6993 + $0x30] sm:$0xff]
  %v6998 = vld [vmem:[%s6993 + $0x40] sm:$0xff]
  %v6999 = vld [vmem:[%s6993 + $0x50] sm:$0xff]
  %v7000 = vld [vmem:[%s6993 + $0x60] sm:$0xff]
  %v7001 = vld [vmem:[%s6993 + $0x70] sm:$0xff]
  %v7002 = vld [vmem:[%s3] sm:$0xff]
  %v7003 = vld [vmem:[%s3 + $0x8] sm:$0xff]
  %v7004 = vld [vmem:[#allocation5 + $0x1] sm:$0xff]
  %v7005 = vld [vmem:[#allocation5 + $0x11] sm:$0xff]
  %v7006 = vld [vmem:[#allocation5 + $0x21] sm:$0xff]
  %v7007 = vld [vmem:[#allocation5 + $0x31] sm:$0xff]
  %v7008 = vld [vmem:[#allocation5 + $0x41] sm:$0xff]
  %v7009 = vld [vmem:[#allocation5 + $0x51] sm:$0xff]
  %v7010 = vld [vmem:[#allocation5 + $0x61] sm:$0xff]
  %v7011 = vld [vmem:[#allocation5 + $0x71] sm:$0xff]
  %v7012 = vld [vmem:[%s6993 + $0x1] sm:$0xff]
  %v7013 = vld [vmem:[%s6993 + $0x11] sm:$0xff]
  %v7014 = vld [vmem:[%s6993 + $0x21] sm:$0xff]
  %v7015 = vld [vmem:[%s6993 + $0x31] sm:$0xff]
  %v7016 = vld [vmem:[%s6993 + $0x41] sm:$0xff]
  %v7017 = vld [vmem:[%s6993 + $0x51] sm:$0xff]
  %v7018 = vld [vmem:[%s6993 + $0x61] sm:$0xff]
  %v7019 = vld [vmem:[%s6993 + $0x71] sm:$0xff]
  %v7020 = vld [vmem:[%s3 + $0x10] sm:$0xff]
  %v7021 = vld [vmem:[%s3 + $0x18] sm:$0xff]
  %v7023 = vsel %vm6653, %v7004, 0
  %v7026 = vsel %vm6653, %v7005, 0
  %v7029 = vsel %vm6653, %v7006, 0
  %v7032 = vsel %vm6653, %v7007, 0
  %v7035 = vsel %vm6653, %v7008, 0
  %v7038 = vsel %vm6653, %v7009, 0
  %v7041 = vsel %vm6653, %v7010, 0
  %v7044 = vsel %vm6653, %v7011, 0
  %v7047 = vsel %vm6653, %v7012, 0
  %v7050 = vsel %vm6653, %v7013, 0
  %v7053 = vsel %vm6653, %v7014, 0
  %v7056 = vsel %vm6653, %v7015, 0
  %v7059 = vsel %vm6653, %v7016, 0
  %v7062 = vsel %vm6653, %v7017, 0
  %v7065 = vsel %vm6653, %v7018, 0
  %v7068 = vsel %vm6653, %v7019, 0
  %7070 = vmatprep.subr.mxu0 0.0
  %7071 = vmatpush1.msra.mxu0 %v7020
  %7072 = vmatprep.subr.mxu0 0.0
  %7073 = vmatpush1.msra.mxu0 %v7021
  %7074 = vmatprep.subr.mxu0 0.0
  %7075 = vmatpush1.msra.mxu0 0.0
  %7076 = vmatprep.subr.mxu0 0.0
  %7077 = vmatpush1.msra.mxu0 0.0
  %7078 = vmatprep.subr.mxu0 0.0
  %7079 = vmatpush1.msra.mxu0 0.0
  %7080 = vmatprep.subr.mxu0 0.0
  %7081 = vmatpush1.msra.mxu0 0.0
  %7082 = vmatprep.subr.mxu0 0.0
  %7083 = vmatpush1.msra.mxu0 0.0
  %7084 = vmatprep.subr.mxu0 0.0
  %7085 = vmatpush1.msra.mxu0 0.0
  %7086 = vmatprep.subr.mxu0 0.0
  %7087 = vmatpush1.msra.mxu0 0.0
  %7088 = vmatprep.subr.mxu0 0.0
  %7089 = vmatpush1.msra.mxu0 0.0
  %7090 = vmatprep.subr.mxu0 0.0
  %7091 = vmatpush1.msra.mxu0 0.0
  %7092 = vmatprep.subr.mxu0 0.0
  %7093 = vmatpush1.msra.mxu0 0.0
  %7094 = vmatprep.subr.mxu0 0.0
  %7095 = vmatpush1.msra.mxu0 0.0
  %7096 = vmatprep.subr.mxu0 0.0
  %7097 = vmatpush1.msra.mxu0 0.0
  %7098 = vmatprep.subr.mxu0 0.0
  %7099 = vmatpush1.msra.mxu0 0.0
  %7100 = vmatprep.subr.mxu0 0.0
  %7101 = vmatpush1.msra.mxu0 0.0
  %7102 = vmatprep.subr.mxu0 0.0
  %7103 = vmatpush1.msra.mxu0 0.0
  %7104 = vmatprep.subr.mxu0 0.0
  %7105 = vmatpush1.msra.mxu0 0.0
  %7106 = vmatprep.subr.mxu0 0.0
  %7107 = vmatpush1.msra.mxu0 0.0
  %7108 = vmatprep.subr.mxu0 0.0
  %7109 = vmatpush1.msra.mxu0 0.0
  %7110 = vmatprep.subr.mxu0 0.0
  %7111 = vmatpush1.msra.mxu0 0.0
  %7112 = vmatprep.subr.mxu0 0.0
  %7113 = vmatpush1.msra.mxu0 0.0
  %7114 = vmatprep.subr.mxu0 0.0
  %7115 = vmatpush1.msra.mxu0 0.0
  %7116 = vmatprep.subr.mxu0 0.0
  %7117 = vmatpush1.msra.mxu0 0.0
  %7118 = vmatprep.subr.mxu0 0.0
  %7119 = vmatpush1.msra.mxu0 0.0
  %7120 = vmatprep.subr.mxu0 0.0
  %7121 = vmatpush1.msra.mxu0 0.0
  %7122 = vmatprep.subr.mxu0 0.0
  %7123 = vmatpush1.msra.mxu0 0.0
  %7124 = vmatprep.subr.mxu0 0.0
  %7125 = vmatpush1.msra.mxu0 0.0
  %7126 = vmatprep.subr.mxu0 0.0
  %7127 = vmatpush1.msra.mxu0 0.0
  %7128 = vmatprep.subr.mxu0 0.0
  %7129 = vmatpush1.msra.mxu0 0.0
  %7130 = vmatprep.subr.mxu0 0.0
  %7131 = vmatpush1.msra.mxu0 0.0
  %7132 = vmatprep.subr.mxu0 0.0
  %7133 = vmatpush1.msra.mxu0 0.0
  %7134 = vmatprep.mubr.f32.mxu0 0.0
  %7135 = vmatmul.mubr.f32.gmra.mrb[0].mxu0 %v7023
  %v7136 = vpop.f32.mrb[0].mxu0
  %v7137 = vadd.f32 0.0, %v7136
  %v7138 = vpop.f32.mrb[0].mxu0
  %7139 = vmatprep.mubr.f32.mxu0 0.0
  %7140 = vmatmul.mubr.f32.gmra.mrb[0].mxu0 %v7026
  %v7141 = vpop.f32.mrb[0].mxu0
  %v7142 = vadd.f32 0.0, %v7141
  %v7143 = vpop.f32.mrb[0].mxu0
  %7144 = vmatprep.mubr.f32.mxu0 0.0
  %7145 = vmatmul.mubr.f32.gmra.mrb[0].mxu0 %v7029
  %v7146 = vpop.f32.mrb[0].mxu0
  %v7147 = vadd.f32 0.0, %v7146
  %v7148 = vpop.f32.mrb[0].mxu0
  %7149 = vmatprep.mubr.f32.mxu0 0.0
  %7150 = vmatmul.mubr.f32.gmra.mrb[0].mxu0 %v7032
  %v7151 = vpop.f32.mrb[0].mxu0
  %v7152 = vadd.f32 0.0, %v7151
  %v7153 = vpop.f32.mrb[0].mxu0
  %7154 = vmatprep.mubr.f32.mxu0 0.0
  %7155 = vmatmul.mubr.f32.gmra.mrb[0].mxu0 %v7035
  %v7156 = vpop.f32.mrb[0].mxu0
  %v7157 = vadd.f32 0.0, %v7156
  %v7158 = vpop.f32.mrb[0].mxu0
  %7159 = vmatprep.mubr.f32.mxu0 0.0
  %7160 = vmatmul.mubr.f32.gmra.mrb[0].mxu0 %v7038
  %v7161 = vpop.f32.mrb[0].mxu0
  %v7162 = vadd.f32 0.0, %v7161
  %v7163 = vpop.f32.mrb[0].mxu0
  %7164 = vmatprep.mubr.f32.mxu0 0.0
  %7165 = vmatmul.mubr.f32.gmra.mrb[0].mxu0 %v7041
  %v7166 = vpop.f32.mrb[0].mxu0
  %v7167 = vadd.f32 0.0, %v7166
  %v7168 = vpop.f32.mrb[0].mxu0
  %7169 = vmatprep.mubr.f32.mxu0 0.0
  %7170 = vmatmul.mubr.f32.gmra.mrb[0].mxu0 %v7044
  %v7171 = vpop.f32.mrb[0].mxu0
  %v7172 = vadd.f32 0.0, %v7171
  %v7173 = vpop.f32.mrb[0].mxu0
  %7174 = vmatprep.mubr.f32.mxu0 0.0
  %7175 = vmatmul.mubr.f32.gmra.mrb[0].mxu0 %v7047
  %v7176 = vpop.f32.mrb[0].mxu0
  %v7177 = vadd.f32 0.0, %v7176
  %v7178 = vpop.f32.mrb[0].mxu0
  %7179 = vmatprep.mubr.f32.mxu0 0.0
  %7180 = vmatmul.mubr.f32.gmra.mrb[0].mxu0 %v7050
  %v7181 = vpop.f32.mrb[0].mxu0
  %v7182 = vadd.f32 0.0, %v7181
  %v7183 = vpop.f32.mrb[0].mxu0
  %7184 = vmatprep.mubr.f32.mxu0 0.0
  %7185 = vmatmul.mubr.f32.gmra.mrb[0].mxu0 %v7053
  %v7186 = vpop.f32.mrb[0].mxu0
  %v7187 = vadd.f32 0.0, %v7186
  %v7188 = vpop.f32.mrb[0].mxu0
  %7189 = vmatprep.mubr.f32.mxu0 0.0
  %7190 = vmatmul.mubr.f32.gmra.mrb[0].mxu0 %v7056
  %v7191 = vpop.f32.mrb[0].mxu0
  %v7192 = vadd.f32 0.0, %v7191
  %v7193 = vpop.f32.mrb[0].mxu0
  %7194 = vmatprep.mubr.f32.mxu0 0.0
  %7195 = vmatmul.mubr.f32.gmra.mrb[0].mxu0 %v7059
  %v7196 = vpop.f32.mrb[0].mxu0
  %v7197 = vadd.f32 0.0, %v7196
  %v7198 = vpop.f32.mrb[0].mxu0
  %7199 = vmatprep.mubr.f32.mxu0 0.0
  %7200 = vmatmul.mubr.f32.gmra.mrb[0].mxu0 %v7062
  %v7201 = vpop.f32.mrb[0].mxu0
  %v7202 = vadd.f32 0.0, %v7201
  %v7203 = vpop.f32.mrb[0].mxu0
  %7204 = vmatprep.mubr.f32.mxu0 0.0
  %7205 = vmatmul.mubr.f32.gmra.mrb[0].mxu0 %v7065
  %v7206 = vpop.f32.mrb[0].mxu0
  %v7207 = vadd.f32 0.0, %v7206
  %v7208 = vpop.f32.mrb[0].mxu0
  %7209 = vmatprep.mubr.f32.mxu0 0.0
  %7210 = vmatmul.mubr.f32.gmra.mrb[0].mxu0 %v7068
  %v7211 = vpop.f32.mrb[0].mxu0
  %v7212 = vadd.f32 0.0, %v7211
  %v7213 = vpop.f32.mrb[0].mxu0
  %7214 = vdwg.mxu0
  %v7216 = vsel %vm6653, %v6985, 0
  %v7219 = vsel %vm6653, %v6986, 0
  %v7222 = vsel %vm6653, %v6987, 0
  %v7225 = vsel %vm6653, %v6988, 0
  %v7228 = vsel %vm6653, %v6989, 0
  %v7231 = vsel %vm6653, %v6990, 0
  %v7234 = vsel %vm6653, %v6991, 0
  %v7237 = vsel %vm6653, %v6992, 0
  %v7240 = vsel %vm6653, %v6994, 0
  %v7243 = vsel %vm6653, %v6995, 0
  %v7246 = vsel %vm6653, %v6996, 0
  %v7249 = vsel %vm6653, %v6997, 0
  %v7252 = vsel %vm6653, %v6998, 0
  %v7255 = vsel %vm6653, %v6999, 0
  %v7258 = vsel %vm6653, %v7000, 0
  %v7261 = vsel %vm6653, %v7001, 0
  %7263 = vmatprep.subr.mxu0 0.0
  %7264 = vmatpush1.msra.mxu0 %v7002
  %7265 = vmatprep.subr.mxu0 0.0
  %7266 = vmatpush1.msra.mxu0 %v7003
  %7267 = vmatprep.subr.mxu0 0.0
  %7268 = vmatpush1.msra.mxu0 0.0
  %7269 = vmatprep.subr.mxu0 0.0
  %7270 = vmatpush1.msra.mxu0 0.0
  %7271 = vmatprep.subr.mxu0 0.0
  %7272 = vmatpush1.msra.mxu0 0.0
  %7273 = vmatprep.subr.mxu0 0.0
  %7274 = vmatpush1.msra.mxu0 0.0
  %7275 = vmatprep.subr.mxu0 0.0
  %7276 = vmatpush1.msra.mxu0 0.0
  %7277 = vmatprep.subr.mxu0 0.0
  %7278 = vmatpush1.msra.mxu0 0.0
  %7279 = vmatprep.subr.mxu0 0.0
  %7280 = vmatpush1.msra.mxu0 0.0
  %7281 = vmatprep.subr.mxu0 0.0
  %7282 = vmatpush1.msra.mxu0 0.0
  %7283 = vmatprep.subr.mxu0 0.0
  %7284 = vmatpush1.msra.mxu0 0.0
  %7285 = vmatprep.subr.mxu0 0.0
  %7286 = vmatpush1.msra.mxu0 0.0
  %7287 = vmatprep.subr.mxu0 0.0
  %7288 = vmatpush1.msra.mxu0 0.0
  %7289 = vmatprep.subr.mxu0 0.0
  %7290 = vmatpush1.msra.mxu0 0.0
  %7291 = vmatprep.subr.mxu0 0.0
  %7292 = vmatpush1.msra.mxu0 0.0
  %7293 = vmatprep.subr.mxu0 0.0
  %7294 = vmatpush1.msra.mxu0 0.0
  %7295 = vmatprep.subr.mxu0 0.0
  %7296 = vmatpush1.msra.mxu0 0.0
  %7297 = vmatprep.subr.mxu0 0.0
  %7298 = vmatpush1.msra.mxu0 0.0
  %7299 = vmatprep.subr.mxu0 0.0
  %7300 = vmatpush1.msra.mxu0 0.0
  %7301 = vmatprep.subr.mxu0 0.0
  %7302 = vmatpush1.msra.mxu0 0.0
  %7303 = vmatprep.subr.mxu0 0.0
  %7304 = vmatpush1.msra.mxu0 0.0
  %7305 = vmatprep.subr.mxu0 0.0
  %7306 = vmatpush1.msra.mxu0 0.0
  %7307 = vmatprep.subr.mxu0 0.0
  %7308 = vmatpush1.msra.mxu0 0.0
  %7309 = vmatprep.subr.mxu0 0.0
  %7310 = vmatpush1.msra.mxu0 0.0
  %7311 = vmatprep.subr.mxu0 0.0
  %7312 = vmatpush1.msra.mxu0 0.0
  %7313 = vmatprep.subr.mxu0 0.0
  %7314 = vmatpush1.msra.mxu0 0.0
  %7315 = vmatprep.subr.mxu0 0.0
  %7316 = vmatpush1.msra.mxu0 0.0
  %7317 = vmatprep.subr.mxu0 0.0
  %7318 = vmatpush1.msra.mxu0 0.0
  %7319 = vmatprep.subr.mxu0 0.0
  %7320 = vmatpush1.msra.mxu0 0.0
  %7321 = vmatprep.subr.mxu0 0.0
  %7322 = vmatpush1.msra.mxu0 0.0
  %7323 = vmatprep.subr.mxu0 0.0
  %7324 = vmatpush1.msra.mxu0 0.0
  %7325 = vmatprep.subr.mxu0 0.0
  %7326 = vmatpush1.msra.mxu0 0.0
  %7327 = vmatprep.mubr.f32.mxu0 0.0
  %7328 = vmatmul.mubr.f32.gmra.mrb[0].mxu0 %v7216
  %v7329 = vpop.f32.mrb[0].mxu0
  %v7330 = vadd.f32 %v7137, %v7329
  %v7331 = vpop.f32.mrb[0].mxu0
  %7332 = vmatprep.mubr.f32.mxu0 0.0
  %7333 = vmatmul.mubr.f32.gmra.mrb[0].mxu0 %v7219
  %v7334 = vpop.f32.mrb[0].mxu0
  %v7335 = vadd.f32 %v7142, %v7334
  %v7336 = vpop.f32.mrb[0].mxu0
  %7337 = vmatprep.mubr.f32.mxu0 0.0
  %7338 = vmatmul.mubr.f32.gmra.mrb[0].mxu0 %v7222
  %v7339 = vpop.f32.mrb[0].mxu0
  %v7340 = vadd.f32 %v7147, %v7339
  %v7341 = vpop.f32.mrb[0].mxu0
  %7342 = vmatprep.mubr.f32.mxu0 0.0
  %7343 = vmatmul.mubr.f32.gmra.mrb[0].mxu0 %v7225
  %v7344 = vpop.f32.mrb[0].mxu0
  %v7345 = vadd.f32 %v7152, %v7344
  %v7346 = vpop.f32.mrb[0].mxu0
  %7347 = vmatprep.mubr.f32.mxu0 0.0
  %7348 = vmatmul.mubr.f32.gmra.mrb[0].mxu0 %v7228
  %v7349 = vpop.f32.mrb[0].mxu0
  %v7350 = vadd.f32 %v7157, %v7349
  %v7351 = vpop.f32.mrb[0].mxu0
  %7352 = vmatprep.mubr.f32.mxu0 0.0
  %7353 = vmatmul.mubr.f32.gmra.mrb[0].mxu0 %v7231
  %v7354 = vpop.f32.mrb[0].mxu0
  %v7355 = vadd.f32 %v7162, %v7354
  %v7356 = vpop.f32.mrb[0].mxu0
  %7357 = vmatprep.mubr.f32.mxu0 0.0
  %7358 = vmatmul.mubr.f32.gmra.mrb[0].mxu0 %v7234
  %v7359 = vpop.f32.mrb[0].mxu0
  %v7360 = vadd.f32 %v7167, %v7359
  %v7361 = vpop.f32.mrb[0].mxu0
  %7362 = vmatprep.mubr.f32.mxu0 0.0
  %7363 = vmatmul.mubr.f32.gmra.mrb[0].mxu0 %v7237
  %v7364 = vpop.f32.mrb[0].mxu0
  %v7365 = vadd.f32 %v7172, %v7364
  %v7366 = vpop.f32.mrb[0].mxu0
  %7367 = vmatprep.mubr.f32.mxu0 0.0
  %7368 = vmatmul.mubr.f32.gmra.mrb[0].mxu0 %v7240
  %v7369 = vpop.f32.mrb[0].mxu0
  %v7370 = vadd.f32 %v7177, %v7369
  %v7371 = vpop.f32.mrb[0].mxu0
  %7372 = vmatprep.mubr.f32.mxu0 0.0
  %7373 = vmatmul.mubr.f32.gmra.mrb[0].mxu0 %v7243
  %v7374 = vpop.f32.mrb[0].mxu0
  %v7375 = vadd.f32 %v7182, %v7374
  %v7376 = vpop.f32.mrb[0].mxu0
  %7377 = vmatprep.mubr.f32.mxu0 0.0
  %7378 = vmatmul.mubr.f32.gmra.mrb[0].mxu0 %v7246
  %v7379 = vpop.f32.mrb[0].mxu0
  %v7380 = vadd.f32 %v7187, %v7379
  %v7381 = vpop.f32.mrb[0].mxu0
  %7382 = vmatprep.mubr.f32.mxu0 0.0
  %7383 = vmatmul.mubr.f32.gmra.mrb[0].mxu0 %v7249
  %v7384 = vpop.f32.mrb[0].mxu0
  %v7385 = vadd.f32 %v7192, %v7384
  %v7386 = vpop.f32.mrb[0].mxu0
  %7387 = vmatprep.mubr.f32.mxu0 0.0
  %7388 = vmatmul.mubr.f32.gmra.mrb[0].mxu0 %v7252
  %v7389 = vpop.f32.mrb[0].mxu0
  %v7390 = vadd.f32 %v7197, %v7389
  %v7391 = vpop.f32.mrb[0].mxu0
  %7392 = vmatprep.mubr.f32.mxu0 0.0
  %7393 = vmatmul.mubr.f32.gmra.mrb[0].mxu0 %v7255
  %v7394 = vpop.f32.mrb[0].mxu0
  %v7395 = vadd.f32 %v7202, %v7394
  %v7396 = vpop.f32.mrb[0].mxu0
  %7397 = vmatprep.mubr.f32.mxu0 0.0
  %7398 = vmatmul.mubr.f32.gmra.mrb[0].mxu0 %v7258
  %v7399 = vpop.f32.mrb[0].mxu0
  %v7400 = vadd.f32 %v7207, %v7399
  %v7401 = vpop.f32.mrb[0].mxu0
  %7402 = vmatprep.mubr.f32.mxu0 0.0
  %7403 = vmatmul.mubr.f32.gmra.mrb[0].mxu0 %v7261
  %v7404 = vpop.f32.mrb[0].mxu0
  %v7405 = vadd.f32 %v7212, %v7404
  %v7406 = vpop.f32.mrb[0].mxu0
  %7407 = vdwg.mxu0
  %v7408 = vld [vmem:[#allocation5 + $0x2] sm:$0xff]
  %v7409 = vld [vmem:[#allocation5 + $0x12] sm:$0xff]
  %v7410 = vld [vmem:[#allocation5 + $0x22] sm:$0xff]
  %v7411 = vld [vmem:[#allocation5 + $0x32] sm:$0xff]
  %v7412 = vld [vmem:[#allocation5 + $0x42] sm:$0xff]
  %v7413 = vld [vmem:[#allocation5 + $0x52] sm:$0xff]
  %v7414 = vld [vmem:[#allocation5 + $0x62] sm:$0xff]
  %v7415 = vld [vmem:[#allocation5 + $0x72] sm:$0xff]
  %v7416 = vld [vmem:[%s6993 + $0x2] sm:$0xff]
  %v7417 = vld [vmem:[%s6993 + $0x12] sm:$0xff]
  %v7418 = vld [vmem:[%s6993 + $0x22] sm:$0xff]
  %v7419 = vld [vmem:[%s6993 + $0x32] sm:$0xff]
  %v7420 = vld [vmem:[%s6993 + $0x42] sm:$0xff]
  %v7421 = vld [vmem:[%s6993 + $0x52] sm:$0xff]
  %v7422 = vld [vmem:[%s6993 + $0x62] sm:$0xff]
  %v7423 = vld [vmem:[%s6993 + $0x72] sm:$0xff]
  %v7424 = vld [vmem:[%s3 + $0x20] sm:$0xff]
  %v7425 = vld [vmem:[%s3 + $0x28] sm:$0xff]
  %v7427 = vsel %vm6653, %v7408, 0
  %v7430 = vsel %vm6653, %v7409, 0
  %v7433 = vsel %vm6653, %v7410, 0
  %v7436 = vsel %vm6653, %v7411, 0
  %v7439 = vsel %vm6653, %v7412, 0
  %v7442 = vsel %vm6653, %v7413, 0
  %v7445 = vsel %vm6653, %v7414, 0
  %v7448 = vsel %vm6653, %v7415, 0
  %v7451 = vsel %vm6653, %v7416, 0
  %v7454 = vsel %vm6653, %v7417, 0
  %v7457 = vsel %vm6653, %v7418, 0
  %v7460 = vsel %vm6653, %v7419, 0
  %v7463 = vsel %vm6653, %v7420, 0
  %v7466 = vsel %vm6653, %v7421, 0
  %v7469 = vsel %vm6653, %v7422, 0
  %v7472 = vsel %vm6653, %v7423, 0
  %7474 = vmatprep.subr.mxu0 0.0
  %7475 = vmatpush1.msra.mxu0 %v7424
  %7476 = vmatprep.subr.mxu0 0.0
  %7477 = vmatpush1.msra.mxu0 %v7425
  %7478 = vmatprep.subr.mxu0 0.0
  %7479 = vmatpush1.msra.mxu0 0.0
  %7480 = vmatprep.subr.mxu0 0.0
  %7481 = vmatpush1.msra.mxu0 0.0
  %7482 = vmatprep.subr.mxu0 0.0
  %7483 = vmatpush1.msra.mxu0 0.0
  %7484 = vmatprep.subr.mxu0 0.0
  %7485 = vmatpush1.msra.mxu0 0.0
  %7486 = vmatprep.subr.mxu0 0.0
  %7487 = vmatpush1.msra.mxu0 0.0
  %7488 = vmatprep.subr.mxu0 0.0
  %7489 = vmatpush1.msra.mxu0 0.0
  %7490 = vmatprep.subr.mxu0 0.0
  %7491 = vmatpush1.msra.mxu0 0.0
  %7492 = vmatprep.subr.mxu0 0.0
  %7493 = vmatpush1.msra.mxu0 0.0
  %7494 = vmatprep.subr.mxu0 0.0
  %7495 = vmatpush1.msra.mxu0 0.0
  %7496 = vmatprep.subr.mxu0 0.0
  %7497 = vmatpush1.msra.mxu0 0.0
  %7498 = vmatprep.subr.mxu0 0.0
  %7499 = vmatpush1.msra.mxu0 0.0
  %7500 = vmatprep.subr.mxu0 0.0
  %7501 = vmatpush1.msra.mxu0 0.0
  %7502 = vmatprep.subr.mxu0 0.0
  %7503 = vmatpush1.msra.mxu0 0.0
  %7504 = vmatprep.subr.mxu0 0.0
  %7505 = vmatpush1.msra.mxu0 0.0
  %7506 = vmatprep.subr.mxu0 0.0
  %7507 = vmatpush1.msra.mxu0 0.0
  %7508 = vmatprep.subr.mxu0 0.0
  %7509 = vmatpush1.msra.mxu0 0.0
  %7510 = vmatprep.subr.mxu0 0.0
  %7511 = vmatpush1.msra.mxu0 0.0
  %7512 = vmatprep.subr.mxu0 0.0
  %7513 = vmatpush1.msra.mxu0 0.0
  %7514 = vmatprep.subr.mxu0 0.0
  %7515 = vmatpush1.msra.mxu0 0.0
  %7516 = vmatprep.subr.mxu0 0.0
  %7517 = vmatpush1.msra.mxu0 0.0
  %7518 = vmatprep.subr.mxu0 0.0
  %7519 = vmatpush1.msra.mxu0 0.0
  %7520 = vmatprep.subr.mxu0 0.0
  %7521 = vmatpush1.msra.mxu0 0.0
  %7522 = vmatprep.subr.mxu0 0.0
  %7523 = vmatpush1.msra.mxu0 0.0
  %7524 = vmatprep.subr.mxu0 0.0
  %7525 = vmatpush1.msra.mxu0 0.0
  %7526 = vmatprep.subr.mxu0 0.0
  %7527 = vmatpush1.msra.mxu0 0.0
  %7528 = vmatprep.subr.mxu0 0.0
  %7529 = vmatpush1.msra.mxu0 0.0
  %7530 = vmatprep.subr.mxu0 0.0
  %7531 = vmatpush1.msra.mxu0 0.0
  %7532 = vmatprep.subr.mxu0 0.0
  %7533 = vmatpush1.msra.mxu0 0.0
  %7534 = vmatprep.subr.mxu0 0.0
  %7535 = vmatpush1.msra.mxu0 0.0
  %7536 = vmatprep.subr.mxu0 0.0
  %7537 = vmatpush1.msra.mxu0 0.0
  %7538 = vmatprep.mubr.f32.mxu0 0.0
  %7539 = vmatmul.mubr.f32.gmra.mrb[0].mxu0 %v7427
  %v7540 = vpop.f32.mrb[0].mxu0
  %v7541 = vadd.f32 0.0, %v7540
  %v7542 = vpop.f32.mrb[0].mxu0
  %7543 = vmatprep.mubr.f32.mxu0 0.0
  %7544 = vmatmul.mubr.f32.gmra.mrb[0].mxu0 %v7430
  %v7545 = vpop.f32.mrb[0].mxu0
  %v7546 = vadd.f32 0.0, %v7545
  %v7547 = vpop.f32.mrb[0].mxu0
  %7548 = vmatprep.mubr.f32.mxu0 0.0
  %7549 = vmatmul.mubr.f32.gmra.mrb[0].mxu0 %v7433
  %v7550 = vpop.f32.mrb[0].mxu0
  %v7551 = vadd.f32 0.0, %v7550
  %v7552 = vpop.f32.mrb[0].mxu0
  %7553 = vmatprep.mubr.f32.mxu0 0.0
  %7554 = vmatmul.mubr.f32.gmra.mrb[0].mxu0 %v7436
  %v7555 = vpop.f32.mrb[0].mxu0
  %v7556 = vadd.f32 0.0, %v7555
  %v7557 = vpop.f32.mrb[0].mxu0
  %7558 = vmatprep.mubr.f32.mxu0 0.0
  %7559 = vmatmul.mubr.f32.gmra.mrb[0].mxu0 %v7439
  %v7560 = vpop.f32.mrb[0].mxu0
  %v7561 = vadd.f32 0.0, %v7560
  %v7562 = vpop.f32.mrb[0].mxu0
  %7563 = vmatprep.mubr.f32.mxu0 0.0
  %7564 = vmatmul.mubr.f32.gmra.mrb[0].mxu0 %v7442
  %v7565 = vpop.f32.mrb[0].mxu0
  %v7566 = vadd.f32 0.0, %v7565
  %v7567 = vpop.f32.mrb[0].mxu0
  %7568 = vmatprep.mubr.f32.mxu0 0.0
  %7569 = vmatmul.mubr.f32.gmra.mrb[0].mxu0 %v7445
  %v7570 = vpop.f32.mrb[0].mxu0
  %v7571 = vadd.f32 0.0, %v7570
  %v7572 = vpop.f32.mrb[0].mxu0
  %7573 = vmatprep.mubr.f32.mxu0 0.0
  %7574 = vmatmul.mubr.f32.gmra.mrb[0].mxu0 %v7448
  %v7575 = vpop.f32.mrb[0].mxu0
  %v7576 = vadd.f32 0.0, %v7575
  %v7577 = vpop.f32.mrb[0].mxu0
  %7578 = vmatprep.mubr.f32.mxu0 0.0
  %7579 = vmatmul.mubr.f32.gmra.mrb[0].mxu0 %v7451
  %v7580 = vpop.f32.mrb[0].mxu0
  %v7581 = vadd.f32 0.0, %v7580
  %v7582 = vpop.f32.mrb[0].mxu0
  %7583 = vmatprep.mubr.f32.mxu0 0.0
  %7584 = vmatmul.mubr.f32.gmra.mrb[0].mxu0 %v7454
  %v7585 = vpop.f32.mrb[0].mxu0
  %v7586 = vadd.f32 0.0, %v7585
  %v7587 = vpop.f32.mrb[0].mxu0
  %7588 = vmatprep.mubr.f32.mxu0 0.0
  %7589 = vmatmul.mubr.f32.gmra.mrb[0].mxu0 %v7457
  %v7590 = vpop.f32.mrb[0].mxu0
  %v7591 = vadd.f32 0.0, %v7590
  %v7592 = vpop.f32.mrb[0].mxu0
  %7593 = vmatprep.mubr.f32.mxu0 0.0
  %7594 = vmatmul.mubr.f32.gmra.mrb[0].mxu0 %v7460
  %v7595 = vpop.f32.mrb[0].mxu0
  %v7596 = vadd.f32 0.0, %v7595
  %v7597 = vpop.f32.mrb[0].mxu0
  %7598 = vmatprep.mubr.f32.mxu0 0.0
  %7599 = vmatmul.mubr.f32.gmra.mrb[0].mxu0 %v7463
  %v7600 = vpop.f32.mrb[0].mxu0
  %v7601 = vadd.f32 0.0, %v7600
  %v7602 = vpop.f32.mrb[0].mxu0
  %7603 = vmatprep.mubr.f32.mxu0 0.0
  %7604 = vmatmul.mubr.f32.gmra.mrb[0].mxu0 %v7466
  %v7605 = vpop.f32.mrb[0].mxu0
  %v7606 = vadd.f32 0.0, %v7605
  %v7607 = vpop.f32.mrb[0].mxu0
  %7608 = vmatprep.mubr.f32.mxu0 0.0
  %7609 = vmatmul.mubr.f32.gmra.mrb[0].mxu0 %v7469
  %v7610 = vpop.f32.mrb[0].mxu0
  %v7611 = vadd.f32 0.0, %v7610
  %v7612 = vpop.f32.mrb[0].mxu0
  %7613 = vmatprep.mubr.f32.mxu0 0.0
  %7614 = vmatmul.mubr.f32.gmra.mrb[0].mxu0 %v7472
  %v7615 = vpop.f32.mrb[0].mxu0
  %v7616 = vadd.f32 0.0, %v7615
  %v7617 = vpop.f32.mrb[0].mxu0
  %7618 = vdwg.mxu0
  %v7619 = vadd.f32 %v7330, %v7541
  %v7620 = vadd.f32 %v7335, %v7546
  %v7621 = vadd.f32 %v7340, %v7551
  %v7622 = vadd.f32 %v7345, %v7556
  %v7623 = vadd.f32 %v7350, %v7561
  %v7624 = vadd.f32 %v7355, %v7566
  %v7625 = vadd.f32 %v7360, %v7571
  %v7626 = vadd.f32 %v7365, %v7576
  %v7627 = vadd.f32 %v7370, %v7581
  %v7628 = vadd.f32 %v7375, %v7586
  %v7629 = vadd.f32 %v7380, %v7591
  %v7630 = vadd.f32 %v7385, %v7596
  %v7631 = vadd.f32 %v7390, %v7601
  %v7632 = vadd.f32 %v7395, %v7606
  %v7633 = vadd.f32 %v7400, %v7611
  %v7634 = vadd.f32 %v7405, %v7616
  %v7635 = vld [vmem:[%s6967] sm:$0xff]
  %v7636 = vld [vmem:[%s6967 + $0x10] sm:$0xff]
  %v7637 = vld [vmem:[%s6967 + $0x20] sm:$0xff]
  %v7638 = vld [vmem:[%s6967 + $0x30] sm:$0xff]
  %v7639 = vld [vmem:[%s6967 + $0x40] sm:$0xff]
  %v7640 = vld [vmem:[%s6967 + $0x50] sm:$0xff]
  %v7641 = vld [vmem:[%s6967 + $0x60] sm:$0xff]
  %v7642 = vld [vmem:[%s6967 + $0x70] sm:$0xff]
  %v7643 = vld [vmem:[%s6976] sm:$0xff]
  %v7644 = vld [vmem:[%s6976 + $0x10] sm:$0xff]
  %v7645 = vld [vmem:[%s6976 + $0x20] sm:$0xff]
  %v7646 = vld [vmem:[%s6976 + $0x30] sm:$0xff]
  %v7647 = vld [vmem:[%s6976 + $0x40] sm:$0xff]
  %v7648 = vld [vmem:[%s6976 + $0x50] sm:$0xff]
  %v7649 = vld [vmem:[%s6976 + $0x60] sm:$0xff]
  %v7650 = vld [vmem:[%s6976 + $0x70] sm:$0xff]
  %v7651 = vld [vmem:[%s3 + $0x30] sm:$0xff]
  %v7652 = vld [vmem:[%s3 + $0x38] sm:$0xff]
  %v7654 = vsel %vm6653, %v7635, 0
  %v7657 = vsel %vm6653, %v7636, 0
  %v7660 = vsel %vm6653, %v7637, 0
  %v7663 = vsel %vm6653, %v7638, 0
  %v7666 = vsel %vm6653, %v7639, 0
  %v7669 = vsel %vm6653, %v7640, 0
  %v7672 = vsel %vm6653, %v7641, 0
  %v7675 = vsel %vm6653, %v7642, 0
  %v7678 = vsel %vm6653, %v7643, 0
  %v7681 = vsel %vm6653, %v7644, 0
  %v7684 = vsel %vm6653, %v7645, 0
  %v7687 = vsel %vm6653, %v7646, 0
  %v7690 = vsel %vm6653, %v7647, 0
  %v7693 = vsel %vm6653, %v7648, 0
  %v7696 = vsel %vm6653, %v7649, 0
  %v7699 = vsel %vm6653, %v7650, 0
  %7701 = vmatprep.subr.mxu0 0.0
  %7702 = vmatpush1.msra.mxu0 %v7651
  %7703 = vmatprep.subr.mxu0 0.0
  %7704 = vmatpush1.msra.mxu0 %v7652
  %7705 = vmatprep.subr.mxu0 0.0
  %7706 = vmatpush1.msra.mxu0 0.0
  %7707 = vmatprep.subr.mxu0 0.0
  %7708 = vmatpush1.msra.mxu0 0.0
  %7709 = vmatprep.subr.mxu0 0.0
  %7710 = vmatpush1.msra.mxu0 0.0
  %7711 = vmatprep.subr.mxu0 0.0
  %7712 = vmatpush1.msra.mxu0 0.0
  %7713 = vmatprep.subr.mxu0 0.0
  %7714 = vmatpush1.msra.mxu0 0.0
  %7715 = vmatprep.subr.mxu0 0.0
  %7716 = vmatpush1.msra.mxu0 0.0
  %7717 = vmatprep.subr.mxu0 0.0
  %7718 = vmatpush1.msra.mxu0 0.0
  %7719 = vmatprep.subr.mxu0 0.0
  %7720 = vmatpush1.msra.mxu0 0.0
  %7721 = vmatprep.subr.mxu0 0.0
  %7722 = vmatpush1.msra.mxu0 0.0
  %7723 = vmatprep.subr.mxu0 0.0
  %7724 = vmatpush1.msra.mxu0 0.0
  %7725 = vmatprep.subr.mxu0 0.0
  %7726 = vmatpush1.msra.mxu0 0.0
  %7727 = vmatprep.subr.mxu0 0.0
  %7728 = vmatpush1.msra.mxu0 0.0
  %7729 = vmatprep.subr.mxu0 0.0
  %7730 = vmatpush1.msra.mxu0 0.0
  %7731 = vmatprep.subr.mxu0 0.0
  %7732 = vmatpush1.msra.mxu0 0.0
  %7733 = vmatprep.subr.mxu0 0.0
  %7734 = vmatpush1.msra.mxu0 0.0
  %7735 = vmatprep.subr.mxu0 0.0
  %7736 = vmatpush1.msra.mxu0 0.0
  %7737 = vmatprep.subr.mxu0 0.0
  %7738 = vmatpush1.msra.mxu0 0.0
  %7739 = vmatprep.subr.mxu0 0.0
  %7740 = vmatpush1.msra.mxu0 0.0
  %7741 = vmatprep.subr.mxu0 0.0
  %7742 = vmatpush1.msra.mxu0 0.0
  %7743 = vmatprep.subr.mxu0 0.0
  %7744 = vmatpush1.msra.mxu0 0.0
  %7745 = vmatprep.subr.mxu0 0.0
  %7746 = vmatpush1.msra.mxu0 0.0
  %7747 = vmatprep.subr.mxu0 0.0
  %7748 = vmatpush1.msra.mxu0 0.0
  %7749 = vmatprep.subr.mxu0 0.0
  %7750 = vmatpush1.msra.mxu0 0.0
  %7751 = vmatprep.subr.mxu0 0.0
  %7752 = vmatpush1.msra.mxu0 0.0
  %7753 = vmatprep.subr.mxu0 0.0
  %7754 = vmatpush1.msra.mxu0 0.0
  %7755 = vmatprep.subr.mxu0 0.0
  %7756 = vmatpush1.msra.mxu0 0.0
  %7757 = vmatprep.subr.mxu0 0.0
  %7758 = vmatpush1.msra.mxu0 0.0
  %7759 = vmatprep.subr.mxu0 0.0
  %7760 = vmatpush1.msra.mxu0 0.0
  %7761 = vmatprep.subr.mxu0 0.0
  %7762 = vmatpush1.msra.mxu0 0.0
  %7763 = vmatprep.subr.mxu0 0.0
  %7764 = vmatpush1.msra.mxu0 0.0
  %7765 = vmatprep.mubr.f32.mxu0 0.0
  %7766 = vmatmul.mubr.f32.gmra.mrb[0].mxu0 %v7654
  %v7767 = vpop.f32.mrb[0].mxu0
  %v7768 = vadd.f32 0.0, %v7767
  %v7769 = vpop.f32.mrb[0].mxu0
  %7770 = vmatprep.mubr.f32.mxu0 0.0
  %7771 = vmatmul.mubr.f32.gmra.mrb[0].mxu0 %v7657
  %v7772 = vpop.f32.mrb[0].mxu0
  %v7773 = vadd.f32 0.0, %v7772
  %v7774 = vpop.f32.mrb[0].mxu0
  %7775 = vmatprep.mubr.f32.mxu0 0.0
  %7776 = vmatmul.mubr.f32.gmra.mrb[0].mxu0 %v7660
  %v7777 = vpop.f32.mrb[0].mxu0
  %v7778 = vadd.f32 0.0, %v7777
  %v7779 = vpop.f32.mrb[0].mxu0
  %7780 = vmatprep.mubr.f32.mxu0 0.0
  %7781 = vmatmul.mubr.f32.gmra.mrb[0].mxu0 %v7663
  %v7782 = vpop.f32.mrb[0].mxu0
  %v7783 = vadd.f32 0.0, %v7782
  %v7784 = vpop.f32.mrb[0].mxu0
  %7785 = vmatprep.mubr.f32.mxu0 0.0
  %7786 = vmatmul.mubr.f32.gmra.mrb[0].mxu0 %v7666
  %v7787 = vpop.f32.mrb[0].mxu0
  %v7788 = vadd.f32 0.0, %v7787
  %v7789 = vpop.f32.mrb[0].mxu0
  %7790 = vmatprep.mubr.f32.mxu0 0.0
  %7791 = vmatmul.mubr.f32.gmra.mrb[0].mxu0 %v7669
  %v7792 = vpop.f32.mrb[0].mxu0
  %v7793 = vadd.f32 0.0, %v7792
  %v7794 = vpop.f32.mrb[0].mxu0
  %7795 = vmatprep.mubr.f32.mxu0 0.0
  %7796 = vmatmul.mubr.f32.gmra.mrb[0].mxu0 %v7672
  %v7797 = vpop.f32.mrb[0].mxu0
  %v7798 = vadd.f32 0.0, %v7797
  %v7799 = vpop.f32.mrb[0].mxu0
  %7800 = vmatprep.mubr.f32.mxu0 0.0
  %7801 = vmatmul.mubr.f32.gmra.mrb[0].mxu0 %v7675
  %v7802 = vpop.f32.mrb[0].mxu0
  %v7803 = vadd.f32 0.0, %v7802
  %v7804 = vpop.f32.mrb[0].mxu0
  %7805 = vmatprep.mubr.f32.mxu0 0.0
  %7806 = vmatmul.mubr.f32.gmra.mrb[0].mxu0 %v7678
  %v7807 = vpop.f32.mrb[0].mxu0
  %v7808 = vadd.f32 0.0, %v7807
  %v7809 = vpop.f32.mrb[0].mxu0
  %7810 = vmatprep.mubr.f32.mxu0 0.0
  %7811 = vmatmul.mubr.f32.gmra.mrb[0].mxu0 %v7681
  %v7812 = vpop.f32.mrb[0].mxu0
  %v7813 = vadd.f32 0.0, %v7812
  %v7814 = vpop.f32.mrb[0].mxu0
  %7815 = vmatprep.mubr.f32.mxu0 0.0
  %7816 = vmatmul.mubr.f32.gmra.mrb[0].mxu0 %v7684
  %v7817 = vpop.f32.mrb[0].mxu0
  %v7818 = vadd.f32 0.0, %v7817
  %v7819 = vpop.f32.mrb[0].mxu0
  %7820 = vmatprep.mubr.f32.mxu0 0.0
  %7821 = vmatmul.mubr.f32.gmra.mrb[0].mxu0 %v7687
  %v7822 = vpop.f32.mrb[0].mxu0
  %v7823 = vadd.f32 0.0, %v7822
  %v7824 = vpop.f32.mrb[0].mxu0
  %7825 = vmatprep.mubr.f32.mxu0 0.0
  %7826 = vmatmul.mubr.f32.gmra.mrb[0].mxu0 %v7690
  %v7827 = vpop.f32.mrb[0].mxu0
  %v7828 = vadd.f32 0.0, %v7827
  %v7829 = vpop.f32.mrb[0].mxu0
  %7830 = vmatprep.mubr.f32.mxu0 0.0
  %7831 = vmatmul.mubr.f32.gmra.mrb[0].mxu0 %v7693
  %v7832 = vpop.f32.mrb[0].mxu0
  %v7833 = vadd.f32 0.0, %v7832
  %v7834 = vpop.f32.mrb[0].mxu0
  %7835 = vmatprep.mubr.f32.mxu0 0.0
  %7836 = vmatmul.mubr.f32.gmra.mrb[0].mxu0 %v7696
  %v7837 = vpop.f32.mrb[0].mxu0
  %v7838 = vadd.f32 0.0, %v7837
  %v7839 = vpop.f32.mrb[0].mxu0
  %7840 = vmatprep.mubr.f32.mxu0 0.0
  %7841 = vmatmul.mubr.f32.gmra.mrb[0].mxu0 %v7699
  %v7842 = vpop.f32.mrb[0].mxu0
  %v7843 = vadd.f32 0.0, %v7842
  %v7844 = vpop.f32.mrb[0].mxu0
  %7845 = vdwg.mxu0
  %v7846 = vadd.f32 %v7619, %v7768
  %v7847 = vadd.f32 %v7620, %v7773
  %v7848 = vadd.f32 %v7621, %v7778
  %v7849 = vadd.f32 %v7622, %v7783
  %v7850 = vadd.f32 %v7623, %v7788
  %v7851 = vadd.f32 %v7624, %v7793
  %v7852 = vadd.f32 %v7625, %v7798
  %v7853 = vadd.f32 %v7626, %v7803
  %v7854 = vadd.f32 %v7627, %v7808
  %v7855 = vadd.f32 %v7628, %v7813
  %v7856 = vadd.f32 %v7629, %v7818
  %v7857 = vadd.f32 %v7630, %v7823
  %v7858 = vadd.f32 %v7631, %v7828
  %v7859 = vadd.f32 %v7632, %v7833
  %v7860 = vadd.f32 %v7633, %v7838
  %v7861 = vadd.f32 %v7634, %v7843
  %v7862 = vld [vmem:[%s6967 + $0x1] sm:$0xff]
  %v7863 = vld [vmem:[%s6967 + $0x11] sm:$0xff]
  %v7864 = vld [vmem:[%s6967 + $0x21] sm:$0xff]
  %v7865 = vld [vmem:[%s6967 + $0x31] sm:$0xff]
  %v7866 = vld [vmem:[%s6967 + $0x41] sm:$0xff]
  %v7867 = vld [vmem:[%s6967 + $0x51] sm:$0xff]
  %v7868 = vld [vmem:[%s6967 + $0x61] sm:$0xff]
  %v7869 = vld [vmem:[%s6967 + $0x71] sm:$0xff]
  %v7870 = vld [vmem:[%s6976 + $0x1] sm:$0xff]
  %v7871 = vld [vmem:[%s6976 + $0x11] sm:$0xff]
  %v7872 = vld [vmem:[%s6976 + $0x21] sm:$0xff]
  %v7873 = vld [vmem:[%s6976 + $0x31] sm:$0xff]
  %v7874 = vld [vmem:[%s6976 + $0x41] sm:$0xff]
  %v7875 = vld [vmem:[%s6976 + $0x51] sm:$0xff]
  %v7876 = vld [vmem:[%s6976 + $0x61] sm:$0xff]
  %v7877 = vld [vmem:[%s6976 + $0x71] sm:$0xff]
  %v7878 = vld [vmem:[%s3 + $0x40] sm:$0xff]
  %v7879 = vld [vmem:[%s3 + $0x48] sm:$0xff]
  %v7881 = vsel %vm6653, %v7862, 0
  %v7884 = vsel %vm6653, %v7863, 0
  %v7887 = vsel %vm6653, %v7864, 0
  %v7890 = vsel %vm6653, %v7865, 0
  %v7893 = vsel %vm6653, %v7866, 0
  %v7896 = vsel %vm6653, %v7867, 0
  %v7899 = vsel %vm6653, %v7868, 0
  %v7902 = vsel %vm6653, %v7869, 0
  %v7905 = vsel %vm6653, %v7870, 0
  %v7908 = vsel %vm6653, %v7871, 0
  %v7911 = vsel %vm6653, %v7872, 0
  %v7914 = vsel %vm6653, %v7873, 0
  %v7917 = vsel %vm6653, %v7874, 0
  %v7920 = vsel %vm6653, %v7875, 0
  %v7923 = vsel %vm6653, %v7876, 0
  %v7926 = vsel %vm6653, %v7877, 0
  %7928 = vmatprep.subr.mxu0 0.0
  %7929 = vmatpush1.msra.mxu0 %v7878
  %7930 = vmatprep.subr.mxu0 0.0
  %7931 = vmatpush1.msra.mxu0 %v7879
  %7932 = vmatprep.subr.mxu0 0.0
  %7933 = vmatpush1.msra.mxu0 0.0
  %7934 = vmatprep.subr.mxu0 0.0
  %7935 = vmatpush1.msra.mxu0 0.0
  %7936 = vmatprep.subr.mxu0 0.0
  %7937 = vmatpush1.msra.mxu0 0.0
  %7938 = vmatprep.subr.mxu0 0.0
  %7939 = vmatpush1.msra.mxu0 0.0
  %7940 = vmatprep.subr.mxu0 0.0
  %7941 = vmatpush1.msra.mxu0 0.0
  %7942 = vmatprep.subr.mxu0 0.0
  %7943 = vmatpush1.msra.mxu0 0.0
  %7944 = vmatprep.subr.mxu0 0.0
  %7945 = vmatpush1.msra.mxu0 0.0
  %7946 = vmatprep.subr.mxu0 0.0
  %7947 = vmatpush1.msra.mxu0 0.0
  %7948 = vmatprep.subr.mxu0 0.0
  %7949 = vmatpush1.msra.mxu0 0.0
  %7950 = vmatprep.subr.mxu0 0.0
  %7951 = vmatpush1.msra.mxu0 0.0
  %7952 = vmatprep.subr.mxu0 0.0
  %7953 = vmatpush1.msra.mxu0 0.0
  %7954 = vmatprep.subr.mxu0 0.0
  %7955 = vmatpush1.msra.mxu0 0.0
  %7956 = vmatprep.subr.mxu0 0.0
  %7957 = vmatpush1.msra.mxu0 0.0
  %7958 = vmatprep.subr.mxu0 0.0
  %7959 = vmatpush1.msra.mxu0 0.0
  %7960 = vmatprep.subr.mxu0 0.0
  %7961 = vmatpush1.msra.mxu0 0.0
  %7962 = vmatprep.subr.mxu0 0.0
  %7963 = vmatpush1.msra.mxu0 0.0
  %7964 = vmatprep.subr.mxu0 0.0
  %7965 = vmatpush1.msra.mxu0 0.0
  %7966 = vmatprep.subr.mxu0 0.0
  %7967 = vmatpush1.msra.mxu0 0.0
  %7968 = vmatprep.subr.mxu0 0.0
  %7969 = vmatpush1.msra.mxu0 0.0
  %7970 = vmatprep.subr.mxu0 0.0
  %7971 = vmatpush1.msra.mxu0 0.0
  %7972 = vmatprep.subr.mxu0 0.0
  %7973 = vmatpush1.msra.mxu0 0.0
  %7974 = vmatprep.subr.mxu0 0.0
  %7975 = vmatpush1.msra.mxu0 0.0
  %7976 = vmatprep.subr.mxu0 0.0
  %7977 = vmatpush1.msra.mxu0 0.0
  %7978 = vmatprep.subr.mxu0 0.0
  %7979 = vmatpush1.msra.mxu0 0.0
  %7980 = vmatprep.subr.mxu0 0.0
  %7981 = vmatpush1.msra.mxu0 0.0
  %7982 = vmatprep.subr.mxu0 0.0
  %7983 = vmatpush1.msra.mxu0 0.0
  %7984 = vmatprep.subr.mxu0 0.0
  %7985 = vmatpush1.msra.mxu0 0.0
  %7986 = vmatprep.subr.mxu0 0.0
  %7987 = vmatpush1.msra.mxu0 0.0
  %7988 = vmatprep.subr.mxu0 0.0
  %7989 = vmatpush1.msra.mxu0 0.0
  %7990 = vmatprep.subr.mxu0 0.0
  %7991 = vmatpush1.msra.mxu0 0.0
  %7992 = vmatprep.mubr.f32.mxu0 0.0
  %7993 = vmatmul.mubr.f32.gmra.mrb[0].mxu0 %v7881
  %v7994 = vpop.f32.mrb[0].mxu0
  %v7995 = vadd.f32 0.0, %v7994
  %v7996 = vpop.f32.mrb[0].mxu0
  %7997 = vmatprep.mubr.f32.mxu0 0.0
  %7998 = vmatmul.mubr.f32.gmra.mrb[0].mxu0 %v7884
  %v7999 = vpop.f32.mrb[0].mxu0
  %v8000 = vadd.f32 0.0, %v7999
  %v8001 = vpop.f32.mrb[0].mxu0
  %8002 = vmatprep.mubr.f32.mxu0 0.0
  %8003 = vmatmul.mubr.f32.gmra.mrb[0].mxu0 %v7887
  %v8004 = vpop.f32.mrb[0].mxu0
  %v8005 = vadd.f32 0.0, %v8004
  %v8006 = vpop.f32.mrb[0].mxu0
  %8007 = vmatprep.mubr.f32.mxu0 0.0
  %8008 = vmatmul.mubr.f32.gmra.mrb[0].mxu0 %v7890
  %v8009 = vpop.f32.mrb[0].mxu0
  %v8010 = vadd.f32 0.0, %v8009
  %v8011 = vpop.f32.mrb[0].mxu0
  %8012 = vmatprep.mubr.f32.mxu0 0.0
  %8013 = vmatmul.mubr.f32.gmra.mrb[0].mxu0 %v7893
  %v8014 = vpop.f32.mrb[0].mxu0
  %v8015 = vadd.f32 0.0, %v8014
  %v8016 = vpop.f32.mrb[0].mxu0
  %8017 = vmatprep.mubr.f32.mxu0 0.0
  %8018 = vmatmul.mubr.f32.gmra.mrb[0].mxu0 %v7896
  %v8019 = vpop.f32.mrb[0].mxu0
  %v8020 = vadd.f32 0.0, %v8019
  %v8021 = vpop.f32.mrb[0].mxu0
  %8022 = vmatprep.mubr.f32.mxu0 0.0
  %8023 = vmatmul.mubr.f32.gmra.mrb[0].mxu0 %v7899
  %v8024 = vpop.f32.mrb[0].mxu0
  %v8025 = vadd.f32 0.0, %v8024
  %v8026 = vpop.f32.mrb[0].mxu0
  %8027 = vmatprep.mubr.f32.mxu0 0.0
  %8028 = vmatmul.mubr.f32.gmra.mrb[0].mxu0 %v7902
  %v8029 = vpop.f32.mrb[0].mxu0
  %v8030 = vadd.f32 0.0, %v8029
  %v8031 = vpop.f32.mrb[0].mxu0
  %8032 = vmatprep.mubr.f32.mxu0 0.0
  %8033 = vmatmul.mubr.f32.gmra.mrb[0].mxu0 %v7905
  %v8034 = vpop.f32.mrb[0].mxu0
  %v8035 = vadd.f32 0.0, %v8034
  %v8036 = vpop.f32.mrb[0].mxu0
  %8037 = vmatprep.mubr.f32.mxu0 0.0
  %8038 = vmatmul.mubr.f32.gmra.mrb[0].mxu0 %v7908
  %v8039 = vpop.f32.mrb[0].mxu0
  %v8040 = vadd.f32 0.0, %v8039
  %v8041 = vpop.f32.mrb[0].mxu0
  %8042 = vmatprep.mubr.f32.mxu0 0.0
  %8043 = vmatmul.mubr.f32.gmra.mrb[0].mxu0 %v7911
  %v8044 = vpop.f32.mrb[0].mxu0
  %v8045 = vadd.f32 0.0, %v8044
  %v8046 = vpop.f32.mrb[0].mxu0
  %8047 = vmatprep.mubr.f32.mxu0 0.0
  %8048 = vmatmul.mubr.f32.gmra.mrb[0].mxu0 %v7914
  %v8049 = vpop.f32.mrb[0].mxu0
  %v8050 = vadd.f32 0.0, %v8049
  %v8051 = vpop.f32.mrb[0].mxu0
  %8052 = vmatprep.mubr.f32.mxu0 0.0
  %8053 = vmatmul.mubr.f32.gmra.mrb[0].mxu0 %v7917
  %v8054 = vpop.f32.mrb[0].mxu0
  %v8055 = vadd.f32 0.0, %v8054
  %v8056 = vpop.f32.mrb[0].mxu0
  %8057 = vmatprep.mubr.f32.mxu0 0.0
  %8058 = vmatmul.mubr.f32.gmra.mrb[0].mxu0 %v7920
  %v8059 = vpop.f32.mrb[0].mxu0
  %v8060 = vadd.f32 0.0, %v8059
  %v8061 = vpop.f32.mrb[0].mxu0
  %8062 = vmatprep.mubr.f32.mxu0 0.0
  %8063 = vmatmul.mubr.f32.gmra.mrb[0].mxu0 %v7923
  %v8064 = vpop.f32.mrb[0].mxu0
  %v8065 = vadd.f32 0.0, %v8064
  %v8066 = vpop.f32.mrb[0].mxu0
  %8067 = vmatprep.mubr.f32.mxu0 0.0
  %8068 = vmatmul.mubr.f32.gmra.mrb[0].mxu0 %v7926
  %v8069 = vpop.f32.mrb[0].mxu0
  %v8070 = vadd.f32 0.0, %v8069
  %v8071 = vpop.f32.mrb[0].mxu0
  %8072 = vdwg.mxu0
  %v8073 = vadd.f32 %v7846, %v7995
  %v8074 = vadd.f32 %v7847, %v8000
  %v8075 = vadd.f32 %v7848, %v8005
  %v8076 = vadd.f32 %v7849, %v8010
  %v8077 = vadd.f32 %v7850, %v8015
  %v8078 = vadd.f32 %v7851, %v8020
  %v8079 = vadd.f32 %v7852, %v8025
  %v8080 = vadd.f32 %v7853, %v8030
  %v8081 = vadd.f32 %v7854, %v8035
  %v8082 = vadd.f32 %v7855, %v8040
  %v8083 = vadd.f32 %v7856, %v8045
  %v8084 = vadd.f32 %v7857, %v8050
  %v8085 = vadd.f32 %v7858, %v8055
  %v8086 = vadd.f32 %v7859, %v8060
  %v8087 = vadd.f32 %v7860, %v8065
  %v8088 = vadd.f32 %v7861, %v8070
  %v8089 = vld [vmem:[%s6967 + $0x2] sm:$0xff]
  %v8090 = vld [vmem:[%s6967 + $0x12] sm:$0xff]
  %v8091 = vld [vmem:[%s6967 + $0x22] sm:$0xff]
  %v8092 = vld [vmem:[%s6967 + $0x32] sm:$0xff]
  %v8093 = vld [vmem:[%s6967 + $0x42] sm:$0xff]
  %v8094 = vld [vmem:[%s6967 + $0x52] sm:$0xff]
  %v8095 = vld [vmem:[%s6967 + $0x62] sm:$0xff]
  %v8096 = vld [vmem:[%s6967 + $0x72] sm:$0xff]
  %v8097 = vld [vmem:[%s6976 + $0x2] sm:$0xff]
  %v8098 = vld [vmem:[%s6976 + $0x12] sm:$0xff]
  %v8099 = vld [vmem:[%s6976 + $0x22] sm:$0xff]
  %v8100 = vld [vmem:[%s6976 + $0x32] sm:$0xff]
  %v8101 = vld [vmem:[%s6976 + $0x42] sm:$0xff]
  %v8102 = vld [vmem:[%s6976 + $0x52] sm:$0xff]
  %v8103 = vld [vmem:[%s6976 + $0x62] sm:$0xff]
  %v8104 = vld [vmem:[%s6976 + $0x72] sm:$0xff]
  %v8105 = vld [vmem:[%s3 + $0x50] sm:$0xff]
  %v8106 = vld [vmem:[%s3 + $0x58] sm:$0xff]
  %v8108 = vsel %vm6653, %v8089, 0
  %v8111 = vsel %vm6653, %v8090, 0
  %v8114 = vsel %vm6653, %v8091, 0
  %v8117 = vsel %vm6653, %v8092, 0
  %v8120 = vsel %vm6653, %v8093, 0
  %v8123 = vsel %vm6653, %v8094, 0
  %v8126 = vsel %vm6653, %v8095, 0
  %v8129 = vsel %vm6653, %v8096, 0
  %v8132 = vsel %vm6653, %v8097, 0
  %v8135 = vsel %vm6653, %v8098, 0
  %v8138 = vsel %vm6653, %v8099, 0
  %v8141 = vsel %vm6653, %v8100, 0
  %v8144 = vsel %vm6653, %v8101, 0
  %v8147 = vsel %vm6653, %v8102, 0
  %v8150 = vsel %vm6653, %v8103, 0
  %v8153 = vsel %vm6653, %v8104, 0
  %8155 = vmatprep.subr.mxu0 0.0
  %8156 = vmatpush1.msra.mxu0 %v8105
  %8157 = vmatprep.subr.mxu0 0.0
  %8158 = vmatpush1.msra.mxu0 %v8106
  %8159 = vmatprep.subr.mxu0 0.0
  %8160 = vmatpush1.msra.mxu0 0.0
  %8161 = vmatprep.subr.mxu0 0.0
  %8162 = vmatpush1.msra.mxu0 0.0
  %8163 = vmatprep.subr.mxu0 0.0
  %8164 = vmatpush1.msra.mxu0 0.0
  %8165 = vmatprep.subr.mxu0 0.0
  %8166 = vmatpush1.msra.mxu0 0.0
  %8167 = vmatprep.subr.mxu0 0.0
  %8168 = vmatpush1.msra.mxu0 0.0
  %8169 = vmatprep.subr.mxu0 0.0
  %8170 = vmatpush1.msra.mxu0 0.0
  %8171 = vmatprep.subr.mxu0 0.0
  %8172 = vmatpush1.msra.mxu0 0.0
  %8173 = vmatprep.subr.mxu0 0.0
  %8174 = vmatpush1.msra.mxu0 0.0
  %8175 = vmatprep.subr.mxu0 0.0
  %8176 = vmatpush1.msra.mxu0 0.0
  %8177 = vmatprep.subr.mxu0 0.0
  %8178 = vmatpush1.msra.mxu0 0.0
  %8179 = vmatprep.subr.mxu0 0.0
  %8180 = vmatpush1.msra.mxu0 0.0
  %8181 = vmatprep.subr.mxu0 0.0
  %8182 = vmatpush1.msra.mxu0 0.0
  %8183 = vmatprep.subr.mxu0 0.0
  %8184 = vmatpush1.msra.mxu0 0.0
  %8185 = vmatprep.subr.mxu0 0.0
  %8186 = vmatpush1.msra.mxu0 0.0
  %8187 = vmatprep.subr.mxu0 0.0
  %8188 = vmatpush1.msra.mxu0 0.0
  %8189 = vmatprep.subr.mxu0 0.0
  %8190 = vmatpush1.msra.mxu0 0.0
  %8191 = vmatprep.subr.mxu0 0.0
  %8192 = vmatpush1.msra.mxu0 0.0
  %8193 = vmatprep.subr.mxu0 0.0
  %8194 = vmatpush1.msra.mxu0 0.0
  %8195 = vmatprep.subr.mxu0 0.0
  %8196 = vmatpush1.msra.mxu0 0.0
  %8197 = vmatprep.subr.mxu0 0.0
  %8198 = vmatpush1.msra.mxu0 0.0
  %8199 = vmatprep.subr.mxu0 0.0
  %8200 = vmatpush1.msra.mxu0 0.0
  %8201 = vmatprep.subr.mxu0 0.0
  %8202 = vmatpush1.msra.mxu0 0.0
  %8203 = vmatprep.subr.mxu0 0.0
  %8204 = vmatpush1.msra.mxu0 0.0
  %8205 = vmatprep.subr.mxu0 0.0
  %8206 = vmatpush1.msra.mxu0 0.0
  %8207 = vmatprep.subr.mxu0 0.0
  %8208 = vmatpush1.msra.mxu0 0.0
  %8209 = vmatprep.subr.mxu0 0.0
  %8210 = vmatpush1.msra.mxu0 0.0
  %8211 = vmatprep.subr.mxu0 0.0
  %8212 = vmatpush1.msra.mxu0 0.0
  %8213 = vmatprep.subr.mxu0 0.0
  %8214 = vmatpush1.msra.mxu0 0.0
  %8215 = vmatprep.subr.mxu0 0.0
  %8216 = vmatpush1.msra.mxu0 0.0
  %8217 = vmatprep.subr.mxu0 0.0
  %8218 = vmatpush1.msra.mxu0 0.0
  %8219 = vmatprep.mubr.f32.mxu0 0.0
  %8220 = vmatmul.mubr.f32.gmra.mrb[0].mxu0 %v8108
  %v8221 = vpop.f32.mrb[0].mxu0
  %v8222 = vadd.f32 0.0, %v8221
  %v8223 = vpop.f32.mrb[0].mxu0
  %8224 = vmatprep.mubr.f32.mxu0 0.0
  %8225 = vmatmul.mubr.f32.gmra.mrb[0].mxu0 %v8111
  %v8226 = vpop.f32.mrb[0].mxu0
  %v8227 = vadd.f32 0.0, %v8226
  %v8228 = vpop.f32.mrb[0].mxu0
  %8229 = vmatprep.mubr.f32.mxu0 0.0
  %8230 = vmatmul.mubr.f32.gmra.mrb[0].mxu0 %v8114
  %v8231 = vpop.f32.mrb[0].mxu0
  %v8232 = vadd.f32 0.0, %v8231
  %v8233 = vpop.f32.mrb[0].mxu0
  %8234 = vmatprep.mubr.f32.mxu0 0.0
  %8235 = vmatmul.mubr.f32.gmra.mrb[0].mxu0 %v8117
  %v8236 = vpop.f32.mrb[0].mxu0
  %v8237 = vadd.f32 0.0, %v8236
  %v8238 = vpop.f32.mrb[0].mxu0
  %8239 = vmatprep.mubr.f32.mxu0 0.0
  %8240 = vmatmul.mubr.f32.gmra.mrb[0].mxu0 %v8120
  %v8241 = vpop.f32.mrb[0].mxu0
  %v8242 = vadd.f32 0.0, %v8241
  %v8243 = vpop.f32.mrb[0].mxu0
  %8244 = vmatprep.mubr.f32.mxu0 0.0
  %8245 = vmatmul.mubr.f32.gmra.mrb[0].mxu0 %v8123
  %v8246 = vpop.f32.mrb[0].mxu0
  %v8247 = vadd.f32 0.0, %v8246
  %v8248 = vpop.f32.mrb[0].mxu0
  %8249 = vmatprep.mubr.f32.mxu0 0.0
  %8250 = vmatmul.mubr.f32.gmra.mrb[0].mxu0 %v8126
  %v8251 = vpop.f32.mrb[0].mxu0
  %v8252 = vadd.f32 0.0, %v8251
  %v8253 = vpop.f32.mrb[0].mxu0
  %8254 = vmatprep.mubr.f32.mxu0 0.0
  %8255 = vmatmul.mubr.f32.gmra.mrb[0].mxu0 %v8129
  %v8256 = vpop.f32.mrb[0].mxu0
  %v8257 = vadd.f32 0.0, %v8256
  %v8258 = vpop.f32.mrb[0].mxu0
  %8259 = vmatprep.mubr.f32.mxu0 0.0
  %8260 = vmatmul.mubr.f32.gmra.mrb[0].mxu0 %v8132
  %v8261 = vpop.f32.mrb[0].mxu0
  %v8262 = vadd.f32 0.0, %v8261
  %v8263 = vpop.f32.mrb[0].mxu0
  %8264 = vmatprep.mubr.f32.mxu0 0.0
  %8265 = vmatmul.mubr.f32.gmra.mrb[0].mxu0 %v8135
  %v8266 = vpop.f32.mrb[0].mxu0
  %v8267 = vadd.f32 0.0, %v8266
  %v8268 = vpop.f32.mrb[0].mxu0
  %8269 = vmatprep.mubr.f32.mxu0 0.0
  %8270 = vmatmul.mubr.f32.gmra.mrb[0].mxu0 %v8138
  %v8271 = vpop.f32.mrb[0].mxu0
  %v8272 = vadd.f32 0.0, %v8271
  %v8273 = vpop.f32.mrb[0].mxu0
  %8274 = vmatprep.mubr.f32.mxu0 0.0
  %8275 = vmatmul.mubr.f32.gmra.mrb[0].mxu0 %v8141
  %v8276 = vpop.f32.mrb[0].mxu0
  %v8277 = vadd.f32 0.0, %v8276
  %v8278 = vpop.f32.mrb[0].mxu0
  %8279 = vmatprep.mubr.f32.mxu0 0.0
  %8280 = vmatmul.mubr.f32.gmra.mrb[0].mxu0 %v8144
  %v8281 = vpop.f32.mrb[0].mxu0
  %v8282 = vadd.f32 0.0, %v8281
  %v8283 = vpop.f32.mrb[0].mxu0
  %8284 = vmatprep.mubr.f32.mxu0 0.0
  %8285 = vmatmul.mubr.f32.gmra.mrb[0].mxu0 %v8147
  %v8286 = vpop.f32.mrb[0].mxu0
  %v8287 = vadd.f32 0.0, %v8286
  %v8288 = vpop.f32.mrb[0].mxu0
  %8289 = vmatprep.mubr.f32.mxu0 0.0
  %8290 = vmatmul.mubr.f32.gmra.mrb[0].mxu0 %v8150
  %v8291 = vpop.f32.mrb[0].mxu0
  %v8292 = vadd.f32 0.0, %v8291
  %v8293 = vpop.f32.mrb[0].mxu0
  %8294 = vmatprep.mubr.f32.mxu0 0.0
  %8295 = vmatmul.mubr.f32.gmra.mrb[0].mxu0 %v8153
  %v8296 = vpop.f32.mrb[0].mxu0
  %v8297 = vadd.f32 0.0, %v8296
  %v8298 = vpop.f32.mrb[0].mxu0
  %8299 = vdwg.mxu0
  %v8300 = vadd.f32 %v8073, %v8222
  %v8301 = vadd.f32 %v8074, %v8227
  %v8302 = vadd.f32 %v8075, %v8232
  %v8303 = vadd.f32 %v8076, %v8237
  %v8304 = vadd.f32 %v8077, %v8242
  %v8305 = vadd.f32 %v8078, %v8247
  %v8306 = vadd.f32 %v8079, %v8252
  %v8307 = vadd.f32 %v8080, %v8257
  %v8308 = vadd.f32 %v8081, %v8262
  %v8309 = vadd.f32 %v8082, %v8267
  %v8310 = vadd.f32 %v8083, %v8272
  %v8311 = vadd.f32 %v8084, %v8277
  %v8312 = vadd.f32 %v8085, %v8282
  %v8313 = vadd.f32 %v8086, %v8287
  %v8314 = vadd.f32 %v8087, %v8292
  %v8315 = vadd.f32 %v8088, %v8297
  %s8316 = scalar_lea.vmem [#allocation5], 32
  %v8317 = vld [vmem:[%s8316] sm:$0xff]
  %v8318 = vld [vmem:[%s8316 + $0x10] sm:$0xff]
  %v8319 = vld [vmem:[%s8316 + $0x20] sm:$0xff]
  %v8320 = vld [vmem:[%s8316 + $0x30] sm:$0xff]
  %v8321 = vld [vmem:[%s8316 + $0x40] sm:$0xff]
  %v8322 = vld [vmem:[%s8316 + $0x50] sm:$0xff]
  %v8323 = vld [vmem:[%s8316 + $0x60] sm:$0xff]
  %v8324 = vld [vmem:[%s8316 + $0x70] sm:$0xff]
  %s8325 = scalar_lea.vmem [#allocation5], 192
  %v8326 = vld [vmem:[%s8325] sm:$0xff]
  %v8327 = vld [vmem:[%s8325 + $0x10] sm:$0xff]
  %v8328 = vld [vmem:[%s8325 + $0x20] sm:$0xff]
  %v8329 = vld [vmem:[%s8325 + $0x30] sm:$0xff]
  %v8330 = vld [vmem:[%s8325 + $0x40] sm:$0xff]
  %v8331 = vld [vmem:[%s8325 + $0x50] sm:$0xff]
  %v8332 = vld [vmem:[%s8325 + $0x60] sm:$0xff]
  %v8333 = vld [vmem:[%s8325 + $0x70] sm:$0xff]
  %v8334 = vld [vmem:[%s3 + $0x60] sm:$0xff]
  %v8335 = vld [vmem:[%s3 + $0x68] sm:$0xff]
  %v8337 = vsel %vm6653, %v8317, 0
  %v8340 = vsel %vm6653, %v8318, 0
  %v8343 = vsel %vm6653, %v8319, 0
  %v8346 = vsel %vm6653, %v8320, 0
  %v8349 = vsel %vm6653, %v8321, 0
  %v8352 = vsel %vm6653, %v8322, 0
  %v8355 = vsel %vm6653, %v8323, 0
  %v8358 = vsel %vm6653, %v8324, 0
  %v8361 = vsel %vm6653, %v8326, 0
  %v8364 = vsel %vm6653, %v8327, 0
  %v8367 = vsel %vm6653, %v8328, 0
  %v8370 = vsel %vm6653, %v8329, 0
  %v8373 = vsel %vm6653, %v8330, 0
  %v8376 = vsel %vm6653, %v8331, 0
  %v8379 = vsel %vm6653, %v8332, 0
  %v8382 = vsel %vm6653, %v8333, 0
  %8384 = vmatprep.subr.mxu0 0.0
  %8385 = vmatpush1.msra.mxu0 %v8334
  %8386 = vmatprep.subr.mxu0 0.0
  %8387 = vmatpush1.msra.mxu0 %v8335
  %8388 = vmatprep.subr.mxu0 0.0
  %8389 = vmatpush1.msra.mxu0 0.0
  %8390 = vmatprep.subr.mxu0 0.0
  %8391 = vmatpush1.msra.mxu0 0.0
  %8392 = vmatprep.subr.mxu0 0.0
  %8393 = vmatpush1.msra.mxu0 0.0
  %8394 = vmatprep.subr.mxu0 0.0
  %8395 = vmatpush1.msra.mxu0 0.0
  %8396 = vmatprep.subr.mxu0 0.0
  %8397 = vmatpush1.msra.mxu0 0.0
  %8398 = vmatprep.subr.mxu0 0.0
  %8399 = vmatpush1.msra.mxu0 0.0
  %8400 = vmatprep.subr.mxu0 0.0
  %8401 = vmatpush1.msra.mxu0 0.0
  %8402 = vmatprep.subr.mxu0 0.0
  %8403 = vmatpush1.msra.mxu0 0.0
  %8404 = vmatprep.subr.mxu0 0.0
  %8405 = vmatpush1.msra.mxu0 0.0
  %8406 = vmatprep.subr.mxu0 0.0
  %8407 = vmatpush1.msra.mxu0 0.0
  %8408 = vmatprep.subr.mxu0 0.0
  %8409 = vmatpush1.msra.mxu0 0.0
  %8410 = vmatprep.subr.mxu0 0.0
  %8411 = vmatpush1.msra.mxu0 0.0
  %8412 = vmatprep.subr.mxu0 0.0
  %8413 = vmatpush1.msra.mxu0 0.0
  %8414 = vmatprep.subr.mxu0 0.0
  %8415 = vmatpush1.msra.mxu0 0.0
  %8416 = vmatprep.subr.mxu0 0.0
  %8417 = vmatpush1.msra.mxu0 0.0
  %8418 = vmatprep.subr.mxu0 0.0
  %8419 = vmatpush1.msra.mxu0 0.0
  %8420 = vmatprep.subr.mxu0 0.0
  %8421 = vmatpush1.msra.mxu0 0.0
  %8422 = vmatprep.subr.mxu0 0.0
  %8423 = vmatpush1.msra.mxu0 0.0
  %8424 = vmatprep.subr.mxu0 0.0
  %8425 = vmatpush1.msra.mxu0 0.0
  %8426 = vmatprep.subr.mxu0 0.0
  %8427 = vmatpush1.msra.mxu0 0.0
  %8428 = vmatprep.subr.mxu0 0.0
  %8429 = vmatpush1.msra.mxu0 0.0
  %8430 = vmatprep.subr.mxu0 0.0
  %8431 = vmatpush1.msra.mxu0 0.0
  %8432 = vmatprep.subr.mxu0 0.0
  %8433 = vmatpush1.msra.mxu0 0.0
  %8434 = vmatprep.subr.mxu0 0.0
  %8435 = vmatpush1.msra.mxu0 0.0
  %8436 = vmatprep.subr.mxu0 0.0
  %8437 = vmatpush1.msra.mxu0 0.0
  %8438 = vmatprep.subr.mxu0 0.0
  %8439 = vmatpush1.msra.mxu0 0.0
  %8440 = vmatprep.subr.mxu0 0.0
  %8441 = vmatpush1.msra.mxu0 0.0
  %8442 = vmatprep.subr.mxu0 0.0
  %8443 = vmatpush1.msra.mxu0 0.0
  %8444 = vmatprep.subr.mxu0 0.0
  %8445 = vmatpush1.msra.mxu0 0.0
  %8446 = vmatprep.subr.mxu0 0.0
  %8447 = vmatpush1.msra.mxu0 0.0
  %8448 = vmatprep.mubr.f32.mxu0 0.0
  %8449 = vmatmul.mubr.f32.gmra.mrb[0].mxu0 %v8337
  %v8450 = vpop.f32.mrb[0].mxu0
  %v8451 = vadd.f32 0.0, %v8450
  %v8452 = vpop.f32.mrb[0].mxu0
  %8453 = vmatprep.mubr.f32.mxu0 0.0
  %8454 = vmatmul.mubr.f32.gmra.mrb[0].mxu0 %v8340
  %v8455 = vpop.f32.mrb[0].mxu0
  %v8456 = vadd.f32 0.0, %v8455
  %v8457 = vpop.f32.mrb[0].mxu0
  %8458 = vmatprep.mubr.f32.mxu0 0.0
  %8459 = vmatmul.mubr.f32.gmra.mrb[0].mxu0 %v8343
  %v8460 = vpop.f32.mrb[0].mxu0
  %v8461 = vadd.f32 0.0, %v8460
  %v8462 = vpop.f32.mrb[0].mxu0
  %8463 = vmatprep.mubr.f32.mxu0 0.0
  %8464 = vmatmul.mubr.f32.gmra.mrb[0].mxu0 %v8346
  %v8465 = vpop.f32.mrb[0].mxu0
  %v8466 = vadd.f32 0.0, %v8465
  %v8467 = vpop.f32.mrb[0].mxu0
  %8468 = vmatprep.mubr.f32.mxu0 0.0
  %8469 = vmatmul.mubr.f32.gmra.mrb[0].mxu0 %v8349
  %v8470 = vpop.f32.mrb[0].mxu0
  %v8471 = vadd.f32 0.0, %v8470
  %v8472 = vpop.f32.mrb[0].mxu0
  %8473 = vmatprep.mubr.f32.mxu0 0.0
  %8474 = vmatmul.mubr.f32.gmra.mrb[0].mxu0 %v8352
  %v8475 = vpop.f32.mrb[0].mxu0
  %v8476 = vadd.f32 0.0, %v8475
  %v8477 = vpop.f32.mrb[0].mxu0
  %8478 = vmatprep.mubr.f32.mxu0 0.0
  %8479 = vmatmul.mubr.f32.gmra.mrb[0].mxu0 %v8355
  %v8480 = vpop.f32.mrb[0].mxu0
  %v8481 = vadd.f32 0.0, %v8480
  %v8482 = vpop.f32.mrb[0].mxu0
  %8483 = vmatprep.mubr.f32.mxu0 0.0
  %8484 = vmatmul.mubr.f32.gmra.mrb[0].mxu0 %v8358
  %v8485 = vpop.f32.mrb[0].mxu0
  %v8486 = vadd.f32 0.0, %v8485
  %v8487 = vpop.f32.mrb[0].mxu0
  %8488 = vmatprep.mubr.f32.mxu0 0.0
  %8489 = vmatmul.mubr.f32.gmra.mrb[0].mxu0 %v8361
  %v8490 = vpop.f32.mrb[0].mxu0
  %v8491 = vadd.f32 0.0, %v8490
  %v8492 = vpop.f32.mrb[0].mxu0
  %8493 = vmatprep.mubr.f32.mxu0 0.0
  %8494 = vmatmul.mubr.f32.gmra.mrb[0].mxu0 %v8364
  %v8495 = vpop.f32.mrb[0].mxu0
  %v8496 = vadd.f32 0.0, %v8495
  %v8497 = vpop.f32.mrb[0].mxu0
  %8498 = vmatprep.mubr.f32.mxu0 0.0
  %8499 = vmatmul.mubr.f32.gmra.mrb[0].mxu0 %v8367
  %v8500 = vpop.f32.mrb[0].mxu0
  %v8501 = vadd.f32 0.0, %v8500
  %v8502 = vpop.f32.mrb[0].mxu0
  %8503 = vmatprep.mubr.f32.mxu0 0.0
  %8504 = vmatmul.mubr.f32.gmra.mrb[0].mxu0 %v8370
  %v8505 = vpop.f32.mrb[0].mxu0
  %v8506 = vadd.f32 0.0, %v8505
  %v8507 = vpop.f32.mrb[0].mxu0
  %8508 = vmatprep.mubr.f32.mxu0 0.0
  %8509 = vmatmul.mubr.f32.gmra.mrb[0].mxu0 %v8373
  %v8510 = vpop.f32.mrb[0].mxu0
  %v8511 = vadd.f32 0.0, %v8510
  %v8512 = vpop.f32.mrb[0].mxu0
  %8513 = vmatprep.mubr.f32.mxu0 0.0
  %8514 = vmatmul.mubr.f32.gmra.mrb[0].mxu0 %v8376
  %v8515 = vpop.f32.mrb[0].mxu0
  %v8516 = vadd.f32 0.0, %v8515
  %v8517 = vpop.f32.mrb[0].mxu0
  %8518 = vmatprep.mubr.f32.mxu0 0.0
  %8519 = vmatmul.mubr.f32.gmra.mrb[0].mxu0 %v8379
  %v8520 = vpop.f32.mrb[0].mxu0
  %v8521 = vadd.f32 0.0, %v8520
  %v8522 = vpop.f32.mrb[0].mxu0
  %8523 = vmatprep.mubr.f32.mxu0 0.0
  %8524 = vmatmul.mubr.f32.gmra.mrb[0].mxu0 %v8382
  %v8525 = vpop.f32.mrb[0].mxu0
  %v8526 = vadd.f32 0.0, %v8525
  %v8527 = vpop.f32.mrb[0].mxu0
  %8528 = vdwg.mxu0
  %v8529 = vadd.f32 %v8300, %v8451
  %v8530 = vadd.f32 %v8301, %v8456
  %v8531 = vadd.f32 %v8302, %v8461
  %v8532 = vadd.f32 %v8303, %v8466
  %v8533 = vadd.f32 %v8304, %v8471
  %v8534 = vadd.f32 %v8305, %v8476
  %v8535 = vadd.f32 %v8306, %v8481
  %v8536 = vadd.f32 %v8307, %v8486
  %v8537 = vadd.f32 %v8308, %v8491
  %v8538 = vadd.f32 %v8309, %v8496
  %v8539 = vadd.f32 %v8310, %v8501
  %v8540 = vadd.f32 %v8311, %v8506
  %v8541 = vadd.f32 %v8312, %v8511
  %v8542 = vadd.f32 %v8313, %v8516
  %v8543 = vadd.f32 %v8314, %v8521
  %v8544 = vadd.f32 %v8315, %v8526
  %v8545 = vld [vmem:[%s8316 + $0x1] sm:$0xff]
  %v8546 = vld [vmem:[%s8316 + $0x11] sm:$0xff]
  %v8547 = vld [vmem:[%s8316 + $0x21] sm:$0xff]
  %v8548 = vld [vmem:[%s8316 + $0x31] sm:$0xff]
  %v8549 = vld [vmem:[%s8316 + $0x41] sm:$0xff]
  %v8550 = vld [vmem:[%s8316 + $0x51] sm:$0xff]
  %v8551 = vld [vmem:[%s8316 + $0x61] sm:$0xff]
  %v8552 = vld [vmem:[%s8316 + $0x71] sm:$0xff]
  %v8553 = vld [vmem:[%s8325 + $0x1] sm:$0xff]
  %v8554 = vld [vmem:[%s8325 + $0x11] sm:$0xff]
  %v8555 = vld [vmem:[%s8325 + $0x21] sm:$0xff]
  %v8556 = vld [vmem:[%s8325 + $0x31] sm:$0xff]
  %v8557 = vld [vmem:[%s8325 + $0x41] sm:$0xff]
  %v8558 = vld [vmem:[%s8325 + $0x51] sm:$0xff]
  %v8559 = vld [vmem:[%s8325 + $0x61] sm:$0xff]
  %v8560 = vld [vmem:[%s8325 + $0x71] sm:$0xff]
  %v8561 = vld [vmem:[%s3 + $0x70] sm:$0xff]
  %v8562 = vld [vmem:[%s3 + $0x78] sm:$0xff]
  %v8564 = vsel %vm6653, %v8545, 0
  %v8567 = vsel %vm6653, %v8546, 0
  %v8570 = vsel %vm6653, %v8547, 0
  %v8573 = vsel %vm6653, %v8548, 0
  %v8576 = vsel %vm6653, %v8549, 0
  %v8579 = vsel %vm6653, %v8550, 0
  %v8582 = vsel %vm6653, %v8551, 0
  %v8585 = vsel %vm6653, %v8552, 0
  %v8588 = vsel %vm6653, %v8553, 0
  %v8591 = vsel %vm6653, %v8554, 0
  %v8594 = vsel %vm6653, %v8555, 0
  %v8597 = vsel %vm6653, %v8556, 0
  %v8600 = vsel %vm6653, %v8557, 0
  %v8603 = vsel %vm6653, %v8558, 0
  %v8606 = vsel %vm6653, %v8559, 0
  %v8609 = vsel %vm6653, %v8560, 0
  %8611 = vmatprep.subr.mxu0 0.0
  %8612 = vmatpush1.msra.mxu0 %v8561
  %8613 = vmatprep.subr.mxu0 0.0
  %8614 = vmatpush1.msra.mxu0 %v8562
  %8615 = vmatprep.subr.mxu0 0.0
  %8616 = vmatpush1.msra.mxu0 0.0
  %8617 = vmatprep.subr.mxu0 0.0
  %8618 = vmatpush1.msra.mxu0 0.0
  %8619 = vmatprep.subr.mxu0 0.0
  %8620 = vmatpush1.msra.mxu0 0.0
  %8621 = vmatprep.subr.mxu0 0.0
  %8622 = vmatpush1.msra.mxu0 0.0
  %8623 = vmatprep.subr.mxu0 0.0
  %8624 = vmatpush1.msra.mxu0 0.0
  %8625 = vmatprep.subr.mxu0 0.0
  %8626 = vmatpush1.msra.mxu0 0.0
  %8627 = vmatprep.subr.mxu0 0.0
  %8628 = vmatpush1.msra.mxu0 0.0
  %8629 = vmatprep.subr.mxu0 0.0
  %8630 = vmatpush1.msra.mxu0 0.0
  %8631 = vmatprep.subr.mxu0 0.0
  %8632 = vmatpush1.msra.mxu0 0.0
  %8633 = vmatprep.subr.mxu0 0.0
  %8634 = vmatpush1.msra.mxu0 0.0
  %8635 = vmatprep.subr.mxu0 0.0
  %8636 = vmatpush1.msra.mxu0 0.0
  %8637 = vmatprep.subr.mxu0 0.0
  %8638 = vmatpush1.msra.mxu0 0.0
  %8639 = vmatprep.subr.mxu0 0.0
  %8640 = vmatpush1.msra.mxu0 0.0
  %8641 = vmatprep.subr.mxu0 0.0
  %8642 = vmatpush1.msra.mxu0 0.0
  %8643 = vmatprep.subr.mxu0 0.0
  %8644 = vmatpush1.msra.mxu0 0.0
  %8645 = vmatprep.subr.mxu0 0.0
  %8646 = vmatpush1.msra.mxu0 0.0
  %8647 = vmatprep.subr.mxu0 0.0
  %8648 = vmatpush1.msra.mxu0 0.0
  %8649 = vmatprep.subr.mxu0 0.0
  %8650 = vmatpush1.msra.mxu0 0.0
  %8651 = vmatprep.subr.mxu0 0.0
  %8652 = vmatpush1.msra.mxu0 0.0
  %8653 = vmatprep.subr.mxu0 0.0
  %8654 = vmatpush1.msra.mxu0 0.0
  %8655 = vmatprep.subr.mxu0 0.0
  %8656 = vmatpush1.msra.mxu0 0.0
  %8657 = vmatprep.subr.mxu0 0.0
  %8658 = vmatpush1.msra.mxu0 0.0
  %8659 = vmatprep.subr.mxu0 0.0
  %8660 = vmatpush1.msra.mxu0 0.0
  %8661 = vmatprep.subr.mxu0 0.0
  %8662 = vmatpush1.msra.mxu0 0.0
  %8663 = vmatprep.subr.mxu0 0.0
  %8664 = vmatpush1.msra.mxu0 0.0
  %8665 = vmatprep.subr.mxu0 0.0
  %8666 = vmatpush1.msra.mxu0 0.0
  %8667 = vmatprep.subr.mxu0 0.0
  %8668 = vmatpush1.msra.mxu0 0.0
  %8669 = vmatprep.subr.mxu0 0.0
  %8670 = vmatpush1.msra.mxu0 0.0
  %8671 = vmatprep.subr.mxu0 0.0
  %8672 = vmatpush1.msra.mxu0 0.0
  %8673 = vmatprep.subr.mxu0 0.0
  %8674 = vmatpush1.msra.mxu0 0.0
  %8675 = vmatprep.mubr.f32.mxu0 0.0
  %8676 = vmatmul.mubr.f32.gmra.mrb[0].mxu0 %v8564
  %v8677 = vpop.f32.mrb[0].mxu0
  %v8678 = vadd.f32 0.0, %v8677
  %v8679 = vpop.f32.mrb[0].mxu0
  %8680 = vmatprep.mubr.f32.mxu0 0.0
  %8681 = vmatmul.mubr.f32.gmra.mrb[0].mxu0 %v8567
  %v8682 = vpop.f32.mrb[0].mxu0
  %v8683 = vadd.f32 0.0, %v8682
  %v8684 = vpop.f32.mrb[0].mxu0
  %8685 = vmatprep.mubr.f32.mxu0 0.0
  %8686 = vmatmul.mubr.f32.gmra.mrb[0].mxu0 %v8570
  %v8687 = vpop.f32.mrb[0].mxu0
  %v8688 = vadd.f32 0.0, %v8687
  %v8689 = vpop.f32.mrb[0].mxu0
  %8690 = vmatprep.mubr.f32.mxu0 0.0
  %8691 = vmatmul.mubr.f32.gmra.mrb[0].mxu0 %v8573
  %v8692 = vpop.f32.mrb[0].mxu0
  %v8693 = vadd.f32 0.0, %v8692
  %v8694 = vpop.f32.mrb[0].mxu0
  %8695 = vmatprep.mubr.f32.mxu0 0.0
  %8696 = vmatmul.mubr.f32.gmra.mrb[0].mxu0 %v8576
  %v8697 = vpop.f32.mrb[0].mxu0
  %v8698 = vadd.f32 0.0, %v8697
  %v8699 = vpop.f32.mrb[0].mxu0
  %8700 = vmatprep.mubr.f32.mxu0 0.0
  %8701 = vmatmul.mubr.f32.gmra.mrb[0].mxu0 %v8579
  %v8702 = vpop.f32.mrb[0].mxu0
  %v8703 = vadd.f32 0.0, %v8702
  %v8704 = vpop.f32.mrb[0].mxu0
  %8705 = vmatprep.mubr.f32.mxu0 0.0
  %8706 = vmatmul.mubr.f32.gmra.mrb[0].mxu0 %v8582
  %v8707 = vpop.f32.mrb[0].mxu0
  %v8708 = vadd.f32 0.0, %v8707
  %v8709 = vpop.f32.mrb[0].mxu0
  %8710 = vmatprep.mubr.f32.mxu0 0.0
  %8711 = vmatmul.mubr.f32.gmra.mrb[0].mxu0 %v8585
  %v8712 = vpop.f32.mrb[0].mxu0
  %v8713 = vadd.f32 0.0, %v8712
  %v8714 = vpop.f32.mrb[0].mxu0
  %8715 = vmatprep.mubr.f32.mxu0 0.0
  %8716 = vmatmul.mubr.f32.gmra.mrb[0].mxu0 %v8588
  %v8717 = vpop.f32.mrb[0].mxu0
  %v8718 = vadd.f32 0.0, %v8717
  %v8719 = vpop.f32.mrb[0].mxu0
  %8720 = vmatprep.mubr.f32.mxu0 0.0
  %8721 = vmatmul.mubr.f32.gmra.mrb[0].mxu0 %v8591
  %v8722 = vpop.f32.mrb[0].mxu0
  %v8723 = vadd.f32 0.0, %v8722
  %v8724 = vpop.f32.mrb[0].mxu0
  %8725 = vmatprep.mubr.f32.mxu0 0.0
  %8726 = vmatmul.mubr.f32.gmra.mrb[0].mxu0 %v8594
  %v8727 = vpop.f32.mrb[0].mxu0
  %v8728 = vadd.f32 0.0, %v8727
  %v8729 = vpop.f32.mrb[0].mxu0
  %8730 = vmatprep.mubr.f32.mxu0 0.0
  %8731 = vmatmul.mubr.f32.gmra.mrb[0].mxu0 %v8597
  %v8732 = vpop.f32.mrb[0].mxu0
  %v8733 = vadd.f32 0.0, %v8732
  %v8734 = vpop.f32.mrb[0].mxu0
  %8735 = vmatprep.mubr.f32.mxu0 0.0
  %8736 = vmatmul.mubr.f32.gmra.mrb[0].mxu0 %v8600
  %v8737 = vpop.f32.mrb[0].mxu0
  %v8738 = vadd.f32 0.0, %v8737
  %v8739 = vpop.f32.mrb[0].mxu0
  %8740 = vmatprep.mubr.f32.mxu0 0.0
  %8741 = vmatmul.mubr.f32.gmra.mrb[0].mxu0 %v8603
  %v8742 = vpop.f32.mrb[0].mxu0
  %v8743 = vadd.f32 0.0, %v8742
  %v8744 = vpop.f32.mrb[0].mxu0
  %8745 = vmatprep.mubr.f32.mxu0 0.0
  %8746 = vmatmul.mubr.f32.gmra.mrb[0].mxu0 %v8606
  %v8747 = vpop.f32.mrb[0].mxu0
  %v8748 = vadd.f32 0.0, %v8747
  %v8749 = vpop.f32.mrb[0].mxu0
  %8750 = vmatprep.mubr.f32.mxu0 0.0
  %8751 = vmatmul.mubr.f32.gmra.mrb[0].mxu0 %v8609
  %v8752 = vpop.f32.mrb[0].mxu0
  %v8753 = vadd.f32 0.0, %v8752
  %v8754 = vpop.f32.mrb[0].mxu0
  %8755 = vdwg.mxu0
  %v8756 = vadd.f32 %v8529, %v8678
  %v8757 = vadd.f32 %v8530, %v8683
  %v8758 = vadd.f32 %v8531, %v8688
  %v8759 = vadd.f32 %v8532, %v8693
  %v8760 = vadd.f32 %v8533, %v8698
  %v8761 = vadd.f32 %v8534, %v8703
  %v8762 = vadd.f32 %v8535, %v8708
  %v8763 = vadd.f32 %v8536, %v8713
  %v8764 = vadd.f32 %v8537, %v8718
  %v8765 = vadd.f32 %v8538, %v8723
  %v8766 = vadd.f32 %v8539, %v8728
  %v8767 = vadd.f32 %v8540, %v8733
  %v8768 = vadd.f32 %v8541, %v8738
  %v8769 = vadd.f32 %v8542, %v8743
  %v8770 = vadd.f32 %v8543, %v8748
  %v8771 = vadd.f32 %v8544, %v8753
  %v8772 = vld [vmem:[%s8316 + $0x2] sm:$0xff]
  %v8773 = vld [vmem:[%s8316 + $0x12] sm:$0xff]
  %v8774 = vld [vmem:[%s8316 + $0x22] sm:$0xff]
  %v8775 = vld [vmem:[%s8316 + $0x32] sm:$0xff]
  %v8776 = vld [vmem:[%s8316 + $0x42] sm:$0xff]
  %v8777 = vld [vmem:[%s8316 + $0x52] sm:$0xff]
  %v8778 = vld [vmem:[%s8316 + $0x62] sm:$0xff]
  %v8779 = vld [vmem:[%s8316 + $0x72] sm:$0xff]
  %v8780 = vld [vmem:[%s8325 + $0x2] sm:$0xff]
  %v8781 = vld [vmem:[%s8325 + $0x12] sm:$0xff]
  %v8782 = vld [vmem:[%s8325 + $0x22] sm:$0xff]
  %v8783 = vld [vmem:[%s8325 + $0x32] sm:$0xff]
  %v8784 = vld [vmem:[%s8325 + $0x42] sm:$0xff]
  %v8785 = vld [vmem:[%s8325 + $0x52] sm:$0xff]
  %v8786 = vld [vmem:[%s8325 + $0x62] sm:$0xff]
  %v8787 = vld [vmem:[%s8325 + $0x72] sm:$0xff]
  %v8788 = vld [vmem:[%s3 + $0x80] sm:$0xff]
  %v8789 = vld [vmem:[%s3 + $0x88] sm:$0xff]
  %v8791 = vsel %vm6653, %v8772, 0
  %v8794 = vsel %vm6653, %v8773, 0
  %v8797 = vsel %vm6653, %v8774, 0
  %v8800 = vsel %vm6653, %v8775, 0
  %v8803 = vsel %vm6653, %v8776, 0
  %v8806 = vsel %vm6653, %v8777, 0
  %v8809 = vsel %vm6653, %v8778, 0
  %v8812 = vsel %vm6653, %v8779, 0
  %v8815 = vsel %vm6653, %v8780, 0
  %v8818 = vsel %vm6653, %v8781, 0
  %v8821 = vsel %vm6653, %v8782, 0
  %v8824 = vsel %vm6653, %v8783, 0
  %v8827 = vsel %vm6653, %v8784, 0
  %v8830 = vsel %vm6653, %v8785, 0
  %v8833 = vsel %vm6653, %v8786, 0
  %v8836 = vsel %vm6653, %v8787, 0
  %8838 = vmatprep.subr.mxu0 0.0
  %8839 = vmatpush1.msra.mxu0 %v8788
  %8840 = vmatprep.subr.mxu0 0.0
  %8841 = vmatpush1.msra.mxu0 %v8789
  %8842 = vmatprep.subr.mxu0 0.0
  %8843 = vmatpush1.msra.mxu0 0.0
  %8844 = vmatprep.subr.mxu0 0.0
  %8845 = vmatpush1.msra.mxu0 0.0
  %8846 = vmatprep.subr.mxu0 0.0
  %8847 = vmatpush1.msra.mxu0 0.0
  %8848 = vmatprep.subr.mxu0 0.0
  %8849 = vmatpush1.msra.mxu0 0.0
  %8850 = vmatprep.subr.mxu0 0.0
  %8851 = vmatpush1.msra.mxu0 0.0
  %8852 = vmatprep.subr.mxu0 0.0
  %8853 = vmatpush1.msra.mxu0 0.0
  %8854 = vmatprep.subr.mxu0 0.0
  %8855 = vmatpush1.msra.mxu0 0.0
  %8856 = vmatprep.subr.mxu0 0.0
  %8857 = vmatpush1.msra.mxu0 0.0
  %8858 = vmatprep.subr.mxu0 0.0
  %8859 = vmatpush1.msra.mxu0 0.0
  %8860 = vmatprep.subr.mxu0 0.0
  %8861 = vmatpush1.msra.mxu0 0.0
  %8862 = vmatprep.subr.mxu0 0.0
  %8863 = vmatpush1.msra.mxu0 0.0
  %8864 = vmatprep.subr.mxu0 0.0
  %8865 = vmatpush1.msra.mxu0 0.0
  %8866 = vmatprep.subr.mxu0 0.0
  %8867 = vmatpush1.msra.mxu0 0.0
  %8868 = vmatprep.subr.mxu0 0.0
  %8869 = vmatpush1.msra.mxu0 0.0
  %8870 = vmatprep.subr.mxu0 0.0
  %8871 = vmatpush1.msra.mxu0 0.0
  %8872 = vmatprep.subr.mxu0 0.0
  %8873 = vmatpush1.msra.mxu0 0.0
  %8874 = vmatprep.subr.mxu0 0.0
  %8875 = vmatpush1.msra.mxu0 0.0
  %8876 = vmatprep.subr.mxu0 0.0
  %8877 = vmatpush1.msra.mxu0 0.0
  %8878 = vmatprep.subr.mxu0 0.0
  %8879 = vmatpush1.msra.mxu0 0.0
  %8880 = vmatprep.subr.mxu0 0.0
  %8881 = vmatpush1.msra.mxu0 0.0
  %8882 = vmatprep.subr.mxu0 0.0
  %8883 = vmatpush1.msra.mxu0 0.0
  %8884 = vmatprep.subr.mxu0 0.0
  %8885 = vmatpush1.msra.mxu0 0.0
  %8886 = vmatprep.subr.mxu0 0.0
  %8887 = vmatpush1.msra.mxu0 0.0
  %8888 = vmatprep.subr.mxu0 0.0
  %8889 = vmatpush1.msra.mxu0 0.0
  %8890 = vmatprep.subr.mxu0 0.0
  %8891 = vmatpush1.msra.mxu0 0.0
  %8892 = vmatprep.subr.mxu0 0.0
  %8893 = vmatpush1.msra.mxu0 0.0
  %8894 = vmatprep.subr.mxu0 0.0
  %8895 = vmatpush1.msra.mxu0 0.0
  %8896 = vmatprep.subr.mxu0 0.0
  %8897 = vmatpush1.msra.mxu0 0.0
  %8898 = vmatprep.subr.mxu0 0.0
  %8899 = vmatpush1.msra.mxu0 0.0
  %8900 = vmatprep.subr.mxu0 0.0
  %8901 = vmatpush1.msra.mxu0 0.0
  %8902 = vmatprep.mubr.f32.mxu0 0.0
  %8903 = vmatmul.mubr.f32.gmra.mrb[0].mxu0 %v8791
  %v8904 = vpop.f32.mrb[0].mxu0
  %v8905 = vadd.f32 0.0, %v8904
  %v8906 = vpop.f32.mrb[0].mxu0
  %8907 = vmatprep.mubr.f32.mxu0 0.0
  %8908 = vmatmul.mubr.f32.gmra.mrb[0].mxu0 %v8794
  %v8909 = vpop.f32.mrb[0].mxu0
  %v8910 = vadd.f32 0.0, %v8909
  %v8911 = vpop.f32.mrb[0].mxu0
  %8912 = vmatprep.mubr.f32.mxu0 0.0
  %8913 = vmatmul.mubr.f32.gmra.mrb[0].mxu0 %v8797
  %v8914 = vpop.f32.mrb[0].mxu0
  %v8915 = vadd.f32 0.0, %v8914
  %v8916 = vpop.f32.mrb[0].mxu0
  %8917 = vmatprep.mubr.f32.mxu0 0.0
  %8918 = vmatmul.mubr.f32.gmra.mrb[0].mxu0 %v8800
  %v8919 = vpop.f32.mrb[0].mxu0
  %v8920 = vadd.f32 0.0, %v8919
  %v8921 = vpop.f32.mrb[0].mxu0
  %8922 = vmatprep.mubr.f32.mxu0 0.0
  %8923 = vmatmul.mubr.f32.gmra.mrb[0].mxu0 %v8803
  %v8924 = vpop.f32.mrb[0].mxu0
  %v8925 = vadd.f32 0.0, %v8924
  %v8926 = vpop.f32.mrb[0].mxu0
  %8927 = vmatprep.mubr.f32.mxu0 0.0
  %8928 = vmatmul.mubr.f32.gmra.mrb[0].mxu0 %v8806
  %v8929 = vpop.f32.mrb[0].mxu0
  %v8930 = vadd.f32 0.0, %v8929
  %v8931 = vpop.f32.mrb[0].mxu0
  %8932 = vmatprep.mubr.f32.mxu0 0.0
  %8933 = vmatmul.mubr.f32.gmra.mrb[0].mxu0 %v8809
  %v8934 = vpop.f32.mrb[0].mxu0
  %v8935 = vadd.f32 0.0, %v8934
  %v8936 = vpop.f32.mrb[0].mxu0
  %8937 = vmatprep.mubr.f32.mxu0 0.0
  %8938 = vmatmul.mubr.f32.gmra.mrb[0].mxu0 %v8812
  %v8939 = vpop.f32.mrb[0].mxu0
  %v8940 = vadd.f32 0.0, %v8939
  %v8941 = vpop.f32.mrb[0].mxu0
  %8942 = vmatprep.mubr.f32.mxu0 0.0
  %8943 = vmatmul.mubr.f32.gmra.mrb[0].mxu0 %v8815
  %v8944 = vpop.f32.mrb[0].mxu0
  %v8945 = vadd.f32 0.0, %v8944
  %v8946 = vpop.f32.mrb[0].mxu0
  %8947 = vmatprep.mubr.f32.mxu0 0.0
  %8948 = vmatmul.mubr.f32.gmra.mrb[0].mxu0 %v8818
  %v8949 = vpop.f32.mrb[0].mxu0
  %v8950 = vadd.f32 0.0, %v8949
  %v8951 = vpop.f32.mrb[0].mxu0
  %8952 = vmatprep.mubr.f32.mxu0 0.0
  %8953 = vmatmul.mubr.f32.gmra.mrb[0].mxu0 %v8821
  %v8954 = vpop.f32.mrb[0].mxu0
  %v8955 = vadd.f32 0.0, %v8954
  %v8956 = vpop.f32.mrb[0].mxu0
  %8957 = vmatprep.mubr.f32.mxu0 0.0
  %8958 = vmatmul.mubr.f32.gmra.mrb[0].mxu0 %v8824
  %v8959 = vpop.f32.mrb[0].mxu0
  %v8960 = vadd.f32 0.0, %v8959
  %v8961 = vpop.f32.mrb[0].mxu0
  %8962 = vmatprep.mubr.f32.mxu0 0.0
  %8963 = vmatmul.mubr.f32.gmra.mrb[0].mxu0 %v8827
  %v8964 = vpop.f32.mrb[0].mxu0
  %v8965 = vadd.f32 0.0, %v8964
  %v8966 = vpop.f32.mrb[0].mxu0
  %8967 = vmatprep.mubr.f32.mxu0 0.0
  %8968 = vmatmul.mubr.f32.gmra.mrb[0].mxu0 %v8830
  %v8969 = vpop.f32.mrb[0].mxu0
  %v8970 = vadd.f32 0.0, %v8969
  %v8971 = vpop.f32.mrb[0].mxu0
  %8972 = vmatprep.mubr.f32.mxu0 0.0
  %8973 = vmatmul.mubr.f32.gmra.mrb[0].mxu0 %v8833
  %v8974 = vpop.f32.mrb[0].mxu0
  %v8975 = vadd.f32 0.0, %v8974
  %v8976 = vpop.f32.mrb[0].mxu0
  %8977 = vmatprep.mubr.f32.mxu0 0.0
  %8978 = vmatmul.mubr.f32.gmra.mrb[0].mxu0 %v8836
  %v8979 = vpop.f32.mrb[0].mxu0
  %v8980 = vadd.f32 0.0, %v8979
  %v8981 = vpop.f32.mrb[0].mxu0
  %8982 = vdwg.mxu0
  %v8983 = vadd.f32 %v8756, %v8905
  %v8984 = vadd.f32 %v8757, %v8910
  %v8985 = vadd.f32 %v8758, %v8915
  %v8986 = vadd.f32 %v8759, %v8920
  %v8987 = vadd.f32 %v8760, %v8925
  %v8988 = vadd.f32 %v8761, %v8930
  %v8989 = vadd.f32 %v8762, %v8935
  %v8990 = vadd.f32 %v8763, %v8940
  %v8991 = vadd.f32 %v8764, %v8945
  %v8992 = vadd.f32 %v8765, %v8950
  %v8993 = vadd.f32 %v8766, %v8955
  %v8994 = vadd.f32 %v8767, %v8960
  %v8995 = vadd.f32 %v8768, %v8965
  %v8996 = vadd.f32 %v8769, %v8970
  %v8997 = vadd.f32 %v8770, %v8975
  %v8998 = vadd.f32 %v8771, %v8980
  %v8999 = vld [vmem:[%s4] sm:$0x1]
  %v9001 = vlaneseq
  %v9002 = vshrl.u32 %v9001, 7
  %v9003 = vsub.s32 0, %v9002
  %v9004 = vrot.slane %v8999, %v9003
  %v9006 = vadd.f32 %v8983, %v9004
  %v9007 = vadd.f32 %v8984, %v9004
  %v9008 = vadd.f32 %v8985, %v9004
  %v9009 = vadd.f32 %v8986, %v9004
  %v9010 = vadd.f32 %v8987, %v9004
  %v9011 = vadd.f32 %v8988, %v9004
  %v9012 = vadd.f32 %v8989, %v9004
  %v9013 = vadd.f32 %v8990, %v9004
  %v9014 = vadd.f32 %v8991, %v9004
  %v9015 = vadd.f32 %v8992, %v9004
  %v9016 = vadd.f32 %v8993, %v9004
  %v9017 = vadd.f32 %v8994, %v9004
  %v9018 = vadd.f32 %v8995, %v9004
  %v9019 = vadd.f32 %v8996, %v9004
  %v9020 = vadd.f32 %v8997, %v9004
  %v9021 = vadd.f32 %v8998, %v9004
  %v9022 = vmax.f32 %v9006, 0.0
  %v9023 = vmax.f32 %v9007, 0.0
  %v9024 = vmax.f32 %v9008, 0.0
  %v9025 = vmax.f32 %v9009, 0.0
  %v9026 = vmax.f32 %v9010, 0.0
  %v9027 = vmax.f32 %v9011, 0.0
  %v9028 = vmax.f32 %v9012, 0.0
  %v9029 = vmax.f32 %v9013, 0.0
  %v9030 = vmax.f32 %v9014, 0.0
  %v9031 = vmax.f32 %v9015, 0.0
  %v9032 = vmax.f32 %v9016, 0.0
  %v9033 = vmax.f32 %v9017, 0.0
  %v9034 = vmax.f32 %v9018, 0.0
  %v9035 = vmax.f32 %v9019, 0.0
  %v9036 = vmax.f32 %v9020, 0.0
  %v9037 = vmax.f32 %v9021, 0.0
  %vm9038 = vcmask 261120
  %9039 = vst.msk [vmem:[#allocation6] sm:$0xff] %vm9038, %v9022
  %9040 = vst.msk [vmem:[#allocation6 + $0x8] sm:$0xff] %vm9038, %v9023
  %9041 = vst.msk [vmem:[#allocation6 + $0x10] sm:$0xff] %vm9038, %v9024
  %9042 = vst.msk [vmem:[#allocation6 + $0x18] sm:$0xff] %vm9038, %v9025
  %9043 = vst.msk [vmem:[#allocation6 + $0x20] sm:$0xff] %vm9038, %v9026
  %9044 = vst.msk [vmem:[#allocation6 + $0x28] sm:$0xff] %vm9038, %v9027
  %9045 = vst.msk [vmem:[#allocation6 + $0x30] sm:$0xff] %vm9038, %v9028
  %9046 = vst.msk [vmem:[#allocation6 + $0x38] sm:$0xff] %vm9038, %v9029
  %9047 = vst.msk [vmem:[#allocation6 + $0x40] sm:$0xff] %vm9038, %v9030
  %9048 = vst.msk [vmem:[#allocation6 + $0x48] sm:$0xff] %vm9038, %v9031
  %9049 = vst.msk [vmem:[#allocation6 + $0x50] sm:$0xff] %vm9038, %v9032
  %9050 = vst.msk [vmem:[#allocation6 + $0x58] sm:$0xff] %vm9038, %v9033
  %9051 = vst.msk [vmem:[#allocation6 + $0x60] sm:$0xff] %vm9038, %v9034
  %9052 = vst.msk [vmem:[#allocation6 + $0x68] sm:$0xff] %vm9038, %v9035
  %9053 = vst.msk [vmem:[#allocation6 + $0x70] sm:$0xff] %vm9038, %v9036
  %9054 = vst.msk [vmem:[#allocation6 + $0x78] sm:$0xff] %vm9038, %v9037
  %v9055 = vld [vmem:[#allocation6] sm:$0xff]
  %v9056 = vld [vmem:[#allocation6 + $0x10] sm:$0xff]
  %v9057 = vld [vmem:[#allocation6 + $0x20] sm:$0xff]
  %v9058 = vld [vmem:[#allocation6 + $0x30] sm:$0xff]
  %v9059 = vld [vmem:[#allocation6 + $0x40] sm:$0xff]
  %v9060 = vld [vmem:[#allocation6 + $0x50] sm:$0xff]
  %v9061 = vld [vmem:[#allocation6 + $0x60] sm:$0xff]
  %v9062 = vld [vmem:[#allocation6 + $0x70] sm:$0xff]
  %s9063 = scalar_lea.vmem [#allocation6], 8
  %v9064 = vld [vmem:[%s9063] sm:$0xff]
  %v9065 = vld [vmem:[%s9063 + $0x10] sm:$0xff]
  %v9066 = vld [vmem:[%s9063 + $0x20] sm:$0xff]
  %v9067 = vld [vmem:[%s9063 + $0x30] sm:$0xff]
  %v9068 = vld [vmem:[%s9063 + $0x40] sm:$0xff]
  %v9069 = vld [vmem:[%s9063 + $0x50] sm:$0xff]
  %v9070 = vld [vmem:[%s9063 + $0x60] sm:$0xff]
  %v9071 = vld [vmem:[%s9063 + $0x70] sm:$0xff]
  %v9072 = vmax.f32 %v9055, %v9064
  %v9073 = vmax.f32 %v9056, %v9065
  %v9074 = vmax.f32 %v9057, %v9066
  %v9075 = vmax.f32 %v9058, %v9067
  %v9076 = vmax.f32 %v9059, %v9068
  %v9077 = vmax.f32 %v9060, %v9069
  %v9078 = vmax.f32 %v9061, %v9070
  %v9079 = vmax.f32 %v9062, %v9071
  %9080 = vst.msk [vmem:[#allocation7] sm:$0xff] %vm9038, %v9072
  %9081 = vst.msk [vmem:[#allocation7 + $0x8] sm:$0xff] %vm9038, %v9073
  %9082 = vst.msk [vmem:[#allocation7 + $0x10] sm:$0xff] %vm9038, %v9074
  %9083 = vst.msk [vmem:[#allocation7 + $0x18] sm:$0xff] %vm9038, %v9075
  %9084 = vst.msk [vmem:[#allocation7 + $0x20] sm:$0xff] %vm9038, %v9076
  %9085 = vst.msk [vmem:[#allocation7 + $0x28] sm:$0xff] %vm9038, %v9077
  %9086 = vst.msk [vmem:[#allocation7 + $0x30] sm:$0xff] %vm9038, %v9078
  %9087 = vst.msk [vmem:[#allocation7 + $0x38] sm:$0xff] %vm9038, %v9079
  %v9088 = vld [vmem:[#allocation7] ss:$2 sm:$0xf]
  %s9089 = scalar_lea.vmem [#allocation7], 8
  %v9090 = vld [vmem:[%s9089] ss:$2 sm:$0xf]
  %s9091 = scalar_lea.vmem [#allocation7], 16
  %v9092 = vld [vmem:[%s9091] ss:$2 sm:$0xf]
  %s9093 = scalar_lea.vmem [#allocation7], 24
  %v9094 = vld [vmem:[%s9093] ss:$2 sm:$0xf]
  %s9095 = scalar_lea.vmem [#allocation7], 32
  %v9096 = vld [vmem:[%s9095] ss:$2 sm:$0xf]
  %s9097 = scalar_lea.vmem [#allocation7], 40
  %v9098 = vld [vmem:[%s9097] ss:$2 sm:$0xf]
  %s9099 = scalar_lea.vmem [#allocation7], 48
  %v9100 = vld [vmem:[%s9099] ss:$2 sm:$0xf]
  %s9101 = scalar_lea.vmem [#allocation7], 56
  %v9102 = vld [vmem:[%s9101] ss:$2 sm:$0xf]
  %s9103 = scalar_lea.vmem [#allocation7], 1
  %v9104 = vld [vmem:[%s9103] ss:$2 sm:$0xf]
  %s9105 = scalar_lea.vmem [#allocation7], 9
  %v9106 = vld [vmem:[%s9105] ss:$2 sm:$0xf]
  %s9107 = scalar_lea.vmem [#allocation7], 17
  %v9108 = vld [vmem:[%s9107] ss:$2 sm:$0xf]
  %s9109 = scalar_lea.vmem [#allocation7], 25
  %v9110 = vld [vmem:[%s9109] ss:$2 sm:$0xf]
  %s9111 = scalar_lea.vmem [#allocation7], 33
  %v9112 = vld [vmem:[%s9111] ss:$2 sm:$0xf]
  %s9113 = scalar_lea.vmem [#allocation7], 41
  %v9114 = vld [vmem:[%s9113] ss:$2 sm:$0xf]
  %s9115 = scalar_lea.vmem [#allocation7], 49
  %v9116 = vld [vmem:[%s9115] ss:$2 sm:$0xf]
  %s9117 = scalar_lea.vmem [#allocation7], 57
  %v9118 = vld [vmem:[%s9117] ss:$2 sm:$0xf]
  %v9119 = vmax.f32 %v9088, %v9104
  %v9120 = vmax.f32 %v9090, %v9106
  %v9121 = vmax.f32 %v9092, %v9108
  %v9122 = vmax.f32 %v9094, %v9110
  %v9123 = vmax.f32 %v9096, %v9112
  %v9124 = vmax.f32 %v9098, %v9114
  %v9125 = vmax.f32 %v9100, %v9116
  %v9126 = vmax.f32 %v9102, %v9118
  %vm9127 = vcmask 257024
  %9128 = vst.msk [vmem:[%s5] sm:$0xf] %vm9127, %v9119
  %9129 = vst.msk [vmem:[%s5 + $0x4] sm:$0xf] %vm9127, %v9120
  %9130 = vst.msk [vmem:[%s5 + $0x8] sm:$0xf] %vm9127, %v9121
  %9131 = vst.msk [vmem:[%s5 + $0xc] sm:$0xf] %vm9127, %v9122
  %9132 = vst.msk [vmem:[%s5 + $0x10] sm:$0xf] %vm9127, %v9123
  %9133 = vst.msk [vmem:[%s5 + $0x14] sm:$0xf] %vm9127, %v9124
  %9134 = vst.msk [vmem:[%s5 + $0x18] sm:$0xf] %vm9127, %v9125
  %9135 = vst.msk [vmem:[%s5 + $0x1c] sm:$0xf] %vm9127, %v9126
  // Predicated region
  $region22: #{conv_vgg_forward.2} parent=0 // pred_check
    _
  $region23: #{conv_vgg_forward.2} parent=0 // pred_check_branch
    %9137 = sbr.rel (0) target = $region25
  $region24: #{conv_vgg_forward.2} parent=0 // pred_region
    _
  $region25: #{conv_vgg_forward.2} parent=0 // pred_fallthru
    _
  // Predicated region
  $region26: #{conv_vgg_forward.2} parent=0 // pred_check
    _
  $region27: #{conv_vgg_forward.2} parent=0 // pred_check_branch
    %9139 = sbr.rel (0) target = $region29
  $region28: #{conv_vgg_forward.2} parent=0 // pred_region
    _
  $region29: #{conv_vgg_forward.2} parent=0 // pred_fallthru
    _

</llo_original>
